<compile_context>
chip_gen: v7x
topology: tpu7x:2x2x1
jax: 0.10.0
libtpu: 0.0.40
codegen_flags: <defaults>
</compile_context>

<pallas_src>
import functools

import numpy as np
import jax
import jax.numpy as jnp
from jax.experimental import pallas as pl
from jax.experimental.pallas import tpu as pltpu


# ----------------------------------------------------------------------------
# Fused kernel: one grid step == one batch element, everything VMEM/vreg
# resident, channel-major (C, DHW) layout.
# ----------------------------------------------------------------------------

def fused_bottleneck_kernel(
        x_ref, mask_ref,                            # (1, Cin, DHW), (27, DHW)
        w1_ref, s1_ref, t1_ref,                     # conv1 + bn1
        w2_ref, s0_ref, t0_ref,                     # conv2 taps + bn0
        wf1_ref, bf1_ref, sr_ref, tr_ref,           # fc1 + bn(attn)
        wf2_ref, bf2_ref,                           # fc2
        w3_ref, s3_ref, t3_ref,                     # conv3 + bn3
        o_ref,                                      # (1, Cout, DHW)
        *, D, H, W, radix, cardinality):
    DHW = D * H * W
    gw = w1_ref.shape[0]                            # group_width
    Cmid = s0_ref.shape[0]                          # gw * radix
    groups = cardinality * radix
    cin_g = gw // groups
    cout_g = Cmid // groups
    mm_dtype = w1_ref.dtype                         # f32 or bf16 (MXU operands)

    x = x_ref[0]                                    # (Cin, DHW) f32, residual

    # ---- conv1 (1x1x1) + bn1 + relu : dot((gw,Cin),(Cin,DHW)) --------------
    y1 = jnp.dot(w1_ref[...], x.astype(mm_dtype),
                 preferred_element_type=jnp.float32)
    y1 = jnp.maximum(y1 * s1_ref[...] + t1_ref[...], 0.0)       # (gw, DHW)

    # ---- conv2: grouped 3x3x3 as 27 roll+mask taps, accumulated on the MXU.
    #      Per-tap: shift the flattened DHW lane axis, zero the halo with a
    #      precomputed 0/1 mask, then one small matmul per group (block-diag
    #      weight exploited -> no zero multiplies, no im2col slab).
    accs = [jnp.zeros((cout_g, DHW), jnp.float32) for _ in range(groups)]
    t = 0
    for kd in range(3):
        for kh in range(3):
            for kw in range(3):
                s = (kd - 1) * H * W + (kh - 1) * W + (kw - 1)
                if s == 0:
                    z = y1                                      # centre tap
                else:
                    # z[i] = y1[i + s] (wrapped values zeroed by the mask)
                    z = (pltpu.roll(y1, (-s) % DHW, axis=1)
                         * mask_ref[pl.ds(t, 1), :])
                zb = z.astype(mm_dtype)
                for g in range(groups):
                    wt = w2_ref[t, g]                           # (cout_g, cin_g)
                    accs[g] = accs[g] + jnp.dot(
                        wt, zb[g * cin_g:(g + 1) * cin_g],
                        preferred_element_type=jnp.float32)
                t += 1
    y2 = jnp.concatenate(accs, axis=0)                          # (Cmid, DHW)
    y2 = jnp.maximum(y2 * s0_ref[...] + t0_ref[...], 0.0)

    # ---- radix split-sum + adaptive_avg_pool3d(1) (lane reduction) ---------
    splits = [y2[r * gw:(r + 1) * gw] for r in range(radix)]
    ssum = splits[0]
    for r in range(1, radix):
        ssum = ssum + splits[r]
    gap = jnp.sum(ssum, axis=1, keepdims=True) * (1.0 / DHW)    # (gw, 1)

    # ---- attention MLP (tiny, f32): fc1 -> bn -> relu -> fc2 -> rSoftMax ---
    h = jnp.dot(wf1_ref[...], gap, preferred_element_type=jnp.float32) + bf1_ref[...]
    h = jnp.maximum(h * sr_ref[...] + tr_ref[...], 0.0)         # (inter, 1)
    logits = (jnp.dot(wf2_ref[...], h, preferred_element_type=jnp.float32)
              + bf2_ref[...])                                   # (Cmid, 1)
    # TODO(synk): rSoftMax / fc grouping below assume cardinality == 1.
    if radix > 1:
        lg = [logits[r * gw:(r + 1) * gw] for r in range(radix)]
        m = lg[0]
        for v in lg[1:]:
            m = jnp.maximum(m, v)
        ex = [jnp.exp(v - m) for v in lg]
        den = ex[0]
        for e in ex[1:]:
            den = den + e
        attn = [e / den for e in ex]                            # (gw, 1) each
    else:
        attn = [1.0 / (1.0 + jnp.exp(-logits))]

    # ---- attention apply + conv3 (1x1x1) + bn3 + residual + relu -----------
    zf = splits[0] * attn[0]
    for r in range(1, radix):
        zf = zf + splits[r] * attn[r]                           # (gw, DHW)
    out = jnp.dot(w3_ref[...], zf.astype(mm_dtype),
                  preferred_element_type=jnp.float32)           # (Cout, DHW)
    # TODO(synk): assumes stride=1, downsample=None, inplanes == planes*4.
    out = out * s3_ref[...] + t3_ref[...] + x
    o_ref[0] = jnp.maximum(out, 0.0)


# ----------------------------------------------------------------------------
# Host-side helpers
# ----------------------------------------------------------------------------

def _tap_masks(D, H, W):
    """(27, D*H*W) float32 0/1 masks: validity of each 3x3x3 tap offset."""
    d = np.arange(D)[:, None, None]
    h = np.arange(H)[None, :, None]
    w = np.arange(W)[None, None, :]
    rows = []
    for kd in range(3):
        for kh in range(3):
            for kw in range(3):
                od, oh, ow = kd - 1, kh - 1, kw - 1
                m = ((d + od >= 0) & (d + od < D) &
                     (h + oh >= 0) & (h + oh < H) &
                     (w + ow >= 0) & (w + ow < W))
                rows.append(m.reshape(-1))
    return jnp.asarray(np.stack(rows).astype(np.float32))


def bottleneck_forward(x, p, radix, cardinality=1, *, weight_dtype=jnp.float32):
    """x: (N, Cin, D, H, W) float32 (NCDHW, like the PyTorch module)."""
    N, Cin, D, H, W = x.shape
    DHW = D * H * W
    gw = p['w1'].shape[0]
    Cmid = p['w_fc2'].shape[0]
    inter = p['w_fc1'].shape[0]
    Cout = p['w3'].shape[0]
    groups = cardinality * radix
    cin_g, cout_g = gw // groups, Cmid // groups

    xf = x.reshape(N, Cin, DHW)                      # lane-dense spatial axis
    masks = _tap_masks(D, H, W)                      # (27, DHW)
    w1 = p['w1'].astype(weight_dtype)
    w2 = p['w2_taps'].astype(weight_dtype)           # (27, groups, cout_g, cin_g)
    w3 = p['w3'].astype(weight_dtype)

    kern = functools.partial(fused_bottleneck_kernel,
                             D=D, H=H, W=W, radix=radix, cardinality=cardinality)
    rep2 = lambda n: (0, 0)
    rep4 = lambda n: (0, 0, 0, 0)

    out = pl.pallas_call(
        kern,
        out_shape=jax.ShapeDtypeStruct((N, Cout, DHW), jnp.float32),
        grid=(N,),
        in_specs=[
            pl.BlockSpec((1, Cin, DHW), lambda n: (n, 0, 0)),   # x / residual
            pl.BlockSpec((27, DHW), rep2),                      # halo masks
            pl.BlockSpec((gw, Cin), rep2),                      # w1
            pl.BlockSpec((gw, 1), rep2),                        # s_bn1
            pl.BlockSpec((gw, 1), rep2),                        # t_bn1
            pl.BlockSpec((27, groups, cout_g, cin_g), rep4),    # w2 taps
            pl.BlockSpec((Cmid, 1), rep2),                      # s_bn0
            pl.BlockSpec((Cmid, 1), rep2),                      # t_bn0
            pl.BlockSpec((inter, gw), rep2),                    # w_fc1
            pl.BlockSpec((inter, 1), rep2),                     # b_fc1
            pl.BlockSpec((inter, 1), rep2),                     # s_bnr
            pl.BlockSpec((inter, 1), rep2),                     # t_bnr
            pl.BlockSpec((Cmid, inter), rep2),                  # w_fc2
            pl.BlockSpec((Cmid, 1), rep2),                      # b_fc2
            pl.BlockSpec((Cout, gw), rep2),                     # w3
            pl.BlockSpec((Cout, 1), rep2),                      # s_bn3
            pl.BlockSpec((Cout, 1), rep2),                      # t_bn3
        ],
        out_specs=pl.BlockSpec((1, Cout, DHW), lambda n: (n, 0, 0)),
        compiler_params=pltpu.CompilerParams(
            dimension_semantics=("parallel",),                  # megacore
            vmem_limit_bytes=32 * 1024 * 1024),
    )(xf, masks, w1, p['s_bn1'], p['t_bn1'],
      w2, p['s_bn0'], p['t_bn0'],
      p['w_fc1'], p['b_fc1'], p['s_bnr'], p['t_bnr'],
      p['w_fc2'], p['b_fc2'],
      w3, p['s_bn3'], p['t_bn3'])

    return out.reshape(N, Cout, D, H, W)


# ----------------------------------------------------------------------------
# Parameter construction (deterministic, synthetic) — eval-mode folded BN
# ----------------------------------------------------------------------------

def _bn_fold(key, c):
    k1, k2, k3, k4 = jax.random.split(key, 4)
    gamma = 1.0 + 0.1 * jax.random.normal(k1, (c,), jnp.float32)
    beta = 0.1 * jax.random.normal(k2, (c,), jnp.float32)
    mean = 0.1 * jax.random.normal(k3, (c,), jnp.float32)
    var = 1.0 + 0.1 * jax.random.uniform(k4, (c,), jnp.float32)
    scale = gamma / jnp.sqrt(var + 1e-5)
    shift = beta - mean * scale
    return scale.reshape(c, 1), shift.reshape(c, 1)


def make_params(key, inplanes, planes, radix, cardinality, bottleneck_width=64):
    gw = int(planes * (bottleneck_width / 64.0)) * cardinality   # group_width
    groups = cardinality * radix
    cmid = gw * radix
    cout = planes * 4
    inter = max(gw * radix // 4, 32)
    cin_g, cout_g = gw // groups, cmid // groups
    ks = jax.random.split(key, 11)
    p = {}
    p['w1'] = 0.1 * jax.random.normal(ks[0], (gw, inplanes), jnp.float32)
    p['s_bn1'], p['t_bn1'] = _bn_fold(ks[1], gw)
    # grouped 3x3x3 conv weight, PyTorch / OIDHW layout (cmid, cin_g, 3,3,3)
    w2 = 0.1 * jax.random.normal(ks[2], (cmid, cin_g, 3, 3, 3), jnp.float32)
    p['w2_oidhw'] = w2                                           # XLA reference
    p['w2_taps'] = w2.reshape(groups, cout_g, cin_g, 27).transpose(3, 0, 1, 2)
    p['s_bn0'], p['t_bn0'] = _bn_fold(ks[3], cmid)
    p['w_fc1'] = 0.1 * jax.random.normal(ks[4], (inter, gw), jnp.float32)
    p['b_fc1'] = 0.1 * jax.random.normal(ks[5], (inter, 1), jnp.float32)
    p['s_bnr'], p['t_bnr'] = _bn_fold(ks[6], inter)
    p['w_fc2'] = 0.1 * jax.random.normal(ks[7], (cmid, inter), jnp.float32)
    p['b_fc2'] = 0.1 * jax.random.normal(ks[8], (cmid, 1), jnp.float32)
    p['w3'] = 0.1 * jax.random.normal(ks[9], (cout, gw), jnp.float32)
    p['s_bn3'], p['t_bn3'] = _bn_fold(ks[10], cout)
    return p


# ----------------------------------------------------------------------------
# Pure-JAX reference (mirrors the PyTorch forward, NCDHW)
# ----------------------------------------------------------------------------

def ref_forward(x, p, radix, cardinality=1):
    gw = p['w1'].shape[0]
    groups = cardinality * radix
    bshape = lambda a: a.reshape(1, -1, 1, 1, 1)
    y = jnp.einsum('oc,ncdhw->nodhw', p['w1'], x)
    y = jnp.maximum(y * bshape(p['s_bn1']) + bshape(p['t_bn1']), 0.0)
    y2 = jax.lax.conv_general_dilated(
        y, p['w2_oidhw'], window_strides=(1, 1, 1),
        padding=((1, 1), (1, 1), (1, 1)),
        dimension_numbers=('NCDHW', 'OIDHW', 'NCDHW'),
        feature_group_count=groups)
    y2 = jnp.maximum(y2 * bshape(p['s_bn0']) + bshape(p['t_bn0']), 0.0)
    splits = [y2[:, r * gw:(r + 1) * gw] for r in range(radix)]
    gap = sum(splits).mean(axis=(2, 3, 4))                       # (N, gw)
    h = gap @ p['w_fc1'].T + p['b_fc1'][:, 0]
    h = jnp.maximum(h * p['s_bnr'][:, 0] + p['t_bnr'][:, 0], 0.0)
    logits = h @ p['w_fc2'].T + p['b_fc2'][:, 0]                 # (N, radix*gw)
    if radix > 1:
        att = jax.nn.softmax(logits.reshape(-1, radix, gw), axis=1)
        att = att.reshape(-1, radix * gw)
    else:
        att = jax.nn.sigmoid(logits)
    out = sum(att[:, r * gw:(r + 1) * gw][:, :, None, None, None] * splits[r]
              for r in range(radix))
    out = jnp.einsum('oc,ncdhw->nodhw', p['w3'], out)
    out = out * bshape(p['s_bn3']) + bshape(p['t_bn3'])
    return jnp.maximum(out + x, 0.0)


# ----------------------------------------------------------------------------

if __name__ == "__main__":
    # DHW = 4*8*8 = 256 -> two full 128-lane groups (lane-dense stores).
    N, D, H, W = 2, 4, 8, 8
    planes, radix, cardinality = 16, 2, 1
    inplanes = planes * 4                 # identity residual path

    key = jax.random.PRNGKey(0)
    kx, kp = jax.random.split(key)
    x = jax.random.normal(kx, (N, inplanes, D, H, W), jnp.float32)   # NCDHW
    params = make_params(kp, inplanes, planes, radix, cardinality)

    ref = ref_forward(x, params, radix, cardinality)

    # f32 weights / operands: tight correctness check.
    out_f32 = bottleneck_forward(x, params, radix, cardinality,
                                 weight_dtype=jnp.float32)
    out_f32 = jax.block_until_ready(out_f32)
    err = float(jnp.max(jnp.abs(out_f32 - ref)))
    assert err < 5e-3, f"f32 max abs error {err}"

    # bf16 conv weights + bf16 MXU operands (v6e/v7x path): looser check.
    out_bf16 = bottleneck_forward(x, params, radix, cardinality,
                                  weight_dtype=jnp.bfloat16)
    out_bf16 = jax.block_until_ready(out_bf16)
    err_bf16 = float(jnp.max(jnp.abs(out_bf16 - ref)))
    assert err_bf16 < 1e-1, f"bf16 max abs error {err_bf16}"

    print("KERNEL_OK")
</pallas_src>

<mosaic_0001>
module attributes {stable_mosaic.version = 11 : i64} {
  func.func @fused_bottleneck_kernel(%arg0: i32, %arg1: memref<1x64x256xf32, #tpu.memory_space<vmem>>, %arg2: memref<27x256xf32, #tpu.memory_space<vmem>>, %arg3: memref<16x64xf32, #tpu.memory_space<vmem>>, %arg4: memref<16x1xf32, #tpu.memory_space<vmem>>, %arg5: memref<16x1xf32, #tpu.memory_space<vmem>>, %arg6: memref<27x2x16x8xf32, #tpu.memory_space<vmem>>, %arg7: memref<32x1xf32, #tpu.memory_space<vmem>>, %arg8: memref<32x1xf32, #tpu.memory_space<vmem>>, %arg9: memref<32x16xf32, #tpu.memory_space<vmem>>, %arg10: memref<32x1xf32, #tpu.memory_space<vmem>>, %arg11: memref<32x1xf32, #tpu.memory_space<vmem>>, %arg12: memref<32x1xf32, #tpu.memory_space<vmem>>, %arg13: memref<32x32xf32, #tpu.memory_space<vmem>>, %arg14: memref<32x1xf32, #tpu.memory_space<vmem>>, %arg15: memref<64x16xf32, #tpu.memory_space<vmem>>, %arg16: memref<64x1xf32, #tpu.memory_space<vmem>>, %arg17: memref<64x1xf32, #tpu.memory_space<vmem>>, %arg18: memref<1x64x256xf32, #tpu.memory_space<vmem>>) attributes {dimension_semantics = [#tpu.dimension_semantics<parallel>], iteration_bounds = array<i64: 2>, scalar_prefetch = 0 : i64, scratch_operands = 0 : i64, tpu.core_type = #tpu.core_type<tc>, window_params = [{transform_indices = @transform_0, window_bounds = array<i64: 1, 64, 256>}, {pipeline_mode = #tpu.pipeline_mode<synchronous>, transform_indices = @transform_1, window_bounds = array<i64: 27, 256>}, {pipeline_mode = #tpu.pipeline_mode<synchronous>, transform_indices = @transform_2, window_bounds = array<i64: 16, 64>}, {pipeline_mode = #tpu.pipeline_mode<synchronous>, transform_indices = @transform_3, window_bounds = array<i64: 16, 1>}, {pipeline_mode = #tpu.pipeline_mode<synchronous>, transform_indices = @transform_4, window_bounds = array<i64: 16, 1>}, {pipeline_mode = #tpu.pipeline_mode<synchronous>, transform_indices = @transform_5, window_bounds = array<i64: 27, 2, 16, 8>}, {pipeline_mode = #tpu.pipeline_mode<synchronous>, transform_indices = @transform_6, window_bounds = array<i64: 32, 1>}, {pipeline_mode = #tpu.pipeline_mode<synchronous>, transform_indices = @transform_7, window_bounds = array<i64: 32, 1>}, {pipeline_mode = #tpu.pipeline_mode<synchronous>, transform_indices = @transform_8, window_bounds = array<i64: 32, 16>}, {pipeline_mode = #tpu.pipeline_mode<synchronous>, transform_indices = @transform_9, window_bounds = array<i64: 32, 1>}, {pipeline_mode = #tpu.pipeline_mode<synchronous>, transform_indices = @transform_10, window_bounds = array<i64: 32, 1>}, {pipeline_mode = #tpu.pipeline_mode<synchronous>, transform_indices = @transform_11, window_bounds = array<i64: 32, 1>}, {pipeline_mode = #tpu.pipeline_mode<synchronous>, transform_indices = @transform_12, window_bounds = array<i64: 32, 32>}, {pipeline_mode = #tpu.pipeline_mode<synchronous>, transform_indices = @transform_13, window_bounds = array<i64: 32, 1>}, {pipeline_mode = #tpu.pipeline_mode<synchronous>, transform_indices = @transform_14, window_bounds = array<i64: 64, 16>}, {pipeline_mode = #tpu.pipeline_mode<synchronous>, transform_indices = @transform_15, window_bounds = array<i64: 64, 1>}, {pipeline_mode = #tpu.pipeline_mode<synchronous>, transform_indices = @transform_16, window_bounds = array<i64: 64, 1>}, {transform_indices = @transform_17, window_bounds = array<i64: 1, 64, 256>}]} {
    %c0 = arith.constant 0 : index
    %c0_0 = arith.constant 0 : index
    %c0_1 = arith.constant 0 : index
    %0 = vector.load %arg1[%c0, %c0_0, %c0_1] : memref<1x64x256xf32, #tpu.memory_space<vmem>>, vector<1x64x256xf32>
    %1 = vector.shape_cast %0 : vector<1x64x256xf32> to vector<64x256xf32>
    %c0_2 = arith.constant 0 : index
    %c0_3 = arith.constant 0 : index
    %2 = vector.load %arg3[%c0_2, %c0_3] : memref<16x64xf32, #tpu.memory_space<vmem>>, vector<16x64xf32>
    %cst = arith.constant dense<0.000000e+00> : vector<16x256xf32>
    %3 = tpu.matmul %2, %1, %cst {dimension_numbers = #tpu.dot_dimension_numbers<[1], [0], [0], [1], [0, 0, 1, 1], [], []>} : vector<16x64xf32>, vector<64x256xf32>, vector<16x256xf32> -> vector<16x256xf32>
    %c0_4 = arith.constant 0 : index
    %c0_5 = arith.constant 0 : index
    %4 = vector.load %arg4[%c0_4, %c0_5] : memref<16x1xf32, #tpu.memory_space<vmem>>, vector<16x1xf32>
    %5 = vector.broadcast %4 : vector<16x1xf32> to vector<16x256xf32>
    %6 = arith.mulf %3, %5 : vector<16x256xf32>
    %c0_6 = arith.constant 0 : index
    %c0_7 = arith.constant 0 : index
    %7 = vector.load %arg5[%c0_6, %c0_7] : memref<16x1xf32, #tpu.memory_space<vmem>>, vector<16x1xf32>
    %8 = vector.broadcast %7 : vector<16x1xf32> to vector<16x256xf32>
    %9 = arith.addf %6, %8 : vector<16x256xf32>
    %cst_8 = arith.constant 0.000000e+00 : f32
    %10 = vector.broadcast %cst_8 : f32 to vector<16x256xf32>
    %11 = arith.maximumf %9, %10 : vector<16x256xf32>
    %cst_9 = arith.constant 0.000000e+00 : f32
    %12 = vector.broadcast %cst_9 : f32 to vector<16x256xf32>
    %cst_10 = arith.constant 0.000000e+00 : f32
    %13 = vector.broadcast %cst_10 : f32 to vector<16x256xf32>
    %c73_i32 = arith.constant 73 : i32
    %14 = tpu.dynamic_rotate %11 by %c73_i32 dim 1 : vector<16x256xf32>, i32 -> vector<16x256xf32>
    %c0_11 = arith.constant 0 : index
    %c0_12 = arith.constant 0 : index
    %15 = vector.load %arg2[%c0_11, %c0_12] : memref<27x256xf32, #tpu.memory_space<vmem>>, vector<1x256xf32>
    %16 = vector.broadcast %15 : vector<1x256xf32> to vector<16x256xf32>
    %17 = arith.mulf %14, %16 : vector<16x256xf32>
    %c0_13 = arith.constant 0 : index
    %c0_14 = arith.constant 0 : index
    %c0_15 = arith.constant 0 : index
    %c0_16 = arith.constant 0 : index
    %18 = vector.load %arg6[%c0_13, %c0_14, %c0_15, %c0_16] : memref<27x2x16x8xf32, #tpu.memory_space<vmem>>, vector<1x1x16x8xf32>
    %19 = vector.shape_cast %18 : vector<1x1x16x8xf32> to vector<16x8xf32>
    %20 = vector.extract_strided_slice %17 {offsets = [0, 0], sizes = [8, 256], strides = [1, 1]} : vector<16x256xf32> to vector<8x256xf32>
    %cst_17 = arith.constant dense<0.000000e+00> : vector<16x256xf32>
    %21 = tpu.matmul %19, %20, %cst_17 {dimension_numbers = #tpu.dot_dimension_numbers<[1], [0], [0], [1], [0, 0, 1, 1], [], []>} : vector<16x8xf32>, vector<8x256xf32>, vector<16x256xf32> -> vector<16x256xf32>
    %22 = arith.addf %12, %21 : vector<16x256xf32>
    %c0_18 = arith.constant 0 : index
    %c1 = arith.constant 1 : index
    %c0_19 = arith.constant 0 : index
    %c0_20 = arith.constant 0 : index
    %23 = vector.load %arg6[%c0_18, %c1, %c0_19, %c0_20] : memref<27x2x16x8xf32, #tpu.memory_space<vmem>>, vector<1x1x16x8xf32>
    %24 = vector.shape_cast %23 : vector<1x1x16x8xf32> to vector<16x8xf32>
    %25 = vector.extract_strided_slice %17 {offsets = [8, 0], sizes = [8, 256], strides = [1, 1]} : vector<16x256xf32> to vector<8x256xf32>
    %cst_21 = arith.constant dense<0.000000e+00> : vector<16x256xf32>
    %26 = tpu.matmul %24, %25, %cst_21 {dimension_numbers = #tpu.dot_dimension_numbers<[1], [0], [0], [1], [0, 0, 1, 1], [], []>} : vector<16x8xf32>, vector<8x256xf32>, vector<16x256xf32> -> vector<16x256xf32>
    %27 = arith.addf %13, %26 : vector<16x256xf32>
    %c72_i32 = arith.constant 72 : i32
    %28 = tpu.dynamic_rotate %11 by %c72_i32 dim 1 : vector<16x256xf32>, i32 -> vector<16x256xf32>
    %c1_22 = arith.constant 1 : index
    %c0_23 = arith.constant 0 : index
    %29 = vector.load %arg2[%c1_22, %c0_23] : memref<27x256xf32, #tpu.memory_space<vmem>>, vector<1x256xf32>
    %30 = vector.broadcast %29 : vector<1x256xf32> to vector<16x256xf32>
    %31 = arith.mulf %28, %30 : vector<16x256xf32>
    %c1_24 = arith.constant 1 : index
    %c0_25 = arith.constant 0 : index
    %c0_26 = arith.constant 0 : index
    %c0_27 = arith.constant 0 : index
    %32 = vector.load %arg6[%c1_24, %c0_25, %c0_26, %c0_27] : memref<27x2x16x8xf32, #tpu.memory_space<vmem>>, vector<1x1x16x8xf32>
    %33 = vector.shape_cast %32 : vector<1x1x16x8xf32> to vector<16x8xf32>
    %34 = vector.extract_strided_slice %31 {offsets = [0, 0], sizes = [8, 256], strides = [1, 1]} : vector<16x256xf32> to vector<8x256xf32>
    %cst_28 = arith.constant dense<0.000000e+00> : vector<16x256xf32>
    %35 = tpu.matmul %33, %34, %cst_28 {dimension_numbers = #tpu.dot_dimension_numbers<[1], [0], [0], [1], [0, 0, 1, 1], [], []>} : vector<16x8xf32>, vector<8x256xf32>, vector<16x256xf32> -> vector<16x256xf32>
    %36 = arith.addf %22, %35 : vector<16x256xf32>
    %c1_29 = arith.constant 1 : index
    %c1_30 = arith.constant 1 : index
    %c0_31 = arith.constant 0 : index
    %c0_32 = arith.constant 0 : index
    %37 = vector.load %arg6[%c1_29, %c1_30, %c0_31, %c0_32] : memref<27x2x16x8xf32, #tpu.memory_space<vmem>>, vector<1x1x16x8xf32>
    %38 = vector.shape_cast %37 : vector<1x1x16x8xf32> to vector<16x8xf32>
    %39 = vector.extract_strided_slice %31 {offsets = [8, 0], sizes = [8, 256], strides = [1, 1]} : vector<16x256xf32> to vector<8x256xf32>
    %cst_33 = arith.constant dense<0.000000e+00> : vector<16x256xf32>
    %40 = tpu.matmul %38, %39, %cst_33 {dimension_numbers = #tpu.dot_dimension_numbers<[1], [0], [0], [1], [0, 0, 1, 1], [], []>} : vector<16x8xf32>, vector<8x256xf32>, vector<16x256xf32> -> vector<16x256xf32>
    %41 = arith.addf %27, %40 : vector<16x256xf32>
    %c71_i32 = arith.constant 71 : i32
    %42 = tpu.dynamic_rotate %11 by %c71_i32 dim 1 : vector<16x256xf32>, i32 -> vector<16x256xf32>
    %c2 = arith.constant 2 : index
    %c0_34 = arith.constant 0 : index
    %43 = vector.load %arg2[%c2, %c0_34] : memref<27x256xf32, #tpu.memory_space<vmem>>, vector<1x256xf32>
    %44 = vector.broadcast %43 : vector<1x256xf32> to vector<16x256xf32>
    %45 = arith.mulf %42, %44 : vector<16x256xf32>
    %c2_35 = arith.constant 2 : index
    %c0_36 = arith.constant 0 : index
    %c0_37 = arith.constant 0 : index
    %c0_38 = arith.constant 0 : index
    %46 = vector.load %arg6[%c2_35, %c0_36, %c0_37, %c0_38] : memref<27x2x16x8xf32, #tpu.memory_space<vmem>>, vector<1x1x16x8xf32>
    %47 = vector.shape_cast %46 : vector<1x1x16x8xf32> to vector<16x8xf32>
    %48 = vector.extract_strided_slice %45 {offsets = [0, 0], sizes = [8, 256], strides = [1, 1]} : vector<16x256xf32> to vector<8x256xf32>
    %cst_39 = arith.constant dense<0.000000e+00> : vector<16x256xf32>
    %49 = tpu.matmul %47, %48, %cst_39 {dimension_numbers = #tpu.dot_dimension_numbers<[1], [0], [0], [1], [0, 0, 1, 1], [], []>} : vector<16x8xf32>, vector<8x256xf32>, vector<16x256xf32> -> vector<16x256xf32>
    %50 = arith.addf %36, %49 : vector<16x256xf32>
    %c2_40 = arith.constant 2 : index
    %c1_41 = arith.constant 1 : index
    %c0_42 = arith.constant 0 : index
    %c0_43 = arith.constant 0 : index
    %51 = vector.load %arg6[%c2_40, %c1_41, %c0_42, %c0_43] : memref<27x2x16x8xf32, #tpu.memory_space<vmem>>, vector<1x1x16x8xf32>
    %52 = vector.shape_cast %51 : vector<1x1x16x8xf32> to vector<16x8xf32>
    %53 = vector.extract_strided_slice %45 {offsets = [8, 0], sizes = [8, 256], strides = [1, 1]} : vector<16x256xf32> to vector<8x256xf32>
    %cst_44 = arith.constant dense<0.000000e+00> : vector<16x256xf32>
    %54 = tpu.matmul %52, %53, %cst_44 {dimension_numbers = #tpu.dot_dimension_numbers<[1], [0], [0], [1], [0, 0, 1, 1], [], []>} : vector<16x8xf32>, vector<8x256xf32>, vector<16x256xf32> -> vector<16x256xf32>
    %55 = arith.addf %41, %54 : vector<16x256xf32>
    %c65_i32 = arith.constant 65 : i32
    %56 = tpu.dynamic_rotate %11 by %c65_i32 dim 1 : vector<16x256xf32>, i32 -> vector<16x256xf32>
    %c3 = arith.constant 3 : index
    %c0_45 = arith.constant 0 : index
    %57 = vector.load %arg2[%c3, %c0_45] : memref<27x256xf32, #tpu.memory_space<vmem>>, vector<1x256xf32>
    %58 = vector.broadcast %57 : vector<1x256xf32> to vector<16x256xf32>
    %59 = arith.mulf %56, %58 : vector<16x256xf32>
    %c3_46 = arith.constant 3 : index
    %c0_47 = arith.constant 0 : index
    %c0_48 = arith.constant 0 : index
    %c0_49 = arith.constant 0 : index
    %60 = vector.load %arg6[%c3_46, %c0_47, %c0_48, %c0_49] : memref<27x2x16x8xf32, #tpu.memory_space<vmem>>, vector<1x1x16x8xf32>
    %61 = vector.shape_cast %60 : vector<1x1x16x8xf32> to vector<16x8xf32>
    %62 = vector.extract_strided_slice %59 {offsets = [0, 0], sizes = [8, 256], strides = [1, 1]} : vector<16x256xf32> to vector<8x256xf32>
    %cst_50 = arith.constant dense<0.000000e+00> : vector<16x256xf32>
    %63 = tpu.matmul %61, %62, %cst_50 {dimension_numbers = #tpu.dot_dimension_numbers<[1], [0], [0], [1], [0, 0, 1, 1], [], []>} : vector<16x8xf32>, vector<8x256xf32>, vector<16x256xf32> -> vector<16x256xf32>
    %64 = arith.addf %50, %63 : vector<16x256xf32>
    %c3_51 = arith.constant 3 : index
    %c1_52 = arith.constant 1 : index
    %c0_53 = arith.constant 0 : index
    %c0_54 = arith.constant 0 : index
    %65 = vector.load %arg6[%c3_51, %c1_52, %c0_53, %c0_54] : memref<27x2x16x8xf32, #tpu.memory_space<vmem>>, vector<1x1x16x8xf32>
    %66 = vector.shape_cast %65 : vector<1x1x16x8xf32> to vector<16x8xf32>
    %67 = vector.extract_strided_slice %59 {offsets = [8, 0], sizes = [8, 256], strides = [1, 1]} : vector<16x256xf32> to vector<8x256xf32>
    %cst_55 = arith.constant dense<0.000000e+00> : vector<16x256xf32>
    %68 = tpu.matmul %66, %67, %cst_55 {dimension_numbers = #tpu.dot_dimension_numbers<[1], [0], [0], [1], [0, 0, 1, 1], [], []>} : vector<16x8xf32>, vector<8x256xf32>, vector<16x256xf32> -> vector<16x256xf32>
    %69 = arith.addf %55, %68 : vector<16x256xf32>
    %c64_i32 = arith.constant 64 : i32
    %70 = tpu.dynamic_rotate %11 by %c64_i32 dim 1 : vector<16x256xf32>, i32 -> vector<16x256xf32>
    %c4 = arith.constant 4 : index
    %c0_56 = arith.constant 0 : index
    %71 = vector.load %arg2[%c4, %c0_56] : memref<27x256xf32, #tpu.memory_space<vmem>>, vector<1x256xf32>
    %72 = vector.broadcast %71 : vector<1x256xf32> to vector<16x256xf32>
    %73 = arith.mulf %70, %72 : vector<16x256xf32>
    %c4_57 = arith.constant 4 : index
    %c0_58 = arith.constant 0 : index
    %c0_59 = arith.constant 0 : index
    %c0_60 = arith.constant 0 : index
    %74 = vector.load %arg6[%c4_57, %c0_58, %c0_59, %c0_60] : memref<27x2x16x8xf32, #tpu.memory_space<vmem>>, vector<1x1x16x8xf32>
    %75 = vector.shape_cast %74 : vector<1x1x16x8xf32> to vector<16x8xf32>
    %76 = vector.extract_strided_slice %73 {offsets = [0, 0], sizes = [8, 256], strides = [1, 1]} : vector<16x256xf32> to vector<8x256xf32>
    %cst_61 = arith.constant dense<0.000000e+00> : vector<16x256xf32>
    %77 = tpu.matmul %75, %76, %cst_61 {dimension_numbers = #tpu.dot_dimension_numbers<[1], [0], [0], [1], [0, 0, 1, 1], [], []>} : vector<16x8xf32>, vector<8x256xf32>, vector<16x256xf32> -> vector<16x256xf32>
    %78 = arith.addf %64, %77 : vector<16x256xf32>
    %c4_62 = arith.constant 4 : index
    %c1_63 = arith.constant 1 : index
    %c0_64 = arith.constant 0 : index
    %c0_65 = arith.constant 0 : index
    %79 = vector.load %arg6[%c4_62, %c1_63, %c0_64, %c0_65] : memref<27x2x16x8xf32, #tpu.memory_space<vmem>>, vector<1x1x16x8xf32>
    %80 = vector.shape_cast %79 : vector<1x1x16x8xf32> to vector<16x8xf32>
    %81 = vector.extract_strided_slice %73 {offsets = [8, 0], sizes = [8, 256], strides = [1, 1]} : vector<16x256xf32> to vector<8x256xf32>
    %cst_66 = arith.constant dense<0.000000e+00> : vector<16x256xf32>
    %82 = tpu.matmul %80, %81, %cst_66 {dimension_numbers = #tpu.dot_dimension_numbers<[1], [0], [0], [1], [0, 0, 1, 1], [], []>} : vector<16x8xf32>, vector<8x256xf32>, vector<16x256xf32> -> vector<16x256xf32>
    %83 = arith.addf %69, %82 : vector<16x256xf32>
    %c63_i32 = arith.constant 63 : i32
    %84 = tpu.dynamic_rotate %11 by %c63_i32 dim 1 : vector<16x256xf32>, i32 -> vector<16x256xf32>
    %c5 = arith.constant 5 : index
    %c0_67 = arith.constant 0 : index
    %85 = vector.load %arg2[%c5, %c0_67] : memref<27x256xf32, #tpu.memory_space<vmem>>, vector<1x256xf32>
    %86 = vector.broadcast %85 : vector<1x256xf32> to vector<16x256xf32>
    %87 = arith.mulf %84, %86 : vector<16x256xf32>
    %c5_68 = arith.constant 5 : index
    %c0_69 = arith.constant 0 : index
    %c0_70 = arith.constant 0 : index
    %c0_71 = arith.constant 0 : index
    %88 = vector.load %arg6[%c5_68, %c0_69, %c0_70, %c0_71] : memref<27x2x16x8xf32, #tpu.memory_space<vmem>>, vector<1x1x16x8xf32>
    %89 = vector.shape_cast %88 : vector<1x1x16x8xf32> to vector<16x8xf32>
    %90 = vector.extract_strided_slice %87 {offsets = [0, 0], sizes = [8, 256], strides = [1, 1]} : vector<16x256xf32> to vector<8x256xf32>
    %cst_72 = arith.constant dense<0.000000e+00> : vector<16x256xf32>
    %91 = tpu.matmul %89, %90, %cst_72 {dimension_numbers = #tpu.dot_dimension_numbers<[1], [0], [0], [1], [0, 0, 1, 1], [], []>} : vector<16x8xf32>, vector<8x256xf32>, vector<16x256xf32> -> vector<16x256xf32>
    %92 = arith.addf %78, %91 : vector<16x256xf32>
    %c5_73 = arith.constant 5 : index
    %c1_74 = arith.constant 1 : index
    %c0_75 = arith.constant 0 : index
    %c0_76 = arith.constant 0 : index
    %93 = vector.load %arg6[%c5_73, %c1_74, %c0_75, %c0_76] : memref<27x2x16x8xf32, #tpu.memory_space<vmem>>, vector<1x1x16x8xf32>
    %94 = vector.shape_cast %93 : vector<1x1x16x8xf32> to vector<16x8xf32>
    %95 = vector.extract_strided_slice %87 {offsets = [8, 0], sizes = [8, 256], strides = [1, 1]} : vector<16x256xf32> to vector<8x256xf32>
    %cst_77 = arith.constant dense<0.000000e+00> : vector<16x256xf32>
    %96 = tpu.matmul %94, %95, %cst_77 {dimension_numbers = #tpu.dot_dimension_numbers<[1], [0], [0], [1], [0, 0, 1, 1], [], []>} : vector<16x8xf32>, vector<8x256xf32>, vector<16x256xf32> -> vector<16x256xf32>
    %97 = arith.addf %83, %96 : vector<16x256xf32>
    %c57_i32 = arith.constant 57 : i32
    %98 = tpu.dynamic_rotate %11 by %c57_i32 dim 1 : vector<16x256xf32>, i32 -> vector<16x256xf32>
    %c6 = arith.constant 6 : index
    %c0_78 = arith.constant 0 : index
    %99 = vector.load %arg2[%c6, %c0_78] : memref<27x256xf32, #tpu.memory_space<vmem>>, vector<1x256xf32>
    %100 = vector.broadcast %99 : vector<1x256xf32> to vector<16x256xf32>
    %101 = arith.mulf %98, %100 : vector<16x256xf32>
    %c6_79 = arith.constant 6 : index
    %c0_80 = arith.constant 0 : index
    %c0_81 = arith.constant 0 : index
    %c0_82 = arith.constant 0 : index
    %102 = vector.load %arg6[%c6_79, %c0_80, %c0_81, %c0_82] : memref<27x2x16x8xf32, #tpu.memory_space<vmem>>, vector<1x1x16x8xf32>
    %103 = vector.shape_cast %102 : vector<1x1x16x8xf32> to vector<16x8xf32>
    %104 = vector.extract_strided_slice %101 {offsets = [0, 0], sizes = [8, 256], strides = [1, 1]} : vector<16x256xf32> to vector<8x256xf32>
    %cst_83 = arith.constant dense<0.000000e+00> : vector<16x256xf32>
    %105 = tpu.matmul %103, %104, %cst_83 {dimension_numbers = #tpu.dot_dimension_numbers<[1], [0], [0], [1], [0, 0, 1, 1], [], []>} : vector<16x8xf32>, vector<8x256xf32>, vector<16x256xf32> -> vector<16x256xf32>
    %106 = arith.addf %92, %105 : vector<16x256xf32>
    %c6_84 = arith.constant 6 : index
    %c1_85 = arith.constant 1 : index
    %c0_86 = arith.constant 0 : index
    %c0_87 = arith.constant 0 : index
    %107 = vector.load %arg6[%c6_84, %c1_85, %c0_86, %c0_87] : memref<27x2x16x8xf32, #tpu.memory_space<vmem>>, vector<1x1x16x8xf32>
    %108 = vector.shape_cast %107 : vector<1x1x16x8xf32> to vector<16x8xf32>
    %109 = vector.extract_strided_slice %101 {offsets = [8, 0], sizes = [8, 256], strides = [1, 1]} : vector<16x256xf32> to vector<8x256xf32>
    %cst_88 = arith.constant dense<0.000000e+00> : vector<16x256xf32>
    %110 = tpu.matmul %108, %109, %cst_88 {dimension_numbers = #tpu.dot_dimension_numbers<[1], [0], [0], [1], [0, 0, 1, 1], [], []>} : vector<16x8xf32>, vector<8x256xf32>, vector<16x256xf32> -> vector<16x256xf32>
    %111 = arith.addf %97, %110 : vector<16x256xf32>
    %c56_i32 = arith.constant 56 : i32
    %112 = tpu.dynamic_rotate %11 by %c56_i32 dim 1 : vector<16x256xf32>, i32 -> vector<16x256xf32>
    %c7 = arith.constant 7 : index
    %c0_89 = arith.constant 0 : index
    %113 = vector.load %arg2[%c7, %c0_89] : memref<27x256xf32, #tpu.memory_space<vmem>>, vector<1x256xf32>
    %114 = vector.broadcast %113 : vector<1x256xf32> to vector<16x256xf32>
    %115 = arith.mulf %112, %114 : vector<16x256xf32>
    %c7_90 = arith.constant 7 : index
    %c0_91 = arith.constant 0 : index
    %c0_92 = arith.constant 0 : index
    %c0_93 = arith.constant 0 : index
    %116 = vector.load %arg6[%c7_90, %c0_91, %c0_92, %c0_93] : memref<27x2x16x8xf32, #tpu.memory_space<vmem>>, vector<1x1x16x8xf32>
    %117 = vector.shape_cast %116 : vector<1x1x16x8xf32> to vector<16x8xf32>
    %118 = vector.extract_strided_slice %115 {offsets = [0, 0], sizes = [8, 256], strides = [1, 1]} : vector<16x256xf32> to vector<8x256xf32>
    %cst_94 = arith.constant dense<0.000000e+00> : vector<16x256xf32>
    %119 = tpu.matmul %117, %118, %cst_94 {dimension_numbers = #tpu.dot_dimension_numbers<[1], [0], [0], [1], [0, 0, 1, 1], [], []>} : vector<16x8xf32>, vector<8x256xf32>, vector<16x256xf32> -> vector<16x256xf32>
    %120 = arith.addf %106, %119 : vector<16x256xf32>
    %c7_95 = arith.constant 7 : index
    %c1_96 = arith.constant 1 : index
    %c0_97 = arith.constant 0 : index
    %c0_98 = arith.constant 0 : index
    %121 = vector.load %arg6[%c7_95, %c1_96, %c0_97, %c0_98] : memref<27x2x16x8xf32, #tpu.memory_space<vmem>>, vector<1x1x16x8xf32>
    %122 = vector.shape_cast %121 : vector<1x1x16x8xf32> to vector<16x8xf32>
    %123 = vector.extract_strided_slice %115 {offsets = [8, 0], sizes = [8, 256], strides = [1, 1]} : vector<16x256xf32> to vector<8x256xf32>
    %cst_99 = arith.constant dense<0.000000e+00> : vector<16x256xf32>
    %124 = tpu.matmul %122, %123, %cst_99 {dimension_numbers = #tpu.dot_dimension_numbers<[1], [0], [0], [1], [0, 0, 1, 1], [], []>} : vector<16x8xf32>, vector<8x256xf32>, vector<16x256xf32> -> vector<16x256xf32>
    %125 = arith.addf %111, %124 : vector<16x256xf32>
    %c55_i32 = arith.constant 55 : i32
    %126 = tpu.dynamic_rotate %11 by %c55_i32 dim 1 : vector<16x256xf32>, i32 -> vector<16x256xf32>
    %c8 = arith.constant 8 : index
    %c0_100 = arith.constant 0 : index
    %127 = vector.load %arg2[%c8, %c0_100] : memref<27x256xf32, #tpu.memory_space<vmem>>, vector<1x256xf32>
    %128 = vector.broadcast %127 : vector<1x256xf32> to vector<16x256xf32>
    %129 = arith.mulf %126, %128 : vector<16x256xf32>
    %c8_101 = arith.constant 8 : index
    %c0_102 = arith.constant 0 : index
    %c0_103 = arith.constant 0 : index
    %c0_104 = arith.constant 0 : index
    %130 = vector.load %arg6[%c8_101, %c0_102, %c0_103, %c0_104] : memref<27x2x16x8xf32, #tpu.memory_space<vmem>>, vector<1x1x16x8xf32>
    %131 = vector.shape_cast %130 : vector<1x1x16x8xf32> to vector<16x8xf32>
    %132 = vector.extract_strided_slice %129 {offsets = [0, 0], sizes = [8, 256], strides = [1, 1]} : vector<16x256xf32> to vector<8x256xf32>
    %cst_105 = arith.constant dense<0.000000e+00> : vector<16x256xf32>
    %133 = tpu.matmul %131, %132, %cst_105 {dimension_numbers = #tpu.dot_dimension_numbers<[1], [0], [0], [1], [0, 0, 1, 1], [], []>} : vector<16x8xf32>, vector<8x256xf32>, vector<16x256xf32> -> vector<16x256xf32>
    %134 = arith.addf %120, %133 : vector<16x256xf32>
    %c8_106 = arith.constant 8 : index
    %c1_107 = arith.constant 1 : index
    %c0_108 = arith.constant 0 : index
    %c0_109 = arith.constant 0 : index
    %135 = vector.load %arg6[%c8_106, %c1_107, %c0_108, %c0_109] : memref<27x2x16x8xf32, #tpu.memory_space<vmem>>, vector<1x1x16x8xf32>
    %136 = vector.shape_cast %135 : vector<1x1x16x8xf32> to vector<16x8xf32>
    %137 = vector.extract_strided_slice %129 {offsets = [8, 0], sizes = [8, 256], strides = [1, 1]} : vector<16x256xf32> to vector<8x256xf32>
    %cst_110 = arith.constant dense<0.000000e+00> : vector<16x256xf32>
    %138 = tpu.matmul %136, %137, %cst_110 {dimension_numbers = #tpu.dot_dimension_numbers<[1], [0], [0], [1], [0, 0, 1, 1], [], []>} : vector<16x8xf32>, vector<8x256xf32>, vector<16x256xf32> -> vector<16x256xf32>
    %139 = arith.addf %125, %138 : vector<16x256xf32>
    %c9_i32 = arith.constant 9 : i32
    %140 = tpu.dynamic_rotate %11 by %c9_i32 dim 1 : vector<16x256xf32>, i32 -> vector<16x256xf32>
    %c9 = arith.constant 9 : index
    %c0_111 = arith.constant 0 : index
    %141 = vector.load %arg2[%c9, %c0_111] : memref<27x256xf32, #tpu.memory_space<vmem>>, vector<1x256xf32>
    %142 = vector.broadcast %141 : vector<1x256xf32> to vector<16x256xf32>
    %143 = arith.mulf %140, %142 : vector<16x256xf32>
    %c9_112 = arith.constant 9 : index
    %c0_113 = arith.constant 0 : index
    %c0_114 = arith.constant 0 : index
    %c0_115 = arith.constant 0 : index
    %144 = vector.load %arg6[%c9_112, %c0_113, %c0_114, %c0_115] : memref<27x2x16x8xf32, #tpu.memory_space<vmem>>, vector<1x1x16x8xf32>
    %145 = vector.shape_cast %144 : vector<1x1x16x8xf32> to vector<16x8xf32>
    %146 = vector.extract_strided_slice %143 {offsets = [0, 0], sizes = [8, 256], strides = [1, 1]} : vector<16x256xf32> to vector<8x256xf32>
    %cst_116 = arith.constant dense<0.000000e+00> : vector<16x256xf32>
    %147 = tpu.matmul %145, %146, %cst_116 {dimension_numbers = #tpu.dot_dimension_numbers<[1], [0], [0], [1], [0, 0, 1, 1], [], []>} : vector<16x8xf32>, vector<8x256xf32>, vector<16x256xf32> -> vector<16x256xf32>
    %148 = arith.addf %134, %147 : vector<16x256xf32>
    %c9_117 = arith.constant 9 : index
    %c1_118 = arith.constant 1 : index
    %c0_119 = arith.constant 0 : index
    %c0_120 = arith.constant 0 : index
    %149 = vector.load %arg6[%c9_117, %c1_118, %c0_119, %c0_120] : memref<27x2x16x8xf32, #tpu.memory_space<vmem>>, vector<1x1x16x8xf32>
    %150 = vector.shape_cast %149 : vector<1x1x16x8xf32> to vector<16x8xf32>
    %151 = vector.extract_strided_slice %143 {offsets = [8, 0], sizes = [8, 256], strides = [1, 1]} : vector<16x256xf32> to vector<8x256xf32>
    %cst_121 = arith.constant dense<0.000000e+00> : vector<16x256xf32>
    %152 = tpu.matmul %150, %151, %cst_121 {dimension_numbers = #tpu.dot_dimension_numbers<[1], [0], [0], [1], [0, 0, 1, 1], [], []>} : vector<16x8xf32>, vector<8x256xf32>, vector<16x256xf32> -> vector<16x256xf32>
    %153 = arith.addf %139, %152 : vector<16x256xf32>
    %c8_i32 = arith.constant 8 : i32
    %154 = tpu.dynamic_rotate %11 by %c8_i32 dim 1 : vector<16x256xf32>, i32 -> vector<16x256xf32>
    %c10 = arith.constant 10 : index
    %c0_122 = arith.constant 0 : index
    %155 = vector.load %arg2[%c10, %c0_122] : memref<27x256xf32, #tpu.memory_space<vmem>>, vector<1x256xf32>
    %156 = vector.broadcast %155 : vector<1x256xf32> to vector<16x256xf32>
    %157 = arith.mulf %154, %156 : vector<16x256xf32>
    %c10_123 = arith.constant 10 : index
    %c0_124 = arith.constant 0 : index
    %c0_125 = arith.constant 0 : index
    %c0_126 = arith.constant 0 : index
    %158 = vector.load %arg6[%c10_123, %c0_124, %c0_125, %c0_126] : memref<27x2x16x8xf32, #tpu.memory_space<vmem>>, vector<1x1x16x8xf32>
    %159 = vector.shape_cast %158 : vector<1x1x16x8xf32> to vector<16x8xf32>
    %160 = vector.extract_strided_slice %157 {offsets = [0, 0], sizes = [8, 256], strides = [1, 1]} : vector<16x256xf32> to vector<8x256xf32>
    %cst_127 = arith.constant dense<0.000000e+00> : vector<16x256xf32>
    %161 = tpu.matmul %159, %160, %cst_127 {dimension_numbers = #tpu.dot_dimension_numbers<[1], [0], [0], [1], [0, 0, 1, 1], [], []>} : vector<16x8xf32>, vector<8x256xf32>, vector<16x256xf32> -> vector<16x256xf32>
    %162 = arith.addf %148, %161 : vector<16x256xf32>
    %c10_128 = arith.constant 10 : index
    %c1_129 = arith.constant 1 : index
    %c0_130 = arith.constant 0 : index
    %c0_131 = arith.constant 0 : index
    %163 = vector.load %arg6[%c10_128, %c1_129, %c0_130, %c0_131] : memref<27x2x16x8xf32, #tpu.memory_space<vmem>>, vector<1x1x16x8xf32>
    %164 = vector.shape_cast %163 : vector<1x1x16x8xf32> to vector<16x8xf32>
    %165 = vector.extract_strided_slice %157 {offsets = [8, 0], sizes = [8, 256], strides = [1, 1]} : vector<16x256xf32> to vector<8x256xf32>
    %cst_132 = arith.constant dense<0.000000e+00> : vector<16x256xf32>
    %166 = tpu.matmul %164, %165, %cst_132 {dimension_numbers = #tpu.dot_dimension_numbers<[1], [0], [0], [1], [0, 0, 1, 1], [], []>} : vector<16x8xf32>, vector<8x256xf32>, vector<16x256xf32> -> vector<16x256xf32>
    %167 = arith.addf %153, %166 : vector<16x256xf32>
    %c7_i32 = arith.constant 7 : i32
    %168 = tpu.dynamic_rotate %11 by %c7_i32 dim 1 : vector<16x256xf32>, i32 -> vector<16x256xf32>
    %c11 = arith.constant 11 : index
    %c0_133 = arith.constant 0 : index
    %169 = vector.load %arg2[%c11, %c0_133] : memref<27x256xf32, #tpu.memory_space<vmem>>, vector<1x256xf32>
    %170 = vector.broadcast %169 : vector<1x256xf32> to vector<16x256xf32>
    %171 = arith.mulf %168, %170 : vector<16x256xf32>
    %c11_134 = arith.constant 11 : index
    %c0_135 = arith.constant 0 : index
    %c0_136 = arith.constant 0 : index
    %c0_137 = arith.constant 0 : index
    %172 = vector.load %arg6[%c11_134, %c0_135, %c0_136, %c0_137] : memref<27x2x16x8xf32, #tpu.memory_space<vmem>>, vector<1x1x16x8xf32>
    %173 = vector.shape_cast %172 : vector<1x1x16x8xf32> to vector<16x8xf32>
    %174 = vector.extract_strided_slice %171 {offsets = [0, 0], sizes = [8, 256], strides = [1, 1]} : vector<16x256xf32> to vector<8x256xf32>
    %cst_138 = arith.constant dense<0.000000e+00> : vector<16x256xf32>
    %175 = tpu.matmul %173, %174, %cst_138 {dimension_numbers = #tpu.dot_dimension_numbers<[1], [0], [0], [1], [0, 0, 1, 1], [], []>} : vector<16x8xf32>, vector<8x256xf32>, vector<16x256xf32> -> vector<16x256xf32>
    %176 = arith.addf %162, %175 : vector<16x256xf32>
    %c11_139 = arith.constant 11 : index
    %c1_140 = arith.constant 1 : index
    %c0_141 = arith.constant 0 : index
    %c0_142 = arith.constant 0 : index
    %177 = vector.load %arg6[%c11_139, %c1_140, %c0_141, %c0_142] : memref<27x2x16x8xf32, #tpu.memory_space<vmem>>, vector<1x1x16x8xf32>
    %178 = vector.shape_cast %177 : vector<1x1x16x8xf32> to vector<16x8xf32>
    %179 = vector.extract_strided_slice %171 {offsets = [8, 0], sizes = [8, 256], strides = [1, 1]} : vector<16x256xf32> to vector<8x256xf32>
    %cst_143 = arith.constant dense<0.000000e+00> : vector<16x256xf32>
    %180 = tpu.matmul %178, %179, %cst_143 {dimension_numbers = #tpu.dot_dimension_numbers<[1], [0], [0], [1], [0, 0, 1, 1], [], []>} : vector<16x8xf32>, vector<8x256xf32>, vector<16x256xf32> -> vector<16x256xf32>
    %181 = arith.addf %167, %180 : vector<16x256xf32>
    %c1_i32 = arith.constant 1 : i32
    %182 = tpu.dynamic_rotate %11 by %c1_i32 dim 1 : vector<16x256xf32>, i32 -> vector<16x256xf32>
    %c12 = arith.constant 12 : index
    %c0_144 = arith.constant 0 : index
    %183 = vector.load %arg2[%c12, %c0_144] : memref<27x256xf32, #tpu.memory_space<vmem>>, vector<1x256xf32>
    %184 = vector.broadcast %183 : vector<1x256xf32> to vector<16x256xf32>
    %185 = arith.mulf %182, %184 : vector<16x256xf32>
    %c12_145 = arith.constant 12 : index
    %c0_146 = arith.constant 0 : index
    %c0_147 = arith.constant 0 : index
    %c0_148 = arith.constant 0 : index
    %186 = vector.load %arg6[%c12_145, %c0_146, %c0_147, %c0_148] : memref<27x2x16x8xf32, #tpu.memory_space<vmem>>, vector<1x1x16x8xf32>
    %187 = vector.shape_cast %186 : vector<1x1x16x8xf32> to vector<16x8xf32>
    %188 = vector.extract_strided_slice %185 {offsets = [0, 0], sizes = [8, 256], strides = [1, 1]} : vector<16x256xf32> to vector<8x256xf32>
    %cst_149 = arith.constant dense<0.000000e+00> : vector<16x256xf32>
    %189 = tpu.matmul %187, %188, %cst_149 {dimension_numbers = #tpu.dot_dimension_numbers<[1], [0], [0], [1], [0, 0, 1, 1], [], []>} : vector<16x8xf32>, vector<8x256xf32>, vector<16x256xf32> -> vector<16x256xf32>
    %190 = arith.addf %176, %189 : vector<16x256xf32>
    %c12_150 = arith.constant 12 : index
    %c1_151 = arith.constant 1 : index
    %c0_152 = arith.constant 0 : index
    %c0_153 = arith.constant 0 : index
    %191 = vector.load %arg6[%c12_150, %c1_151, %c0_152, %c0_153] : memref<27x2x16x8xf32, #tpu.memory_space<vmem>>, vector<1x1x16x8xf32>
    %192 = vector.shape_cast %191 : vector<1x1x16x8xf32> to vector<16x8xf32>
    %193 = vector.extract_strided_slice %185 {offsets = [8, 0], sizes = [8, 256], strides = [1, 1]} : vector<16x256xf32> to vector<8x256xf32>
    %cst_154 = arith.constant dense<0.000000e+00> : vector<16x256xf32>
    %194 = tpu.matmul %192, %193, %cst_154 {dimension_numbers = #tpu.dot_dimension_numbers<[1], [0], [0], [1], [0, 0, 1, 1], [], []>} : vector<16x8xf32>, vector<8x256xf32>, vector<16x256xf32> -> vector<16x256xf32>
    %195 = arith.addf %181, %194 : vector<16x256xf32>
    %c13 = arith.constant 13 : index
    %c0_155 = arith.constant 0 : index
    %c0_156 = arith.constant 0 : index
    %c0_157 = arith.constant 0 : index
    %196 = vector.load %arg6[%c13, %c0_155, %c0_156, %c0_157] : memref<27x2x16x8xf32, #tpu.memory_space<vmem>>, vector<1x1x16x8xf32>
    %197 = vector.shape_cast %196 : vector<1x1x16x8xf32> to vector<16x8xf32>
    %198 = vector.extract_strided_slice %11 {offsets = [0, 0], sizes = [8, 256], strides = [1, 1]} : vector<16x256xf32> to vector<8x256xf32>
    %cst_158 = arith.constant dense<0.000000e+00> : vector<16x256xf32>
    %199 = tpu.matmul %197, %198, %cst_158 {dimension_numbers = #tpu.dot_dimension_numbers<[1], [0], [0], [1], [0, 0, 1, 1], [], []>} : vector<16x8xf32>, vector<8x256xf32>, vector<16x256xf32> -> vector<16x256xf32>
    %200 = arith.addf %190, %199 : vector<16x256xf32>
    %c13_159 = arith.constant 13 : index
    %c1_160 = arith.constant 1 : index
    %c0_161 = arith.constant 0 : index
    %c0_162 = arith.constant 0 : index
    %201 = vector.load %arg6[%c13_159, %c1_160, %c0_161, %c0_162] : memref<27x2x16x8xf32, #tpu.memory_space<vmem>>, vector<1x1x16x8xf32>
    %202 = vector.shape_cast %201 : vector<1x1x16x8xf32> to vector<16x8xf32>
    %203 = vector.extract_strided_slice %11 {offsets = [8, 0], sizes = [8, 256], strides = [1, 1]} : vector<16x256xf32> to vector<8x256xf32>
    %cst_163 = arith.constant dense<0.000000e+00> : vector<16x256xf32>
    %204 = tpu.matmul %202, %203, %cst_163 {dimension_numbers = #tpu.dot_dimension_numbers<[1], [0], [0], [1], [0, 0, 1, 1], [], []>} : vector<16x8xf32>, vector<8x256xf32>, vector<16x256xf32> -> vector<16x256xf32>
    %205 = arith.addf %195, %204 : vector<16x256xf32>
    %c255_i32 = arith.constant 255 : i32
    %206 = tpu.dynamic_rotate %11 by %c255_i32 dim 1 : vector<16x256xf32>, i32 -> vector<16x256xf32>
    %c14 = arith.constant 14 : index
    %c0_164 = arith.constant 0 : index
    %207 = vector.load %arg2[%c14, %c0_164] : memref<27x256xf32, #tpu.memory_space<vmem>>, vector<1x256xf32>
    %208 = vector.broadcast %207 : vector<1x256xf32> to vector<16x256xf32>
    %209 = arith.mulf %206, %208 : vector<16x256xf32>
    %c14_165 = arith.constant 14 : index
    %c0_166 = arith.constant 0 : index
    %c0_167 = arith.constant 0 : index
    %c0_168 = arith.constant 0 : index
    %210 = vector.load %arg6[%c14_165, %c0_166, %c0_167, %c0_168] : memref<27x2x16x8xf32, #tpu.memory_space<vmem>>, vector<1x1x16x8xf32>
    %211 = vector.shape_cast %210 : vector<1x1x16x8xf32> to vector<16x8xf32>
    %212 = vector.extract_strided_slice %209 {offsets = [0, 0], sizes = [8, 256], strides = [1, 1]} : vector<16x256xf32> to vector<8x256xf32>
    %cst_169 = arith.constant dense<0.000000e+00> : vector<16x256xf32>
    %213 = tpu.matmul %211, %212, %cst_169 {dimension_numbers = #tpu.dot_dimension_numbers<[1], [0], [0], [1], [0, 0, 1, 1], [], []>} : vector<16x8xf32>, vector<8x256xf32>, vector<16x256xf32> -> vector<16x256xf32>
    %214 = arith.addf %200, %213 : vector<16x256xf32>
    %c14_170 = arith.constant 14 : index
    %c1_171 = arith.constant 1 : index
    %c0_172 = arith.constant 0 : index
    %c0_173 = arith.constant 0 : index
    %215 = vector.load %arg6[%c14_170, %c1_171, %c0_172, %c0_173] : memref<27x2x16x8xf32, #tpu.memory_space<vmem>>, vector<1x1x16x8xf32>
    %216 = vector.shape_cast %215 : vector<1x1x16x8xf32> to vector<16x8xf32>
    %217 = vector.extract_strided_slice %209 {offsets = [8, 0], sizes = [8, 256], strides = [1, 1]} : vector<16x256xf32> to vector<8x256xf32>
    %cst_174 = arith.constant dense<0.000000e+00> : vector<16x256xf32>
    %218 = tpu.matmul %216, %217, %cst_174 {dimension_numbers = #tpu.dot_dimension_numbers<[1], [0], [0], [1], [0, 0, 1, 1], [], []>} : vector<16x8xf32>, vector<8x256xf32>, vector<16x256xf32> -> vector<16x256xf32>
    %219 = arith.addf %205, %218 : vector<16x256xf32>
    %c249_i32 = arith.constant 249 : i32
    %220 = tpu.dynamic_rotate %11 by %c249_i32 dim 1 : vector<16x256xf32>, i32 -> vector<16x256xf32>
    %c15 = arith.constant 15 : index
    %c0_175 = arith.constant 0 : index
    %221 = vector.load %arg2[%c15, %c0_175] : memref<27x256xf32, #tpu.memory_space<vmem>>, vector<1x256xf32>
    %222 = vector.broadcast %221 : vector<1x256xf32> to vector<16x256xf32>
    %223 = arith.mulf %220, %222 : vector<16x256xf32>
    %c15_176 = arith.constant 15 : index
    %c0_177 = arith.constant 0 : index
    %c0_178 = arith.constant 0 : index
    %c0_179 = arith.constant 0 : index
    %224 = vector.load %arg6[%c15_176, %c0_177, %c0_178, %c0_179] : memref<27x2x16x8xf32, #tpu.memory_space<vmem>>, vector<1x1x16x8xf32>
    %225 = vector.shape_cast %224 : vector<1x1x16x8xf32> to vector<16x8xf32>
    %226 = vector.extract_strided_slice %223 {offsets = [0, 0], sizes = [8, 256], strides = [1, 1]} : vector<16x256xf32> to vector<8x256xf32>
    %cst_180 = arith.constant dense<0.000000e+00> : vector<16x256xf32>
    %227 = tpu.matmul %225, %226, %cst_180 {dimension_numbers = #tpu.dot_dimension_numbers<[1], [0], [0], [1], [0, 0, 1, 1], [], []>} : vector<16x8xf32>, vector<8x256xf32>, vector<16x256xf32> -> vector<16x256xf32>
    %228 = arith.addf %214, %227 : vector<16x256xf32>
    %c15_181 = arith.constant 15 : index
    %c1_182 = arith.constant 1 : index
    %c0_183 = arith.constant 0 : index
    %c0_184 = arith.constant 0 : index
    %229 = vector.load %arg6[%c15_181, %c1_182, %c0_183, %c0_184] : memref<27x2x16x8xf32, #tpu.memory_space<vmem>>, vector<1x1x16x8xf32>
    %230 = vector.shape_cast %229 : vector<1x1x16x8xf32> to vector<16x8xf32>
    %231 = vector.extract_strided_slice %223 {offsets = [8, 0], sizes = [8, 256], strides = [1, 1]} : vector<16x256xf32> to vector<8x256xf32>
    %cst_185 = arith.constant dense<0.000000e+00> : vector<16x256xf32>
    %232 = tpu.matmul %230, %231, %cst_185 {dimension_numbers = #tpu.dot_dimension_numbers<[1], [0], [0], [1], [0, 0, 1, 1], [], []>} : vector<16x8xf32>, vector<8x256xf32>, vector<16x256xf32> -> vector<16x256xf32>
    %233 = arith.addf %219, %232 : vector<16x256xf32>
    %c248_i32 = arith.constant 248 : i32
    %234 = tpu.dynamic_rotate %11 by %c248_i32 dim 1 : vector<16x256xf32>, i32 -> vector<16x256xf32>
    %c16 = arith.constant 16 : index
    %c0_186 = arith.constant 0 : index
    %235 = vector.load %arg2[%c16, %c0_186] : memref<27x256xf32, #tpu.memory_space<vmem>>, vector<1x256xf32>
    %236 = vector.broadcast %235 : vector<1x256xf32> to vector<16x256xf32>
    %237 = arith.mulf %234, %236 : vector<16x256xf32>
    %c16_187 = arith.constant 16 : index
    %c0_188 = arith.constant 0 : index
    %c0_189 = arith.constant 0 : index
    %c0_190 = arith.constant 0 : index
    %238 = vector.load %arg6[%c16_187, %c0_188, %c0_189, %c0_190] : memref<27x2x16x8xf32, #tpu.memory_space<vmem>>, vector<1x1x16x8xf32>
    %239 = vector.shape_cast %238 : vector<1x1x16x8xf32> to vector<16x8xf32>
    %240 = vector.extract_strided_slice %237 {offsets = [0, 0], sizes = [8, 256], strides = [1, 1]} : vector<16x256xf32> to vector<8x256xf32>
    %cst_191 = arith.constant dense<0.000000e+00> : vector<16x256xf32>
    %241 = tpu.matmul %239, %240, %cst_191 {dimension_numbers = #tpu.dot_dimension_numbers<[1], [0], [0], [1], [0, 0, 1, 1], [], []>} : vector<16x8xf32>, vector<8x256xf32>, vector<16x256xf32> -> vector<16x256xf32>
    %242 = arith.addf %228, %241 : vector<16x256xf32>
    %c16_192 = arith.constant 16 : index
    %c1_193 = arith.constant 1 : index
    %c0_194 = arith.constant 0 : index
    %c0_195 = arith.constant 0 : index
    %243 = vector.load %arg6[%c16_192, %c1_193, %c0_194, %c0_195] : memref<27x2x16x8xf32, #tpu.memory_space<vmem>>, vector<1x1x16x8xf32>
    %244 = vector.shape_cast %243 : vector<1x1x16x8xf32> to vector<16x8xf32>
    %245 = vector.extract_strided_slice %237 {offsets = [8, 0], sizes = [8, 256], strides = [1, 1]} : vector<16x256xf32> to vector<8x256xf32>
    %cst_196 = arith.constant dense<0.000000e+00> : vector<16x256xf32>
    %246 = tpu.matmul %244, %245, %cst_196 {dimension_numbers = #tpu.dot_dimension_numbers<[1], [0], [0], [1], [0, 0, 1, 1], [], []>} : vector<16x8xf32>, vector<8x256xf32>, vector<16x256xf32> -> vector<16x256xf32>
    %247 = arith.addf %233, %246 : vector<16x256xf32>
    %c247_i32 = arith.constant 247 : i32
    %248 = tpu.dynamic_rotate %11 by %c247_i32 dim 1 : vector<16x256xf32>, i32 -> vector<16x256xf32>
    %c17 = arith.constant 17 : index
    %c0_197 = arith.constant 0 : index
    %249 = vector.load %arg2[%c17, %c0_197] : memref<27x256xf32, #tpu.memory_space<vmem>>, vector<1x256xf32>
    %250 = vector.broadcast %249 : vector<1x256xf32> to vector<16x256xf32>
    %251 = arith.mulf %248, %250 : vector<16x256xf32>
    %c17_198 = arith.constant 17 : index
    %c0_199 = arith.constant 0 : index
    %c0_200 = arith.constant 0 : index
    %c0_201 = arith.constant 0 : index
    %252 = vector.load %arg6[%c17_198, %c0_199, %c0_200, %c0_201] : memref<27x2x16x8xf32, #tpu.memory_space<vmem>>, vector<1x1x16x8xf32>
    %253 = vector.shape_cast %252 : vector<1x1x16x8xf32> to vector<16x8xf32>
    %254 = vector.extract_strided_slice %251 {offsets = [0, 0], sizes = [8, 256], strides = [1, 1]} : vector<16x256xf32> to vector<8x256xf32>
    %cst_202 = arith.constant dense<0.000000e+00> : vector<16x256xf32>
    %255 = tpu.matmul %253, %254, %cst_202 {dimension_numbers = #tpu.dot_dimension_numbers<[1], [0], [0], [1], [0, 0, 1, 1], [], []>} : vector<16x8xf32>, vector<8x256xf32>, vector<16x256xf32> -> vector<16x256xf32>
    %256 = arith.addf %242, %255 : vector<16x256xf32>
    %c17_203 = arith.constant 17 : index
    %c1_204 = arith.constant 1 : index
    %c0_205 = arith.constant 0 : index
    %c0_206 = arith.constant 0 : index
    %257 = vector.load %arg6[%c17_203, %c1_204, %c0_205, %c0_206] : memref<27x2x16x8xf32, #tpu.memory_space<vmem>>, vector<1x1x16x8xf32>
    %258 = vector.shape_cast %257 : vector<1x1x16x8xf32> to vector<16x8xf32>
    %259 = vector.extract_strided_slice %251 {offsets = [8, 0], sizes = [8, 256], strides = [1, 1]} : vector<16x256xf32> to vector<8x256xf32>
    %cst_207 = arith.constant dense<0.000000e+00> : vector<16x256xf32>
    %260 = tpu.matmul %258, %259, %cst_207 {dimension_numbers = #tpu.dot_dimension_numbers<[1], [0], [0], [1], [0, 0, 1, 1], [], []>} : vector<16x8xf32>, vector<8x256xf32>, vector<16x256xf32> -> vector<16x256xf32>
    %261 = arith.addf %247, %260 : vector<16x256xf32>
    %c201_i32 = arith.constant 201 : i32
    %262 = tpu.dynamic_rotate %11 by %c201_i32 dim 1 : vector<16x256xf32>, i32 -> vector<16x256xf32>
    %c18 = arith.constant 18 : index
    %c0_208 = arith.constant 0 : index
    %263 = vector.load %arg2[%c18, %c0_208] : memref<27x256xf32, #tpu.memory_space<vmem>>, vector<1x256xf32>
    %264 = vector.broadcast %263 : vector<1x256xf32> to vector<16x256xf32>
    %265 = arith.mulf %262, %264 : vector<16x256xf32>
    %c18_209 = arith.constant 18 : index
    %c0_210 = arith.constant 0 : index
    %c0_211 = arith.constant 0 : index
    %c0_212 = arith.constant 0 : index
    %266 = vector.load %arg6[%c18_209, %c0_210, %c0_211, %c0_212] : memref<27x2x16x8xf32, #tpu.memory_space<vmem>>, vector<1x1x16x8xf32>
    %267 = vector.shape_cast %266 : vector<1x1x16x8xf32> to vector<16x8xf32>
    %268 = vector.extract_strided_slice %265 {offsets = [0, 0], sizes = [8, 256], strides = [1, 1]} : vector<16x256xf32> to vector<8x256xf32>
    %cst_213 = arith.constant dense<0.000000e+00> : vector<16x256xf32>
    %269 = tpu.matmul %267, %268, %cst_213 {dimension_numbers = #tpu.dot_dimension_numbers<[1], [0], [0], [1], [0, 0, 1, 1], [], []>} : vector<16x8xf32>, vector<8x256xf32>, vector<16x256xf32> -> vector<16x256xf32>
    %270 = arith.addf %256, %269 : vector<16x256xf32>
    %c18_214 = arith.constant 18 : index
    %c1_215 = arith.constant 1 : index
    %c0_216 = arith.constant 0 : index
    %c0_217 = arith.constant 0 : index
    %271 = vector.load %arg6[%c18_214, %c1_215, %c0_216, %c0_217] : memref<27x2x16x8xf32, #tpu.memory_space<vmem>>, vector<1x1x16x8xf32>
    %272 = vector.shape_cast %271 : vector<1x1x16x8xf32> to vector<16x8xf32>
    %273 = vector.extract_strided_slice %265 {offsets = [8, 0], sizes = [8, 256], strides = [1, 1]} : vector<16x256xf32> to vector<8x256xf32>
    %cst_218 = arith.constant dense<0.000000e+00> : vector<16x256xf32>
    %274 = tpu.matmul %272, %273, %cst_218 {dimension_numbers = #tpu.dot_dimension_numbers<[1], [0], [0], [1], [0, 0, 1, 1], [], []>} : vector<16x8xf32>, vector<8x256xf32>, vector<16x256xf32> -> vector<16x256xf32>
    %275 = arith.addf %261, %274 : vector<16x256xf32>
    %c200_i32 = arith.constant 200 : i32
    %276 = tpu.dynamic_rotate %11 by %c200_i32 dim 1 : vector<16x256xf32>, i32 -> vector<16x256xf32>
    %c19 = arith.constant 19 : index
    %c0_219 = arith.constant 0 : index
    %277 = vector.load %arg2[%c19, %c0_219] : memref<27x256xf32, #tpu.memory_space<vmem>>, vector<1x256xf32>
    %278 = vector.broadcast %277 : vector<1x256xf32> to vector<16x256xf32>
    %279 = arith.mulf %276, %278 : vector<16x256xf32>
    %c19_220 = arith.constant 19 : index
    %c0_221 = arith.constant 0 : index
    %c0_222 = arith.constant 0 : index
    %c0_223 = arith.constant 0 : index
    %280 = vector.load %arg6[%c19_220, %c0_221, %c0_222, %c0_223] : memref<27x2x16x8xf32, #tpu.memory_space<vmem>>, vector<1x1x16x8xf32>
    %281 = vector.shape_cast %280 : vector<1x1x16x8xf32> to vector<16x8xf32>
    %282 = vector.extract_strided_slice %279 {offsets = [0, 0], sizes = [8, 256], strides = [1, 1]} : vector<16x256xf32> to vector<8x256xf32>
    %cst_224 = arith.constant dense<0.000000e+00> : vector<16x256xf32>
    %283 = tpu.matmul %281, %282, %cst_224 {dimension_numbers = #tpu.dot_dimension_numbers<[1], [0], [0], [1], [0, 0, 1, 1], [], []>} : vector<16x8xf32>, vector<8x256xf32>, vector<16x256xf32> -> vector<16x256xf32>
    %284 = arith.addf %270, %283 : vector<16x256xf32>
    %c19_225 = arith.constant 19 : index
    %c1_226 = arith.constant 1 : index
    %c0_227 = arith.constant 0 : index
    %c0_228 = arith.constant 0 : index
    %285 = vector.load %arg6[%c19_225, %c1_226, %c0_227, %c0_228] : memref<27x2x16x8xf32, #tpu.memory_space<vmem>>, vector<1x1x16x8xf32>
    %286 = vector.shape_cast %285 : vector<1x1x16x8xf32> to vector<16x8xf32>
    %287 = vector.extract_strided_slice %279 {offsets = [8, 0], sizes = [8, 256], strides = [1, 1]} : vector<16x256xf32> to vector<8x256xf32>
    %cst_229 = arith.constant dense<0.000000e+00> : vector<16x256xf32>
    %288 = tpu.matmul %286, %287, %cst_229 {dimension_numbers = #tpu.dot_dimension_numbers<[1], [0], [0], [1], [0, 0, 1, 1], [], []>} : vector<16x8xf32>, vector<8x256xf32>, vector<16x256xf32> -> vector<16x256xf32>
    %289 = arith.addf %275, %288 : vector<16x256xf32>
    %c199_i32 = arith.constant 199 : i32
    %290 = tpu.dynamic_rotate %11 by %c199_i32 dim 1 : vector<16x256xf32>, i32 -> vector<16x256xf32>
    %c20 = arith.constant 20 : index
    %c0_230 = arith.constant 0 : index
    %291 = vector.load %arg2[%c20, %c0_230] : memref<27x256xf32, #tpu.memory_space<vmem>>, vector<1x256xf32>
    %292 = vector.broadcast %291 : vector<1x256xf32> to vector<16x256xf32>
    %293 = arith.mulf %290, %292 : vector<16x256xf32>
    %c20_231 = arith.constant 20 : index
    %c0_232 = arith.constant 0 : index
    %c0_233 = arith.constant 0 : index
    %c0_234 = arith.constant 0 : index
    %294 = vector.load %arg6[%c20_231, %c0_232, %c0_233, %c0_234] : memref<27x2x16x8xf32, #tpu.memory_space<vmem>>, vector<1x1x16x8xf32>
    %295 = vector.shape_cast %294 : vector<1x1x16x8xf32> to vector<16x8xf32>
    %296 = vector.extract_strided_slice %293 {offsets = [0, 0], sizes = [8, 256], strides = [1, 1]} : vector<16x256xf32> to vector<8x256xf32>
    %cst_235 = arith.constant dense<0.000000e+00> : vector<16x256xf32>
    %297 = tpu.matmul %295, %296, %cst_235 {dimension_numbers = #tpu.dot_dimension_numbers<[1], [0], [0], [1], [0, 0, 1, 1], [], []>} : vector<16x8xf32>, vector<8x256xf32>, vector<16x256xf32> -> vector<16x256xf32>
    %298 = arith.addf %284, %297 : vector<16x256xf32>
    %c20_236 = arith.constant 20 : index
    %c1_237 = arith.constant 1 : index
    %c0_238 = arith.constant 0 : index
    %c0_239 = arith.constant 0 : index
    %299 = vector.load %arg6[%c20_236, %c1_237, %c0_238, %c0_239] : memref<27x2x16x8xf32, #tpu.memory_space<vmem>>, vector<1x1x16x8xf32>
    %300 = vector.shape_cast %299 : vector<1x1x16x8xf32> to vector<16x8xf32>
    %301 = vector.extract_strided_slice %293 {offsets = [8, 0], sizes = [8, 256], strides = [1, 1]} : vector<16x256xf32> to vector<8x256xf32>
    %cst_240 = arith.constant dense<0.000000e+00> : vector<16x256xf32>
    %302 = tpu.matmul %300, %301, %cst_240 {dimension_numbers = #tpu.dot_dimension_numbers<[1], [0], [0], [1], [0, 0, 1, 1], [], []>} : vector<16x8xf32>, vector<8x256xf32>, vector<16x256xf32> -> vector<16x256xf32>
    %303 = arith.addf %289, %302 : vector<16x256xf32>
    %c193_i32 = arith.constant 193 : i32
    %304 = tpu.dynamic_rotate %11 by %c193_i32 dim 1 : vector<16x256xf32>, i32 -> vector<16x256xf32>
    %c21 = arith.constant 21 : index
    %c0_241 = arith.constant 0 : index
    %305 = vector.load %arg2[%c21, %c0_241] : memref<27x256xf32, #tpu.memory_space<vmem>>, vector<1x256xf32>
    %306 = vector.broadcast %305 : vector<1x256xf32> to vector<16x256xf32>
    %307 = arith.mulf %304, %306 : vector<16x256xf32>
    %c21_242 = arith.constant 21 : index
    %c0_243 = arith.constant 0 : index
    %c0_244 = arith.constant 0 : index
    %c0_245 = arith.constant 0 : index
    %308 = vector.load %arg6[%c21_242, %c0_243, %c0_244, %c0_245] : memref<27x2x16x8xf32, #tpu.memory_space<vmem>>, vector<1x1x16x8xf32>
    %309 = vector.shape_cast %308 : vector<1x1x16x8xf32> to vector<16x8xf32>
    %310 = vector.extract_strided_slice %307 {offsets = [0, 0], sizes = [8, 256], strides = [1, 1]} : vector<16x256xf32> to vector<8x256xf32>
    %cst_246 = arith.constant dense<0.000000e+00> : vector<16x256xf32>
    %311 = tpu.matmul %309, %310, %cst_246 {dimension_numbers = #tpu.dot_dimension_numbers<[1], [0], [0], [1], [0, 0, 1, 1], [], []>} : vector<16x8xf32>, vector<8x256xf32>, vector<16x256xf32> -> vector<16x256xf32>
    %312 = arith.addf %298, %311 : vector<16x256xf32>
    %c21_247 = arith.constant 21 : index
    %c1_248 = arith.constant 1 : index
    %c0_249 = arith.constant 0 : index
    %c0_250 = arith.constant 0 : index
    %313 = vector.load %arg6[%c21_247, %c1_248, %c0_249, %c0_250] : memref<27x2x16x8xf32, #tpu.memory_space<vmem>>, vector<1x1x16x8xf32>
    %314 = vector.shape_cast %313 : vector<1x1x16x8xf32> to vector<16x8xf32>
    %315 = vector.extract_strided_slice %307 {offsets = [8, 0], sizes = [8, 256], strides = [1, 1]} : vector<16x256xf32> to vector<8x256xf32>
    %cst_251 = arith.constant dense<0.000000e+00> : vector<16x256xf32>
    %316 = tpu.matmul %314, %315, %cst_251 {dimension_numbers = #tpu.dot_dimension_numbers<[1], [0], [0], [1], [0, 0, 1, 1], [], []>} : vector<16x8xf32>, vector<8x256xf32>, vector<16x256xf32> -> vector<16x256xf32>
    %317 = arith.addf %303, %316 : vector<16x256xf32>
    %c192_i32 = arith.constant 192 : i32
    %318 = tpu.dynamic_rotate %11 by %c192_i32 dim 1 : vector<16x256xf32>, i32 -> vector<16x256xf32>
    %c22 = arith.constant 22 : index
    %c0_252 = arith.constant 0 : index
    %319 = vector.load %arg2[%c22, %c0_252] : memref<27x256xf32, #tpu.memory_space<vmem>>, vector<1x256xf32>
    %320 = vector.broadcast %319 : vector<1x256xf32> to vector<16x256xf32>
    %321 = arith.mulf %318, %320 : vector<16x256xf32>
    %c22_253 = arith.constant 22 : index
    %c0_254 = arith.constant 0 : index
    %c0_255 = arith.constant 0 : index
    %c0_256 = arith.constant 0 : index
    %322 = vector.load %arg6[%c22_253, %c0_254, %c0_255, %c0_256] : memref<27x2x16x8xf32, #tpu.memory_space<vmem>>, vector<1x1x16x8xf32>
    %323 = vector.shape_cast %322 : vector<1x1x16x8xf32> to vector<16x8xf32>
    %324 = vector.extract_strided_slice %321 {offsets = [0, 0], sizes = [8, 256], strides = [1, 1]} : vector<16x256xf32> to vector<8x256xf32>
    %cst_257 = arith.constant dense<0.000000e+00> : vector<16x256xf32>
    %325 = tpu.matmul %323, %324, %cst_257 {dimension_numbers = #tpu.dot_dimension_numbers<[1], [0], [0], [1], [0, 0, 1, 1], [], []>} : vector<16x8xf32>, vector<8x256xf32>, vector<16x256xf32> -> vector<16x256xf32>
    %326 = arith.addf %312, %325 : vector<16x256xf32>
    %c22_258 = arith.constant 22 : index
    %c1_259 = arith.constant 1 : index
    %c0_260 = arith.constant 0 : index
    %c0_261 = arith.constant 0 : index
    %327 = vector.load %arg6[%c22_258, %c1_259, %c0_260, %c0_261] : memref<27x2x16x8xf32, #tpu.memory_space<vmem>>, vector<1x1x16x8xf32>
    %328 = vector.shape_cast %327 : vector<1x1x16x8xf32> to vector<16x8xf32>
    %329 = vector.extract_strided_slice %321 {offsets = [8, 0], sizes = [8, 256], strides = [1, 1]} : vector<16x256xf32> to vector<8x256xf32>
    %cst_262 = arith.constant dense<0.000000e+00> : vector<16x256xf32>
    %330 = tpu.matmul %328, %329, %cst_262 {dimension_numbers = #tpu.dot_dimension_numbers<[1], [0], [0], [1], [0, 0, 1, 1], [], []>} : vector<16x8xf32>, vector<8x256xf32>, vector<16x256xf32> -> vector<16x256xf32>
    %331 = arith.addf %317, %330 : vector<16x256xf32>
    %c191_i32 = arith.constant 191 : i32
    %332 = tpu.dynamic_rotate %11 by %c191_i32 dim 1 : vector<16x256xf32>, i32 -> vector<16x256xf32>
    %c23 = arith.constant 23 : index
    %c0_263 = arith.constant 0 : index
    %333 = vector.load %arg2[%c23, %c0_263] : memref<27x256xf32, #tpu.memory_space<vmem>>, vector<1x256xf32>
    %334 = vector.broadcast %333 : vector<1x256xf32> to vector<16x256xf32>
    %335 = arith.mulf %332, %334 : vector<16x256xf32>
    %c23_264 = arith.constant 23 : index
    %c0_265 = arith.constant 0 : index
    %c0_266 = arith.constant 0 : index
    %c0_267 = arith.constant 0 : index
    %336 = vector.load %arg6[%c23_264, %c0_265, %c0_266, %c0_267] : memref<27x2x16x8xf32, #tpu.memory_space<vmem>>, vector<1x1x16x8xf32>
    %337 = vector.shape_cast %336 : vector<1x1x16x8xf32> to vector<16x8xf32>
    %338 = vector.extract_strided_slice %335 {offsets = [0, 0], sizes = [8, 256], strides = [1, 1]} : vector<16x256xf32> to vector<8x256xf32>
    %cst_268 = arith.constant dense<0.000000e+00> : vector<16x256xf32>
    %339 = tpu.matmul %337, %338, %cst_268 {dimension_numbers = #tpu.dot_dimension_numbers<[1], [0], [0], [1], [0, 0, 1, 1], [], []>} : vector<16x8xf32>, vector<8x256xf32>, vector<16x256xf32> -> vector<16x256xf32>
    %340 = arith.addf %326, %339 : vector<16x256xf32>
    %c23_269 = arith.constant 23 : index
    %c1_270 = arith.constant 1 : index
    %c0_271 = arith.constant 0 : index
    %c0_272 = arith.constant 0 : index
    %341 = vector.load %arg6[%c23_269, %c1_270, %c0_271, %c0_272] : memref<27x2x16x8xf32, #tpu.memory_space<vmem>>, vector<1x1x16x8xf32>
    %342 = vector.shape_cast %341 : vector<1x1x16x8xf32> to vector<16x8xf32>
    %343 = vector.extract_strided_slice %335 {offsets = [8, 0], sizes = [8, 256], strides = [1, 1]} : vector<16x256xf32> to vector<8x256xf32>
    %cst_273 = arith.constant dense<0.000000e+00> : vector<16x256xf32>
    %344 = tpu.matmul %342, %343, %cst_273 {dimension_numbers = #tpu.dot_dimension_numbers<[1], [0], [0], [1], [0, 0, 1, 1], [], []>} : vector<16x8xf32>, vector<8x256xf32>, vector<16x256xf32> -> vector<16x256xf32>
    %345 = arith.addf %331, %344 : vector<16x256xf32>
    %c185_i32 = arith.constant 185 : i32
    %346 = tpu.dynamic_rotate %11 by %c185_i32 dim 1 : vector<16x256xf32>, i32 -> vector<16x256xf32>
    %c24 = arith.constant 24 : index
    %c0_274 = arith.constant 0 : index
    %347 = vector.load %arg2[%c24, %c0_274] : memref<27x256xf32, #tpu.memory_space<vmem>>, vector<1x256xf32>
    %348 = vector.broadcast %347 : vector<1x256xf32> to vector<16x256xf32>
    %349 = arith.mulf %346, %348 : vector<16x256xf32>
    %c24_275 = arith.constant 24 : index
    %c0_276 = arith.constant 0 : index
    %c0_277 = arith.constant 0 : index
    %c0_278 = arith.constant 0 : index
    %350 = vector.load %arg6[%c24_275, %c0_276, %c0_277, %c0_278] : memref<27x2x16x8xf32, #tpu.memory_space<vmem>>, vector<1x1x16x8xf32>
    %351 = vector.shape_cast %350 : vector<1x1x16x8xf32> to vector<16x8xf32>
    %352 = vector.extract_strided_slice %349 {offsets = [0, 0], sizes = [8, 256], strides = [1, 1]} : vector<16x256xf32> to vector<8x256xf32>
    %cst_279 = arith.constant dense<0.000000e+00> : vector<16x256xf32>
    %353 = tpu.matmul %351, %352, %cst_279 {dimension_numbers = #tpu.dot_dimension_numbers<[1], [0], [0], [1], [0, 0, 1, 1], [], []>} : vector<16x8xf32>, vector<8x256xf32>, vector<16x256xf32> -> vector<16x256xf32>
    %354 = arith.addf %340, %353 : vector<16x256xf32>
    %c24_280 = arith.constant 24 : index
    %c1_281 = arith.constant 1 : index
    %c0_282 = arith.constant 0 : index
    %c0_283 = arith.constant 0 : index
    %355 = vector.load %arg6[%c24_280, %c1_281, %c0_282, %c0_283] : memref<27x2x16x8xf32, #tpu.memory_space<vmem>>, vector<1x1x16x8xf32>
    %356 = vector.shape_cast %355 : vector<1x1x16x8xf32> to vector<16x8xf32>
    %357 = vector.extract_strided_slice %349 {offsets = [8, 0], sizes = [8, 256], strides = [1, 1]} : vector<16x256xf32> to vector<8x256xf32>
    %cst_284 = arith.constant dense<0.000000e+00> : vector<16x256xf32>
    %358 = tpu.matmul %356, %357, %cst_284 {dimension_numbers = #tpu.dot_dimension_numbers<[1], [0], [0], [1], [0, 0, 1, 1], [], []>} : vector<16x8xf32>, vector<8x256xf32>, vector<16x256xf32> -> vector<16x256xf32>
    %359 = arith.addf %345, %358 : vector<16x256xf32>
    %c184_i32 = arith.constant 184 : i32
    %360 = tpu.dynamic_rotate %11 by %c184_i32 dim 1 : vector<16x256xf32>, i32 -> vector<16x256xf32>
    %c25 = arith.constant 25 : index
    %c0_285 = arith.constant 0 : index
    %361 = vector.load %arg2[%c25, %c0_285] : memref<27x256xf32, #tpu.memory_space<vmem>>, vector<1x256xf32>
    %362 = vector.broadcast %361 : vector<1x256xf32> to vector<16x256xf32>
    %363 = arith.mulf %360, %362 : vector<16x256xf32>
    %c25_286 = arith.constant 25 : index
    %c0_287 = arith.constant 0 : index
    %c0_288 = arith.constant 0 : index
    %c0_289 = arith.constant 0 : index
    %364 = vector.load %arg6[%c25_286, %c0_287, %c0_288, %c0_289] : memref<27x2x16x8xf32, #tpu.memory_space<vmem>>, vector<1x1x16x8xf32>
    %365 = vector.shape_cast %364 : vector<1x1x16x8xf32> to vector<16x8xf32>
    %366 = vector.extract_strided_slice %363 {offsets = [0, 0], sizes = [8, 256], strides = [1, 1]} : vector<16x256xf32> to vector<8x256xf32>
    %cst_290 = arith.constant dense<0.000000e+00> : vector<16x256xf32>
    %367 = tpu.matmul %365, %366, %cst_290 {dimension_numbers = #tpu.dot_dimension_numbers<[1], [0], [0], [1], [0, 0, 1, 1], [], []>} : vector<16x8xf32>, vector<8x256xf32>, vector<16x256xf32> -> vector<16x256xf32>
    %368 = arith.addf %354, %367 : vector<16x256xf32>
    %c25_291 = arith.constant 25 : index
    %c1_292 = arith.constant 1 : index
    %c0_293 = arith.constant 0 : index
    %c0_294 = arith.constant 0 : index
    %369 = vector.load %arg6[%c25_291, %c1_292, %c0_293, %c0_294] : memref<27x2x16x8xf32, #tpu.memory_space<vmem>>, vector<1x1x16x8xf32>
    %370 = vector.shape_cast %369 : vector<1x1x16x8xf32> to vector<16x8xf32>
    %371 = vector.extract_strided_slice %363 {offsets = [8, 0], sizes = [8, 256], strides = [1, 1]} : vector<16x256xf32> to vector<8x256xf32>
    %cst_295 = arith.constant dense<0.000000e+00> : vector<16x256xf32>
    %372 = tpu.matmul %370, %371, %cst_295 {dimension_numbers = #tpu.dot_dimension_numbers<[1], [0], [0], [1], [0, 0, 1, 1], [], []>} : vector<16x8xf32>, vector<8x256xf32>, vector<16x256xf32> -> vector<16x256xf32>
    %373 = arith.addf %359, %372 : vector<16x256xf32>
    %c183_i32 = arith.constant 183 : i32
    %374 = tpu.dynamic_rotate %11 by %c183_i32 dim 1 : vector<16x256xf32>, i32 -> vector<16x256xf32>
    %c26 = arith.constant 26 : index
    %c0_296 = arith.constant 0 : index
    %375 = vector.load %arg2[%c26, %c0_296] : memref<27x256xf32, #tpu.memory_space<vmem>>, vector<1x256xf32>
    %376 = vector.broadcast %375 : vector<1x256xf32> to vector<16x256xf32>
    %377 = arith.mulf %374, %376 : vector<16x256xf32>
    %c26_297 = arith.constant 26 : index
    %c0_298 = arith.constant 0 : index
    %c0_299 = arith.constant 0 : index
    %c0_300 = arith.constant 0 : index
    %378 = vector.load %arg6[%c26_297, %c0_298, %c0_299, %c0_300] : memref<27x2x16x8xf32, #tpu.memory_space<vmem>>, vector<1x1x16x8xf32>
    %379 = vector.shape_cast %378 : vector<1x1x16x8xf32> to vector<16x8xf32>
    %380 = vector.extract_strided_slice %377 {offsets = [0, 0], sizes = [8, 256], strides = [1, 1]} : vector<16x256xf32> to vector<8x256xf32>
    %cst_301 = arith.constant dense<0.000000e+00> : vector<16x256xf32>
    %381 = tpu.matmul %379, %380, %cst_301 {dimension_numbers = #tpu.dot_dimension_numbers<[1], [0], [0], [1], [0, 0, 1, 1], [], []>} : vector<16x8xf32>, vector<8x256xf32>, vector<16x256xf32> -> vector<16x256xf32>
    %382 = arith.addf %368, %381 : vector<16x256xf32>
    %c26_302 = arith.constant 26 : index
    %c1_303 = arith.constant 1 : index
    %c0_304 = arith.constant 0 : index
    %c0_305 = arith.constant 0 : index
    %383 = vector.load %arg6[%c26_302, %c1_303, %c0_304, %c0_305] : memref<27x2x16x8xf32, #tpu.memory_space<vmem>>, vector<1x1x16x8xf32>
    %384 = vector.shape_cast %383 : vector<1x1x16x8xf32> to vector<16x8xf32>
    %385 = vector.extract_strided_slice %377 {offsets = [8, 0], sizes = [8, 256], strides = [1, 1]} : vector<16x256xf32> to vector<8x256xf32>
    %cst_306 = arith.constant dense<0.000000e+00> : vector<16x256xf32>
    %386 = tpu.matmul %384, %385, %cst_306 {dimension_numbers = #tpu.dot_dimension_numbers<[1], [0], [0], [1], [0, 0, 1, 1], [], []>} : vector<16x8xf32>, vector<8x256xf32>, vector<16x256xf32> -> vector<16x256xf32>
    %387 = arith.addf %373, %386 : vector<16x256xf32>
    %388 = tpu.concatenate %382, %387 in 0 : vector<16x256xf32>, vector<16x256xf32> -> vector<32x256xf32>
    %c0_307 = arith.constant 0 : index
    %c0_308 = arith.constant 0 : index
    %389 = vector.load %arg7[%c0_307, %c0_308] : memref<32x1xf32, #tpu.memory_space<vmem>>, vector<32x1xf32>
    %390 = vector.broadcast %389 : vector<32x1xf32> to vector<32x256xf32>
    %391 = arith.mulf %388, %390 : vector<32x256xf32>
    %c0_309 = arith.constant 0 : index
    %c0_310 = arith.constant 0 : index
    %392 = vector.load %arg8[%c0_309, %c0_310] : memref<32x1xf32, #tpu.memory_space<vmem>>, vector<32x1xf32>
    %393 = vector.broadcast %392 : vector<32x1xf32> to vector<32x256xf32>
    %394 = arith.addf %391, %393 : vector<32x256xf32>
    %cst_311 = arith.constant 0.000000e+00 : f32
    %395 = vector.broadcast %cst_311 : f32 to vector<32x256xf32>
    %396 = arith.maximumf %394, %395 : vector<32x256xf32>
    %397 = vector.extract_strided_slice %396 {offsets = [0, 0], sizes = [16, 256], strides = [1, 1]} : vector<32x256xf32> to vector<16x256xf32>
    %398 = vector.extract_strided_slice %396 {offsets = [16, 0], sizes = [16, 256], strides = [1, 1]} : vector<32x256xf32> to vector<16x256xf32>
    %399 = arith.addf %397, %398 : vector<16x256xf32>
    %cst_312 = arith.constant dense<0.000000e+00> : vector<16xf32>
    %400 = vector.multi_reduction <add>, %399, %cst_312 [1] : vector<16x256xf32> to vector<16xf32>
    %401 = vector.shape_cast %400 : vector<16xf32> to vector<16x1xf32>
    %cst_313 = arith.constant 3.906250e-03 : f32
    %402 = vector.broadcast %cst_313 : f32 to vector<16x1xf32>
    %403 = arith.mulf %401, %402 : vector<16x1xf32>
    %c0_314 = arith.constant 0 : index
    %c0_315 = arith.constant 0 : index
    %404 = vector.load %arg9[%c0_314, %c0_315] : memref<32x16xf32, #tpu.memory_space<vmem>>, vector<32x16xf32>
    %cst_316 = arith.constant dense<0.000000e+00> : vector<32x1xf32>
    %405 = tpu.matmul %404, %403, %cst_316 {dimension_numbers = #tpu.dot_dimension_numbers<[1], [0], [0], [1], [0, 0, 1, 1], [], []>} : vector<32x16xf32>, vector<16x1xf32>, vector<32x1xf32> -> vector<32x1xf32>
    %c0_317 = arith.constant 0 : index
    %c0_318 = arith.constant 0 : index
    %406 = vector.load %arg10[%c0_317, %c0_318] : memref<32x1xf32, #tpu.memory_space<vmem>>, vector<32x1xf32>
    %407 = arith.addf %405, %406 : vector<32x1xf32>
    %c0_319 = arith.constant 0 : index
    %c0_320 = arith.constant 0 : index
    %408 = vector.load %arg11[%c0_319, %c0_320] : memref<32x1xf32, #tpu.memory_space<vmem>>, vector<32x1xf32>
    %409 = arith.mulf %407, %408 : vector<32x1xf32>
    %c0_321 = arith.constant 0 : index
    %c0_322 = arith.constant 0 : index
    %410 = vector.load %arg12[%c0_321, %c0_322] : memref<32x1xf32, #tpu.memory_space<vmem>>, vector<32x1xf32>
    %411 = arith.addf %409, %410 : vector<32x1xf32>
    %cst_323 = arith.constant 0.000000e+00 : f32
    %412 = vector.broadcast %cst_323 : f32 to vector<32x1xf32>
    %413 = arith.maximumf %411, %412 : vector<32x1xf32>
    %c0_324 = arith.constant 0 : index
    %c0_325 = arith.constant 0 : index
    %414 = vector.load %arg13[%c0_324, %c0_325] : memref<32x32xf32, #tpu.memory_space<vmem>>, vector<32x32xf32>
    %cst_326 = arith.constant dense<0.000000e+00> : vector<32x1xf32>
    %415 = tpu.matmul %414, %413, %cst_326 {dimension_numbers = #tpu.dot_dimension_numbers<[1], [0], [0], [1], [0, 0, 1, 1], [], []>} : vector<32x32xf32>, vector<32x1xf32>, vector<32x1xf32> -> vector<32x1xf32>
    %c0_327 = arith.constant 0 : index
    %c0_328 = arith.constant 0 : index
    %416 = vector.load %arg14[%c0_327, %c0_328] : memref<32x1xf32, #tpu.memory_space<vmem>>, vector<32x1xf32>
    %417 = arith.addf %415, %416 : vector<32x1xf32>
    %418 = vector.extract_strided_slice %417 {offsets = [0, 0], sizes = [16, 1], strides = [1, 1]} : vector<32x1xf32> to vector<16x1xf32>
    %419 = vector.extract_strided_slice %417 {offsets = [16, 0], sizes = [16, 1], strides = [1, 1]} : vector<32x1xf32> to vector<16x1xf32>
    %420 = arith.maximumf %418, %419 : vector<16x1xf32>
    %421 = arith.subf %418, %420 : vector<16x1xf32>
    %422 = math.exp %421 : vector<16x1xf32>
    %423 = arith.subf %419, %420 : vector<16x1xf32>
    %424 = math.exp %423 : vector<16x1xf32>
    %425 = arith.addf %422, %424 : vector<16x1xf32>
    %426 = arith.divf %422, %425 : vector<16x1xf32>
    %427 = arith.divf %424, %425 : vector<16x1xf32>
    %428 = vector.broadcast %426 : vector<16x1xf32> to vector<16x256xf32>
    %429 = arith.mulf %397, %428 : vector<16x256xf32>
    %430 = vector.broadcast %427 : vector<16x1xf32> to vector<16x256xf32>
    %431 = arith.mulf %398, %430 : vector<16x256xf32>
    %432 = arith.addf %429, %431 : vector<16x256xf32>
    %c0_329 = arith.constant 0 : index
    %c0_330 = arith.constant 0 : index
    %433 = vector.load %arg15[%c0_329, %c0_330] : memref<64x16xf32, #tpu.memory_space<vmem>>, vector<64x16xf32>
    %cst_331 = arith.constant dense<0.000000e+00> : vector<64x256xf32>
    %434 = tpu.matmul %433, %432, %cst_331 {dimension_numbers = #tpu.dot_dimension_numbers<[1], [0], [0], [1], [0, 0, 1, 1], [], []>} : vector<64x16xf32>, vector<16x256xf32>, vector<64x256xf32> -> vector<64x256xf32>
    %c0_332 = arith.constant 0 : index
    %c0_333 = arith.constant 0 : index
    %435 = vector.load %arg16[%c0_332, %c0_333] : memref<64x1xf32, #tpu.memory_space<vmem>>, vector<64x1xf32>
    %436 = vector.broadcast %435 : vector<64x1xf32> to vector<64x256xf32>
    %437 = arith.mulf %434, %436 : vector<64x256xf32>
    %c0_334 = arith.constant 0 : index
    %c0_335 = arith.constant 0 : index
    %438 = vector.load %arg17[%c0_334, %c0_335] : memref<64x1xf32, #tpu.memory_space<vmem>>, vector<64x1xf32>
    %439 = vector.broadcast %438 : vector<64x1xf32> to vector<64x256xf32>
    %440 = arith.addf %437, %439 : vector<64x256xf32>
    %441 = arith.addf %440, %1 : vector<64x256xf32>
    %cst_336 = arith.constant 0.000000e+00 : f32
    %442 = vector.broadcast %cst_336 : f32 to vector<64x256xf32>
    %443 = arith.maximumf %441, %442 : vector<64x256xf32>
    %c0_337 = arith.constant 0 : index
    %c0_338 = arith.constant 0 : index
    %c0_339 = arith.constant 0 : index
    %444 = vector.load %arg18[%c0_337, %c0_338, %c0_339] : memref<1x64x256xf32, #tpu.memory_space<vmem>>, vector<1x64x256xf32>
    %445 = vector.shape_cast %444 : vector<1x64x256xf32> to vector<64x256xf32>
    %446 = vector.shape_cast %443 : vector<64x256xf32> to vector<1x64x256xf32>
    tpu.vector_store %arg18[%c0_337, %c0_338, %c0_339], %446 {strides = array<i32>} : memref<1x64x256xf32, #tpu.memory_space<vmem>>, vector<1x64x256xf32>,
    return
  }
  func.func @transform_0(%arg0: i32) -> (i32, i32, i32) {
    %c0_i32 = arith.constant 0 : i32
    %c0_i32_0 = arith.constant 0 : i32
    %c0_i32_1 = arith.constant 0 : i32
    return %arg0, %c0_i32, %c0_i32_0 : i32, i32, i32
  }
  func.func @transform_1(%arg0: i32) -> (i32, i32) {
    %c0_i32 = arith.constant 0 : i32
    %c0_i32_0 = arith.constant 0 : i32
    %c0_i32_1 = arith.constant 0 : i32
    return %c0_i32, %c0_i32_0 : i32, i32
  }
  func.func @transform_2(%arg0: i32) -> (i32, i32) {
    %c0_i32 = arith.constant 0 : i32
    %c0_i32_0 = arith.constant 0 : i32
    %c0_i32_1 = arith.constant 0 : i32
    return %c0_i32, %c0_i32_0 : i32, i32
  }
  func.func @transform_3(%arg0: i32) -> (i32, i32) {
    %c0_i32 = arith.constant 0 : i32
    %c0_i32_0 = arith.constant 0 : i32
    %c0_i32_1 = arith.constant 0 : i32
    return %c0_i32, %c0_i32_0 : i32, i32
  }
  func.func @transform_4(%arg0: i32) -> (i32, i32) {
    %c0_i32 = arith.constant 0 : i32
    %c0_i32_0 = arith.constant 0 : i32
    %c0_i32_1 = arith.constant 0 : i32
    return %c0_i32, %c0_i32_0 : i32, i32
  }
  func.func @transform_5(%arg0: i32) -> (i32, i32, i32, i32) {
    %c0_i32 = arith.constant 0 : i32
    %c0_i32_0 = arith.constant 0 : i32
    %c0_i32_1 = arith.constant 0 : i32
    %c0_i32_2 = arith.constant 0 : i32
    %c0_i32_3 = arith.constant 0 : i32
    return %c0_i32, %c0_i32_0, %c0_i32_1, %c0_i32_2 : i32, i32, i32, i32
  }
  func.func @transform_6(%arg0: i32) -> (i32, i32) {
    %c0_i32 = arith.constant 0 : i32
    %c0_i32_0 = arith.constant 0 : i32
    %c0_i32_1 = arith.constant 0 : i32
    return %c0_i32, %c0_i32_0 : i32, i32
  }
  func.func @transform_7(%arg0: i32) -> (i32, i32) {
    %c0_i32 = arith.constant 0 : i32
    %c0_i32_0 = arith.constant 0 : i32
    %c0_i32_1 = arith.constant 0 : i32
    return %c0_i32, %c0_i32_0 : i32, i32
  }
  func.func @transform_8(%arg0: i32) -> (i32, i32) {
    %c0_i32 = arith.constant 0 : i32
    %c0_i32_0 = arith.constant 0 : i32
    %c0_i32_1 = arith.constant 0 : i32
    return %c0_i32, %c0_i32_0 : i32, i32
  }
  func.func @transform_9(%arg0: i32) -> (i32, i32) {
    %c0_i32 = arith.constant 0 : i32
    %c0_i32_0 = arith.constant 0 : i32
    %c0_i32_1 = arith.constant 0 : i32
    return %c0_i32, %c0_i32_0 : i32, i32
  }
  func.func @transform_10(%arg0: i32) -> (i32, i32) {
    %c0_i32 = arith.constant 0 : i32
    %c0_i32_0 = arith.constant 0 : i32
    %c0_i32_1 = arith.constant 0 : i32
    return %c0_i32, %c0_i32_0 : i32, i32
  }
  func.func @transform_11(%arg0: i32) -> (i32, i32) {
    %c0_i32 = arith.constant 0 : i32
    %c0_i32_0 = arith.constant 0 : i32
    %c0_i32_1 = arith.constant 0 : i32
    return %c0_i32, %c0_i32_0 : i32, i32
  }
  func.func @transform_12(%arg0: i32) -> (i32, i32) {
    %c0_i32 = arith.constant 0 : i32
    %c0_i32_0 = arith.constant 0 : i32
    %c0_i32_1 = arith.constant 0 : i32
    return %c0_i32, %c0_i32_0 : i32, i32
  }
  func.func @transform_13(%arg0: i32) -> (i32, i32) {
    %c0_i32 = arith.constant 0 : i32
    %c0_i32_0 = arith.constant 0 : i32
    %c0_i32_1 = arith.constant 0 : i32
    return %c0_i32, %c0_i32_0 : i32, i32
  }
  func.func @transform_14(%arg0: i32) -> (i32, i32) {
    %c0_i32 = arith.constant 0 : i32
    %c0_i32_0 = arith.constant 0 : i32
    %c0_i32_1 = arith.constant 0 : i32
    return %c0_i32, %c0_i32_0 : i32, i32
  }
  func.func @transform_15(%arg0: i32) -> (i32, i32) {
    %c0_i32 = arith.constant 0 : i32
    %c0_i32_0 = arith.constant 0 : i32
    %c0_i32_1 = arith.constant 0 : i32
    return %c0_i32, %c0_i32_0 : i32, i32
  }
  func.func @transform_16(%arg0: i32) -> (i32, i32) {
    %c0_i32 = arith.constant 0 : i32
    %c0_i32_0 = arith.constant 0 : i32
    %c0_i32_1 = arith.constant 0 : i32
    return %c0_i32, %c0_i32_0 : i32, i32
  }
  func.func @transform_17(%arg0: i32) -> (i32, i32, i32) {
    %c0_i32 = arith.constant 0 : i32
    %c0_i32_0 = arith.constant 0 : i32
    %c0_i32_1 = arith.constant 0 : i32
    return %arg0, %c0_i32, %c0_i32_0 : i32, i32, i32
  }
}

</mosaic_0001>

<llo_original>
// kernel: tpu_custom_call.1
$region0: #{tpu_custom_call.1}
  #allocation0 [shape = 'u32[]', space=smem, size = 0x4, offset = 0x4, fixed_abs, tag = 'smem constant byte address 0x4 - core index']
  #allocation1 [shape = 'u32[144,128]{1,0:T(1,128)}', space=vmem, size = 0x12000, scoped, tag = 'internal scratch']
  %s0 = inlined_call_operand.vmem [shape: f32[2,64,256], index: 0, kind: input, shape index: {}]
  %s1 = inlined_call_operand.vmem [shape: f32[27,256], index: 1, kind: input, shape index: {}]
  %s2 = inlined_call_operand.vmem [shape: f32[16,64], index: 2, kind: input, shape index: {}]
  %s3 = inlined_call_operand.vmem [shape: f32[16,1], index: 3, kind: input, shape index: {}]
  %s4 = inlined_call_operand.vmem [shape: f32[16,1], index: 4, kind: input, shape index: {}]
  %s5 = inlined_call_operand.vmem [shape: f32[27,2,16,8], index: 5, kind: input, shape index: {}]
  %s6 = inlined_call_operand.vmem [shape: f32[32,1], index: 6, kind: input, shape index: {}]
  %s7 = inlined_call_operand.vmem [shape: f32[32,1], index: 7, kind: input, shape index: {}]
  %s8 = inlined_call_operand.vmem [shape: f32[32,16], index: 8, kind: input, shape index: {}]
  %s9 = inlined_call_operand.vmem [shape: f32[32,1], index: 9, kind: input, shape index: {}]
  %s10 = inlined_call_operand.vmem [shape: f32[32,1], index: 10, kind: input, shape index: {}]
  %s11 = inlined_call_operand.vmem [shape: f32[32,1], index: 11, kind: input, shape index: {}]
  %s12 = inlined_call_operand.vmem [shape: f32[32,32], index: 12, kind: input, shape index: {}]
  %s13 = inlined_call_operand.vmem [shape: f32[32,1], index: 13, kind: input, shape index: {}]
  %s14 = inlined_call_operand.vmem [shape: f32[64,16], index: 14, kind: input, shape index: {}]
  %s15 = inlined_call_operand.vmem [shape: f32[64,1], index: 15, kind: input, shape index: {}]
  %s16 = inlined_call_operand.vmem [shape: f32[64,1], index: 16, kind: input, shape index: {}]
  %s17 = inlined_call_operand.hbm [shape: f32[2,64,256], index: 17, kind: output, shape index: {}]
  %s18 = sld [smem:[#allocation0]]
  $region101: #{tpu_custom_call.1} parent=0
    _
  %s20 = ssub.s32 1, %s18
  %s21 = scalar_select 0, %s20, %s18
  $region1: #{tpu_custom_call.1} parent=0
    #allocation2 [shape = 'u8[131072]{0}', space=vmem, size = 0x20000, scoped, tag = 'output window, operand 0']
    #allocation3 [shape = 's32[2]{0}', space=sflag, size = 0x8, scoped, tag = 'scoped memory for tpu_custom_call.1']
    %22 = vsyncpa [#allocation3], 0
    %s23 = scalar_lea.sflag [#allocation3], 1
    %24 = vsyncpa %s23, 0
    loop: start=0, step=1, limit=4
    $region2: #{tpu_custom_call.1} parent=1 // loop_pre_header
      _
    $region3: #{tpu_custom_call.1} parent=1 // loop_header
      %s26 = sphi 0, %s30
      %p27 = scmp.ge.s32.totalorder %s26, 4
      %s36 = sphi 0, %s38
      %s39 = sphi 0, %s36
      %s40 = sphi 0, %s39
      %s56 = sphi 0, %s40
      %s60 = sphi 0, %s60
      %s62 = sphi 0, %s60
      %s63 = sphi 0, %s62
      %s77 = sphi 0, %s63
      %s81 = sphi 0, %s81
      %s83 = sphi 0, %s81
      %s84 = sphi 0, %s83
      %s98 = sphi 0, %s84
      %s102 = sphi 0, %s102
      %s104 = sphi 0, %s102
      %s105 = sphi 0, %s104
      %s119 = sphi 0, %s105
      %s123 = sphi 0, %s123
      %s125 = sphi 0, %s123
      %s126 = sphi 0, %s125
      %s140 = sphi 0, %s126
      %s144 = sphi 0, %s144
      %s146 = sphi 0, %s144
      %s147 = sphi 0, %s146
      %s161 = sphi 0, %s147
      %s165 = sphi 0, %s165
      %s167 = sphi 0, %s165
      %s168 = sphi 0, %s167
      %s182 = sphi 0, %s168
      %s186 = sphi 0, %s186
      %s188 = sphi 0, %s186
      %s189 = sphi 0, %s188
      %s203 = sphi 0, %s189
      %s207 = sphi 0, %s207
      %s209 = sphi 0, %s207
      %s210 = sphi 0, %s209
      %s224 = sphi 0, %s210
      %s228 = sphi 0, %s228
      %s230 = sphi 0, %s228
      %s231 = sphi 0, %s230
      %s245 = sphi 0, %s231
      %s249 = sphi 0, %s249
      %s251 = sphi 0, %s249
      %s252 = sphi 0, %s251
      %s266 = sphi 0, %s252
      %s270 = sphi 0, %s270
      %s272 = sphi 0, %s270
      %s273 = sphi 0, %s272
      %s287 = sphi 0, %s273
      %s291 = sphi 0, %s291
      %s293 = sphi 0, %s291
      %s294 = sphi 0, %s293
      %s308 = sphi 0, %s294
      %s312 = sphi 0, %s312
      %s314 = sphi 0, %s312
      %s315 = sphi 0, %s314
      %s329 = sphi 0, %s315
      %s333 = sphi 0, %s333
      %s335 = sphi 0, %s333
      %s336 = sphi 0, %s335
      %s350 = sphi 0, %s336
      %s354 = sphi 0, %s354
      %s356 = sphi 0, %s354
      %s357 = sphi 0, %s356
      %s371 = sphi 0, %s357
      %s375 = sphi 0, %s375
      %s377 = sphi 0, %s375
      %s378 = sphi 0, %s377
      %s392 = sphi 0, %s378
      %s398 = sphi 0, %s400
      %s401 = sphi 0, %s398
      %s402 = sphi 0, %s401
      %s418 = sphi 0, %s402
    $region4: #{tpu_custom_call.1} parent=1 // loop_header_branch
      %29 = sbr.rel (%p27) target = $region8
    $region5: #{tpu_custom_call.1} parent=1 // loop_body
      %s31 = ssub.s32 %s26, 1
      %s32 = ssub.s32 %s26, 2
      %s33 = sadd.s32 %s26, 1
      %s34 = ssub.s32 %s26, %s33
      %p35 = scmp.eq.s32.totalorder %s34, 0
      %s37 = sadd.s32 %s36, 1
      %s38 = scalar_select %p35, %s36, %s37
      %p41 = pneg %p35
      %p42 = scmp.eq.s32.totalorder %s26, 1
      %p43 = por %p41, %p42
      %p44 = scmp.ne.s32.totalorder %s36, %s39
      %p45 = scmp.eq.s32.totalorder %s26, 0
      %p46 = por %p44, %p45
      %p47 = scmp.ne.s32.totalorder %s36, %s39
      %p48 = scmp.eq.s32.totalorder %s31, 1
      %p49 = por %p47, %p48
      %p50 = scmp.ne.s32.totalorder %s39, %s40
      %p51 = scmp.eq.s32.totalorder %s31, 0
      %p52 = por %p50, %p51
      %p53 = scmp.ne.s32.totalorder %s39, %s40
      %p54 = scmp.eq.s32.totalorder %s32, 1
      %p55 = por %p53, %p54
      %p57 = scmp.ne.s32.totalorder %s40, %s56
      %p58 = scmp.eq.s32.totalorder %s32, 0
      %p59 = por %p57, %p58
      %s61 = sadd.s32 %s60, 1
      %p64 = scmp.eq.s32.totalorder %s26, 1
      %p65 = scmp.ne.s32.totalorder %s60, %s62
      %p66 = scmp.eq.s32.totalorder %s26, 0
      %p67 = por %p65, %p66
      %p68 = scmp.ne.s32.totalorder %s60, %s62
      %p69 = scmp.eq.s32.totalorder %s31, 1
      %p70 = por %p68, %p69
      %p71 = scmp.ne.s32.totalorder %s62, %s63
      %p72 = scmp.eq.s32.totalorder %s31, 0
      %p73 = por %p71, %p72
      %p74 = scmp.ne.s32.totalorder %s62, %s63
      %p75 = scmp.eq.s32.totalorder %s32, 1
      %p76 = por %p74, %p75
      %p78 = scmp.ne.s32.totalorder %s63, %s77
      %p79 = scmp.eq.s32.totalorder %s32, 0
      %p80 = por %p78, %p79
      %s82 = sadd.s32 %s81, 1
      %p85 = scmp.eq.s32.totalorder %s26, 1
      %p86 = scmp.ne.s32.totalorder %s81, %s83
      %p87 = scmp.eq.s32.totalorder %s26, 0
      %p88 = por %p86, %p87
      %p89 = scmp.ne.s32.totalorder %s81, %s83
      %p90 = scmp.eq.s32.totalorder %s31, 1
      %p91 = por %p89, %p90
      %p92 = scmp.ne.s32.totalorder %s83, %s84
      %p93 = scmp.eq.s32.totalorder %s31, 0
      %p94 = por %p92, %p93
      %p95 = scmp.ne.s32.totalorder %s83, %s84
      %p96 = scmp.eq.s32.totalorder %s32, 1
      %p97 = por %p95, %p96
      %p99 = scmp.ne.s32.totalorder %s84, %s98
      %p100 = scmp.eq.s32.totalorder %s32, 0
      %p101 = por %p99, %p100
      %s103 = sadd.s32 %s102, 1
      %p106 = scmp.eq.s32.totalorder %s26, 1
      %p107 = scmp.ne.s32.totalorder %s102, %s104
      %p108 = scmp.eq.s32.totalorder %s26, 0
      %p109 = por %p107, %p108
      %p110 = scmp.ne.s32.totalorder %s102, %s104
      %p111 = scmp.eq.s32.totalorder %s31, 1
      %p112 = por %p110, %p111
      %p113 = scmp.ne.s32.totalorder %s104, %s105
      %p114 = scmp.eq.s32.totalorder %s31, 0
      %p115 = por %p113, %p114
      %p116 = scmp.ne.s32.totalorder %s104, %s105
      %p117 = scmp.eq.s32.totalorder %s32, 1
      %p118 = por %p116, %p117
      %p120 = scmp.ne.s32.totalorder %s105, %s119
      %p121 = scmp.eq.s32.totalorder %s32, 0
      %p122 = por %p120, %p121
      %s124 = sadd.s32 %s123, 1
      %p127 = scmp.eq.s32.totalorder %s26, 1
      %p128 = scmp.ne.s32.totalorder %s123, %s125
      %p129 = scmp.eq.s32.totalorder %s26, 0
      %p130 = por %p128, %p129
      %p131 = scmp.ne.s32.totalorder %s123, %s125
      %p132 = scmp.eq.s32.totalorder %s31, 1
      %p133 = por %p131, %p132
      %p134 = scmp.ne.s32.totalorder %s125, %s126
      %p135 = scmp.eq.s32.totalorder %s31, 0
      %p136 = por %p134, %p135
      %p137 = scmp.ne.s32.totalorder %s125, %s126
      %p138 = scmp.eq.s32.totalorder %s32, 1
      %p139 = por %p137, %p138
      %p141 = scmp.ne.s32.totalorder %s126, %s140
      %p142 = scmp.eq.s32.totalorder %s32, 0
      %p143 = por %p141, %p142
      %s145 = sadd.s32 %s144, 1
      %p148 = scmp.eq.s32.totalorder %s26, 1
      %p149 = scmp.ne.s32.totalorder %s144, %s146
      %p150 = scmp.eq.s32.totalorder %s26, 0
      %p151 = por %p149, %p150
      %p152 = scmp.ne.s32.totalorder %s144, %s146
      %p153 = scmp.eq.s32.totalorder %s31, 1
      %p154 = por %p152, %p153
      %p155 = scmp.ne.s32.totalorder %s146, %s147
      %p156 = scmp.eq.s32.totalorder %s31, 0
      %p157 = por %p155, %p156
      %p158 = scmp.ne.s32.totalorder %s146, %s147
      %p159 = scmp.eq.s32.totalorder %s32, 1
      %p160 = por %p158, %p159
      %p162 = scmp.ne.s32.totalorder %s147, %s161
      %p163 = scmp.eq.s32.totalorder %s32, 0
      %p164 = por %p162, %p163
      %s166 = sadd.s32 %s165, 1
      %p169 = scmp.eq.s32.totalorder %s26, 1
      %p170 = scmp.ne.s32.totalorder %s165, %s167
      %p171 = scmp.eq.s32.totalorder %s26, 0
      %p172 = por %p170, %p171
      %p173 = scmp.ne.s32.totalorder %s165, %s167
      %p174 = scmp.eq.s32.totalorder %s31, 1
      %p175 = por %p173, %p174
      %p176 = scmp.ne.s32.totalorder %s167, %s168
      %p177 = scmp.eq.s32.totalorder %s31, 0
      %p178 = por %p176, %p177
      %p179 = scmp.ne.s32.totalorder %s167, %s168
      %p180 = scmp.eq.s32.totalorder %s32, 1
      %p181 = por %p179, %p180
      %p183 = scmp.ne.s32.totalorder %s168, %s182
      %p184 = scmp.eq.s32.totalorder %s32, 0
      %p185 = por %p183, %p184
      %s187 = sadd.s32 %s186, 1
      %p190 = scmp.eq.s32.totalorder %s26, 1
      %p191 = scmp.ne.s32.totalorder %s186, %s188
      %p192 = scmp.eq.s32.totalorder %s26, 0
      %p193 = por %p191, %p192
      %p194 = scmp.ne.s32.totalorder %s186, %s188
      %p195 = scmp.eq.s32.totalorder %s31, 1
      %p196 = por %p194, %p195
      %p197 = scmp.ne.s32.totalorder %s188, %s189
      %p198 = scmp.eq.s32.totalorder %s31, 0
      %p199 = por %p197, %p198
      %p200 = scmp.ne.s32.totalorder %s188, %s189
      %p201 = scmp.eq.s32.totalorder %s32, 1
      %p202 = por %p200, %p201
      %p204 = scmp.ne.s32.totalorder %s189, %s203
      %p205 = scmp.eq.s32.totalorder %s32, 0
      %p206 = por %p204, %p205
      %s208 = sadd.s32 %s207, 1
      %p211 = scmp.eq.s32.totalorder %s26, 1
      %p212 = scmp.ne.s32.totalorder %s207, %s209
      %p213 = scmp.eq.s32.totalorder %s26, 0
      %p214 = por %p212, %p213
      %p215 = scmp.ne.s32.totalorder %s207, %s209
      %p216 = scmp.eq.s32.totalorder %s31, 1
      %p217 = por %p215, %p216
      %p218 = scmp.ne.s32.totalorder %s209, %s210
      %p219 = scmp.eq.s32.totalorder %s31, 0
      %p220 = por %p218, %p219
      %p221 = scmp.ne.s32.totalorder %s209, %s210
      %p222 = scmp.eq.s32.totalorder %s32, 1
      %p223 = por %p221, %p222
      %p225 = scmp.ne.s32.totalorder %s210, %s224
      %p226 = scmp.eq.s32.totalorder %s32, 0
      %p227 = por %p225, %p226
      %s229 = sadd.s32 %s228, 1
      %p232 = scmp.eq.s32.totalorder %s26, 1
      %p233 = scmp.ne.s32.totalorder %s228, %s230
      %p234 = scmp.eq.s32.totalorder %s26, 0
      %p235 = por %p233, %p234
      %p236 = scmp.ne.s32.totalorder %s228, %s230
      %p237 = scmp.eq.s32.totalorder %s31, 1
      %p238 = por %p236, %p237
      %p239 = scmp.ne.s32.totalorder %s230, %s231
      %p240 = scmp.eq.s32.totalorder %s31, 0
      %p241 = por %p239, %p240
      %p242 = scmp.ne.s32.totalorder %s230, %s231
      %p243 = scmp.eq.s32.totalorder %s32, 1
      %p244 = por %p242, %p243
      %p246 = scmp.ne.s32.totalorder %s231, %s245
      %p247 = scmp.eq.s32.totalorder %s32, 0
      %p248 = por %p246, %p247
      %s250 = sadd.s32 %s249, 1
      %p253 = scmp.eq.s32.totalorder %s26, 1
      %p254 = scmp.ne.s32.totalorder %s249, %s251
      %p255 = scmp.eq.s32.totalorder %s26, 0
      %p256 = por %p254, %p255
      %p257 = scmp.ne.s32.totalorder %s249, %s251
      %p258 = scmp.eq.s32.totalorder %s31, 1
      %p259 = por %p257, %p258
      %p260 = scmp.ne.s32.totalorder %s251, %s252
      %p261 = scmp.eq.s32.totalorder %s31, 0
      %p262 = por %p260, %p261
      %p263 = scmp.ne.s32.totalorder %s251, %s252
      %p264 = scmp.eq.s32.totalorder %s32, 1
      %p265 = por %p263, %p264
      %p267 = scmp.ne.s32.totalorder %s252, %s266
      %p268 = scmp.eq.s32.totalorder %s32, 0
      %p269 = por %p267, %p268
      %s271 = sadd.s32 %s270, 1
      %p274 = scmp.eq.s32.totalorder %s26, 1
      %p275 = scmp.ne.s32.totalorder %s270, %s272
      %p276 = scmp.eq.s32.totalorder %s26, 0
      %p277 = por %p275, %p276
      %p278 = scmp.ne.s32.totalorder %s270, %s272
      %p279 = scmp.eq.s32.totalorder %s31, 1
      %p280 = por %p278, %p279
      %p281 = scmp.ne.s32.totalorder %s272, %s273
      %p282 = scmp.eq.s32.totalorder %s31, 0
      %p283 = por %p281, %p282
      %p284 = scmp.ne.s32.totalorder %s272, %s273
      %p285 = scmp.eq.s32.totalorder %s32, 1
      %p286 = por %p284, %p285
      %p288 = scmp.ne.s32.totalorder %s273, %s287
      %p289 = scmp.eq.s32.totalorder %s32, 0
      %p290 = por %p288, %p289
      %s292 = sadd.s32 %s291, 1
      %p295 = scmp.eq.s32.totalorder %s26, 1
      %p296 = scmp.ne.s32.totalorder %s291, %s293
      %p297 = scmp.eq.s32.totalorder %s26, 0
      %p298 = por %p296, %p297
      %p299 = scmp.ne.s32.totalorder %s291, %s293
      %p300 = scmp.eq.s32.totalorder %s31, 1
      %p301 = por %p299, %p300
      %p302 = scmp.ne.s32.totalorder %s293, %s294
      %p303 = scmp.eq.s32.totalorder %s31, 0
      %p304 = por %p302, %p303
      %p305 = scmp.ne.s32.totalorder %s293, %s294
      %p306 = scmp.eq.s32.totalorder %s32, 1
      %p307 = por %p305, %p306
      %p309 = scmp.ne.s32.totalorder %s294, %s308
      %p310 = scmp.eq.s32.totalorder %s32, 0
      %p311 = por %p309, %p310
      %s313 = sadd.s32 %s312, 1
      %p316 = scmp.eq.s32.totalorder %s26, 1
      %p317 = scmp.ne.s32.totalorder %s312, %s314
      %p318 = scmp.eq.s32.totalorder %s26, 0
      %p319 = por %p317, %p318
      %p320 = scmp.ne.s32.totalorder %s312, %s314
      %p321 = scmp.eq.s32.totalorder %s31, 1
      %p322 = por %p320, %p321
      %p323 = scmp.ne.s32.totalorder %s314, %s315
      %p324 = scmp.eq.s32.totalorder %s31, 0
      %p325 = por %p323, %p324
      %p326 = scmp.ne.s32.totalorder %s314, %s315
      %p327 = scmp.eq.s32.totalorder %s32, 1
      %p328 = por %p326, %p327
      %p330 = scmp.ne.s32.totalorder %s315, %s329
      %p331 = scmp.eq.s32.totalorder %s32, 0
      %p332 = por %p330, %p331
      %s334 = sadd.s32 %s333, 1
      %p337 = scmp.eq.s32.totalorder %s26, 1
      %p338 = scmp.ne.s32.totalorder %s333, %s335
      %p339 = scmp.eq.s32.totalorder %s26, 0
      %p340 = por %p338, %p339
      %p341 = scmp.ne.s32.totalorder %s333, %s335
      %p342 = scmp.eq.s32.totalorder %s31, 1
      %p343 = por %p341, %p342
      %p344 = scmp.ne.s32.totalorder %s335, %s336
      %p345 = scmp.eq.s32.totalorder %s31, 0
      %p346 = por %p344, %p345
      %p347 = scmp.ne.s32.totalorder %s335, %s336
      %p348 = scmp.eq.s32.totalorder %s32, 1
      %p349 = por %p347, %p348
      %p351 = scmp.ne.s32.totalorder %s336, %s350
      %p352 = scmp.eq.s32.totalorder %s32, 0
      %p353 = por %p351, %p352
      %s355 = sadd.s32 %s354, 1
      %p358 = scmp.eq.s32.totalorder %s26, 1
      %p359 = scmp.ne.s32.totalorder %s354, %s356
      %p360 = scmp.eq.s32.totalorder %s26, 0
      %p361 = por %p359, %p360
      %p362 = scmp.ne.s32.totalorder %s354, %s356
      %p363 = scmp.eq.s32.totalorder %s31, 1
      %p364 = por %p362, %p363
      %p365 = scmp.ne.s32.totalorder %s356, %s357
      %p366 = scmp.eq.s32.totalorder %s31, 0
      %p367 = por %p365, %p366
      %p368 = scmp.ne.s32.totalorder %s356, %s357
      %p369 = scmp.eq.s32.totalorder %s32, 1
      %p370 = por %p368, %p369
      %p372 = scmp.ne.s32.totalorder %s357, %s371
      %p373 = scmp.eq.s32.totalorder %s32, 0
      %p374 = por %p372, %p373
      %s376 = sadd.s32 %s375, 1
      %p379 = scmp.eq.s32.totalorder %s26, 1
      %p380 = scmp.ne.s32.totalorder %s375, %s377
      %p381 = scmp.eq.s32.totalorder %s26, 0
      %p382 = por %p380, %p381
      %p383 = scmp.ne.s32.totalorder %s375, %s377
      %p384 = scmp.eq.s32.totalorder %s31, 1
      %p385 = por %p383, %p384
      %p386 = scmp.ne.s32.totalorder %s377, %s378
      %p387 = scmp.eq.s32.totalorder %s31, 0
      %p388 = por %p386, %p387
      %p389 = scmp.ne.s32.totalorder %s377, %s378
      %p390 = scmp.eq.s32.totalorder %s32, 1
      %p391 = por %p389, %p390
      %p393 = scmp.ne.s32.totalorder %s378, %s392
      %p394 = scmp.eq.s32.totalorder %s32, 0
      %p395 = por %p393, %p394
      %s396 = ssub.s32 %s26, %s33
      %p397 = scmp.eq.s32.totalorder %s396, 0
      %s399 = sadd.s32 %s398, 1
      %s400 = scalar_select %p397, %s398, %s399
      %p403 = pneg %p397
      %p404 = scmp.eq.s32.totalorder %s26, 1
      %p405 = por %p403, %p404
      %p406 = scmp.ne.s32.totalorder %s398, %s401
      %p407 = scmp.eq.s32.totalorder %s26, 0
      %p408 = por %p406, %p407
      %p409 = scmp.ne.s32.totalorder %s398, %s401
      %p410 = scmp.eq.s32.totalorder %s31, 1
      %p411 = por %p409, %p410
      %p412 = scmp.ne.s32.totalorder %s401, %s402
      %p413 = scmp.eq.s32.totalorder %s31, 0
      %p414 = por %p412, %p413
      %p415 = scmp.ne.s32.totalorder %s401, %s402
      %p416 = scmp.eq.s32.totalorder %s32, 1
      %p417 = por %p415, %p416
      %p419 = scmp.ne.s32.totalorder %s402, %s418
      %p420 = scmp.eq.s32.totalorder %s32, 0
      %p421 = por %p419, %p420
      %p422 = scmp.le.s32.totalorder 1, %s26
      %p423 = scmp.lt.s32.totalorder %s26, 3
      %p424 = pnand %p422, %p423
      %p425 = pneg %p424
      // Predicated region
      $region9: #{tpu_custom_call.1} parent=5 // pred_check
        _
      $region10: #{tpu_custom_call.1} parent=5 // pred_check_branch
        %427 = sbr.rel (%p424) target = $region12
      $region11: #{tpu_custom_call.1} parent=5 // pred_region
        %s428 = ssub.s32 %s26, 1
        // Predicated region
        $region13: #{tpu_custom_call.1} parent=11 // pred_check
          %p429 = pneg %p73
        $region14: #{tpu_custom_call.1} parent=11 // pred_check_branch
          %431 = sbr.rel (%p429) target = $region16
        $region15: #{tpu_custom_call.1} parent=11 // pred_region
          _
        $region16: #{tpu_custom_call.1} parent=11 // pred_fallthru
          _
        // Predicated region
        $region17: #{tpu_custom_call.1} parent=11 // pred_check
          %p432 = pneg %p94
        $region18: #{tpu_custom_call.1} parent=11 // pred_check_branch
          %434 = sbr.rel (%p432) target = $region20
        $region19: #{tpu_custom_call.1} parent=11 // pred_region
          _
        $region20: #{tpu_custom_call.1} parent=11 // pred_fallthru
          _
        // Predicated region
        $region21: #{tpu_custom_call.1} parent=11 // pred_check
          %p435 = pneg %p115
        $region22: #{tpu_custom_call.1} parent=11 // pred_check_branch
          %437 = sbr.rel (%p435) target = $region24
        $region23: #{tpu_custom_call.1} parent=11 // pred_region
          _
        $region24: #{tpu_custom_call.1} parent=11 // pred_fallthru
          _
        // Predicated region
        $region25: #{tpu_custom_call.1} parent=11 // pred_check
          %p438 = pneg %p136
        $region26: #{tpu_custom_call.1} parent=11 // pred_check_branch
          %440 = sbr.rel (%p438) target = $region28
        $region27: #{tpu_custom_call.1} parent=11 // pred_region
          _
        $region28: #{tpu_custom_call.1} parent=11 // pred_fallthru
          _
        // Predicated region
        $region29: #{tpu_custom_call.1} parent=11 // pred_check
          %p441 = pneg %p157
        $region30: #{tpu_custom_call.1} parent=11 // pred_check_branch
          %443 = sbr.rel (%p441) target = $region32
        $region31: #{tpu_custom_call.1} parent=11 // pred_region
          _
        $region32: #{tpu_custom_call.1} parent=11 // pred_fallthru
          _
        // Predicated region
        $region33: #{tpu_custom_call.1} parent=11 // pred_check
          %p444 = pneg %p178
        $region34: #{tpu_custom_call.1} parent=11 // pred_check_branch
          %446 = sbr.rel (%p444) target = $region36
        $region35: #{tpu_custom_call.1} parent=11 // pred_region
          _
        $region36: #{tpu_custom_call.1} parent=11 // pred_fallthru
          _
        // Predicated region
        $region37: #{tpu_custom_call.1} parent=11 // pred_check
          %p447 = pneg %p199
        $region38: #{tpu_custom_call.1} parent=11 // pred_check_branch
          %449 = sbr.rel (%p447) target = $region40
        $region39: #{tpu_custom_call.1} parent=11 // pred_region
          _
        $region40: #{tpu_custom_call.1} parent=11 // pred_fallthru
          _
        // Predicated region
        $region41: #{tpu_custom_call.1} parent=11 // pred_check
          %p450 = pneg %p220
        $region42: #{tpu_custom_call.1} parent=11 // pred_check_branch
          %452 = sbr.rel (%p450) target = $region44
        $region43: #{tpu_custom_call.1} parent=11 // pred_region
          _
        $region44: #{tpu_custom_call.1} parent=11 // pred_fallthru
          _
        // Predicated region
        $region45: #{tpu_custom_call.1} parent=11 // pred_check
          %p453 = pneg %p241
        $region46: #{tpu_custom_call.1} parent=11 // pred_check_branch
          %455 = sbr.rel (%p453) target = $region48
        $region47: #{tpu_custom_call.1} parent=11 // pred_region
          _
        $region48: #{tpu_custom_call.1} parent=11 // pred_fallthru
          _
        // Predicated region
        $region49: #{tpu_custom_call.1} parent=11 // pred_check
          %p456 = pneg %p262
        $region50: #{tpu_custom_call.1} parent=11 // pred_check_branch
          %458 = sbr.rel (%p456) target = $region52
        $region51: #{tpu_custom_call.1} parent=11 // pred_region
          _
        $region52: #{tpu_custom_call.1} parent=11 // pred_fallthru
          _
        // Predicated region
        $region53: #{tpu_custom_call.1} parent=11 // pred_check
          %p459 = pneg %p283
        $region54: #{tpu_custom_call.1} parent=11 // pred_check_branch
          %461 = sbr.rel (%p459) target = $region56
        $region55: #{tpu_custom_call.1} parent=11 // pred_region
          _
        $region56: #{tpu_custom_call.1} parent=11 // pred_fallthru
          _
        // Predicated region
        $region57: #{tpu_custom_call.1} parent=11 // pred_check
          %p462 = pneg %p304
        $region58: #{tpu_custom_call.1} parent=11 // pred_check_branch
          %464 = sbr.rel (%p462) target = $region60
        $region59: #{tpu_custom_call.1} parent=11 // pred_region
          _
        $region60: #{tpu_custom_call.1} parent=11 // pred_fallthru
          _
        // Predicated region
        $region61: #{tpu_custom_call.1} parent=11 // pred_check
          %p465 = pneg %p325
        $region62: #{tpu_custom_call.1} parent=11 // pred_check_branch
          %467 = sbr.rel (%p465) target = $region64
        $region63: #{tpu_custom_call.1} parent=11 // pred_region
          _
        $region64: #{tpu_custom_call.1} parent=11 // pred_fallthru
          _
        // Predicated region
        $region65: #{tpu_custom_call.1} parent=11 // pred_check
          %p468 = pneg %p346
        $region66: #{tpu_custom_call.1} parent=11 // pred_check_branch
          %470 = sbr.rel (%p468) target = $region68
        $region67: #{tpu_custom_call.1} parent=11 // pred_region
          _
        $region68: #{tpu_custom_call.1} parent=11 // pred_fallthru
          _
        // Predicated region
        $region69: #{tpu_custom_call.1} parent=11 // pred_check
          %p471 = pneg %p367
        $region70: #{tpu_custom_call.1} parent=11 // pred_check_branch
          %473 = sbr.rel (%p471) target = $region72
        $region71: #{tpu_custom_call.1} parent=11 // pred_region
          _
        $region72: #{tpu_custom_call.1} parent=11 // pred_fallthru
          _
        // Predicated region
        $region73: #{tpu_custom_call.1} parent=11 // pred_check
          %p474 = pneg %p388
        $region74: #{tpu_custom_call.1} parent=11 // pred_check_branch
          %476 = sbr.rel (%p474) target = $region76
        $region75: #{tpu_custom_call.1} parent=11 // pred_region
          _
        $region76: #{tpu_custom_call.1} parent=11 // pred_fallthru
          _
      $region12: #{tpu_custom_call.1} parent=5 // pred_fallthru
        _
      %p477 = scmp.lt.s32.totalorder %s26, 2
      // Predicated region
      $region77: #{tpu_custom_call.1} parent=5 // pred_check
        %p478 = pneg %p477
      $region78: #{tpu_custom_call.1} parent=5 // pred_check_branch
        %480 = sbr.rel (%p478) target = $region80
      $region79: #{tpu_custom_call.1} parent=5 // pred_region
        // Predicated region
        $region81: #{tpu_custom_call.1} parent=79 // pred_check
          %p481 = pneg %p46
        $region82: #{tpu_custom_call.1} parent=79 // pred_check_branch
          %483 = sbr.rel (%p481) target = $region84
        $region83: #{tpu_custom_call.1} parent=79 // pred_region
          %p484 = scmp.lt.s32.totalorder %s26, 1
          %s485 = scalar_select %p484, %s26, 1
          %s486 = smul.addr %s485, 16
          %s487 = smul.addr %s486, 8
          %s488 = scalar_lea.vmem %s0, %s487
        $region84: #{tpu_custom_call.1} parent=79 // pred_fallthru
          _
      $region80: #{tpu_custom_call.1} parent=5 // pred_fallthru
        _
      %p489 = scmp.le.s32.totalorder 1, %s26
      %p490 = scmp.lt.s32.totalorder %s26, 3
      %p491 = pnand %p489, %p490
      %p492 = pneg %p491
      // Predicated region
      $region85: #{tpu_custom_call.1} parent=5 // pred_check
        _
      $region86: #{tpu_custom_call.1} parent=5 // pred_check_branch
        %494 = sbr.rel (%p491) target = $region88
      $region87: #{tpu_custom_call.1} parent=5 // pred_region
        %s495 = ssub.s32 %s26, 1
        %p496 = scmp.lt.s32.totalorder %s31, 1
        %s497 = scalar_select %p496, %s31, 1
        %s498 = smul.addr %s497, 16
        %s499 = smul.addr %s498, 8
        %s500 = scalar_lea.vmem %s0, %s499
        %p501 = pneg %p52
        %p502 = pneg %p49
        %p503 = pneg %p73
        %p504 = pneg %p70
        %p505 = pneg %p94
        %p506 = pneg %p91
        %p507 = pneg %p115
        %p508 = pneg %p112
        %p509 = pneg %p136
        %p510 = pneg %p133
        %p511 = pneg %p157
        %p512 = pneg %p154
        %p513 = pneg %p178
        %p514 = pneg %p175
        %p515 = pneg %p199
        %p516 = pneg %p196
        %p517 = pneg %p220
        %p518 = pneg %p217
        %p519 = pneg %p241
        %p520 = pneg %p238
        %p521 = pneg %p262
        %p522 = pneg %p259
        %p523 = pneg %p283
        %p524 = pneg %p280
        %p525 = pneg %p304
        %p526 = pneg %p301
        %p527 = pneg %p325
        %p528 = pneg %p322
        %p529 = pneg %p346
        %p530 = pneg %p343
        %p531 = pneg %p367
        %p532 = pneg %p364
        %p533 = pneg %p388
        %p534 = pneg %p385
        %p535 = pneg %p414
        %p536 = pneg %p411
        %s537 = sand.u32 %s401, 1
        %s538 = scalar_lea.sflag [#allocation3], %s537
        %s539 = sand.u32 %s401, 1
        %s540 = smul.addr %s539, 128
        %s541 = scalar_lea.vmem [#allocation2], %s540
        %p542 = scmp.lt.s32.totalorder %s31, 1
        %s543 = scalar_select %p542, %s31, 1
        %s544 = smul.addr %s543, 16
        %s545 = smul.addr %s544, 8
        %s546 = scalar_lea.vmem %s0, %s545
        %v547 = vld [vmem:[%s546] sm:$0xff]
        %v548 = vld [vmem:[%s546 + $0x8] sm:$0xff]
        %v549 = vld [vmem:[%s546 + $0x10] sm:$0xff]
        %v550 = vld [vmem:[%s546 + $0x18] sm:$0xff]
        %v551 = vld [vmem:[%s546 + $0x20] sm:$0xff]
        %v552 = vld [vmem:[%s546 + $0x28] sm:$0xff]
        %v553 = vld [vmem:[%s546 + $0x30] sm:$0xff]
        %v554 = vld [vmem:[%s546 + $0x38] sm:$0xff]
        %v555 = vld [vmem:[%s546 + $0x40] sm:$0xff]
        %v556 = vld [vmem:[%s546 + $0x48] sm:$0xff]
        %v557 = vld [vmem:[%s546 + $0x50] sm:$0xff]
        %v558 = vld [vmem:[%s546 + $0x58] sm:$0xff]
        %v559 = vld [vmem:[%s546 + $0x60] sm:$0xff]
        %v560 = vld [vmem:[%s546 + $0x68] sm:$0xff]
        %v561 = vld [vmem:[%s546 + $0x70] sm:$0xff]
        %v562 = vld [vmem:[%s546 + $0x78] sm:$0xff]
        %v563 = vld [vmem:[%s2] sm:$0xff]
        %v564 = vld [vmem:[%s2 + $0x8] sm:$0xff]
        %vm565 = vcmask 523264
        %v567 = vsel %vm565, %v563, 0
        %v570 = vsel %vm565, %v564, 0
        %572 = vmatprep.subr.mxu0 %v548
        %573 = vmatpush1.msra.mxu0 %v547
        %574 = vmatprep.subr.mxu0 %v550
        %575 = vmatpush1.msra.mxu0 %v549
        %576 = vmatprep.subr.mxu0 %v552
        %577 = vmatpush1.msra.mxu0 %v551
        %578 = vmatprep.subr.mxu0 %v554
        %579 = vmatpush1.msra.mxu0 %v553
        %580 = vmatprep.subr.mxu0 %v556
        %581 = vmatpush1.msra.mxu0 %v555
        %582 = vmatprep.subr.mxu0 %v558
        %583 = vmatpush1.msra.mxu0 %v557
        %584 = vmatprep.subr.mxu0 %v560
        %585 = vmatpush1.msra.mxu0 %v559
        %586 = vmatprep.subr.mxu0 %v562
        %587 = vmatpush1.msra.mxu0 %v561
        %588 = vmatprep.subr.mxu0 0.0
        %589 = vmatpush1.msra.mxu0 0.0
        %590 = vmatprep.subr.mxu0 0.0
        %591 = vmatpush1.msra.mxu0 0.0
        %592 = vmatprep.subr.mxu0 0.0
        %593 = vmatpush1.msra.mxu0 0.0
        %594 = vmatprep.subr.mxu0 0.0
        %595 = vmatpush1.msra.mxu0 0.0
        %596 = vmatprep.subr.mxu0 0.0
        %597 = vmatpush1.msra.mxu0 0.0
        %598 = vmatprep.subr.mxu0 0.0
        %599 = vmatpush1.msra.mxu0 0.0
        %600 = vmatprep.subr.mxu0 0.0
        %601 = vmatpush1.msra.mxu0 0.0
        %602 = vmatprep.subr.mxu0 0.0
        %603 = vmatpush1.msra.mxu0 0.0
        %604 = vmatprep.subr.mxu0 0.0
        %605 = vmatpush1.msra.mxu0 0.0
        %606 = vmatprep.subr.mxu0 0.0
        %607 = vmatpush1.msra.mxu0 0.0
        %608 = vmatprep.subr.mxu0 0.0
        %609 = vmatpush1.msra.mxu0 0.0
        %610 = vmatprep.subr.mxu0 0.0
        %611 = vmatpush1.msra.mxu0 0.0
        %612 = vmatprep.subr.mxu0 0.0
        %613 = vmatpush1.msra.mxu0 0.0
        %614 = vmatprep.subr.mxu0 0.0
        %615 = vmatpush1.msra.mxu0 0.0
        %616 = vmatprep.subr.mxu0 0.0
        %617 = vmatpush1.msra.mxu0 0.0
        %618 = vmatprep.subr.mxu0 0.0
        %619 = vmatpush1.msra.mxu0 0.0
        %620 = vmatprep.subr.mxu0 0.0
        %621 = vmatpush1.msra.mxu0 0.0
        %622 = vmatprep.subr.mxu0 0.0
        %623 = vmatpush1.msra.mxu0 0.0
        %624 = vmatprep.subr.mxu0 0.0
        %625 = vmatpush1.msra.mxu0 0.0
        %626 = vmatprep.subr.mxu0 0.0
        %627 = vmatpush1.msra.mxu0 0.0
        %628 = vmatprep.subr.mxu0 0.0
        %629 = vmatpush1.msra.mxu0 0.0
        %630 = vmatprep.subr.mxu0 0.0
        %631 = vmatpush1.msra.mxu0 0.0
        %632 = vmatprep.subr.mxu0 0.0
        %633 = vmatpush1.msra.mxu0 0.0
        %634 = vmatprep.subr.mxu0 0.0
        %635 = vmatpush1.msra.mxu0 0.0
        %636 = vmatprep.mubr.f32.mxu0 0.0
        %637 = vmatmul.mubr.f32.gmra.mrb[0].mxu0 %v567
        %v638 = vpop.f32.mrb[0].mxu0
        %v639 = vadd.f32 0.0, %v638
        %v640 = vpop.f32.mrb[0].mxu0
        %v641 = vadd.f32 0.0, %v640
        %642 = vmatprep.mubr.f32.mxu0 0.0
        %643 = vmatmul.mubr.f32.gmra.mrb[0].mxu0 %v570
        %v644 = vpop.f32.mrb[0].mxu0
        %v645 = vadd.f32 0.0, %v644
        %v646 = vpop.f32.mrb[0].mxu0
        %v647 = vadd.f32 0.0, %v646
        %648 = vdwg.mxu0
        %v649 = vld [vmem:[%s3] sm:$0xff]
        %v650 = vld [vmem:[%s3 + $0x8] sm:$0xff]
        %652 = vset.pattern.permute.xlu0 0
        %653 = vperm.xlu0 %652, %v649
        %v654 = vpop.permute.xlu0 %653
        %657 = vset.pattern.permute.xlu0 0
        %658 = vperm.xlu0 %657, %v650
        %v659 = vpop.permute.xlu0 %658
        %v661 = vmul.f32 %v639, %v654
        %v662 = vmul.f32 %v641, %v654
        %v663 = vmul.f32 %v645, %v659
        %v664 = vmul.f32 %v647, %v659
        %v665 = vld [vmem:[%s4] sm:$0xff]
        %v666 = vld [vmem:[%s4 + $0x8] sm:$0xff]
        %668 = vset.pattern.permute.xlu0 0
        %669 = vperm.xlu0 %668, %v665
        %v670 = vpop.permute.xlu0 %669
        %673 = vset.pattern.permute.xlu0 0
        %674 = vperm.xlu0 %673, %v666
        %v675 = vpop.permute.xlu0 %674
        %v677 = vadd.f32 %v661, %v670
        %v678 = vadd.f32 %v662, %v670
        %v679 = vadd.f32 %v663, %v675
        %v680 = vadd.f32 %v664, %v675
        %v681 = vmax.f32 %v677, 0.0
        %v682 = vmax.f32 %v678, 0.0
        %v683 = vmax.f32 %v679, 0.0
        %v684 = vmax.f32 %v680, 0.0
        %685 = vrot.lane.b32.xlu0 %v681, 73
        %v686 = vpop.permute.xlu0 %685
        %687 = vrot.lane.b32.xlu0 %v683, 73
        %v688 = vpop.permute.xlu0 %687
        %689 = vrot.lane.b32.xlu0 %v682, 73
        %v690 = vpop.permute.xlu0 %689
        %691 = vrot.lane.b32.xlu0 %v684, 73
        %v692 = vpop.permute.xlu0 %691
        %v693 = vlaneseq
        %v694 = vand.u32 %v693, 127
        %vm695 = vcmp.lt.s32.totalorder %v694, 73
        %v696 = vsel %vm695, %v686, %v690
        %v697 = vsel %vm695, %v688, %v692
        %v698 = vsel %vm695, %v690, %v686
        %v699 = vsel %vm695, %v692, %v688
        %v700 = vld [vmem:[%s1] ss:$8 sm:$0x3]
        %v702 = vlaneseq
        %v703 = vshrl.u32 %v702, 7
        %v704 = vsub.s32 0, %v703
        %v705 = vrot.slane %v700, %v704
        %v706 = vlaneseq
        %v707 = vshrl.u32 %v706, 7
        %v708 = vsub.s32 1, %v707
        %v709 = vrot.slane %v700, %v708
        %v712 = vmul.f32 %v698, %v705
        %v713 = vmul.f32 %v696, %v709
        %v714 = vmul.f32 %v699, %v705
        %v715 = vmul.f32 %v697, %v709
        %v716 = vld [vmem:[%s5] sm:$0xff]
        %v717 = vld [vmem:[%s5 + $0x8] sm:$0xff]
        %s718 = scalar_lea.vmem %s5, 16
        %v719 = vld [vmem:[%s718] sm:$0xff]
        %v720 = vld [vmem:[%s718 + $0x8] sm:$0xff]
        %721 = vrot.lane.b32.xlu0 %v681, 72
        %v722 = vpop.permute.xlu0 %721
        %723 = vrot.lane.b32.xlu0 %v683, 72
        %v724 = vpop.permute.xlu0 %723
        %725 = vrot.lane.b32.xlu0 %v682, 72
        %v726 = vpop.permute.xlu0 %725
        %727 = vrot.lane.b32.xlu0 %v684, 72
        %v728 = vpop.permute.xlu0 %727
        %vm729 = vcmp.lt.s32.totalorder %v694, 72
        %v730 = vsel %vm729, %v722, %v726
        %v731 = vsel %vm729, %v724, %v728
        %v732 = vsel %vm729, %v726, %v722
        %v733 = vsel %vm729, %v728, %v724
        %s734 = scalar_lea.vmem %s1, 1
        %v735 = vld [vmem:[%s734] ss:$8 sm:$0x3]
        %v737 = vlaneseq
        %v738 = vshrl.u32 %v737, 7
        %v739 = vsub.s32 0, %v738
        %v740 = vrot.slane %v735, %v739
        %v741 = vlaneseq
        %v742 = vshrl.u32 %v741, 7
        %v743 = vsub.s32 1, %v742
        %v744 = vrot.slane %v735, %v743
        %v747 = vmul.f32 %v732, %v740
        %v748 = vmul.f32 %v730, %v744
        %v749 = vmul.f32 %v733, %v740
        %v750 = vmul.f32 %v731, %v744
        %s751 = scalar_lea.vmem %s5, 32
        %v752 = vld [vmem:[%s751] sm:$0xff]
        %v753 = vld [vmem:[%s751 + $0x8] sm:$0xff]
        %vm754 = vcmask 64512
        %v756 = vsel %vm754, %v752, 0
        %v759 = vsel %vm754, %v753, 0
        %761 = vmatprep.subr.mxu0 %v748
        %762 = vmatpush1.msra.mxu0 %v747
        %763 = vmatprep.subr.mxu0 0.0
        %764 = vmatpush1.msra.mxu0 0.0
        %765 = vmatprep.subr.mxu0 0.0
        %766 = vmatpush1.msra.mxu0 0.0
        %767 = vmatprep.subr.mxu0 0.0
        %768 = vmatpush1.msra.mxu0 0.0
        %769 = vmatprep.subr.mxu0 0.0
        %770 = vmatpush1.msra.mxu0 0.0
        %771 = vmatprep.subr.mxu0 0.0
        %772 = vmatpush1.msra.mxu0 0.0
        %773 = vmatprep.subr.mxu0 0.0
        %774 = vmatpush1.msra.mxu0 0.0
        %775 = vmatprep.subr.mxu0 0.0
        %776 = vmatpush1.msra.mxu0 0.0
        %777 = vmatprep.subr.mxu0 0.0
        %778 = vmatpush1.msra.mxu0 0.0
        %779 = vmatprep.subr.mxu0 0.0
        %780 = vmatpush1.msra.mxu0 0.0
        %781 = vmatprep.subr.mxu0 0.0
        %782 = vmatpush1.msra.mxu0 0.0
        %783 = vmatprep.subr.mxu0 0.0
        %784 = vmatpush1.msra.mxu0 0.0
        %785 = vmatprep.subr.mxu0 0.0
        %786 = vmatpush1.msra.mxu0 0.0
        %787 = vmatprep.subr.mxu0 0.0
        %788 = vmatpush1.msra.mxu0 0.0
        %789 = vmatprep.subr.mxu0 0.0
        %790 = vmatpush1.msra.mxu0 0.0
        %791 = vmatprep.subr.mxu0 0.0
        %792 = vmatpush1.msra.mxu0 0.0
        %793 = vmatprep.subr.mxu0 0.0
        %794 = vmatpush1.msra.mxu0 0.0
        %795 = vmatprep.subr.mxu0 0.0
        %796 = vmatpush1.msra.mxu0 0.0
        %797 = vmatprep.subr.mxu0 0.0
        %798 = vmatpush1.msra.mxu0 0.0
        %799 = vmatprep.subr.mxu0 0.0
        %800 = vmatpush1.msra.mxu0 0.0
        %801 = vmatprep.subr.mxu0 0.0
        %802 = vmatpush1.msra.mxu0 0.0
        %803 = vmatprep.subr.mxu0 0.0
        %804 = vmatpush1.msra.mxu0 0.0
        %805 = vmatprep.subr.mxu0 0.0
        %806 = vmatpush1.msra.mxu0 0.0
        %807 = vmatprep.subr.mxu0 0.0
        %808 = vmatpush1.msra.mxu0 0.0
        %809 = vmatprep.subr.mxu0 0.0
        %810 = vmatpush1.msra.mxu0 0.0
        %811 = vmatprep.subr.mxu0 0.0
        %812 = vmatpush1.msra.mxu0 0.0
        %813 = vmatprep.subr.mxu0 0.0
        %814 = vmatpush1.msra.mxu0 0.0
        %815 = vmatprep.subr.mxu0 0.0
        %816 = vmatpush1.msra.mxu0 0.0
        %817 = vmatprep.subr.mxu0 0.0
        %818 = vmatpush1.msra.mxu0 0.0
        %819 = vmatprep.subr.mxu0 0.0
        %820 = vmatpush1.msra.mxu0 0.0
        %821 = vmatprep.subr.mxu0 0.0
        %822 = vmatpush1.msra.mxu0 0.0
        %823 = vmatprep.subr.mxu0 0.0
        %824 = vmatpush1.msra.mxu0 0.0
        %825 = vmatprep.mubr.f32.mxu0 0.0
        %826 = vmatmul.mubr.f32.gmra.mrb[0].mxu0 %v756
        %v827 = vpop.f32.mrb[0].mxu0
        %v828 = vadd.f32 0.0, %v827
        %v829 = vpop.f32.mrb[0].mxu0
        %v830 = vadd.f32 0.0, %v829
        %831 = vmatprep.mubr.f32.mxu0 0.0
        %832 = vmatmul.mubr.f32.gmra.mrb[0].mxu0 %v759
        %v833 = vpop.f32.mrb[0].mxu0
        %v834 = vadd.f32 0.0, %v833
        %v835 = vpop.f32.mrb[0].mxu0
        %v836 = vadd.f32 0.0, %v835
        %837 = vdwg.mxu0
        %v839 = vsel %vm754, %v716, 0
        %v842 = vsel %vm754, %v717, 0
        %844 = vmatprep.subr.mxu0 %v713
        %845 = vmatpush1.msra.mxu0 %v712
        %846 = vmatprep.subr.mxu0 0.0
        %847 = vmatpush1.msra.mxu0 0.0
        %848 = vmatprep.subr.mxu0 0.0
        %849 = vmatpush1.msra.mxu0 0.0
        %850 = vmatprep.subr.mxu0 0.0
        %851 = vmatpush1.msra.mxu0 0.0
        %852 = vmatprep.subr.mxu0 0.0
        %853 = vmatpush1.msra.mxu0 0.0
        %854 = vmatprep.subr.mxu0 0.0
        %855 = vmatpush1.msra.mxu0 0.0
        %856 = vmatprep.subr.mxu0 0.0
        %857 = vmatpush1.msra.mxu0 0.0
        %858 = vmatprep.subr.mxu0 0.0
        %859 = vmatpush1.msra.mxu0 0.0
        %860 = vmatprep.subr.mxu0 0.0
        %861 = vmatpush1.msra.mxu0 0.0
        %862 = vmatprep.subr.mxu0 0.0
        %863 = vmatpush1.msra.mxu0 0.0
        %864 = vmatprep.subr.mxu0 0.0
        %865 = vmatpush1.msra.mxu0 0.0
        %866 = vmatprep.subr.mxu0 0.0
        %867 = vmatpush1.msra.mxu0 0.0
        %868 = vmatprep.subr.mxu0 0.0
        %869 = vmatpush1.msra.mxu0 0.0
        %870 = vmatprep.subr.mxu0 0.0
        %871 = vmatpush1.msra.mxu0 0.0
        %872 = vmatprep.subr.mxu0 0.0
        %873 = vmatpush1.msra.mxu0 0.0
        %874 = vmatprep.subr.mxu0 0.0
        %875 = vmatpush1.msra.mxu0 0.0
        %876 = vmatprep.subr.mxu0 0.0
        %877 = vmatpush1.msra.mxu0 0.0
        %878 = vmatprep.subr.mxu0 0.0
        %879 = vmatpush1.msra.mxu0 0.0
        %880 = vmatprep.subr.mxu0 0.0
        %881 = vmatpush1.msra.mxu0 0.0
        %882 = vmatprep.subr.mxu0 0.0
        %883 = vmatpush1.msra.mxu0 0.0
        %884 = vmatprep.subr.mxu0 0.0
        %885 = vmatpush1.msra.mxu0 0.0
        %886 = vmatprep.subr.mxu0 0.0
        %887 = vmatpush1.msra.mxu0 0.0
        %888 = vmatprep.subr.mxu0 0.0
        %889 = vmatpush1.msra.mxu0 0.0
        %890 = vmatprep.subr.mxu0 0.0
        %891 = vmatpush1.msra.mxu0 0.0
        %892 = vmatprep.subr.mxu0 0.0
        %893 = vmatpush1.msra.mxu0 0.0
        %894 = vmatprep.subr.mxu0 0.0
        %895 = vmatpush1.msra.mxu0 0.0
        %896 = vmatprep.subr.mxu0 0.0
        %897 = vmatpush1.msra.mxu0 0.0
        %898 = vmatprep.subr.mxu0 0.0
        %899 = vmatpush1.msra.mxu0 0.0
        %900 = vmatprep.subr.mxu0 0.0
        %901 = vmatpush1.msra.mxu0 0.0
        %902 = vmatprep.subr.mxu0 0.0
        %903 = vmatpush1.msra.mxu0 0.0
        %904 = vmatprep.subr.mxu0 0.0
        %905 = vmatpush1.msra.mxu0 0.0
        %906 = vmatprep.subr.mxu0 0.0
        %907 = vmatpush1.msra.mxu0 0.0
        %908 = vmatprep.mubr.f32.mxu0 0.0
        %909 = vmatmul.mubr.f32.gmra.mrb[0].mxu0 %v839
        %v910 = vpop.f32.mrb[0].mxu0
        %v911 = vadd.f32 %v828, %v910
        %v912 = vpop.f32.mrb[0].mxu0
        %v913 = vadd.f32 %v830, %v912
        %914 = vmatprep.mubr.f32.mxu0 0.0
        %915 = vmatmul.mubr.f32.gmra.mrb[0].mxu0 %v842
        %v916 = vpop.f32.mrb[0].mxu0
        %v917 = vadd.f32 %v834, %v916
        %v918 = vpop.f32.mrb[0].mxu0
        %v919 = vadd.f32 %v836, %v918
        %920 = vdwg.mxu0
        %s921 = scalar_lea.vmem %s5, 48
        %v922 = vld [vmem:[%s921] sm:$0xff]
        %v923 = vld [vmem:[%s921 + $0x8] sm:$0xff]
        %v925 = vsel %vm754, %v922, 0
        %v928 = vsel %vm754, %v923, 0
        %930 = vmatprep.subr.mxu0 %v750
        %931 = vmatpush1.msra.mxu0 %v749
        %932 = vmatprep.subr.mxu0 0.0
        %933 = vmatpush1.msra.mxu0 0.0
        %934 = vmatprep.subr.mxu0 0.0
        %935 = vmatpush1.msra.mxu0 0.0
        %936 = vmatprep.subr.mxu0 0.0
        %937 = vmatpush1.msra.mxu0 0.0
        %938 = vmatprep.subr.mxu0 0.0
        %939 = vmatpush1.msra.mxu0 0.0
        %940 = vmatprep.subr.mxu0 0.0
        %941 = vmatpush1.msra.mxu0 0.0
        %942 = vmatprep.subr.mxu0 0.0
        %943 = vmatpush1.msra.mxu0 0.0
        %944 = vmatprep.subr.mxu0 0.0
        %945 = vmatpush1.msra.mxu0 0.0
        %946 = vmatprep.subr.mxu0 0.0
        %947 = vmatpush1.msra.mxu0 0.0
        %948 = vmatprep.subr.mxu0 0.0
        %949 = vmatpush1.msra.mxu0 0.0
        %950 = vmatprep.subr.mxu0 0.0
        %951 = vmatpush1.msra.mxu0 0.0
        %952 = vmatprep.subr.mxu0 0.0
        %953 = vmatpush1.msra.mxu0 0.0
        %954 = vmatprep.subr.mxu0 0.0
        %955 = vmatpush1.msra.mxu0 0.0
        %956 = vmatprep.subr.mxu0 0.0
        %957 = vmatpush1.msra.mxu0 0.0
        %958 = vmatprep.subr.mxu0 0.0
        %959 = vmatpush1.msra.mxu0 0.0
        %960 = vmatprep.subr.mxu0 0.0
        %961 = vmatpush1.msra.mxu0 0.0
        %962 = vmatprep.subr.mxu0 0.0
        %963 = vmatpush1.msra.mxu0 0.0
        %964 = vmatprep.subr.mxu0 0.0
        %965 = vmatpush1.msra.mxu0 0.0
        %966 = vmatprep.subr.mxu0 0.0
        %967 = vmatpush1.msra.mxu0 0.0
        %968 = vmatprep.subr.mxu0 0.0
        %969 = vmatpush1.msra.mxu0 0.0
        %970 = vmatprep.subr.mxu0 0.0
        %971 = vmatpush1.msra.mxu0 0.0
        %972 = vmatprep.subr.mxu0 0.0
        %973 = vmatpush1.msra.mxu0 0.0
        %974 = vmatprep.subr.mxu0 0.0
        %975 = vmatpush1.msra.mxu0 0.0
        %976 = vmatprep.subr.mxu0 0.0
        %977 = vmatpush1.msra.mxu0 0.0
        %978 = vmatprep.subr.mxu0 0.0
        %979 = vmatpush1.msra.mxu0 0.0
        %980 = vmatprep.subr.mxu0 0.0
        %981 = vmatpush1.msra.mxu0 0.0
        %982 = vmatprep.subr.mxu0 0.0
        %983 = vmatpush1.msra.mxu0 0.0
        %984 = vmatprep.subr.mxu0 0.0
        %985 = vmatpush1.msra.mxu0 0.0
        %986 = vmatprep.subr.mxu0 0.0
        %987 = vmatpush1.msra.mxu0 0.0
        %988 = vmatprep.subr.mxu0 0.0
        %989 = vmatpush1.msra.mxu0 0.0
        %990 = vmatprep.subr.mxu0 0.0
        %991 = vmatpush1.msra.mxu0 0.0
        %992 = vmatprep.subr.mxu0 0.0
        %993 = vmatpush1.msra.mxu0 0.0
        %994 = vmatprep.mubr.f32.mxu0 0.0
        %995 = vmatmul.mubr.f32.gmra.mrb[0].mxu0 %v925
        %v996 = vpop.f32.mrb[0].mxu0
        %v997 = vadd.f32 0.0, %v996
        %v998 = vpop.f32.mrb[0].mxu0
        %v999 = vadd.f32 0.0, %v998
        %1000 = vmatprep.mubr.f32.mxu0 0.0
        %1001 = vmatmul.mubr.f32.gmra.mrb[0].mxu0 %v928
        %v1002 = vpop.f32.mrb[0].mxu0
        %v1003 = vadd.f32 0.0, %v1002
        %v1004 = vpop.f32.mrb[0].mxu0
        %v1005 = vadd.f32 0.0, %v1004
        %1006 = vdwg.mxu0
        %v1008 = vsel %vm754, %v719, 0
        %v1011 = vsel %vm754, %v720, 0
        %1013 = vmatprep.subr.mxu0 %v715
        %1014 = vmatpush1.msra.mxu0 %v714
        %1015 = vmatprep.subr.mxu0 0.0
        %1016 = vmatpush1.msra.mxu0 0.0
        %1017 = vmatprep.subr.mxu0 0.0
        %1018 = vmatpush1.msra.mxu0 0.0
        %1019 = vmatprep.subr.mxu0 0.0
        %1020 = vmatpush1.msra.mxu0 0.0
        %1021 = vmatprep.subr.mxu0 0.0
        %1022 = vmatpush1.msra.mxu0 0.0
        %1023 = vmatprep.subr.mxu0 0.0
        %1024 = vmatpush1.msra.mxu0 0.0
        %1025 = vmatprep.subr.mxu0 0.0
        %1026 = vmatpush1.msra.mxu0 0.0
        %1027 = vmatprep.subr.mxu0 0.0
        %1028 = vmatpush1.msra.mxu0 0.0
        %1029 = vmatprep.subr.mxu0 0.0
        %1030 = vmatpush1.msra.mxu0 0.0
        %1031 = vmatprep.subr.mxu0 0.0
        %1032 = vmatpush1.msra.mxu0 0.0
        %1033 = vmatprep.subr.mxu0 0.0
        %1034 = vmatpush1.msra.mxu0 0.0
        %1035 = vmatprep.subr.mxu0 0.0
        %1036 = vmatpush1.msra.mxu0 0.0
        %1037 = vmatprep.subr.mxu0 0.0
        %1038 = vmatpush1.msra.mxu0 0.0
        %1039 = vmatprep.subr.mxu0 0.0
        %1040 = vmatpush1.msra.mxu0 0.0
        %1041 = vmatprep.subr.mxu0 0.0
        %1042 = vmatpush1.msra.mxu0 0.0
        %1043 = vmatprep.subr.mxu0 0.0
        %1044 = vmatpush1.msra.mxu0 0.0
        %1045 = vmatprep.subr.mxu0 0.0
        %1046 = vmatpush1.msra.mxu0 0.0
        %1047 = vmatprep.subr.mxu0 0.0
        %1048 = vmatpush1.msra.mxu0 0.0
        %1049 = vmatprep.subr.mxu0 0.0
        %1050 = vmatpush1.msra.mxu0 0.0
        %1051 = vmatprep.subr.mxu0 0.0
        %1052 = vmatpush1.msra.mxu0 0.0
        %1053 = vmatprep.subr.mxu0 0.0
        %1054 = vmatpush1.msra.mxu0 0.0
        %1055 = vmatprep.subr.mxu0 0.0
        %1056 = vmatpush1.msra.mxu0 0.0
        %1057 = vmatprep.subr.mxu0 0.0
        %1058 = vmatpush1.msra.mxu0 0.0
        %1059 = vmatprep.subr.mxu0 0.0
        %1060 = vmatpush1.msra.mxu0 0.0
        %1061 = vmatprep.subr.mxu0 0.0
        %1062 = vmatpush1.msra.mxu0 0.0
        %1063 = vmatprep.subr.mxu0 0.0
        %1064 = vmatpush1.msra.mxu0 0.0
        %1065 = vmatprep.subr.mxu0 0.0
        %1066 = vmatpush1.msra.mxu0 0.0
        %1067 = vmatprep.subr.mxu0 0.0
        %1068 = vmatpush1.msra.mxu0 0.0
        %1069 = vmatprep.subr.mxu0 0.0
        %1070 = vmatpush1.msra.mxu0 0.0
        %1071 = vmatprep.subr.mxu0 0.0
        %1072 = vmatpush1.msra.mxu0 0.0
        %1073 = vmatprep.subr.mxu0 0.0
        %1074 = vmatpush1.msra.mxu0 0.0
        %1075 = vmatprep.subr.mxu0 0.0
        %1076 = vmatpush1.msra.mxu0 0.0
        %1077 = vmatprep.mubr.f32.mxu0 0.0
        %1078 = vmatmul.mubr.f32.gmra.mrb[0].mxu0 %v1008
        %v1079 = vpop.f32.mrb[0].mxu0
        %v1080 = vadd.f32 %v997, %v1079
        %v1081 = vpop.f32.mrb[0].mxu0
        %v1082 = vadd.f32 %v999, %v1081
        %1083 = vmatprep.mubr.f32.mxu0 0.0
        %1084 = vmatmul.mubr.f32.gmra.mrb[0].mxu0 %v1011
        %v1085 = vpop.f32.mrb[0].mxu0
        %v1086 = vadd.f32 %v1003, %v1085
        %v1087 = vpop.f32.mrb[0].mxu0
        %v1088 = vadd.f32 %v1005, %v1087
        %1089 = vdwg.mxu0
        %1090 = vrot.lane.b32.xlu0 %v681, 71
        %v1091 = vpop.permute.xlu0 %1090
        %1092 = vrot.lane.b32.xlu0 %v683, 71
        %v1093 = vpop.permute.xlu0 %1092
        %1094 = vrot.lane.b32.xlu0 %v682, 71
        %v1095 = vpop.permute.xlu0 %1094
        %1096 = vrot.lane.b32.xlu0 %v684, 71
        %v1097 = vpop.permute.xlu0 %1096
        %vm1098 = vcmp.lt.s32.totalorder %v694, 71
        %v1099 = vsel %vm1098, %v1091, %v1095
        %v1100 = vsel %vm1098, %v1093, %v1097
        %v1101 = vsel %vm1098, %v1095, %v1091
        %v1102 = vsel %vm1098, %v1097, %v1093
        %s1103 = scalar_lea.vmem %s1, 2
        %v1104 = vld [vmem:[%s1103] ss:$8 sm:$0x3]
        %v1106 = vlaneseq
        %v1107 = vshrl.u32 %v1106, 7
        %v1108 = vsub.s32 0, %v1107
        %v1109 = vrot.slane %v1104, %v1108
        %v1110 = vlaneseq
        %v1111 = vshrl.u32 %v1110, 7
        %v1112 = vsub.s32 1, %v1111
        %v1113 = vrot.slane %v1104, %v1112
        %v1116 = vmul.f32 %v1101, %v1109
        %v1117 = vmul.f32 %v1099, %v1113
        %v1118 = vmul.f32 %v1102, %v1109
        %v1119 = vmul.f32 %v1100, %v1113
        %s1120 = scalar_lea.vmem %s5, 64
        %v1121 = vld [vmem:[%s1120] sm:$0xff]
        %v1122 = vld [vmem:[%s1120 + $0x8] sm:$0xff]
        %v1124 = vsel %vm754, %v1121, 0
        %v1127 = vsel %vm754, %v1122, 0
        %1129 = vmatprep.subr.mxu0 %v1117
        %1130 = vmatpush1.msra.mxu0 %v1116
        %1131 = vmatprep.subr.mxu0 0.0
        %1132 = vmatpush1.msra.mxu0 0.0
        %1133 = vmatprep.subr.mxu0 0.0
        %1134 = vmatpush1.msra.mxu0 0.0
        %1135 = vmatprep.subr.mxu0 0.0
        %1136 = vmatpush1.msra.mxu0 0.0
        %1137 = vmatprep.subr.mxu0 0.0
        %1138 = vmatpush1.msra.mxu0 0.0
        %1139 = vmatprep.subr.mxu0 0.0
        %1140 = vmatpush1.msra.mxu0 0.0
        %1141 = vmatprep.subr.mxu0 0.0
        %1142 = vmatpush1.msra.mxu0 0.0
        %1143 = vmatprep.subr.mxu0 0.0
        %1144 = vmatpush1.msra.mxu0 0.0
        %1145 = vmatprep.subr.mxu0 0.0
        %1146 = vmatpush1.msra.mxu0 0.0
        %1147 = vmatprep.subr.mxu0 0.0
        %1148 = vmatpush1.msra.mxu0 0.0
        %1149 = vmatprep.subr.mxu0 0.0
        %1150 = vmatpush1.msra.mxu0 0.0
        %1151 = vmatprep.subr.mxu0 0.0
        %1152 = vmatpush1.msra.mxu0 0.0
        %1153 = vmatprep.subr.mxu0 0.0
        %1154 = vmatpush1.msra.mxu0 0.0
        %1155 = vmatprep.subr.mxu0 0.0
        %1156 = vmatpush1.msra.mxu0 0.0
        %1157 = vmatprep.subr.mxu0 0.0
        %1158 = vmatpush1.msra.mxu0 0.0
        %1159 = vmatprep.subr.mxu0 0.0
        %1160 = vmatpush1.msra.mxu0 0.0
        %1161 = vmatprep.subr.mxu0 0.0
        %1162 = vmatpush1.msra.mxu0 0.0
        %1163 = vmatprep.subr.mxu0 0.0
        %1164 = vmatpush1.msra.mxu0 0.0
        %1165 = vmatprep.subr.mxu0 0.0
        %1166 = vmatpush1.msra.mxu0 0.0
        %1167 = vmatprep.subr.mxu0 0.0
        %1168 = vmatpush1.msra.mxu0 0.0
        %1169 = vmatprep.subr.mxu0 0.0
        %1170 = vmatpush1.msra.mxu0 0.0
        %1171 = vmatprep.subr.mxu0 0.0
        %1172 = vmatpush1.msra.mxu0 0.0
        %1173 = vmatprep.subr.mxu0 0.0
        %1174 = vmatpush1.msra.mxu0 0.0
        %1175 = vmatprep.subr.mxu0 0.0
        %1176 = vmatpush1.msra.mxu0 0.0
        %1177 = vmatprep.subr.mxu0 0.0
        %1178 = vmatpush1.msra.mxu0 0.0
        %1179 = vmatprep.subr.mxu0 0.0
        %1180 = vmatpush1.msra.mxu0 0.0
        %1181 = vmatprep.subr.mxu0 0.0
        %1182 = vmatpush1.msra.mxu0 0.0
        %1183 = vmatprep.subr.mxu0 0.0
        %1184 = vmatpush1.msra.mxu0 0.0
        %1185 = vmatprep.subr.mxu0 0.0
        %1186 = vmatpush1.msra.mxu0 0.0
        %1187 = vmatprep.subr.mxu0 0.0
        %1188 = vmatpush1.msra.mxu0 0.0
        %1189 = vmatprep.subr.mxu0 0.0
        %1190 = vmatpush1.msra.mxu0 0.0
        %1191 = vmatprep.subr.mxu0 0.0
        %1192 = vmatpush1.msra.mxu0 0.0
        %1193 = vmatprep.mubr.f32.mxu0 0.0
        %1194 = vmatmul.mubr.f32.gmra.mrb[0].mxu0 %v1124
        %v1195 = vpop.f32.mrb[0].mxu0
        %v1196 = vadd.f32 0.0, %v1195
        %v1197 = vpop.f32.mrb[0].mxu0
        %v1198 = vadd.f32 0.0, %v1197
        %1199 = vmatprep.mubr.f32.mxu0 0.0
        %1200 = vmatmul.mubr.f32.gmra.mrb[0].mxu0 %v1127
        %v1201 = vpop.f32.mrb[0].mxu0
        %v1202 = vadd.f32 0.0, %v1201
        %v1203 = vpop.f32.mrb[0].mxu0
        %v1204 = vadd.f32 0.0, %v1203
        %1205 = vdwg.mxu0
        %v1206 = vadd.f32 %v911, %v1196
        %v1207 = vadd.f32 %v913, %v1198
        %v1208 = vadd.f32 %v917, %v1202
        %v1209 = vadd.f32 %v919, %v1204
        %s1210 = scalar_lea.vmem %s5, 80
        %v1211 = vld [vmem:[%s1210] sm:$0xff]
        %v1212 = vld [vmem:[%s1210 + $0x8] sm:$0xff]
        %v1214 = vsel %vm754, %v1211, 0
        %v1217 = vsel %vm754, %v1212, 0
        %1219 = vmatprep.subr.mxu0 %v1119
        %1220 = vmatpush1.msra.mxu0 %v1118
        %1221 = vmatprep.subr.mxu0 0.0
        %1222 = vmatpush1.msra.mxu0 0.0
        %1223 = vmatprep.subr.mxu0 0.0
        %1224 = vmatpush1.msra.mxu0 0.0
        %1225 = vmatprep.subr.mxu0 0.0
        %1226 = vmatpush1.msra.mxu0 0.0
        %1227 = vmatprep.subr.mxu0 0.0
        %1228 = vmatpush1.msra.mxu0 0.0
        %1229 = vmatprep.subr.mxu0 0.0
        %1230 = vmatpush1.msra.mxu0 0.0
        %1231 = vmatprep.subr.mxu0 0.0
        %1232 = vmatpush1.msra.mxu0 0.0
        %1233 = vmatprep.subr.mxu0 0.0
        %1234 = vmatpush1.msra.mxu0 0.0
        %1235 = vmatprep.subr.mxu0 0.0
        %1236 = vmatpush1.msra.mxu0 0.0
        %1237 = vmatprep.subr.mxu0 0.0
        %1238 = vmatpush1.msra.mxu0 0.0
        %1239 = vmatprep.subr.mxu0 0.0
        %1240 = vmatpush1.msra.mxu0 0.0
        %1241 = vmatprep.subr.mxu0 0.0
        %1242 = vmatpush1.msra.mxu0 0.0
        %1243 = vmatprep.subr.mxu0 0.0
        %1244 = vmatpush1.msra.mxu0 0.0
        %1245 = vmatprep.subr.mxu0 0.0
        %1246 = vmatpush1.msra.mxu0 0.0
        %1247 = vmatprep.subr.mxu0 0.0
        %1248 = vmatpush1.msra.mxu0 0.0
        %1249 = vmatprep.subr.mxu0 0.0
        %1250 = vmatpush1.msra.mxu0 0.0
        %1251 = vmatprep.subr.mxu0 0.0
        %1252 = vmatpush1.msra.mxu0 0.0
        %1253 = vmatprep.subr.mxu0 0.0
        %1254 = vmatpush1.msra.mxu0 0.0
        %1255 = vmatprep.subr.mxu0 0.0
        %1256 = vmatpush1.msra.mxu0 0.0
        %1257 = vmatprep.subr.mxu0 0.0
        %1258 = vmatpush1.msra.mxu0 0.0
        %1259 = vmatprep.subr.mxu0 0.0
        %1260 = vmatpush1.msra.mxu0 0.0
        %1261 = vmatprep.subr.mxu0 0.0
        %1262 = vmatpush1.msra.mxu0 0.0
        %1263 = vmatprep.subr.mxu0 0.0
        %1264 = vmatpush1.msra.mxu0 0.0
        %1265 = vmatprep.subr.mxu0 0.0
        %1266 = vmatpush1.msra.mxu0 0.0
        %1267 = vmatprep.subr.mxu0 0.0
        %1268 = vmatpush1.msra.mxu0 0.0
        %1269 = vmatprep.subr.mxu0 0.0
        %1270 = vmatpush1.msra.mxu0 0.0
        %1271 = vmatprep.subr.mxu0 0.0
        %1272 = vmatpush1.msra.mxu0 0.0
        %1273 = vmatprep.subr.mxu0 0.0
        %1274 = vmatpush1.msra.mxu0 0.0
        %1275 = vmatprep.subr.mxu0 0.0
        %1276 = vmatpush1.msra.mxu0 0.0
        %1277 = vmatprep.subr.mxu0 0.0
        %1278 = vmatpush1.msra.mxu0 0.0
        %1279 = vmatprep.subr.mxu0 0.0
        %1280 = vmatpush1.msra.mxu0 0.0
        %1281 = vmatprep.subr.mxu0 0.0
        %1282 = vmatpush1.msra.mxu0 0.0
        %1283 = vmatprep.mubr.f32.mxu0 0.0
        %1284 = vmatmul.mubr.f32.gmra.mrb[0].mxu0 %v1214
        %v1285 = vpop.f32.mrb[0].mxu0
        %v1286 = vadd.f32 0.0, %v1285
        %v1287 = vpop.f32.mrb[0].mxu0
        %v1288 = vadd.f32 0.0, %v1287
        %1289 = vmatprep.mubr.f32.mxu0 0.0
        %1290 = vmatmul.mubr.f32.gmra.mrb[0].mxu0 %v1217
        %v1291 = vpop.f32.mrb[0].mxu0
        %v1292 = vadd.f32 0.0, %v1291
        %v1293 = vpop.f32.mrb[0].mxu0
        %v1294 = vadd.f32 0.0, %v1293
        %1295 = vdwg.mxu0
        %v1296 = vadd.f32 %v1080, %v1286
        %v1297 = vadd.f32 %v1082, %v1288
        %v1298 = vadd.f32 %v1086, %v1292
        %v1299 = vadd.f32 %v1088, %v1294
        %1300 = vrot.lane.b32.xlu0 %v681, 65
        %v1301 = vpop.permute.xlu0 %1300
        %1302 = vrot.lane.b32.xlu0 %v683, 65
        %v1303 = vpop.permute.xlu0 %1302
        %1304 = vrot.lane.b32.xlu0 %v682, 65
        %v1305 = vpop.permute.xlu0 %1304
        %1306 = vrot.lane.b32.xlu0 %v684, 65
        %v1307 = vpop.permute.xlu0 %1306
        %vm1308 = vcmp.lt.s32.totalorder %v694, 65
        %v1309 = vsel %vm1308, %v1301, %v1305
        %v1310 = vsel %vm1308, %v1303, %v1307
        %v1311 = vsel %vm1308, %v1305, %v1301
        %v1312 = vsel %vm1308, %v1307, %v1303
        %s1313 = scalar_lea.vmem %s1, 3
        %v1314 = vld [vmem:[%s1313] ss:$8 sm:$0x3]
        %v1316 = vlaneseq
        %v1317 = vshrl.u32 %v1316, 7
        %v1318 = vsub.s32 0, %v1317
        %v1319 = vrot.slane %v1314, %v1318
        %v1320 = vlaneseq
        %v1321 = vshrl.u32 %v1320, 7
        %v1322 = vsub.s32 1, %v1321
        %v1323 = vrot.slane %v1314, %v1322
        %v1326 = vmul.f32 %v1311, %v1319
        %v1327 = vmul.f32 %v1309, %v1323
        %v1328 = vmul.f32 %v1312, %v1319
        %v1329 = vmul.f32 %v1310, %v1323
        %s1330 = scalar_lea.vmem %s5, 96
        %v1331 = vld [vmem:[%s1330] sm:$0xff]
        %v1332 = vld [vmem:[%s1330 + $0x8] sm:$0xff]
        %v1334 = vsel %vm754, %v1331, 0
        %v1337 = vsel %vm754, %v1332, 0
        %1339 = vmatprep.subr.mxu0 %v1327
        %1340 = vmatpush1.msra.mxu0 %v1326
        %1341 = vmatprep.subr.mxu0 0.0
        %1342 = vmatpush1.msra.mxu0 0.0
        %1343 = vmatprep.subr.mxu0 0.0
        %1344 = vmatpush1.msra.mxu0 0.0
        %1345 = vmatprep.subr.mxu0 0.0
        %1346 = vmatpush1.msra.mxu0 0.0
        %1347 = vmatprep.subr.mxu0 0.0
        %1348 = vmatpush1.msra.mxu0 0.0
        %1349 = vmatprep.subr.mxu0 0.0
        %1350 = vmatpush1.msra.mxu0 0.0
        %1351 = vmatprep.subr.mxu0 0.0
        %1352 = vmatpush1.msra.mxu0 0.0
        %1353 = vmatprep.subr.mxu0 0.0
        %1354 = vmatpush1.msra.mxu0 0.0
        %1355 = vmatprep.subr.mxu0 0.0
        %1356 = vmatpush1.msra.mxu0 0.0
        %1357 = vmatprep.subr.mxu0 0.0
        %1358 = vmatpush1.msra.mxu0 0.0
        %1359 = vmatprep.subr.mxu0 0.0
        %1360 = vmatpush1.msra.mxu0 0.0
        %1361 = vmatprep.subr.mxu0 0.0
        %1362 = vmatpush1.msra.mxu0 0.0
        %1363 = vmatprep.subr.mxu0 0.0
        %1364 = vmatpush1.msra.mxu0 0.0
        %1365 = vmatprep.subr.mxu0 0.0
        %1366 = vmatpush1.msra.mxu0 0.0
        %1367 = vmatprep.subr.mxu0 0.0
        %1368 = vmatpush1.msra.mxu0 0.0
        %1369 = vmatprep.subr.mxu0 0.0
        %1370 = vmatpush1.msra.mxu0 0.0
        %1371 = vmatprep.subr.mxu0 0.0
        %1372 = vmatpush1.msra.mxu0 0.0
        %1373 = vmatprep.subr.mxu0 0.0
        %1374 = vmatpush1.msra.mxu0 0.0
        %1375 = vmatprep.subr.mxu0 0.0
        %1376 = vmatpush1.msra.mxu0 0.0
        %1377 = vmatprep.subr.mxu0 0.0
        %1378 = vmatpush1.msra.mxu0 0.0
        %1379 = vmatprep.subr.mxu0 0.0
        %1380 = vmatpush1.msra.mxu0 0.0
        %1381 = vmatprep.subr.mxu0 0.0
        %1382 = vmatpush1.msra.mxu0 0.0
        %1383 = vmatprep.subr.mxu0 0.0
        %1384 = vmatpush1.msra.mxu0 0.0
        %1385 = vmatprep.subr.mxu0 0.0
        %1386 = vmatpush1.msra.mxu0 0.0
        %1387 = vmatprep.subr.mxu0 0.0
        %1388 = vmatpush1.msra.mxu0 0.0
        %1389 = vmatprep.subr.mxu0 0.0
        %1390 = vmatpush1.msra.mxu0 0.0
        %1391 = vmatprep.subr.mxu0 0.0
        %1392 = vmatpush1.msra.mxu0 0.0
        %1393 = vmatprep.subr.mxu0 0.0
        %1394 = vmatpush1.msra.mxu0 0.0
        %1395 = vmatprep.subr.mxu0 0.0
        %1396 = vmatpush1.msra.mxu0 0.0
        %1397 = vmatprep.subr.mxu0 0.0
        %1398 = vmatpush1.msra.mxu0 0.0
        %1399 = vmatprep.subr.mxu0 0.0
        %1400 = vmatpush1.msra.mxu0 0.0
        %1401 = vmatprep.subr.mxu0 0.0
        %1402 = vmatpush1.msra.mxu0 0.0
        %1403 = vmatprep.mubr.f32.mxu0 0.0
        %1404 = vmatmul.mubr.f32.gmra.mrb[0].mxu0 %v1334
        %v1405 = vpop.f32.mrb[0].mxu0
        %v1406 = vadd.f32 0.0, %v1405
        %v1407 = vpop.f32.mrb[0].mxu0
        %v1408 = vadd.f32 0.0, %v1407
        %1409 = vmatprep.mubr.f32.mxu0 0.0
        %1410 = vmatmul.mubr.f32.gmra.mrb[0].mxu0 %v1337
        %v1411 = vpop.f32.mrb[0].mxu0
        %v1412 = vadd.f32 0.0, %v1411
        %v1413 = vpop.f32.mrb[0].mxu0
        %v1414 = vadd.f32 0.0, %v1413
        %1415 = vdwg.mxu0
        %v1416 = vadd.f32 %v1206, %v1406
        %v1417 = vadd.f32 %v1207, %v1408
        %v1418 = vadd.f32 %v1208, %v1412
        %v1419 = vadd.f32 %v1209, %v1414
        %s1420 = scalar_lea.vmem %s5, 112
        %v1421 = vld [vmem:[%s1420] sm:$0xff]
        %v1422 = vld [vmem:[%s1420 + $0x8] sm:$0xff]
        %v1424 = vsel %vm754, %v1421, 0
        %v1427 = vsel %vm754, %v1422, 0
        %1429 = vmatprep.subr.mxu0 %v1329
        %1430 = vmatpush1.msra.mxu0 %v1328
        %1431 = vmatprep.subr.mxu0 0.0
        %1432 = vmatpush1.msra.mxu0 0.0
        %1433 = vmatprep.subr.mxu0 0.0
        %1434 = vmatpush1.msra.mxu0 0.0
        %1435 = vmatprep.subr.mxu0 0.0
        %1436 = vmatpush1.msra.mxu0 0.0
        %1437 = vmatprep.subr.mxu0 0.0
        %1438 = vmatpush1.msra.mxu0 0.0
        %1439 = vmatprep.subr.mxu0 0.0
        %1440 = vmatpush1.msra.mxu0 0.0
        %1441 = vmatprep.subr.mxu0 0.0
        %1442 = vmatpush1.msra.mxu0 0.0
        %1443 = vmatprep.subr.mxu0 0.0
        %1444 = vmatpush1.msra.mxu0 0.0
        %1445 = vmatprep.subr.mxu0 0.0
        %1446 = vmatpush1.msra.mxu0 0.0
        %1447 = vmatprep.subr.mxu0 0.0
        %1448 = vmatpush1.msra.mxu0 0.0
        %1449 = vmatprep.subr.mxu0 0.0
        %1450 = vmatpush1.msra.mxu0 0.0
        %1451 = vmatprep.subr.mxu0 0.0
        %1452 = vmatpush1.msra.mxu0 0.0
        %1453 = vmatprep.subr.mxu0 0.0
        %1454 = vmatpush1.msra.mxu0 0.0
        %1455 = vmatprep.subr.mxu0 0.0
        %1456 = vmatpush1.msra.mxu0 0.0
        %1457 = vmatprep.subr.mxu0 0.0
        %1458 = vmatpush1.msra.mxu0 0.0
        %1459 = vmatprep.subr.mxu0 0.0
        %1460 = vmatpush1.msra.mxu0 0.0
        %1461 = vmatprep.subr.mxu0 0.0
        %1462 = vmatpush1.msra.mxu0 0.0
        %1463 = vmatprep.subr.mxu0 0.0
        %1464 = vmatpush1.msra.mxu0 0.0
        %1465 = vmatprep.subr.mxu0 0.0
        %1466 = vmatpush1.msra.mxu0 0.0
        %1467 = vmatprep.subr.mxu0 0.0
        %1468 = vmatpush1.msra.mxu0 0.0
        %1469 = vmatprep.subr.mxu0 0.0
        %1470 = vmatpush1.msra.mxu0 0.0
        %1471 = vmatprep.subr.mxu0 0.0
        %1472 = vmatpush1.msra.mxu0 0.0
        %1473 = vmatprep.subr.mxu0 0.0
        %1474 = vmatpush1.msra.mxu0 0.0
        %1475 = vmatprep.subr.mxu0 0.0
        %1476 = vmatpush1.msra.mxu0 0.0
        %1477 = vmatprep.subr.mxu0 0.0
        %1478 = vmatpush1.msra.mxu0 0.0
        %1479 = vmatprep.subr.mxu0 0.0
        %1480 = vmatpush1.msra.mxu0 0.0
        %1481 = vmatprep.subr.mxu0 0.0
        %1482 = vmatpush1.msra.mxu0 0.0
        %1483 = vmatprep.subr.mxu0 0.0
        %1484 = vmatpush1.msra.mxu0 0.0
        %1485 = vmatprep.subr.mxu0 0.0
        %1486 = vmatpush1.msra.mxu0 0.0
        %1487 = vmatprep.subr.mxu0 0.0
        %1488 = vmatpush1.msra.mxu0 0.0
        %1489 = vmatprep.subr.mxu0 0.0
        %1490 = vmatpush1.msra.mxu0 0.0
        %1491 = vmatprep.subr.mxu0 0.0
        %1492 = vmatpush1.msra.mxu0 0.0
        %1493 = vmatprep.mubr.f32.mxu0 0.0
        %1494 = vmatmul.mubr.f32.gmra.mrb[0].mxu0 %v1424
        %v1495 = vpop.f32.mrb[0].mxu0
        %v1496 = vadd.f32 0.0, %v1495
        %v1497 = vpop.f32.mrb[0].mxu0
        %v1498 = vadd.f32 0.0, %v1497
        %1499 = vmatprep.mubr.f32.mxu0 0.0
        %1500 = vmatmul.mubr.f32.gmra.mrb[0].mxu0 %v1427
        %v1501 = vpop.f32.mrb[0].mxu0
        %v1502 = vadd.f32 0.0, %v1501
        %v1503 = vpop.f32.mrb[0].mxu0
        %v1504 = vadd.f32 0.0, %v1503
        %1505 = vdwg.mxu0
        %v1506 = vadd.f32 %v1296, %v1496
        %v1507 = vadd.f32 %v1297, %v1498
        %v1508 = vadd.f32 %v1298, %v1502
        %v1509 = vadd.f32 %v1299, %v1504
        %1510 = vrot.lane.b32.xlu0 %v681, 64
        %v1511 = vpop.permute.xlu0 %1510
        %1512 = vrot.lane.b32.xlu0 %v683, 64
        %v1513 = vpop.permute.xlu0 %1512
        %1514 = vrot.lane.b32.xlu0 %v682, 64
        %v1515 = vpop.permute.xlu0 %1514
        %1516 = vrot.lane.b32.xlu0 %v684, 64
        %v1517 = vpop.permute.xlu0 %1516
        %vm1518 = vcmp.lt.s32.totalorder %v694, 64
        %v1519 = vsel %vm1518, %v1511, %v1515
        %v1520 = vsel %vm1518, %v1513, %v1517
        %v1521 = vsel %vm1518, %v1515, %v1511
        %v1522 = vsel %vm1518, %v1517, %v1513
        %s1523 = scalar_lea.vmem %s1, 4
        %v1524 = vld [vmem:[%s1523] ss:$8 sm:$0x3]
        %v1526 = vlaneseq
        %v1527 = vshrl.u32 %v1526, 7
        %v1528 = vsub.s32 0, %v1527
        %v1529 = vrot.slane %v1524, %v1528
        %v1530 = vlaneseq
        %v1531 = vshrl.u32 %v1530, 7
        %v1532 = vsub.s32 1, %v1531
        %v1533 = vrot.slane %v1524, %v1532
        %v1536 = vmul.f32 %v1521, %v1529
        %v1537 = vmul.f32 %v1519, %v1533
        %v1538 = vmul.f32 %v1522, %v1529
        %v1539 = vmul.f32 %v1520, %v1533
        %s1540 = scalar_lea.vmem %s5, 128
        %v1541 = vld [vmem:[%s1540] sm:$0xff]
        %v1542 = vld [vmem:[%s1540 + $0x8] sm:$0xff]
        %v1544 = vsel %vm754, %v1541, 0
        %v1547 = vsel %vm754, %v1542, 0
        %1549 = vmatprep.subr.mxu0 %v1537
        %1550 = vmatpush1.msra.mxu0 %v1536
        %1551 = vmatprep.subr.mxu0 0.0
        %1552 = vmatpush1.msra.mxu0 0.0
        %1553 = vmatprep.subr.mxu0 0.0
        %1554 = vmatpush1.msra.mxu0 0.0
        %1555 = vmatprep.subr.mxu0 0.0
        %1556 = vmatpush1.msra.mxu0 0.0
        %1557 = vmatprep.subr.mxu0 0.0
        %1558 = vmatpush1.msra.mxu0 0.0
        %1559 = vmatprep.subr.mxu0 0.0
        %1560 = vmatpush1.msra.mxu0 0.0
        %1561 = vmatprep.subr.mxu0 0.0
        %1562 = vmatpush1.msra.mxu0 0.0
        %1563 = vmatprep.subr.mxu0 0.0
        %1564 = vmatpush1.msra.mxu0 0.0
        %1565 = vmatprep.subr.mxu0 0.0
        %1566 = vmatpush1.msra.mxu0 0.0
        %1567 = vmatprep.subr.mxu0 0.0
        %1568 = vmatpush1.msra.mxu0 0.0
        %1569 = vmatprep.subr.mxu0 0.0
        %1570 = vmatpush1.msra.mxu0 0.0
        %1571 = vmatprep.subr.mxu0 0.0
        %1572 = vmatpush1.msra.mxu0 0.0
        %1573 = vmatprep.subr.mxu0 0.0
        %1574 = vmatpush1.msra.mxu0 0.0
        %1575 = vmatprep.subr.mxu0 0.0
        %1576 = vmatpush1.msra.mxu0 0.0
        %1577 = vmatprep.subr.mxu0 0.0
        %1578 = vmatpush1.msra.mxu0 0.0
        %1579 = vmatprep.subr.mxu0 0.0
        %1580 = vmatpush1.msra.mxu0 0.0
        %1581 = vmatprep.subr.mxu0 0.0
        %1582 = vmatpush1.msra.mxu0 0.0
        %1583 = vmatprep.subr.mxu0 0.0
        %1584 = vmatpush1.msra.mxu0 0.0
        %1585 = vmatprep.subr.mxu0 0.0
        %1586 = vmatpush1.msra.mxu0 0.0
        %1587 = vmatprep.subr.mxu0 0.0
        %1588 = vmatpush1.msra.mxu0 0.0
        %1589 = vmatprep.subr.mxu0 0.0
        %1590 = vmatpush1.msra.mxu0 0.0
        %1591 = vmatprep.subr.mxu0 0.0
        %1592 = vmatpush1.msra.mxu0 0.0
        %1593 = vmatprep.subr.mxu0 0.0
        %1594 = vmatpush1.msra.mxu0 0.0
        %1595 = vmatprep.subr.mxu0 0.0
        %1596 = vmatpush1.msra.mxu0 0.0
        %1597 = vmatprep.subr.mxu0 0.0
        %1598 = vmatpush1.msra.mxu0 0.0
        %1599 = vmatprep.subr.mxu0 0.0
        %1600 = vmatpush1.msra.mxu0 0.0
        %1601 = vmatprep.subr.mxu0 0.0
        %1602 = vmatpush1.msra.mxu0 0.0
        %1603 = vmatprep.subr.mxu0 0.0
        %1604 = vmatpush1.msra.mxu0 0.0
        %1605 = vmatprep.subr.mxu0 0.0
        %1606 = vmatpush1.msra.mxu0 0.0
        %1607 = vmatprep.subr.mxu0 0.0
        %1608 = vmatpush1.msra.mxu0 0.0
        %1609 = vmatprep.subr.mxu0 0.0
        %1610 = vmatpush1.msra.mxu0 0.0
        %1611 = vmatprep.subr.mxu0 0.0
        %1612 = vmatpush1.msra.mxu0 0.0
        %1613 = vmatprep.mubr.f32.mxu0 0.0
        %1614 = vmatmul.mubr.f32.gmra.mrb[0].mxu0 %v1544
        %v1615 = vpop.f32.mrb[0].mxu0
        %v1616 = vadd.f32 0.0, %v1615
        %v1617 = vpop.f32.mrb[0].mxu0
        %v1618 = vadd.f32 0.0, %v1617
        %1619 = vmatprep.mubr.f32.mxu0 0.0
        %1620 = vmatmul.mubr.f32.gmra.mrb[0].mxu0 %v1547
        %v1621 = vpop.f32.mrb[0].mxu0
        %v1622 = vadd.f32 0.0, %v1621
        %v1623 = vpop.f32.mrb[0].mxu0
        %v1624 = vadd.f32 0.0, %v1623
        %1625 = vdwg.mxu0
        %v1626 = vadd.f32 %v1416, %v1616
        %v1627 = vadd.f32 %v1417, %v1618
        %v1628 = vadd.f32 %v1418, %v1622
        %v1629 = vadd.f32 %v1419, %v1624
        %s1630 = scalar_lea.vmem %s5, 144
        %v1631 = vld [vmem:[%s1630] sm:$0xff]
        %v1632 = vld [vmem:[%s1630 + $0x8] sm:$0xff]
        %v1634 = vsel %vm754, %v1631, 0
        %v1637 = vsel %vm754, %v1632, 0
        %1639 = vmatprep.subr.mxu0 %v1539
        %1640 = vmatpush1.msra.mxu0 %v1538
        %1641 = vmatprep.subr.mxu0 0.0
        %1642 = vmatpush1.msra.mxu0 0.0
        %1643 = vmatprep.subr.mxu0 0.0
        %1644 = vmatpush1.msra.mxu0 0.0
        %1645 = vmatprep.subr.mxu0 0.0
        %1646 = vmatpush1.msra.mxu0 0.0
        %1647 = vmatprep.subr.mxu0 0.0
        %1648 = vmatpush1.msra.mxu0 0.0
        %1649 = vmatprep.subr.mxu0 0.0
        %1650 = vmatpush1.msra.mxu0 0.0
        %1651 = vmatprep.subr.mxu0 0.0
        %1652 = vmatpush1.msra.mxu0 0.0
        %1653 = vmatprep.subr.mxu0 0.0
        %1654 = vmatpush1.msra.mxu0 0.0
        %1655 = vmatprep.subr.mxu0 0.0
        %1656 = vmatpush1.msra.mxu0 0.0
        %1657 = vmatprep.subr.mxu0 0.0
        %1658 = vmatpush1.msra.mxu0 0.0
        %1659 = vmatprep.subr.mxu0 0.0
        %1660 = vmatpush1.msra.mxu0 0.0
        %1661 = vmatprep.subr.mxu0 0.0
        %1662 = vmatpush1.msra.mxu0 0.0
        %1663 = vmatprep.subr.mxu0 0.0
        %1664 = vmatpush1.msra.mxu0 0.0
        %1665 = vmatprep.subr.mxu0 0.0
        %1666 = vmatpush1.msra.mxu0 0.0
        %1667 = vmatprep.subr.mxu0 0.0
        %1668 = vmatpush1.msra.mxu0 0.0
        %1669 = vmatprep.subr.mxu0 0.0
        %1670 = vmatpush1.msra.mxu0 0.0
        %1671 = vmatprep.subr.mxu0 0.0
        %1672 = vmatpush1.msra.mxu0 0.0
        %1673 = vmatprep.subr.mxu0 0.0
        %1674 = vmatpush1.msra.mxu0 0.0
        %1675 = vmatprep.subr.mxu0 0.0
        %1676 = vmatpush1.msra.mxu0 0.0
        %1677 = vmatprep.subr.mxu0 0.0
        %1678 = vmatpush1.msra.mxu0 0.0
        %1679 = vmatprep.subr.mxu0 0.0
        %1680 = vmatpush1.msra.mxu0 0.0
        %1681 = vmatprep.subr.mxu0 0.0
        %1682 = vmatpush1.msra.mxu0 0.0
        %1683 = vmatprep.subr.mxu0 0.0
        %1684 = vmatpush1.msra.mxu0 0.0
        %1685 = vmatprep.subr.mxu0 0.0
        %1686 = vmatpush1.msra.mxu0 0.0
        %1687 = vmatprep.subr.mxu0 0.0
        %1688 = vmatpush1.msra.mxu0 0.0
        %1689 = vmatprep.subr.mxu0 0.0
        %1690 = vmatpush1.msra.mxu0 0.0
        %1691 = vmatprep.subr.mxu0 0.0
        %1692 = vmatpush1.msra.mxu0 0.0
        %1693 = vmatprep.subr.mxu0 0.0
        %1694 = vmatpush1.msra.mxu0 0.0
        %1695 = vmatprep.subr.mxu0 0.0
        %1696 = vmatpush1.msra.mxu0 0.0
        %1697 = vmatprep.subr.mxu0 0.0
        %1698 = vmatpush1.msra.mxu0 0.0
        %1699 = vmatprep.subr.mxu0 0.0
        %1700 = vmatpush1.msra.mxu0 0.0
        %1701 = vmatprep.subr.mxu0 0.0
        %1702 = vmatpush1.msra.mxu0 0.0
        %1703 = vmatprep.mubr.f32.mxu0 0.0
        %1704 = vmatmul.mubr.f32.gmra.mrb[0].mxu0 %v1634
        %v1705 = vpop.f32.mrb[0].mxu0
        %v1706 = vadd.f32 0.0, %v1705
        %v1707 = vpop.f32.mrb[0].mxu0
        %v1708 = vadd.f32 0.0, %v1707
        %1709 = vmatprep.mubr.f32.mxu0 0.0
        %1710 = vmatmul.mubr.f32.gmra.mrb[0].mxu0 %v1637
        %v1711 = vpop.f32.mrb[0].mxu0
        %v1712 = vadd.f32 0.0, %v1711
        %v1713 = vpop.f32.mrb[0].mxu0
        %v1714 = vadd.f32 0.0, %v1713
        %1715 = vdwg.mxu0
        %v1716 = vadd.f32 %v1506, %v1706
        %v1717 = vadd.f32 %v1507, %v1708
        %v1718 = vadd.f32 %v1508, %v1712
        %v1719 = vadd.f32 %v1509, %v1714
        %1720 = vrot.lane.b32.xlu0 %v681, 63
        %v1721 = vpop.permute.xlu0 %1720
        %1722 = vrot.lane.b32.xlu0 %v683, 63
        %v1723 = vpop.permute.xlu0 %1722
        %1724 = vrot.lane.b32.xlu0 %v682, 63
        %v1725 = vpop.permute.xlu0 %1724
        %1726 = vrot.lane.b32.xlu0 %v684, 63
        %v1727 = vpop.permute.xlu0 %1726
        %vm1728 = vcmp.lt.s32.totalorder %v694, 63
        %v1729 = vsel %vm1728, %v1721, %v1725
        %v1730 = vsel %vm1728, %v1723, %v1727
        %v1731 = vsel %vm1728, %v1725, %v1721
        %v1732 = vsel %vm1728, %v1727, %v1723
        %s1733 = scalar_lea.vmem %s1, 5
        %v1734 = vld [vmem:[%s1733] ss:$8 sm:$0x3]
        %v1736 = vlaneseq
        %v1737 = vshrl.u32 %v1736, 7
        %v1738 = vsub.s32 0, %v1737
        %v1739 = vrot.slane %v1734, %v1738
        %v1740 = vlaneseq
        %v1741 = vshrl.u32 %v1740, 7
        %v1742 = vsub.s32 1, %v1741
        %v1743 = vrot.slane %v1734, %v1742
        %v1746 = vmul.f32 %v1731, %v1739
        %v1747 = vmul.f32 %v1729, %v1743
        %v1748 = vmul.f32 %v1732, %v1739
        %v1749 = vmul.f32 %v1730, %v1743
        %s1750 = scalar_lea.vmem %s5, 160
        %v1751 = vld [vmem:[%s1750] sm:$0xff]
        %v1752 = vld [vmem:[%s1750 + $0x8] sm:$0xff]
        %v1754 = vsel %vm754, %v1751, 0
        %v1757 = vsel %vm754, %v1752, 0
        %1759 = vmatprep.subr.mxu0 %v1747
        %1760 = vmatpush1.msra.mxu0 %v1746
        %1761 = vmatprep.subr.mxu0 0.0
        %1762 = vmatpush1.msra.mxu0 0.0
        %1763 = vmatprep.subr.mxu0 0.0
        %1764 = vmatpush1.msra.mxu0 0.0
        %1765 = vmatprep.subr.mxu0 0.0
        %1766 = vmatpush1.msra.mxu0 0.0
        %1767 = vmatprep.subr.mxu0 0.0
        %1768 = vmatpush1.msra.mxu0 0.0
        %1769 = vmatprep.subr.mxu0 0.0
        %1770 = vmatpush1.msra.mxu0 0.0
        %1771 = vmatprep.subr.mxu0 0.0
        %1772 = vmatpush1.msra.mxu0 0.0
        %1773 = vmatprep.subr.mxu0 0.0
        %1774 = vmatpush1.msra.mxu0 0.0
        %1775 = vmatprep.subr.mxu0 0.0
        %1776 = vmatpush1.msra.mxu0 0.0
        %1777 = vmatprep.subr.mxu0 0.0
        %1778 = vmatpush1.msra.mxu0 0.0
        %1779 = vmatprep.subr.mxu0 0.0
        %1780 = vmatpush1.msra.mxu0 0.0
        %1781 = vmatprep.subr.mxu0 0.0
        %1782 = vmatpush1.msra.mxu0 0.0
        %1783 = vmatprep.subr.mxu0 0.0
        %1784 = vmatpush1.msra.mxu0 0.0
        %1785 = vmatprep.subr.mxu0 0.0
        %1786 = vmatpush1.msra.mxu0 0.0
        %1787 = vmatprep.subr.mxu0 0.0
        %1788 = vmatpush1.msra.mxu0 0.0
        %1789 = vmatprep.subr.mxu0 0.0
        %1790 = vmatpush1.msra.mxu0 0.0
        %1791 = vmatprep.subr.mxu0 0.0
        %1792 = vmatpush1.msra.mxu0 0.0
        %1793 = vmatprep.subr.mxu0 0.0
        %1794 = vmatpush1.msra.mxu0 0.0
        %1795 = vmatprep.subr.mxu0 0.0
        %1796 = vmatpush1.msra.mxu0 0.0
        %1797 = vmatprep.subr.mxu0 0.0
        %1798 = vmatpush1.msra.mxu0 0.0
        %1799 = vmatprep.subr.mxu0 0.0
        %1800 = vmatpush1.msra.mxu0 0.0
        %1801 = vmatprep.subr.mxu0 0.0
        %1802 = vmatpush1.msra.mxu0 0.0
        %1803 = vmatprep.subr.mxu0 0.0
        %1804 = vmatpush1.msra.mxu0 0.0
        %1805 = vmatprep.subr.mxu0 0.0
        %1806 = vmatpush1.msra.mxu0 0.0
        %1807 = vmatprep.subr.mxu0 0.0
        %1808 = vmatpush1.msra.mxu0 0.0
        %1809 = vmatprep.subr.mxu0 0.0
        %1810 = vmatpush1.msra.mxu0 0.0
        %1811 = vmatprep.subr.mxu0 0.0
        %1812 = vmatpush1.msra.mxu0 0.0
        %1813 = vmatprep.subr.mxu0 0.0
        %1814 = vmatpush1.msra.mxu0 0.0
        %1815 = vmatprep.subr.mxu0 0.0
        %1816 = vmatpush1.msra.mxu0 0.0
        %1817 = vmatprep.subr.mxu0 0.0
        %1818 = vmatpush1.msra.mxu0 0.0
        %1819 = vmatprep.subr.mxu0 0.0
        %1820 = vmatpush1.msra.mxu0 0.0
        %1821 = vmatprep.subr.mxu0 0.0
        %1822 = vmatpush1.msra.mxu0 0.0
        %1823 = vmatprep.mubr.f32.mxu0 0.0
        %1824 = vmatmul.mubr.f32.gmra.mrb[0].mxu0 %v1754
        %v1825 = vpop.f32.mrb[0].mxu0
        %v1826 = vadd.f32 0.0, %v1825
        %v1827 = vpop.f32.mrb[0].mxu0
        %v1828 = vadd.f32 0.0, %v1827
        %1829 = vmatprep.mubr.f32.mxu0 0.0
        %1830 = vmatmul.mubr.f32.gmra.mrb[0].mxu0 %v1757
        %v1831 = vpop.f32.mrb[0].mxu0
        %v1832 = vadd.f32 0.0, %v1831
        %v1833 = vpop.f32.mrb[0].mxu0
        %v1834 = vadd.f32 0.0, %v1833
        %1835 = vdwg.mxu0
        %v1836 = vadd.f32 %v1626, %v1826
        %v1837 = vadd.f32 %v1627, %v1828
        %v1838 = vadd.f32 %v1628, %v1832
        %v1839 = vadd.f32 %v1629, %v1834
        %s1840 = scalar_lea.vmem %s5, 176
        %v1841 = vld [vmem:[%s1840] sm:$0xff]
        %v1842 = vld [vmem:[%s1840 + $0x8] sm:$0xff]
        %v1844 = vsel %vm754, %v1841, 0
        %v1847 = vsel %vm754, %v1842, 0
        %1849 = vmatprep.subr.mxu0 %v1749
        %1850 = vmatpush1.msra.mxu0 %v1748
        %1851 = vmatprep.subr.mxu0 0.0
        %1852 = vmatpush1.msra.mxu0 0.0
        %1853 = vmatprep.subr.mxu0 0.0
        %1854 = vmatpush1.msra.mxu0 0.0
        %1855 = vmatprep.subr.mxu0 0.0
        %1856 = vmatpush1.msra.mxu0 0.0
        %1857 = vmatprep.subr.mxu0 0.0
        %1858 = vmatpush1.msra.mxu0 0.0
        %1859 = vmatprep.subr.mxu0 0.0
        %1860 = vmatpush1.msra.mxu0 0.0
        %1861 = vmatprep.subr.mxu0 0.0
        %1862 = vmatpush1.msra.mxu0 0.0
        %1863 = vmatprep.subr.mxu0 0.0
        %1864 = vmatpush1.msra.mxu0 0.0
        %1865 = vmatprep.subr.mxu0 0.0
        %1866 = vmatpush1.msra.mxu0 0.0
        %1867 = vmatprep.subr.mxu0 0.0
        %1868 = vmatpush1.msra.mxu0 0.0
        %1869 = vmatprep.subr.mxu0 0.0
        %1870 = vmatpush1.msra.mxu0 0.0
        %1871 = vmatprep.subr.mxu0 0.0
        %1872 = vmatpush1.msra.mxu0 0.0
        %1873 = vmatprep.subr.mxu0 0.0
        %1874 = vmatpush1.msra.mxu0 0.0
        %1875 = vmatprep.subr.mxu0 0.0
        %1876 = vmatpush1.msra.mxu0 0.0
        %1877 = vmatprep.subr.mxu0 0.0
        %1878 = vmatpush1.msra.mxu0 0.0
        %1879 = vmatprep.subr.mxu0 0.0
        %1880 = vmatpush1.msra.mxu0 0.0
        %1881 = vmatprep.subr.mxu0 0.0
        %1882 = vmatpush1.msra.mxu0 0.0
        %1883 = vmatprep.subr.mxu0 0.0
        %1884 = vmatpush1.msra.mxu0 0.0
        %1885 = vmatprep.subr.mxu0 0.0
        %1886 = vmatpush1.msra.mxu0 0.0
        %1887 = vmatprep.subr.mxu0 0.0
        %1888 = vmatpush1.msra.mxu0 0.0
        %1889 = vmatprep.subr.mxu0 0.0
        %1890 = vmatpush1.msra.mxu0 0.0
        %1891 = vmatprep.subr.mxu0 0.0
        %1892 = vmatpush1.msra.mxu0 0.0
        %1893 = vmatprep.subr.mxu0 0.0
        %1894 = vmatpush1.msra.mxu0 0.0
        %1895 = vmatprep.subr.mxu0 0.0
        %1896 = vmatpush1.msra.mxu0 0.0
        %1897 = vmatprep.subr.mxu0 0.0
        %1898 = vmatpush1.msra.mxu0 0.0
        %1899 = vmatprep.subr.mxu0 0.0
        %1900 = vmatpush1.msra.mxu0 0.0
        %1901 = vmatprep.subr.mxu0 0.0
        %1902 = vmatpush1.msra.mxu0 0.0
        %1903 = vmatprep.subr.mxu0 0.0
        %1904 = vmatpush1.msra.mxu0 0.0
        %1905 = vmatprep.subr.mxu0 0.0
        %1906 = vmatpush1.msra.mxu0 0.0
        %1907 = vmatprep.subr.mxu0 0.0
        %1908 = vmatpush1.msra.mxu0 0.0
        %1909 = vmatprep.subr.mxu0 0.0
        %1910 = vmatpush1.msra.mxu0 0.0
        %1911 = vmatprep.subr.mxu0 0.0
        %1912 = vmatpush1.msra.mxu0 0.0
        %1913 = vmatprep.mubr.f32.mxu0 0.0
        %1914 = vmatmul.mubr.f32.gmra.mrb[0].mxu0 %v1844
        %v1915 = vpop.f32.mrb[0].mxu0
        %v1916 = vadd.f32 0.0, %v1915
        %v1917 = vpop.f32.mrb[0].mxu0
        %v1918 = vadd.f32 0.0, %v1917
        %1919 = vmatprep.mubr.f32.mxu0 0.0
        %1920 = vmatmul.mubr.f32.gmra.mrb[0].mxu0 %v1847
        %v1921 = vpop.f32.mrb[0].mxu0
        %v1922 = vadd.f32 0.0, %v1921
        %v1923 = vpop.f32.mrb[0].mxu0
        %v1924 = vadd.f32 0.0, %v1923
        %1925 = vdwg.mxu0
        %v1926 = vadd.f32 %v1716, %v1916
        %v1927 = vadd.f32 %v1717, %v1918
        %v1928 = vadd.f32 %v1718, %v1922
        %v1929 = vadd.f32 %v1719, %v1924
        %1930 = vrot.lane.b32.xlu0 %v681, 57
        %v1931 = vpop.permute.xlu0 %1930
        %1932 = vrot.lane.b32.xlu0 %v683, 57
        %v1933 = vpop.permute.xlu0 %1932
        %1934 = vrot.lane.b32.xlu0 %v682, 57
        %v1935 = vpop.permute.xlu0 %1934
        %1936 = vrot.lane.b32.xlu0 %v684, 57
        %v1937 = vpop.permute.xlu0 %1936
        %vm1938 = vcmp.lt.s32.totalorder %v694, 57
        %v1939 = vsel %vm1938, %v1931, %v1935
        %v1940 = vsel %vm1938, %v1933, %v1937
        %v1941 = vsel %vm1938, %v1935, %v1931
        %v1942 = vsel %vm1938, %v1937, %v1933
        %s1943 = scalar_lea.vmem %s1, 6
        %v1944 = vld [vmem:[%s1943] ss:$8 sm:$0x3]
        %v1946 = vlaneseq
        %v1947 = vshrl.u32 %v1946, 7
        %v1948 = vsub.s32 0, %v1947
        %v1949 = vrot.slane %v1944, %v1948
        %v1950 = vlaneseq
        %v1951 = vshrl.u32 %v1950, 7
        %v1952 = vsub.s32 1, %v1951
        %v1953 = vrot.slane %v1944, %v1952
        %v1956 = vmul.f32 %v1941, %v1949
        %v1957 = vmul.f32 %v1939, %v1953
        %v1958 = vmul.f32 %v1942, %v1949
        %v1959 = vmul.f32 %v1940, %v1953
        %s1960 = scalar_lea.vmem %s5, 192
        %v1961 = vld [vmem:[%s1960] sm:$0xff]
        %v1962 = vld [vmem:[%s1960 + $0x8] sm:$0xff]
        %v1964 = vsel %vm754, %v1961, 0
        %v1967 = vsel %vm754, %v1962, 0
        %1969 = vmatprep.subr.mxu0 %v1957
        %1970 = vmatpush1.msra.mxu0 %v1956
        %1971 = vmatprep.subr.mxu0 0.0
        %1972 = vmatpush1.msra.mxu0 0.0
        %1973 = vmatprep.subr.mxu0 0.0
        %1974 = vmatpush1.msra.mxu0 0.0
        %1975 = vmatprep.subr.mxu0 0.0
        %1976 = vmatpush1.msra.mxu0 0.0
        %1977 = vmatprep.subr.mxu0 0.0
        %1978 = vmatpush1.msra.mxu0 0.0
        %1979 = vmatprep.subr.mxu0 0.0
        %1980 = vmatpush1.msra.mxu0 0.0
        %1981 = vmatprep.subr.mxu0 0.0
        %1982 = vmatpush1.msra.mxu0 0.0
        %1983 = vmatprep.subr.mxu0 0.0
        %1984 = vmatpush1.msra.mxu0 0.0
        %1985 = vmatprep.subr.mxu0 0.0
        %1986 = vmatpush1.msra.mxu0 0.0
        %1987 = vmatprep.subr.mxu0 0.0
        %1988 = vmatpush1.msra.mxu0 0.0
        %1989 = vmatprep.subr.mxu0 0.0
        %1990 = vmatpush1.msra.mxu0 0.0
        %1991 = vmatprep.subr.mxu0 0.0
        %1992 = vmatpush1.msra.mxu0 0.0
        %1993 = vmatprep.subr.mxu0 0.0
        %1994 = vmatpush1.msra.mxu0 0.0
        %1995 = vmatprep.subr.mxu0 0.0
        %1996 = vmatpush1.msra.mxu0 0.0
        %1997 = vmatprep.subr.mxu0 0.0
        %1998 = vmatpush1.msra.mxu0 0.0
        %1999 = vmatprep.subr.mxu0 0.0
        %2000 = vmatpush1.msra.mxu0 0.0
        %2001 = vmatprep.subr.mxu0 0.0
        %2002 = vmatpush1.msra.mxu0 0.0
        %2003 = vmatprep.subr.mxu0 0.0
        %2004 = vmatpush1.msra.mxu0 0.0
        %2005 = vmatprep.subr.mxu0 0.0
        %2006 = vmatpush1.msra.mxu0 0.0
        %2007 = vmatprep.subr.mxu0 0.0
        %2008 = vmatpush1.msra.mxu0 0.0
        %2009 = vmatprep.subr.mxu0 0.0
        %2010 = vmatpush1.msra.mxu0 0.0
        %2011 = vmatprep.subr.mxu0 0.0
        %2012 = vmatpush1.msra.mxu0 0.0
        %2013 = vmatprep.subr.mxu0 0.0
        %2014 = vmatpush1.msra.mxu0 0.0
        %2015 = vmatprep.subr.mxu0 0.0
        %2016 = vmatpush1.msra.mxu0 0.0
        %2017 = vmatprep.subr.mxu0 0.0
        %2018 = vmatpush1.msra.mxu0 0.0
        %2019 = vmatprep.subr.mxu0 0.0
        %2020 = vmatpush1.msra.mxu0 0.0
        %2021 = vmatprep.subr.mxu0 0.0
        %2022 = vmatpush1.msra.mxu0 0.0
        %2023 = vmatprep.subr.mxu0 0.0
        %2024 = vmatpush1.msra.mxu0 0.0
        %2025 = vmatprep.subr.mxu0 0.0
        %2026 = vmatpush1.msra.mxu0 0.0
        %2027 = vmatprep.subr.mxu0 0.0
        %2028 = vmatpush1.msra.mxu0 0.0
        %2029 = vmatprep.subr.mxu0 0.0
        %2030 = vmatpush1.msra.mxu0 0.0
        %2031 = vmatprep.subr.mxu0 0.0
        %2032 = vmatpush1.msra.mxu0 0.0
        %2033 = vmatprep.mubr.f32.mxu0 0.0
        %2034 = vmatmul.mubr.f32.gmra.mrb[0].mxu0 %v1964
        %v2035 = vpop.f32.mrb[0].mxu0
        %v2036 = vadd.f32 0.0, %v2035
        %v2037 = vpop.f32.mrb[0].mxu0
        %v2038 = vadd.f32 0.0, %v2037
        %2039 = vmatprep.mubr.f32.mxu0 0.0
        %2040 = vmatmul.mubr.f32.gmra.mrb[0].mxu0 %v1967
        %v2041 = vpop.f32.mrb[0].mxu0
        %v2042 = vadd.f32 0.0, %v2041
        %v2043 = vpop.f32.mrb[0].mxu0
        %v2044 = vadd.f32 0.0, %v2043
        %2045 = vdwg.mxu0
        %v2046 = vadd.f32 %v1836, %v2036
        %v2047 = vadd.f32 %v1837, %v2038
        %v2048 = vadd.f32 %v1838, %v2042
        %v2049 = vadd.f32 %v1839, %v2044
        %s2050 = scalar_lea.vmem %s5, 208
        %v2051 = vld [vmem:[%s2050] sm:$0xff]
        %v2052 = vld [vmem:[%s2050 + $0x8] sm:$0xff]
        %v2054 = vsel %vm754, %v2051, 0
        %v2057 = vsel %vm754, %v2052, 0
        %2059 = vmatprep.subr.mxu0 %v1959
        %2060 = vmatpush1.msra.mxu0 %v1958
        %2061 = vmatprep.subr.mxu0 0.0
        %2062 = vmatpush1.msra.mxu0 0.0
        %2063 = vmatprep.subr.mxu0 0.0
        %2064 = vmatpush1.msra.mxu0 0.0
        %2065 = vmatprep.subr.mxu0 0.0
        %2066 = vmatpush1.msra.mxu0 0.0
        %2067 = vmatprep.subr.mxu0 0.0
        %2068 = vmatpush1.msra.mxu0 0.0
        %2069 = vmatprep.subr.mxu0 0.0
        %2070 = vmatpush1.msra.mxu0 0.0
        %2071 = vmatprep.subr.mxu0 0.0
        %2072 = vmatpush1.msra.mxu0 0.0
        %2073 = vmatprep.subr.mxu0 0.0
        %2074 = vmatpush1.msra.mxu0 0.0
        %2075 = vmatprep.subr.mxu0 0.0
        %2076 = vmatpush1.msra.mxu0 0.0
        %2077 = vmatprep.subr.mxu0 0.0
        %2078 = vmatpush1.msra.mxu0 0.0
        %2079 = vmatprep.subr.mxu0 0.0
        %2080 = vmatpush1.msra.mxu0 0.0
        %2081 = vmatprep.subr.mxu0 0.0
        %2082 = vmatpush1.msra.mxu0 0.0
        %2083 = vmatprep.subr.mxu0 0.0
        %2084 = vmatpush1.msra.mxu0 0.0
        %2085 = vmatprep.subr.mxu0 0.0
        %2086 = vmatpush1.msra.mxu0 0.0
        %2087 = vmatprep.subr.mxu0 0.0
        %2088 = vmatpush1.msra.mxu0 0.0
        %2089 = vmatprep.subr.mxu0 0.0
        %2090 = vmatpush1.msra.mxu0 0.0
        %2091 = vmatprep.subr.mxu0 0.0
        %2092 = vmatpush1.msra.mxu0 0.0
        %2093 = vmatprep.subr.mxu0 0.0
        %2094 = vmatpush1.msra.mxu0 0.0
        %2095 = vmatprep.subr.mxu0 0.0
        %2096 = vmatpush1.msra.mxu0 0.0
        %2097 = vmatprep.subr.mxu0 0.0
        %2098 = vmatpush1.msra.mxu0 0.0
        %2099 = vmatprep.subr.mxu0 0.0
        %2100 = vmatpush1.msra.mxu0 0.0
        %2101 = vmatprep.subr.mxu0 0.0
        %2102 = vmatpush1.msra.mxu0 0.0
        %2103 = vmatprep.subr.mxu0 0.0
        %2104 = vmatpush1.msra.mxu0 0.0
        %2105 = vmatprep.subr.mxu0 0.0
        %2106 = vmatpush1.msra.mxu0 0.0
        %2107 = vmatprep.subr.mxu0 0.0
        %2108 = vmatpush1.msra.mxu0 0.0
        %2109 = vmatprep.subr.mxu0 0.0
        %2110 = vmatpush1.msra.mxu0 0.0
        %2111 = vmatprep.subr.mxu0 0.0
        %2112 = vmatpush1.msra.mxu0 0.0
        %2113 = vmatprep.subr.mxu0 0.0
        %2114 = vmatpush1.msra.mxu0 0.0
        %2115 = vmatprep.subr.mxu0 0.0
        %2116 = vmatpush1.msra.mxu0 0.0
        %2117 = vmatprep.subr.mxu0 0.0
        %2118 = vmatpush1.msra.mxu0 0.0
        %2119 = vmatprep.subr.mxu0 0.0
        %2120 = vmatpush1.msra.mxu0 0.0
        %2121 = vmatprep.subr.mxu0 0.0
        %2122 = vmatpush1.msra.mxu0 0.0
        %2123 = vmatprep.mubr.f32.mxu0 0.0
        %2124 = vmatmul.mubr.f32.gmra.mrb[0].mxu0 %v2054
        %v2125 = vpop.f32.mrb[0].mxu0
        %v2126 = vadd.f32 0.0, %v2125
        %v2127 = vpop.f32.mrb[0].mxu0
        %v2128 = vadd.f32 0.0, %v2127
        %2129 = vmatprep.mubr.f32.mxu0 0.0
        %2130 = vmatmul.mubr.f32.gmra.mrb[0].mxu0 %v2057
        %v2131 = vpop.f32.mrb[0].mxu0
        %v2132 = vadd.f32 0.0, %v2131
        %v2133 = vpop.f32.mrb[0].mxu0
        %v2134 = vadd.f32 0.0, %v2133
        %2135 = vdwg.mxu0
        %v2136 = vadd.f32 %v1926, %v2126
        %v2137 = vadd.f32 %v1927, %v2128
        %v2138 = vadd.f32 %v1928, %v2132
        %v2139 = vadd.f32 %v1929, %v2134
        %2140 = vrot.lane.b32.xlu0 %v681, 56
        %v2141 = vpop.permute.xlu0 %2140
        %2142 = vrot.lane.b32.xlu0 %v683, 56
        %v2143 = vpop.permute.xlu0 %2142
        %2144 = vrot.lane.b32.xlu0 %v682, 56
        %v2145 = vpop.permute.xlu0 %2144
        %2146 = vrot.lane.b32.xlu0 %v684, 56
        %v2147 = vpop.permute.xlu0 %2146
        %vm2148 = vcmp.lt.s32.totalorder %v694, 56
        %v2149 = vsel %vm2148, %v2141, %v2145
        %v2150 = vsel %vm2148, %v2143, %v2147
        %v2151 = vsel %vm2148, %v2145, %v2141
        %v2152 = vsel %vm2148, %v2147, %v2143
        %s2153 = scalar_lea.vmem %s1, 7
        %v2154 = vld [vmem:[%s2153] ss:$8 sm:$0x3]
        %v2156 = vlaneseq
        %v2157 = vshrl.u32 %v2156, 7
        %v2158 = vsub.s32 0, %v2157
        %v2159 = vrot.slane %v2154, %v2158
        %v2160 = vlaneseq
        %v2161 = vshrl.u32 %v2160, 7
        %v2162 = vsub.s32 1, %v2161
        %v2163 = vrot.slane %v2154, %v2162
        %v2166 = vmul.f32 %v2151, %v2159
        %v2167 = vmul.f32 %v2149, %v2163
        %v2168 = vmul.f32 %v2152, %v2159
        %v2169 = vmul.f32 %v2150, %v2163
        %s2170 = scalar_lea.vmem %s5, 224
        %v2171 = vld [vmem:[%s2170] sm:$0xff]
        %v2172 = vld [vmem:[%s2170 + $0x8] sm:$0xff]
        %v2174 = vsel %vm754, %v2171, 0
        %v2177 = vsel %vm754, %v2172, 0
        %2179 = vmatprep.subr.mxu0 %v2167
        %2180 = vmatpush1.msra.mxu0 %v2166
        %2181 = vmatprep.subr.mxu0 0.0
        %2182 = vmatpush1.msra.mxu0 0.0
        %2183 = vmatprep.subr.mxu0 0.0
        %2184 = vmatpush1.msra.mxu0 0.0
        %2185 = vmatprep.subr.mxu0 0.0
        %2186 = vmatpush1.msra.mxu0 0.0
        %2187 = vmatprep.subr.mxu0 0.0
        %2188 = vmatpush1.msra.mxu0 0.0
        %2189 = vmatprep.subr.mxu0 0.0
        %2190 = vmatpush1.msra.mxu0 0.0
        %2191 = vmatprep.subr.mxu0 0.0
        %2192 = vmatpush1.msra.mxu0 0.0
        %2193 = vmatprep.subr.mxu0 0.0
        %2194 = vmatpush1.msra.mxu0 0.0
        %2195 = vmatprep.subr.mxu0 0.0
        %2196 = vmatpush1.msra.mxu0 0.0
        %2197 = vmatprep.subr.mxu0 0.0
        %2198 = vmatpush1.msra.mxu0 0.0
        %2199 = vmatprep.subr.mxu0 0.0
        %2200 = vmatpush1.msra.mxu0 0.0
        %2201 = vmatprep.subr.mxu0 0.0
        %2202 = vmatpush1.msra.mxu0 0.0
        %2203 = vmatprep.subr.mxu0 0.0
        %2204 = vmatpush1.msra.mxu0 0.0
        %2205 = vmatprep.subr.mxu0 0.0
        %2206 = vmatpush1.msra.mxu0 0.0
        %2207 = vmatprep.subr.mxu0 0.0
        %2208 = vmatpush1.msra.mxu0 0.0
        %2209 = vmatprep.subr.mxu0 0.0
        %2210 = vmatpush1.msra.mxu0 0.0
        %2211 = vmatprep.subr.mxu0 0.0
        %2212 = vmatpush1.msra.mxu0 0.0
        %2213 = vmatprep.subr.mxu0 0.0
        %2214 = vmatpush1.msra.mxu0 0.0
        %2215 = vmatprep.subr.mxu0 0.0
        %2216 = vmatpush1.msra.mxu0 0.0
        %2217 = vmatprep.subr.mxu0 0.0
        %2218 = vmatpush1.msra.mxu0 0.0
        %2219 = vmatprep.subr.mxu0 0.0
        %2220 = vmatpush1.msra.mxu0 0.0
        %2221 = vmatprep.subr.mxu0 0.0
        %2222 = vmatpush1.msra.mxu0 0.0
        %2223 = vmatprep.subr.mxu0 0.0
        %2224 = vmatpush1.msra.mxu0 0.0
        %2225 = vmatprep.subr.mxu0 0.0
        %2226 = vmatpush1.msra.mxu0 0.0
        %2227 = vmatprep.subr.mxu0 0.0
        %2228 = vmatpush1.msra.mxu0 0.0
        %2229 = vmatprep.subr.mxu0 0.0
        %2230 = vmatpush1.msra.mxu0 0.0
        %2231 = vmatprep.subr.mxu0 0.0
        %2232 = vmatpush1.msra.mxu0 0.0
        %2233 = vmatprep.subr.mxu0 0.0
        %2234 = vmatpush1.msra.mxu0 0.0
        %2235 = vmatprep.subr.mxu0 0.0
        %2236 = vmatpush1.msra.mxu0 0.0
        %2237 = vmatprep.subr.mxu0 0.0
        %2238 = vmatpush1.msra.mxu0 0.0
        %2239 = vmatprep.subr.mxu0 0.0
        %2240 = vmatpush1.msra.mxu0 0.0
        %2241 = vmatprep.subr.mxu0 0.0
        %2242 = vmatpush1.msra.mxu0 0.0
        %2243 = vmatprep.mubr.f32.mxu0 0.0
        %2244 = vmatmul.mubr.f32.gmra.mrb[0].mxu0 %v2174
        %v2245 = vpop.f32.mrb[0].mxu0
        %v2246 = vadd.f32 0.0, %v2245
        %v2247 = vpop.f32.mrb[0].mxu0
        %v2248 = vadd.f32 0.0, %v2247
        %2249 = vmatprep.mubr.f32.mxu0 0.0
        %2250 = vmatmul.mubr.f32.gmra.mrb[0].mxu0 %v2177
        %v2251 = vpop.f32.mrb[0].mxu0
        %v2252 = vadd.f32 0.0, %v2251
        %v2253 = vpop.f32.mrb[0].mxu0
        %v2254 = vadd.f32 0.0, %v2253
        %2255 = vdwg.mxu0
        %v2256 = vadd.f32 %v2046, %v2246
        %v2257 = vadd.f32 %v2047, %v2248
        %v2258 = vadd.f32 %v2048, %v2252
        %v2259 = vadd.f32 %v2049, %v2254
        %s2260 = scalar_lea.vmem %s5, 240
        %v2261 = vld [vmem:[%s2260] sm:$0xff]
        %v2262 = vld [vmem:[%s2260 + $0x8] sm:$0xff]
        %v2264 = vsel %vm754, %v2261, 0
        %v2267 = vsel %vm754, %v2262, 0
        %2269 = vmatprep.subr.mxu0 %v2169
        %2270 = vmatpush1.msra.mxu0 %v2168
        %2271 = vmatprep.subr.mxu0 0.0
        %2272 = vmatpush1.msra.mxu0 0.0
        %2273 = vmatprep.subr.mxu0 0.0
        %2274 = vmatpush1.msra.mxu0 0.0
        %2275 = vmatprep.subr.mxu0 0.0
        %2276 = vmatpush1.msra.mxu0 0.0
        %2277 = vmatprep.subr.mxu0 0.0
        %2278 = vmatpush1.msra.mxu0 0.0
        %2279 = vmatprep.subr.mxu0 0.0
        %2280 = vmatpush1.msra.mxu0 0.0
        %2281 = vmatprep.subr.mxu0 0.0
        %2282 = vmatpush1.msra.mxu0 0.0
        %2283 = vmatprep.subr.mxu0 0.0
        %2284 = vmatpush1.msra.mxu0 0.0
        %2285 = vmatprep.subr.mxu0 0.0
        %2286 = vmatpush1.msra.mxu0 0.0
        %2287 = vmatprep.subr.mxu0 0.0
        %2288 = vmatpush1.msra.mxu0 0.0
        %2289 = vmatprep.subr.mxu0 0.0
        %2290 = vmatpush1.msra.mxu0 0.0
        %2291 = vmatprep.subr.mxu0 0.0
        %2292 = vmatpush1.msra.mxu0 0.0
        %2293 = vmatprep.subr.mxu0 0.0
        %2294 = vmatpush1.msra.mxu0 0.0
        %2295 = vmatprep.subr.mxu0 0.0
        %2296 = vmatpush1.msra.mxu0 0.0
        %2297 = vmatprep.subr.mxu0 0.0
        %2298 = vmatpush1.msra.mxu0 0.0
        %2299 = vmatprep.subr.mxu0 0.0
        %2300 = vmatpush1.msra.mxu0 0.0
        %2301 = vmatprep.subr.mxu0 0.0
        %2302 = vmatpush1.msra.mxu0 0.0
        %2303 = vmatprep.subr.mxu0 0.0
        %2304 = vmatpush1.msra.mxu0 0.0
        %2305 = vmatprep.subr.mxu0 0.0
        %2306 = vmatpush1.msra.mxu0 0.0
        %2307 = vmatprep.subr.mxu0 0.0
        %2308 = vmatpush1.msra.mxu0 0.0
        %2309 = vmatprep.subr.mxu0 0.0
        %2310 = vmatpush1.msra.mxu0 0.0
        %2311 = vmatprep.subr.mxu0 0.0
        %2312 = vmatpush1.msra.mxu0 0.0
        %2313 = vmatprep.subr.mxu0 0.0
        %2314 = vmatpush1.msra.mxu0 0.0
        %2315 = vmatprep.subr.mxu0 0.0
        %2316 = vmatpush1.msra.mxu0 0.0
        %2317 = vmatprep.subr.mxu0 0.0
        %2318 = vmatpush1.msra.mxu0 0.0
        %2319 = vmatprep.subr.mxu0 0.0
        %2320 = vmatpush1.msra.mxu0 0.0
        %2321 = vmatprep.subr.mxu0 0.0
        %2322 = vmatpush1.msra.mxu0 0.0
        %2323 = vmatprep.subr.mxu0 0.0
        %2324 = vmatpush1.msra.mxu0 0.0
        %2325 = vmatprep.subr.mxu0 0.0
        %2326 = vmatpush1.msra.mxu0 0.0
        %2327 = vmatprep.subr.mxu0 0.0
        %2328 = vmatpush1.msra.mxu0 0.0
        %2329 = vmatprep.subr.mxu0 0.0
        %2330 = vmatpush1.msra.mxu0 0.0
        %2331 = vmatprep.subr.mxu0 0.0
        %2332 = vmatpush1.msra.mxu0 0.0
        %2333 = vmatprep.mubr.f32.mxu0 0.0
        %2334 = vmatmul.mubr.f32.gmra.mrb[0].mxu0 %v2264
        %v2335 = vpop.f32.mrb[0].mxu0
        %v2336 = vadd.f32 0.0, %v2335
        %v2337 = vpop.f32.mrb[0].mxu0
        %v2338 = vadd.f32 0.0, %v2337
        %2339 = vmatprep.mubr.f32.mxu0 0.0
        %2340 = vmatmul.mubr.f32.gmra.mrb[0].mxu0 %v2267
        %v2341 = vpop.f32.mrb[0].mxu0
        %v2342 = vadd.f32 0.0, %v2341
        %v2343 = vpop.f32.mrb[0].mxu0
        %v2344 = vadd.f32 0.0, %v2343
        %2345 = vdwg.mxu0
        %v2346 = vadd.f32 %v2136, %v2336
        %v2347 = vadd.f32 %v2137, %v2338
        %v2348 = vadd.f32 %v2138, %v2342
        %v2349 = vadd.f32 %v2139, %v2344
        %2350 = vrot.lane.b32.xlu0 %v681, 55
        %v2351 = vpop.permute.xlu0 %2350
        %2352 = vrot.lane.b32.xlu0 %v683, 55
        %v2353 = vpop.permute.xlu0 %2352
        %2354 = vrot.lane.b32.xlu0 %v682, 55
        %v2355 = vpop.permute.xlu0 %2354
        %2356 = vrot.lane.b32.xlu0 %v684, 55
        %v2357 = vpop.permute.xlu0 %2356
        %vm2358 = vcmp.lt.s32.totalorder %v694, 55
        %v2359 = vsel %vm2358, %v2351, %v2355
        %v2360 = vsel %vm2358, %v2353, %v2357
        %v2361 = vsel %vm2358, %v2355, %v2351
        %v2362 = vsel %vm2358, %v2357, %v2353
        %s2363 = scalar_lea.vmem %s1, 16
        %v2364 = vld [vmem:[%s2363] ss:$8 sm:$0x3]
        %v2366 = vlaneseq
        %v2367 = vshrl.u32 %v2366, 7
        %v2368 = vsub.s32 0, %v2367
        %v2369 = vrot.slane %v2364, %v2368
        %v2370 = vlaneseq
        %v2371 = vshrl.u32 %v2370, 7
        %v2372 = vsub.s32 1, %v2371
        %v2373 = vrot.slane %v2364, %v2372
        %v2376 = vmul.f32 %v2361, %v2369
        %v2377 = vmul.f32 %v2359, %v2373
        %v2378 = vmul.f32 %v2362, %v2369
        %v2379 = vmul.f32 %v2360, %v2373
        %s2380 = scalar_lea.vmem %s5, 256
        %v2381 = vld [vmem:[%s2380] sm:$0xff]
        %v2382 = vld [vmem:[%s2380 + $0x8] sm:$0xff]
        %v2384 = vsel %vm754, %v2381, 0
        %v2387 = vsel %vm754, %v2382, 0
        %2389 = vmatprep.subr.mxu0 %v2377
        %2390 = vmatpush1.msra.mxu0 %v2376
        %2391 = vmatprep.subr.mxu0 0.0
        %2392 = vmatpush1.msra.mxu0 0.0
        %2393 = vmatprep.subr.mxu0 0.0
        %2394 = vmatpush1.msra.mxu0 0.0
        %2395 = vmatprep.subr.mxu0 0.0
        %2396 = vmatpush1.msra.mxu0 0.0
        %2397 = vmatprep.subr.mxu0 0.0
        %2398 = vmatpush1.msra.mxu0 0.0
        %2399 = vmatprep.subr.mxu0 0.0
        %2400 = vmatpush1.msra.mxu0 0.0
        %2401 = vmatprep.subr.mxu0 0.0
        %2402 = vmatpush1.msra.mxu0 0.0
        %2403 = vmatprep.subr.mxu0 0.0
        %2404 = vmatpush1.msra.mxu0 0.0
        %2405 = vmatprep.subr.mxu0 0.0
        %2406 = vmatpush1.msra.mxu0 0.0
        %2407 = vmatprep.subr.mxu0 0.0
        %2408 = vmatpush1.msra.mxu0 0.0
        %2409 = vmatprep.subr.mxu0 0.0
        %2410 = vmatpush1.msra.mxu0 0.0
        %2411 = vmatprep.subr.mxu0 0.0
        %2412 = vmatpush1.msra.mxu0 0.0
        %2413 = vmatprep.subr.mxu0 0.0
        %2414 = vmatpush1.msra.mxu0 0.0
        %2415 = vmatprep.subr.mxu0 0.0
        %2416 = vmatpush1.msra.mxu0 0.0
        %2417 = vmatprep.subr.mxu0 0.0
        %2418 = vmatpush1.msra.mxu0 0.0
        %2419 = vmatprep.subr.mxu0 0.0
        %2420 = vmatpush1.msra.mxu0 0.0
        %2421 = vmatprep.subr.mxu0 0.0
        %2422 = vmatpush1.msra.mxu0 0.0
        %2423 = vmatprep.subr.mxu0 0.0
        %2424 = vmatpush1.msra.mxu0 0.0
        %2425 = vmatprep.subr.mxu0 0.0
        %2426 = vmatpush1.msra.mxu0 0.0
        %2427 = vmatprep.subr.mxu0 0.0
        %2428 = vmatpush1.msra.mxu0 0.0
        %2429 = vmatprep.subr.mxu0 0.0
        %2430 = vmatpush1.msra.mxu0 0.0
        %2431 = vmatprep.subr.mxu0 0.0
        %2432 = vmatpush1.msra.mxu0 0.0
        %2433 = vmatprep.subr.mxu0 0.0
        %2434 = vmatpush1.msra.mxu0 0.0
        %2435 = vmatprep.subr.mxu0 0.0
        %2436 = vmatpush1.msra.mxu0 0.0
        %2437 = vmatprep.subr.mxu0 0.0
        %2438 = vmatpush1.msra.mxu0 0.0
        %2439 = vmatprep.subr.mxu0 0.0
        %2440 = vmatpush1.msra.mxu0 0.0
        %2441 = vmatprep.subr.mxu0 0.0
        %2442 = vmatpush1.msra.mxu0 0.0
        %2443 = vmatprep.subr.mxu0 0.0
        %2444 = vmatpush1.msra.mxu0 0.0
        %2445 = vmatprep.subr.mxu0 0.0
        %2446 = vmatpush1.msra.mxu0 0.0
        %2447 = vmatprep.subr.mxu0 0.0
        %2448 = vmatpush1.msra.mxu0 0.0
        %2449 = vmatprep.subr.mxu0 0.0
        %2450 = vmatpush1.msra.mxu0 0.0
        %2451 = vmatprep.subr.mxu0 0.0
        %2452 = vmatpush1.msra.mxu0 0.0
        %2453 = vmatprep.mubr.f32.mxu0 0.0
        %2454 = vmatmul.mubr.f32.gmra.mrb[0].mxu0 %v2384
        %v2455 = vpop.f32.mrb[0].mxu0
        %v2456 = vadd.f32 0.0, %v2455
        %v2457 = vpop.f32.mrb[0].mxu0
        %v2458 = vadd.f32 0.0, %v2457
        %2459 = vmatprep.mubr.f32.mxu0 0.0
        %2460 = vmatmul.mubr.f32.gmra.mrb[0].mxu0 %v2387
        %v2461 = vpop.f32.mrb[0].mxu0
        %v2462 = vadd.f32 0.0, %v2461
        %v2463 = vpop.f32.mrb[0].mxu0
        %v2464 = vadd.f32 0.0, %v2463
        %2465 = vdwg.mxu0
        %v2466 = vadd.f32 %v2256, %v2456
        %v2467 = vadd.f32 %v2257, %v2458
        %v2468 = vadd.f32 %v2258, %v2462
        %v2469 = vadd.f32 %v2259, %v2464
        %s2470 = scalar_lea.vmem %s5, 272
        %v2471 = vld [vmem:[%s2470] sm:$0xff]
        %v2472 = vld [vmem:[%s2470 + $0x8] sm:$0xff]
        %v2474 = vsel %vm754, %v2471, 0
        %v2477 = vsel %vm754, %v2472, 0
        %2479 = vmatprep.subr.mxu0 %v2379
        %2480 = vmatpush1.msra.mxu0 %v2378
        %2481 = vmatprep.subr.mxu0 0.0
        %2482 = vmatpush1.msra.mxu0 0.0
        %2483 = vmatprep.subr.mxu0 0.0
        %2484 = vmatpush1.msra.mxu0 0.0
        %2485 = vmatprep.subr.mxu0 0.0
        %2486 = vmatpush1.msra.mxu0 0.0
        %2487 = vmatprep.subr.mxu0 0.0
        %2488 = vmatpush1.msra.mxu0 0.0
        %2489 = vmatprep.subr.mxu0 0.0
        %2490 = vmatpush1.msra.mxu0 0.0
        %2491 = vmatprep.subr.mxu0 0.0
        %2492 = vmatpush1.msra.mxu0 0.0
        %2493 = vmatprep.subr.mxu0 0.0
        %2494 = vmatpush1.msra.mxu0 0.0
        %2495 = vmatprep.subr.mxu0 0.0
        %2496 = vmatpush1.msra.mxu0 0.0
        %2497 = vmatprep.subr.mxu0 0.0
        %2498 = vmatpush1.msra.mxu0 0.0
        %2499 = vmatprep.subr.mxu0 0.0
        %2500 = vmatpush1.msra.mxu0 0.0
        %2501 = vmatprep.subr.mxu0 0.0
        %2502 = vmatpush1.msra.mxu0 0.0
        %2503 = vmatprep.subr.mxu0 0.0
        %2504 = vmatpush1.msra.mxu0 0.0
        %2505 = vmatprep.subr.mxu0 0.0
        %2506 = vmatpush1.msra.mxu0 0.0
        %2507 = vmatprep.subr.mxu0 0.0
        %2508 = vmatpush1.msra.mxu0 0.0
        %2509 = vmatprep.subr.mxu0 0.0
        %2510 = vmatpush1.msra.mxu0 0.0
        %2511 = vmatprep.subr.mxu0 0.0
        %2512 = vmatpush1.msra.mxu0 0.0
        %2513 = vmatprep.subr.mxu0 0.0
        %2514 = vmatpush1.msra.mxu0 0.0
        %2515 = vmatprep.subr.mxu0 0.0
        %2516 = vmatpush1.msra.mxu0 0.0
        %2517 = vmatprep.subr.mxu0 0.0
        %2518 = vmatpush1.msra.mxu0 0.0
        %2519 = vmatprep.subr.mxu0 0.0
        %2520 = vmatpush1.msra.mxu0 0.0
        %2521 = vmatprep.subr.mxu0 0.0
        %2522 = vmatpush1.msra.mxu0 0.0
        %2523 = vmatprep.subr.mxu0 0.0
        %2524 = vmatpush1.msra.mxu0 0.0
        %2525 = vmatprep.subr.mxu0 0.0
        %2526 = vmatpush1.msra.mxu0 0.0
        %2527 = vmatprep.subr.mxu0 0.0
        %2528 = vmatpush1.msra.mxu0 0.0
        %2529 = vmatprep.subr.mxu0 0.0
        %2530 = vmatpush1.msra.mxu0 0.0
        %2531 = vmatprep.subr.mxu0 0.0
        %2532 = vmatpush1.msra.mxu0 0.0
        %2533 = vmatprep.subr.mxu0 0.0
        %2534 = vmatpush1.msra.mxu0 0.0
        %2535 = vmatprep.subr.mxu0 0.0
        %2536 = vmatpush1.msra.mxu0 0.0
        %2537 = vmatprep.subr.mxu0 0.0
        %2538 = vmatpush1.msra.mxu0 0.0
        %2539 = vmatprep.subr.mxu0 0.0
        %2540 = vmatpush1.msra.mxu0 0.0
        %2541 = vmatprep.subr.mxu0 0.0
        %2542 = vmatpush1.msra.mxu0 0.0
        %2543 = vmatprep.mubr.f32.mxu0 0.0
        %2544 = vmatmul.mubr.f32.gmra.mrb[0].mxu0 %v2474
        %v2545 = vpop.f32.mrb[0].mxu0
        %v2546 = vadd.f32 0.0, %v2545
        %v2547 = vpop.f32.mrb[0].mxu0
        %v2548 = vadd.f32 0.0, %v2547
        %2549 = vmatprep.mubr.f32.mxu0 0.0
        %2550 = vmatmul.mubr.f32.gmra.mrb[0].mxu0 %v2477
        %v2551 = vpop.f32.mrb[0].mxu0
        %v2552 = vadd.f32 0.0, %v2551
        %v2553 = vpop.f32.mrb[0].mxu0
        %v2554 = vadd.f32 0.0, %v2553
        %2555 = vdwg.mxu0
        %v2556 = vadd.f32 %v2346, %v2546
        %v2557 = vadd.f32 %v2347, %v2548
        %v2558 = vadd.f32 %v2348, %v2552
        %v2559 = vadd.f32 %v2349, %v2554
        %2560 = vrot.lane.b32.xlu0 %v681, 9
        %v2561 = vpop.permute.xlu0 %2560
        %2562 = vrot.lane.b32.xlu0 %v683, 9
        %v2563 = vpop.permute.xlu0 %2562
        %2564 = vrot.lane.b32.xlu0 %v682, 9
        %v2565 = vpop.permute.xlu0 %2564
        %2566 = vrot.lane.b32.xlu0 %v684, 9
        %v2567 = vpop.permute.xlu0 %2566
        %vm2568 = vcmp.lt.s32.totalorder %v694, 9
        %v2569 = vsel %vm2568, %v2561, %v2565
        %v2570 = vsel %vm2568, %v2563, %v2567
        %v2571 = vsel %vm2568, %v2565, %v2561
        %v2572 = vsel %vm2568, %v2567, %v2563
        %s2573 = scalar_lea.vmem %s1, 17
        %v2574 = vld [vmem:[%s2573] ss:$8 sm:$0x3]
        %v2576 = vlaneseq
        %v2577 = vshrl.u32 %v2576, 7
        %v2578 = vsub.s32 0, %v2577
        %v2579 = vrot.slane %v2574, %v2578
        %v2580 = vlaneseq
        %v2581 = vshrl.u32 %v2580, 7
        %v2582 = vsub.s32 1, %v2581
        %v2583 = vrot.slane %v2574, %v2582
        %v2586 = vmul.f32 %v2571, %v2579
        %v2587 = vmul.f32 %v2569, %v2583
        %v2588 = vmul.f32 %v2572, %v2579
        %v2589 = vmul.f32 %v2570, %v2583
        %s2590 = scalar_lea.vmem %s5, 288
        %v2591 = vld [vmem:[%s2590] sm:$0xff]
        %v2592 = vld [vmem:[%s2590 + $0x8] sm:$0xff]
        %v2594 = vsel %vm754, %v2591, 0
        %v2597 = vsel %vm754, %v2592, 0
        %2599 = vmatprep.subr.mxu0 %v2587
        %2600 = vmatpush1.msra.mxu0 %v2586
        %2601 = vmatprep.subr.mxu0 0.0
        %2602 = vmatpush1.msra.mxu0 0.0
        %2603 = vmatprep.subr.mxu0 0.0
        %2604 = vmatpush1.msra.mxu0 0.0
        %2605 = vmatprep.subr.mxu0 0.0
        %2606 = vmatpush1.msra.mxu0 0.0
        %2607 = vmatprep.subr.mxu0 0.0
        %2608 = vmatpush1.msra.mxu0 0.0
        %2609 = vmatprep.subr.mxu0 0.0
        %2610 = vmatpush1.msra.mxu0 0.0
        %2611 = vmatprep.subr.mxu0 0.0
        %2612 = vmatpush1.msra.mxu0 0.0
        %2613 = vmatprep.subr.mxu0 0.0
        %2614 = vmatpush1.msra.mxu0 0.0
        %2615 = vmatprep.subr.mxu0 0.0
        %2616 = vmatpush1.msra.mxu0 0.0
        %2617 = vmatprep.subr.mxu0 0.0
        %2618 = vmatpush1.msra.mxu0 0.0
        %2619 = vmatprep.subr.mxu0 0.0
        %2620 = vmatpush1.msra.mxu0 0.0
        %2621 = vmatprep.subr.mxu0 0.0
        %2622 = vmatpush1.msra.mxu0 0.0
        %2623 = vmatprep.subr.mxu0 0.0
        %2624 = vmatpush1.msra.mxu0 0.0
        %2625 = vmatprep.subr.mxu0 0.0
        %2626 = vmatpush1.msra.mxu0 0.0
        %2627 = vmatprep.subr.mxu0 0.0
        %2628 = vmatpush1.msra.mxu0 0.0
        %2629 = vmatprep.subr.mxu0 0.0
        %2630 = vmatpush1.msra.mxu0 0.0
        %2631 = vmatprep.subr.mxu0 0.0
        %2632 = vmatpush1.msra.mxu0 0.0
        %2633 = vmatprep.subr.mxu0 0.0
        %2634 = vmatpush1.msra.mxu0 0.0
        %2635 = vmatprep.subr.mxu0 0.0
        %2636 = vmatpush1.msra.mxu0 0.0
        %2637 = vmatprep.subr.mxu0 0.0
        %2638 = vmatpush1.msra.mxu0 0.0
        %2639 = vmatprep.subr.mxu0 0.0
        %2640 = vmatpush1.msra.mxu0 0.0
        %2641 = vmatprep.subr.mxu0 0.0
        %2642 = vmatpush1.msra.mxu0 0.0
        %2643 = vmatprep.subr.mxu0 0.0
        %2644 = vmatpush1.msra.mxu0 0.0
        %2645 = vmatprep.subr.mxu0 0.0
        %2646 = vmatpush1.msra.mxu0 0.0
        %2647 = vmatprep.subr.mxu0 0.0
        %2648 = vmatpush1.msra.mxu0 0.0
        %2649 = vmatprep.subr.mxu0 0.0
        %2650 = vmatpush1.msra.mxu0 0.0
        %2651 = vmatprep.subr.mxu0 0.0
        %2652 = vmatpush1.msra.mxu0 0.0
        %2653 = vmatprep.subr.mxu0 0.0
        %2654 = vmatpush1.msra.mxu0 0.0
        %2655 = vmatprep.subr.mxu0 0.0
        %2656 = vmatpush1.msra.mxu0 0.0
        %2657 = vmatprep.subr.mxu0 0.0
        %2658 = vmatpush1.msra.mxu0 0.0
        %2659 = vmatprep.subr.mxu0 0.0
        %2660 = vmatpush1.msra.mxu0 0.0
        %2661 = vmatprep.subr.mxu0 0.0
        %2662 = vmatpush1.msra.mxu0 0.0
        %2663 = vmatprep.mubr.f32.mxu0 0.0
        %2664 = vmatmul.mubr.f32.gmra.mrb[0].mxu0 %v2594
        %v2665 = vpop.f32.mrb[0].mxu0
        %v2666 = vadd.f32 0.0, %v2665
        %v2667 = vpop.f32.mrb[0].mxu0
        %v2668 = vadd.f32 0.0, %v2667
        %2669 = vmatprep.mubr.f32.mxu0 0.0
        %2670 = vmatmul.mubr.f32.gmra.mrb[0].mxu0 %v2597
        %v2671 = vpop.f32.mrb[0].mxu0
        %v2672 = vadd.f32 0.0, %v2671
        %v2673 = vpop.f32.mrb[0].mxu0
        %v2674 = vadd.f32 0.0, %v2673
        %2675 = vdwg.mxu0
        %v2676 = vadd.f32 %v2466, %v2666
        %v2677 = vadd.f32 %v2467, %v2668
        %v2678 = vadd.f32 %v2468, %v2672
        %v2679 = vadd.f32 %v2469, %v2674
        %s2680 = scalar_lea.vmem %s5, 304
        %v2681 = vld [vmem:[%s2680] sm:$0xff]
        %v2682 = vld [vmem:[%s2680 + $0x8] sm:$0xff]
        %v2684 = vsel %vm754, %v2681, 0
        %v2687 = vsel %vm754, %v2682, 0
        %2689 = vmatprep.subr.mxu0 %v2589
        %2690 = vmatpush1.msra.mxu0 %v2588
        %2691 = vmatprep.subr.mxu0 0.0
        %2692 = vmatpush1.msra.mxu0 0.0
        %2693 = vmatprep.subr.mxu0 0.0
        %2694 = vmatpush1.msra.mxu0 0.0
        %2695 = vmatprep.subr.mxu0 0.0
        %2696 = vmatpush1.msra.mxu0 0.0
        %2697 = vmatprep.subr.mxu0 0.0
        %2698 = vmatpush1.msra.mxu0 0.0
        %2699 = vmatprep.subr.mxu0 0.0
        %2700 = vmatpush1.msra.mxu0 0.0
        %2701 = vmatprep.subr.mxu0 0.0
        %2702 = vmatpush1.msra.mxu0 0.0
        %2703 = vmatprep.subr.mxu0 0.0
        %2704 = vmatpush1.msra.mxu0 0.0
        %2705 = vmatprep.subr.mxu0 0.0
        %2706 = vmatpush1.msra.mxu0 0.0
        %2707 = vmatprep.subr.mxu0 0.0
        %2708 = vmatpush1.msra.mxu0 0.0
        %2709 = vmatprep.subr.mxu0 0.0
        %2710 = vmatpush1.msra.mxu0 0.0
        %2711 = vmatprep.subr.mxu0 0.0
        %2712 = vmatpush1.msra.mxu0 0.0
        %2713 = vmatprep.subr.mxu0 0.0
        %2714 = vmatpush1.msra.mxu0 0.0
        %2715 = vmatprep.subr.mxu0 0.0
        %2716 = vmatpush1.msra.mxu0 0.0
        %2717 = vmatprep.subr.mxu0 0.0
        %2718 = vmatpush1.msra.mxu0 0.0
        %2719 = vmatprep.subr.mxu0 0.0
        %2720 = vmatpush1.msra.mxu0 0.0
        %2721 = vmatprep.subr.mxu0 0.0
        %2722 = vmatpush1.msra.mxu0 0.0
        %2723 = vmatprep.subr.mxu0 0.0
        %2724 = vmatpush1.msra.mxu0 0.0
        %2725 = vmatprep.subr.mxu0 0.0
        %2726 = vmatpush1.msra.mxu0 0.0
        %2727 = vmatprep.subr.mxu0 0.0
        %2728 = vmatpush1.msra.mxu0 0.0
        %2729 = vmatprep.subr.mxu0 0.0
        %2730 = vmatpush1.msra.mxu0 0.0
        %2731 = vmatprep.subr.mxu0 0.0
        %2732 = vmatpush1.msra.mxu0 0.0
        %2733 = vmatprep.subr.mxu0 0.0
        %2734 = vmatpush1.msra.mxu0 0.0
        %2735 = vmatprep.subr.mxu0 0.0
        %2736 = vmatpush1.msra.mxu0 0.0
        %2737 = vmatprep.subr.mxu0 0.0
        %2738 = vmatpush1.msra.mxu0 0.0
        %2739 = vmatprep.subr.mxu0 0.0
        %2740 = vmatpush1.msra.mxu0 0.0
        %2741 = vmatprep.subr.mxu0 0.0
        %2742 = vmatpush1.msra.mxu0 0.0
        %2743 = vmatprep.subr.mxu0 0.0
        %2744 = vmatpush1.msra.mxu0 0.0
        %2745 = vmatprep.subr.mxu0 0.0
        %2746 = vmatpush1.msra.mxu0 0.0
        %2747 = vmatprep.subr.mxu0 0.0
        %2748 = vmatpush1.msra.mxu0 0.0
        %2749 = vmatprep.subr.mxu0 0.0
        %2750 = vmatpush1.msra.mxu0 0.0
        %2751 = vmatprep.subr.mxu0 0.0
        %2752 = vmatpush1.msra.mxu0 0.0
        %2753 = vmatprep.mubr.f32.mxu0 0.0
        %2754 = vmatmul.mubr.f32.gmra.mrb[0].mxu0 %v2684
        %v2755 = vpop.f32.mrb[0].mxu0
        %v2756 = vadd.f32 0.0, %v2755
        %v2757 = vpop.f32.mrb[0].mxu0
        %v2758 = vadd.f32 0.0, %v2757
        %2759 = vmatprep.mubr.f32.mxu0 0.0
        %2760 = vmatmul.mubr.f32.gmra.mrb[0].mxu0 %v2687
        %v2761 = vpop.f32.mrb[0].mxu0
        %v2762 = vadd.f32 0.0, %v2761
        %v2763 = vpop.f32.mrb[0].mxu0
        %v2764 = vadd.f32 0.0, %v2763
        %2765 = vdwg.mxu0
        %v2766 = vadd.f32 %v2556, %v2756
        %v2767 = vadd.f32 %v2557, %v2758
        %v2768 = vadd.f32 %v2558, %v2762
        %v2769 = vadd.f32 %v2559, %v2764
        %2770 = vrot.lane.b32.xlu0 %v681, 8
        %v2771 = vpop.permute.xlu0 %2770
        %2772 = vrot.lane.b32.xlu0 %v683, 8
        %v2773 = vpop.permute.xlu0 %2772
        %2774 = vrot.lane.b32.xlu0 %v682, 8
        %v2775 = vpop.permute.xlu0 %2774
        %2776 = vrot.lane.b32.xlu0 %v684, 8
        %v2777 = vpop.permute.xlu0 %2776
        %vm2778 = vcmp.lt.s32.totalorder %v694, 8
        %v2779 = vsel %vm2778, %v2771, %v2775
        %v2780 = vsel %vm2778, %v2773, %v2777
        %v2781 = vsel %vm2778, %v2775, %v2771
        %v2782 = vsel %vm2778, %v2777, %v2773
        %s2783 = scalar_lea.vmem %s1, 18
        %v2784 = vld [vmem:[%s2783] ss:$8 sm:$0x3]
        %v2786 = vlaneseq
        %v2787 = vshrl.u32 %v2786, 7
        %v2788 = vsub.s32 0, %v2787
        %v2789 = vrot.slane %v2784, %v2788
        %v2790 = vlaneseq
        %v2791 = vshrl.u32 %v2790, 7
        %v2792 = vsub.s32 1, %v2791
        %v2793 = vrot.slane %v2784, %v2792
        %v2796 = vmul.f32 %v2781, %v2789
        %v2797 = vmul.f32 %v2779, %v2793
        %v2798 = vmul.f32 %v2782, %v2789
        %v2799 = vmul.f32 %v2780, %v2793
        %s2800 = scalar_lea.vmem %s5, 320
        %v2801 = vld [vmem:[%s2800] sm:$0xff]
        %v2802 = vld [vmem:[%s2800 + $0x8] sm:$0xff]
        %v2804 = vsel %vm754, %v2801, 0
        %v2807 = vsel %vm754, %v2802, 0
        %2809 = vmatprep.subr.mxu0 %v2797
        %2810 = vmatpush1.msra.mxu0 %v2796
        %2811 = vmatprep.subr.mxu0 0.0
        %2812 = vmatpush1.msra.mxu0 0.0
        %2813 = vmatprep.subr.mxu0 0.0
        %2814 = vmatpush1.msra.mxu0 0.0
        %2815 = vmatprep.subr.mxu0 0.0
        %2816 = vmatpush1.msra.mxu0 0.0
        %2817 = vmatprep.subr.mxu0 0.0
        %2818 = vmatpush1.msra.mxu0 0.0
        %2819 = vmatprep.subr.mxu0 0.0
        %2820 = vmatpush1.msra.mxu0 0.0
        %2821 = vmatprep.subr.mxu0 0.0
        %2822 = vmatpush1.msra.mxu0 0.0
        %2823 = vmatprep.subr.mxu0 0.0
        %2824 = vmatpush1.msra.mxu0 0.0
        %2825 = vmatprep.subr.mxu0 0.0
        %2826 = vmatpush1.msra.mxu0 0.0
        %2827 = vmatprep.subr.mxu0 0.0
        %2828 = vmatpush1.msra.mxu0 0.0
        %2829 = vmatprep.subr.mxu0 0.0
        %2830 = vmatpush1.msra.mxu0 0.0
        %2831 = vmatprep.subr.mxu0 0.0
        %2832 = vmatpush1.msra.mxu0 0.0
        %2833 = vmatprep.subr.mxu0 0.0
        %2834 = vmatpush1.msra.mxu0 0.0
        %2835 = vmatprep.subr.mxu0 0.0
        %2836 = vmatpush1.msra.mxu0 0.0
        %2837 = vmatprep.subr.mxu0 0.0
        %2838 = vmatpush1.msra.mxu0 0.0
        %2839 = vmatprep.subr.mxu0 0.0
        %2840 = vmatpush1.msra.mxu0 0.0
        %2841 = vmatprep.subr.mxu0 0.0
        %2842 = vmatpush1.msra.mxu0 0.0
        %2843 = vmatprep.subr.mxu0 0.0
        %2844 = vmatpush1.msra.mxu0 0.0
        %2845 = vmatprep.subr.mxu0 0.0
        %2846 = vmatpush1.msra.mxu0 0.0
        %2847 = vmatprep.subr.mxu0 0.0
        %2848 = vmatpush1.msra.mxu0 0.0
        %2849 = vmatprep.subr.mxu0 0.0
        %2850 = vmatpush1.msra.mxu0 0.0
        %2851 = vmatprep.subr.mxu0 0.0
        %2852 = vmatpush1.msra.mxu0 0.0
        %2853 = vmatprep.subr.mxu0 0.0
        %2854 = vmatpush1.msra.mxu0 0.0
        %2855 = vmatprep.subr.mxu0 0.0
        %2856 = vmatpush1.msra.mxu0 0.0
        %2857 = vmatprep.subr.mxu0 0.0
        %2858 = vmatpush1.msra.mxu0 0.0
        %2859 = vmatprep.subr.mxu0 0.0
        %2860 = vmatpush1.msra.mxu0 0.0
        %2861 = vmatprep.subr.mxu0 0.0
        %2862 = vmatpush1.msra.mxu0 0.0
        %2863 = vmatprep.subr.mxu0 0.0
        %2864 = vmatpush1.msra.mxu0 0.0
        %2865 = vmatprep.subr.mxu0 0.0
        %2866 = vmatpush1.msra.mxu0 0.0
        %2867 = vmatprep.subr.mxu0 0.0
        %2868 = vmatpush1.msra.mxu0 0.0
        %2869 = vmatprep.subr.mxu0 0.0
        %2870 = vmatpush1.msra.mxu0 0.0
        %2871 = vmatprep.subr.mxu0 0.0
        %2872 = vmatpush1.msra.mxu0 0.0
        %2873 = vmatprep.mubr.f32.mxu0 0.0
        %2874 = vmatmul.mubr.f32.gmra.mrb[0].mxu0 %v2804
        %v2875 = vpop.f32.mrb[0].mxu0
        %v2876 = vadd.f32 0.0, %v2875
        %v2877 = vpop.f32.mrb[0].mxu0
        %v2878 = vadd.f32 0.0, %v2877
        %2879 = vmatprep.mubr.f32.mxu0 0.0
        %2880 = vmatmul.mubr.f32.gmra.mrb[0].mxu0 %v2807
        %v2881 = vpop.f32.mrb[0].mxu0
        %v2882 = vadd.f32 0.0, %v2881
        %v2883 = vpop.f32.mrb[0].mxu0
        %v2884 = vadd.f32 0.0, %v2883
        %2885 = vdwg.mxu0
        %v2886 = vadd.f32 %v2676, %v2876
        %v2887 = vadd.f32 %v2677, %v2878
        %v2888 = vadd.f32 %v2678, %v2882
        %v2889 = vadd.f32 %v2679, %v2884
        %s2890 = scalar_lea.vmem %s5, 336
        %v2891 = vld [vmem:[%s2890] sm:$0xff]
        %v2892 = vld [vmem:[%s2890 + $0x8] sm:$0xff]
        %v2894 = vsel %vm754, %v2891, 0
        %v2897 = vsel %vm754, %v2892, 0
        %2899 = vmatprep.subr.mxu0 %v2799
        %2900 = vmatpush1.msra.mxu0 %v2798
        %2901 = vmatprep.subr.mxu0 0.0
        %2902 = vmatpush1.msra.mxu0 0.0
        %2903 = vmatprep.subr.mxu0 0.0
        %2904 = vmatpush1.msra.mxu0 0.0
        %2905 = vmatprep.subr.mxu0 0.0
        %2906 = vmatpush1.msra.mxu0 0.0
        %2907 = vmatprep.subr.mxu0 0.0
        %2908 = vmatpush1.msra.mxu0 0.0
        %2909 = vmatprep.subr.mxu0 0.0
        %2910 = vmatpush1.msra.mxu0 0.0
        %2911 = vmatprep.subr.mxu0 0.0
        %2912 = vmatpush1.msra.mxu0 0.0
        %2913 = vmatprep.subr.mxu0 0.0
        %2914 = vmatpush1.msra.mxu0 0.0
        %2915 = vmatprep.subr.mxu0 0.0
        %2916 = vmatpush1.msra.mxu0 0.0
        %2917 = vmatprep.subr.mxu0 0.0
        %2918 = vmatpush1.msra.mxu0 0.0
        %2919 = vmatprep.subr.mxu0 0.0
        %2920 = vmatpush1.msra.mxu0 0.0
        %2921 = vmatprep.subr.mxu0 0.0
        %2922 = vmatpush1.msra.mxu0 0.0
        %2923 = vmatprep.subr.mxu0 0.0
        %2924 = vmatpush1.msra.mxu0 0.0
        %2925 = vmatprep.subr.mxu0 0.0
        %2926 = vmatpush1.msra.mxu0 0.0
        %2927 = vmatprep.subr.mxu0 0.0
        %2928 = vmatpush1.msra.mxu0 0.0
        %2929 = vmatprep.subr.mxu0 0.0
        %2930 = vmatpush1.msra.mxu0 0.0
        %2931 = vmatprep.subr.mxu0 0.0
        %2932 = vmatpush1.msra.mxu0 0.0
        %2933 = vmatprep.subr.mxu0 0.0
        %2934 = vmatpush1.msra.mxu0 0.0
        %2935 = vmatprep.subr.mxu0 0.0
        %2936 = vmatpush1.msra.mxu0 0.0
        %2937 = vmatprep.subr.mxu0 0.0
        %2938 = vmatpush1.msra.mxu0 0.0
        %2939 = vmatprep.subr.mxu0 0.0
        %2940 = vmatpush1.msra.mxu0 0.0
        %2941 = vmatprep.subr.mxu0 0.0
        %2942 = vmatpush1.msra.mxu0 0.0
        %2943 = vmatprep.subr.mxu0 0.0
        %2944 = vmatpush1.msra.mxu0 0.0
        %2945 = vmatprep.subr.mxu0 0.0
        %2946 = vmatpush1.msra.mxu0 0.0
        %2947 = vmatprep.subr.mxu0 0.0
        %2948 = vmatpush1.msra.mxu0 0.0
        %2949 = vmatprep.subr.mxu0 0.0
        %2950 = vmatpush1.msra.mxu0 0.0
        %2951 = vmatprep.subr.mxu0 0.0
        %2952 = vmatpush1.msra.mxu0 0.0
        %2953 = vmatprep.subr.mxu0 0.0
        %2954 = vmatpush1.msra.mxu0 0.0
        %2955 = vmatprep.subr.mxu0 0.0
        %2956 = vmatpush1.msra.mxu0 0.0
        %2957 = vmatprep.subr.mxu0 0.0
        %2958 = vmatpush1.msra.mxu0 0.0
        %2959 = vmatprep.subr.mxu0 0.0
        %2960 = vmatpush1.msra.mxu0 0.0
        %2961 = vmatprep.subr.mxu0 0.0
        %2962 = vmatpush1.msra.mxu0 0.0
        %2963 = vmatprep.mubr.f32.mxu0 0.0
        %2964 = vmatmul.mubr.f32.gmra.mrb[0].mxu0 %v2894
        %v2965 = vpop.f32.mrb[0].mxu0
        %v2966 = vadd.f32 0.0, %v2965
        %v2967 = vpop.f32.mrb[0].mxu0
        %v2968 = vadd.f32 0.0, %v2967
        %2969 = vmatprep.mubr.f32.mxu0 0.0
        %2970 = vmatmul.mubr.f32.gmra.mrb[0].mxu0 %v2897
        %v2971 = vpop.f32.mrb[0].mxu0
        %v2972 = vadd.f32 0.0, %v2971
        %v2973 = vpop.f32.mrb[0].mxu0
        %v2974 = vadd.f32 0.0, %v2973
        %2975 = vdwg.mxu0
        %v2976 = vadd.f32 %v2766, %v2966
        %v2977 = vadd.f32 %v2767, %v2968
        %v2978 = vadd.f32 %v2768, %v2972
        %v2979 = vadd.f32 %v2769, %v2974
        %2980 = vrot.lane.b32.xlu0 %v681, 7
        %v2981 = vpop.permute.xlu0 %2980
        %2982 = vrot.lane.b32.xlu0 %v683, 7
        %v2983 = vpop.permute.xlu0 %2982
        %2984 = vrot.lane.b32.xlu0 %v682, 7
        %v2985 = vpop.permute.xlu0 %2984
        %2986 = vrot.lane.b32.xlu0 %v684, 7
        %v2987 = vpop.permute.xlu0 %2986
        %vm2988 = vcmp.lt.s32.totalorder %v694, 7
        %v2989 = vsel %vm2988, %v2981, %v2985
        %v2990 = vsel %vm2988, %v2983, %v2987
        %v2991 = vsel %vm2988, %v2985, %v2981
        %v2992 = vsel %vm2988, %v2987, %v2983
        %s2993 = scalar_lea.vmem %s1, 19
        %v2994 = vld [vmem:[%s2993] ss:$8 sm:$0x3]
        %v2996 = vlaneseq
        %v2997 = vshrl.u32 %v2996, 7
        %v2998 = vsub.s32 0, %v2997
        %v2999 = vrot.slane %v2994, %v2998
        %v3000 = vlaneseq
        %v3001 = vshrl.u32 %v3000, 7
        %v3002 = vsub.s32 1, %v3001
        %v3003 = vrot.slane %v2994, %v3002
        %v3006 = vmul.f32 %v2991, %v2999
        %v3007 = vmul.f32 %v2989, %v3003
        %v3008 = vmul.f32 %v2992, %v2999
        %v3009 = vmul.f32 %v2990, %v3003
        %s3010 = scalar_lea.vmem %s5, 352
        %v3011 = vld [vmem:[%s3010] sm:$0xff]
        %v3012 = vld [vmem:[%s3010 + $0x8] sm:$0xff]
        %v3014 = vsel %vm754, %v3011, 0
        %v3017 = vsel %vm754, %v3012, 0
        %3019 = vmatprep.subr.mxu0 %v3007
        %3020 = vmatpush1.msra.mxu0 %v3006
        %3021 = vmatprep.subr.mxu0 0.0
        %3022 = vmatpush1.msra.mxu0 0.0
        %3023 = vmatprep.subr.mxu0 0.0
        %3024 = vmatpush1.msra.mxu0 0.0
        %3025 = vmatprep.subr.mxu0 0.0
        %3026 = vmatpush1.msra.mxu0 0.0
        %3027 = vmatprep.subr.mxu0 0.0
        %3028 = vmatpush1.msra.mxu0 0.0
        %3029 = vmatprep.subr.mxu0 0.0
        %3030 = vmatpush1.msra.mxu0 0.0
        %3031 = vmatprep.subr.mxu0 0.0
        %3032 = vmatpush1.msra.mxu0 0.0
        %3033 = vmatprep.subr.mxu0 0.0
        %3034 = vmatpush1.msra.mxu0 0.0
        %3035 = vmatprep.subr.mxu0 0.0
        %3036 = vmatpush1.msra.mxu0 0.0
        %3037 = vmatprep.subr.mxu0 0.0
        %3038 = vmatpush1.msra.mxu0 0.0
        %3039 = vmatprep.subr.mxu0 0.0
        %3040 = vmatpush1.msra.mxu0 0.0
        %3041 = vmatprep.subr.mxu0 0.0
        %3042 = vmatpush1.msra.mxu0 0.0
        %3043 = vmatprep.subr.mxu0 0.0
        %3044 = vmatpush1.msra.mxu0 0.0
        %3045 = vmatprep.subr.mxu0 0.0
        %3046 = vmatpush1.msra.mxu0 0.0
        %3047 = vmatprep.subr.mxu0 0.0
        %3048 = vmatpush1.msra.mxu0 0.0
        %3049 = vmatprep.subr.mxu0 0.0
        %3050 = vmatpush1.msra.mxu0 0.0
        %3051 = vmatprep.subr.mxu0 0.0
        %3052 = vmatpush1.msra.mxu0 0.0
        %3053 = vmatprep.subr.mxu0 0.0
        %3054 = vmatpush1.msra.mxu0 0.0
        %3055 = vmatprep.subr.mxu0 0.0
        %3056 = vmatpush1.msra.mxu0 0.0
        %3057 = vmatprep.subr.mxu0 0.0
        %3058 = vmatpush1.msra.mxu0 0.0
        %3059 = vmatprep.subr.mxu0 0.0
        %3060 = vmatpush1.msra.mxu0 0.0
        %3061 = vmatprep.subr.mxu0 0.0
        %3062 = vmatpush1.msra.mxu0 0.0
        %3063 = vmatprep.subr.mxu0 0.0
        %3064 = vmatpush1.msra.mxu0 0.0
        %3065 = vmatprep.subr.mxu0 0.0
        %3066 = vmatpush1.msra.mxu0 0.0
        %3067 = vmatprep.subr.mxu0 0.0
        %3068 = vmatpush1.msra.mxu0 0.0
        %3069 = vmatprep.subr.mxu0 0.0
        %3070 = vmatpush1.msra.mxu0 0.0
        %3071 = vmatprep.subr.mxu0 0.0
        %3072 = vmatpush1.msra.mxu0 0.0
        %3073 = vmatprep.subr.mxu0 0.0
        %3074 = vmatpush1.msra.mxu0 0.0
        %3075 = vmatprep.subr.mxu0 0.0
        %3076 = vmatpush1.msra.mxu0 0.0
        %3077 = vmatprep.subr.mxu0 0.0
        %3078 = vmatpush1.msra.mxu0 0.0
        %3079 = vmatprep.subr.mxu0 0.0
        %3080 = vmatpush1.msra.mxu0 0.0
        %3081 = vmatprep.subr.mxu0 0.0
        %3082 = vmatpush1.msra.mxu0 0.0
        %3083 = vmatprep.mubr.f32.mxu0 0.0
        %3084 = vmatmul.mubr.f32.gmra.mrb[0].mxu0 %v3014
        %v3085 = vpop.f32.mrb[0].mxu0
        %v3086 = vadd.f32 0.0, %v3085
        %v3087 = vpop.f32.mrb[0].mxu0
        %v3088 = vadd.f32 0.0, %v3087
        %3089 = vmatprep.mubr.f32.mxu0 0.0
        %3090 = vmatmul.mubr.f32.gmra.mrb[0].mxu0 %v3017
        %v3091 = vpop.f32.mrb[0].mxu0
        %v3092 = vadd.f32 0.0, %v3091
        %v3093 = vpop.f32.mrb[0].mxu0
        %v3094 = vadd.f32 0.0, %v3093
        %3095 = vdwg.mxu0
        %v3096 = vadd.f32 %v2886, %v3086
        %v3097 = vadd.f32 %v2887, %v3088
        %v3098 = vadd.f32 %v2888, %v3092
        %v3099 = vadd.f32 %v2889, %v3094
        %s3100 = scalar_lea.vmem %s5, 368
        %v3101 = vld [vmem:[%s3100] sm:$0xff]
        %v3102 = vld [vmem:[%s3100 + $0x8] sm:$0xff]
        %v3104 = vsel %vm754, %v3101, 0
        %v3107 = vsel %vm754, %v3102, 0
        %3109 = vmatprep.subr.mxu0 %v3009
        %3110 = vmatpush1.msra.mxu0 %v3008
        %3111 = vmatprep.subr.mxu0 0.0
        %3112 = vmatpush1.msra.mxu0 0.0
        %3113 = vmatprep.subr.mxu0 0.0
        %3114 = vmatpush1.msra.mxu0 0.0
        %3115 = vmatprep.subr.mxu0 0.0
        %3116 = vmatpush1.msra.mxu0 0.0
        %3117 = vmatprep.subr.mxu0 0.0
        %3118 = vmatpush1.msra.mxu0 0.0
        %3119 = vmatprep.subr.mxu0 0.0
        %3120 = vmatpush1.msra.mxu0 0.0
        %3121 = vmatprep.subr.mxu0 0.0
        %3122 = vmatpush1.msra.mxu0 0.0
        %3123 = vmatprep.subr.mxu0 0.0
        %3124 = vmatpush1.msra.mxu0 0.0
        %3125 = vmatprep.subr.mxu0 0.0
        %3126 = vmatpush1.msra.mxu0 0.0
        %3127 = vmatprep.subr.mxu0 0.0
        %3128 = vmatpush1.msra.mxu0 0.0
        %3129 = vmatprep.subr.mxu0 0.0
        %3130 = vmatpush1.msra.mxu0 0.0
        %3131 = vmatprep.subr.mxu0 0.0
        %3132 = vmatpush1.msra.mxu0 0.0
        %3133 = vmatprep.subr.mxu0 0.0
        %3134 = vmatpush1.msra.mxu0 0.0
        %3135 = vmatprep.subr.mxu0 0.0
        %3136 = vmatpush1.msra.mxu0 0.0
        %3137 = vmatprep.subr.mxu0 0.0
        %3138 = vmatpush1.msra.mxu0 0.0
        %3139 = vmatprep.subr.mxu0 0.0
        %3140 = vmatpush1.msra.mxu0 0.0
        %3141 = vmatprep.subr.mxu0 0.0
        %3142 = vmatpush1.msra.mxu0 0.0
        %3143 = vmatprep.subr.mxu0 0.0
        %3144 = vmatpush1.msra.mxu0 0.0
        %3145 = vmatprep.subr.mxu0 0.0
        %3146 = vmatpush1.msra.mxu0 0.0
        %3147 = vmatprep.subr.mxu0 0.0
        %3148 = vmatpush1.msra.mxu0 0.0
        %3149 = vmatprep.subr.mxu0 0.0
        %3150 = vmatpush1.msra.mxu0 0.0
        %3151 = vmatprep.subr.mxu0 0.0
        %3152 = vmatpush1.msra.mxu0 0.0
        %3153 = vmatprep.subr.mxu0 0.0
        %3154 = vmatpush1.msra.mxu0 0.0
        %3155 = vmatprep.subr.mxu0 0.0
        %3156 = vmatpush1.msra.mxu0 0.0
        %3157 = vmatprep.subr.mxu0 0.0
        %3158 = vmatpush1.msra.mxu0 0.0
        %3159 = vmatprep.subr.mxu0 0.0
        %3160 = vmatpush1.msra.mxu0 0.0
        %3161 = vmatprep.subr.mxu0 0.0
        %3162 = vmatpush1.msra.mxu0 0.0
        %3163 = vmatprep.subr.mxu0 0.0
        %3164 = vmatpush1.msra.mxu0 0.0
        %3165 = vmatprep.subr.mxu0 0.0
        %3166 = vmatpush1.msra.mxu0 0.0
        %3167 = vmatprep.subr.mxu0 0.0
        %3168 = vmatpush1.msra.mxu0 0.0
        %3169 = vmatprep.subr.mxu0 0.0
        %3170 = vmatpush1.msra.mxu0 0.0
        %3171 = vmatprep.subr.mxu0 0.0
        %3172 = vmatpush1.msra.mxu0 0.0
        %3173 = vmatprep.mubr.f32.mxu0 0.0
        %3174 = vmatmul.mubr.f32.gmra.mrb[0].mxu0 %v3104
        %v3175 = vpop.f32.mrb[0].mxu0
        %v3176 = vadd.f32 0.0, %v3175
        %v3177 = vpop.f32.mrb[0].mxu0
        %v3178 = vadd.f32 0.0, %v3177
        %3179 = vmatprep.mubr.f32.mxu0 0.0
        %3180 = vmatmul.mubr.f32.gmra.mrb[0].mxu0 %v3107
        %v3181 = vpop.f32.mrb[0].mxu0
        %v3182 = vadd.f32 0.0, %v3181
        %v3183 = vpop.f32.mrb[0].mxu0
        %v3184 = vadd.f32 0.0, %v3183
        %3185 = vdwg.mxu0
        %v3186 = vadd.f32 %v2976, %v3176
        %v3187 = vadd.f32 %v2977, %v3178
        %v3188 = vadd.f32 %v2978, %v3182
        %v3189 = vadd.f32 %v2979, %v3184
        %3190 = vrot.lane.b32.xlu0 %v681, 1
        %v3191 = vpop.permute.xlu0 %3190
        %3192 = vrot.lane.b32.xlu0 %v683, 1
        %v3193 = vpop.permute.xlu0 %3192
        %3194 = vrot.lane.b32.xlu0 %v682, 1
        %v3195 = vpop.permute.xlu0 %3194
        %3196 = vrot.lane.b32.xlu0 %v684, 1
        %v3197 = vpop.permute.xlu0 %3196
        %vm3198 = vcmp.lt.s32.totalorder %v694, 1
        %v3199 = vsel %vm3198, %v3191, %v3195
        %v3200 = vsel %vm3198, %v3193, %v3197
        %v3201 = vsel %vm3198, %v3195, %v3191
        %v3202 = vsel %vm3198, %v3197, %v3193
        %s3203 = scalar_lea.vmem %s1, 20
        %v3204 = vld [vmem:[%s3203] ss:$8 sm:$0x3]
        %v3206 = vlaneseq
        %v3207 = vshrl.u32 %v3206, 7
        %v3208 = vsub.s32 0, %v3207
        %v3209 = vrot.slane %v3204, %v3208
        %v3210 = vlaneseq
        %v3211 = vshrl.u32 %v3210, 7
        %v3212 = vsub.s32 1, %v3211
        %v3213 = vrot.slane %v3204, %v3212
        %v3216 = vmul.f32 %v3201, %v3209
        %v3217 = vmul.f32 %v3199, %v3213
        %v3218 = vmul.f32 %v3202, %v3209
        %v3219 = vmul.f32 %v3200, %v3213
        %s3220 = scalar_lea.vmem %s5, 384
        %v3221 = vld [vmem:[%s3220] sm:$0xff]
        %v3222 = vld [vmem:[%s3220 + $0x8] sm:$0xff]
        %v3224 = vsel %vm754, %v3221, 0
        %v3227 = vsel %vm754, %v3222, 0
        %3229 = vmatprep.subr.mxu0 %v3217
        %3230 = vmatpush1.msra.mxu0 %v3216
        %3231 = vmatprep.subr.mxu0 0.0
        %3232 = vmatpush1.msra.mxu0 0.0
        %3233 = vmatprep.subr.mxu0 0.0
        %3234 = vmatpush1.msra.mxu0 0.0
        %3235 = vmatprep.subr.mxu0 0.0
        %3236 = vmatpush1.msra.mxu0 0.0
        %3237 = vmatprep.subr.mxu0 0.0
        %3238 = vmatpush1.msra.mxu0 0.0
        %3239 = vmatprep.subr.mxu0 0.0
        %3240 = vmatpush1.msra.mxu0 0.0
        %3241 = vmatprep.subr.mxu0 0.0
        %3242 = vmatpush1.msra.mxu0 0.0
        %3243 = vmatprep.subr.mxu0 0.0
        %3244 = vmatpush1.msra.mxu0 0.0
        %3245 = vmatprep.subr.mxu0 0.0
        %3246 = vmatpush1.msra.mxu0 0.0
        %3247 = vmatprep.subr.mxu0 0.0
        %3248 = vmatpush1.msra.mxu0 0.0
        %3249 = vmatprep.subr.mxu0 0.0
        %3250 = vmatpush1.msra.mxu0 0.0
        %3251 = vmatprep.subr.mxu0 0.0
        %3252 = vmatpush1.msra.mxu0 0.0
        %3253 = vmatprep.subr.mxu0 0.0
        %3254 = vmatpush1.msra.mxu0 0.0
        %3255 = vmatprep.subr.mxu0 0.0
        %3256 = vmatpush1.msra.mxu0 0.0
        %3257 = vmatprep.subr.mxu0 0.0
        %3258 = vmatpush1.msra.mxu0 0.0
        %3259 = vmatprep.subr.mxu0 0.0
        %3260 = vmatpush1.msra.mxu0 0.0
        %3261 = vmatprep.subr.mxu0 0.0
        %3262 = vmatpush1.msra.mxu0 0.0
        %3263 = vmatprep.subr.mxu0 0.0
        %3264 = vmatpush1.msra.mxu0 0.0
        %3265 = vmatprep.subr.mxu0 0.0
        %3266 = vmatpush1.msra.mxu0 0.0
        %3267 = vmatprep.subr.mxu0 0.0
        %3268 = vmatpush1.msra.mxu0 0.0
        %3269 = vmatprep.subr.mxu0 0.0
        %3270 = vmatpush1.msra.mxu0 0.0
        %3271 = vmatprep.subr.mxu0 0.0
        %3272 = vmatpush1.msra.mxu0 0.0
        %3273 = vmatprep.subr.mxu0 0.0
        %3274 = vmatpush1.msra.mxu0 0.0
        %3275 = vmatprep.subr.mxu0 0.0
        %3276 = vmatpush1.msra.mxu0 0.0
        %3277 = vmatprep.subr.mxu0 0.0
        %3278 = vmatpush1.msra.mxu0 0.0
        %3279 = vmatprep.subr.mxu0 0.0
        %3280 = vmatpush1.msra.mxu0 0.0
        %3281 = vmatprep.subr.mxu0 0.0
        %3282 = vmatpush1.msra.mxu0 0.0
        %3283 = vmatprep.subr.mxu0 0.0
        %3284 = vmatpush1.msra.mxu0 0.0
        %3285 = vmatprep.subr.mxu0 0.0
        %3286 = vmatpush1.msra.mxu0 0.0
        %3287 = vmatprep.subr.mxu0 0.0
        %3288 = vmatpush1.msra.mxu0 0.0
        %3289 = vmatprep.subr.mxu0 0.0
        %3290 = vmatpush1.msra.mxu0 0.0
        %3291 = vmatprep.subr.mxu0 0.0
        %3292 = vmatpush1.msra.mxu0 0.0
        %3293 = vmatprep.mubr.f32.mxu0 0.0
        %3294 = vmatmul.mubr.f32.gmra.mrb[0].mxu0 %v3224
        %v3295 = vpop.f32.mrb[0].mxu0
        %v3296 = vadd.f32 0.0, %v3295
        %v3297 = vpop.f32.mrb[0].mxu0
        %v3298 = vadd.f32 0.0, %v3297
        %3299 = vmatprep.mubr.f32.mxu0 0.0
        %3300 = vmatmul.mubr.f32.gmra.mrb[0].mxu0 %v3227
        %v3301 = vpop.f32.mrb[0].mxu0
        %v3302 = vadd.f32 0.0, %v3301
        %v3303 = vpop.f32.mrb[0].mxu0
        %v3304 = vadd.f32 0.0, %v3303
        %3305 = vdwg.mxu0
        %v3306 = vadd.f32 %v3096, %v3296
        %v3307 = vadd.f32 %v3097, %v3298
        %v3308 = vadd.f32 %v3098, %v3302
        %v3309 = vadd.f32 %v3099, %v3304
        %s3310 = scalar_lea.vmem %s5, 400
        %v3311 = vld [vmem:[%s3310] sm:$0xff]
        %v3312 = vld [vmem:[%s3310 + $0x8] sm:$0xff]
        %v3314 = vsel %vm754, %v3311, 0
        %v3317 = vsel %vm754, %v3312, 0
        %3319 = vmatprep.subr.mxu0 %v3219
        %3320 = vmatpush1.msra.mxu0 %v3218
        %3321 = vmatprep.subr.mxu0 0.0
        %3322 = vmatpush1.msra.mxu0 0.0
        %3323 = vmatprep.subr.mxu0 0.0
        %3324 = vmatpush1.msra.mxu0 0.0
        %3325 = vmatprep.subr.mxu0 0.0
        %3326 = vmatpush1.msra.mxu0 0.0
        %3327 = vmatprep.subr.mxu0 0.0
        %3328 = vmatpush1.msra.mxu0 0.0
        %3329 = vmatprep.subr.mxu0 0.0
        %3330 = vmatpush1.msra.mxu0 0.0
        %3331 = vmatprep.subr.mxu0 0.0
        %3332 = vmatpush1.msra.mxu0 0.0
        %3333 = vmatprep.subr.mxu0 0.0
        %3334 = vmatpush1.msra.mxu0 0.0
        %3335 = vmatprep.subr.mxu0 0.0
        %3336 = vmatpush1.msra.mxu0 0.0
        %3337 = vmatprep.subr.mxu0 0.0
        %3338 = vmatpush1.msra.mxu0 0.0
        %3339 = vmatprep.subr.mxu0 0.0
        %3340 = vmatpush1.msra.mxu0 0.0
        %3341 = vmatprep.subr.mxu0 0.0
        %3342 = vmatpush1.msra.mxu0 0.0
        %3343 = vmatprep.subr.mxu0 0.0
        %3344 = vmatpush1.msra.mxu0 0.0
        %3345 = vmatprep.subr.mxu0 0.0
        %3346 = vmatpush1.msra.mxu0 0.0
        %3347 = vmatprep.subr.mxu0 0.0
        %3348 = vmatpush1.msra.mxu0 0.0
        %3349 = vmatprep.subr.mxu0 0.0
        %3350 = vmatpush1.msra.mxu0 0.0
        %3351 = vmatprep.subr.mxu0 0.0
        %3352 = vmatpush1.msra.mxu0 0.0
        %3353 = vmatprep.subr.mxu0 0.0
        %3354 = vmatpush1.msra.mxu0 0.0
        %3355 = vmatprep.subr.mxu0 0.0
        %3356 = vmatpush1.msra.mxu0 0.0
        %3357 = vmatprep.subr.mxu0 0.0
        %3358 = vmatpush1.msra.mxu0 0.0
        %3359 = vmatprep.subr.mxu0 0.0
        %3360 = vmatpush1.msra.mxu0 0.0
        %3361 = vmatprep.subr.mxu0 0.0
        %3362 = vmatpush1.msra.mxu0 0.0
        %3363 = vmatprep.subr.mxu0 0.0
        %3364 = vmatpush1.msra.mxu0 0.0
        %3365 = vmatprep.subr.mxu0 0.0
        %3366 = vmatpush1.msra.mxu0 0.0
        %3367 = vmatprep.subr.mxu0 0.0
        %3368 = vmatpush1.msra.mxu0 0.0
        %3369 = vmatprep.subr.mxu0 0.0
        %3370 = vmatpush1.msra.mxu0 0.0
        %3371 = vmatprep.subr.mxu0 0.0
        %3372 = vmatpush1.msra.mxu0 0.0
        %3373 = vmatprep.subr.mxu0 0.0
        %3374 = vmatpush1.msra.mxu0 0.0
        %3375 = vmatprep.subr.mxu0 0.0
        %3376 = vmatpush1.msra.mxu0 0.0
        %3377 = vmatprep.subr.mxu0 0.0
        %3378 = vmatpush1.msra.mxu0 0.0
        %3379 = vmatprep.subr.mxu0 0.0
        %3380 = vmatpush1.msra.mxu0 0.0
        %3381 = vmatprep.subr.mxu0 0.0
        %3382 = vmatpush1.msra.mxu0 0.0
        %3383 = vmatprep.mubr.f32.mxu0 0.0
        %3384 = vmatmul.mubr.f32.gmra.mrb[0].mxu0 %v3314
        %v3385 = vpop.f32.mrb[0].mxu0
        %v3386 = vadd.f32 0.0, %v3385
        %v3387 = vpop.f32.mrb[0].mxu0
        %v3388 = vadd.f32 0.0, %v3387
        %3389 = vmatprep.mubr.f32.mxu0 0.0
        %3390 = vmatmul.mubr.f32.gmra.mrb[0].mxu0 %v3317
        %v3391 = vpop.f32.mrb[0].mxu0
        %v3392 = vadd.f32 0.0, %v3391
        %v3393 = vpop.f32.mrb[0].mxu0
        %v3394 = vadd.f32 0.0, %v3393
        %3395 = vdwg.mxu0
        %v3396 = vadd.f32 %v3186, %v3386
        %v3397 = vadd.f32 %v3187, %v3388
        %v3398 = vadd.f32 %v3188, %v3392
        %v3399 = vadd.f32 %v3189, %v3394
        %s3400 = scalar_lea.vmem %s5, 416
        %v3401 = vld [vmem:[%s3400] sm:$0xff]
        %v3402 = vld [vmem:[%s3400 + $0x8] sm:$0xff]
        %v3404 = vsel %vm754, %v3401, 0
        %v3407 = vsel %vm754, %v3402, 0
        %3409 = vmatprep.subr.mxu0 %v682
        %3410 = vmatpush1.msra.mxu0 %v681
        %3411 = vmatprep.subr.mxu0 0.0
        %3412 = vmatpush1.msra.mxu0 0.0
        %3413 = vmatprep.subr.mxu0 0.0
        %3414 = vmatpush1.msra.mxu0 0.0
        %3415 = vmatprep.subr.mxu0 0.0
        %3416 = vmatpush1.msra.mxu0 0.0
        %3417 = vmatprep.subr.mxu0 0.0
        %3418 = vmatpush1.msra.mxu0 0.0
        %3419 = vmatprep.subr.mxu0 0.0
        %3420 = vmatpush1.msra.mxu0 0.0
        %3421 = vmatprep.subr.mxu0 0.0
        %3422 = vmatpush1.msra.mxu0 0.0
        %3423 = vmatprep.subr.mxu0 0.0
        %3424 = vmatpush1.msra.mxu0 0.0
        %3425 = vmatprep.subr.mxu0 0.0
        %3426 = vmatpush1.msra.mxu0 0.0
        %3427 = vmatprep.subr.mxu0 0.0
        %3428 = vmatpush1.msra.mxu0 0.0
        %3429 = vmatprep.subr.mxu0 0.0
        %3430 = vmatpush1.msra.mxu0 0.0
        %3431 = vmatprep.subr.mxu0 0.0
        %3432 = vmatpush1.msra.mxu0 0.0
        %3433 = vmatprep.subr.mxu0 0.0
        %3434 = vmatpush1.msra.mxu0 0.0
        %3435 = vmatprep.subr.mxu0 0.0
        %3436 = vmatpush1.msra.mxu0 0.0
        %3437 = vmatprep.subr.mxu0 0.0
        %3438 = vmatpush1.msra.mxu0 0.0
        %3439 = vmatprep.subr.mxu0 0.0
        %3440 = vmatpush1.msra.mxu0 0.0
        %3441 = vmatprep.subr.mxu0 0.0
        %3442 = vmatpush1.msra.mxu0 0.0
        %3443 = vmatprep.subr.mxu0 0.0
        %3444 = vmatpush1.msra.mxu0 0.0
        %3445 = vmatprep.subr.mxu0 0.0
        %3446 = vmatpush1.msra.mxu0 0.0
        %3447 = vmatprep.subr.mxu0 0.0
        %3448 = vmatpush1.msra.mxu0 0.0
        %3449 = vmatprep.subr.mxu0 0.0
        %3450 = vmatpush1.msra.mxu0 0.0
        %3451 = vmatprep.subr.mxu0 0.0
        %3452 = vmatpush1.msra.mxu0 0.0
        %3453 = vmatprep.subr.mxu0 0.0
        %3454 = vmatpush1.msra.mxu0 0.0
        %3455 = vmatprep.subr.mxu0 0.0
        %3456 = vmatpush1.msra.mxu0 0.0
        %3457 = vmatprep.subr.mxu0 0.0
        %3458 = vmatpush1.msra.mxu0 0.0
        %3459 = vmatprep.subr.mxu0 0.0
        %3460 = vmatpush1.msra.mxu0 0.0
        %3461 = vmatprep.subr.mxu0 0.0
        %3462 = vmatpush1.msra.mxu0 0.0
        %3463 = vmatprep.subr.mxu0 0.0
        %3464 = vmatpush1.msra.mxu0 0.0
        %3465 = vmatprep.subr.mxu0 0.0
        %3466 = vmatpush1.msra.mxu0 0.0
        %3467 = vmatprep.subr.mxu0 0.0
        %3468 = vmatpush1.msra.mxu0 0.0
        %3469 = vmatprep.subr.mxu0 0.0
        %3470 = vmatpush1.msra.mxu0 0.0
        %3471 = vmatprep.subr.mxu0 0.0
        %3472 = vmatpush1.msra.mxu0 0.0
        %3473 = vmatprep.mubr.f32.mxu0 0.0
        %3474 = vmatmul.mubr.f32.gmra.mrb[0].mxu0 %v3404
        %v3475 = vpop.f32.mrb[0].mxu0
        %v3476 = vadd.f32 0.0, %v3475
        %v3477 = vpop.f32.mrb[0].mxu0
        %v3478 = vadd.f32 0.0, %v3477
        %3479 = vmatprep.mubr.f32.mxu0 0.0
        %3480 = vmatmul.mubr.f32.gmra.mrb[0].mxu0 %v3407
        %v3481 = vpop.f32.mrb[0].mxu0
        %v3482 = vadd.f32 0.0, %v3481
        %v3483 = vpop.f32.mrb[0].mxu0
        %v3484 = vadd.f32 0.0, %v3483
        %3485 = vdwg.mxu0
        %v3486 = vadd.f32 %v3306, %v3476
        %v3487 = vadd.f32 %v3307, %v3478
        %v3488 = vadd.f32 %v3308, %v3482
        %v3489 = vadd.f32 %v3309, %v3484
        %s3490 = scalar_lea.vmem %s5, 432
        %v3491 = vld [vmem:[%s3490] sm:$0xff]
        %v3492 = vld [vmem:[%s3490 + $0x8] sm:$0xff]
        %v3494 = vsel %vm754, %v3491, 0
        %v3497 = vsel %vm754, %v3492, 0
        %3499 = vmatprep.subr.mxu0 %v684
        %3500 = vmatpush1.msra.mxu0 %v683
        %3501 = vmatprep.subr.mxu0 0.0
        %3502 = vmatpush1.msra.mxu0 0.0
        %3503 = vmatprep.subr.mxu0 0.0
        %3504 = vmatpush1.msra.mxu0 0.0
        %3505 = vmatprep.subr.mxu0 0.0
        %3506 = vmatpush1.msra.mxu0 0.0
        %3507 = vmatprep.subr.mxu0 0.0
        %3508 = vmatpush1.msra.mxu0 0.0
        %3509 = vmatprep.subr.mxu0 0.0
        %3510 = vmatpush1.msra.mxu0 0.0
        %3511 = vmatprep.subr.mxu0 0.0
        %3512 = vmatpush1.msra.mxu0 0.0
        %3513 = vmatprep.subr.mxu0 0.0
        %3514 = vmatpush1.msra.mxu0 0.0
        %3515 = vmatprep.subr.mxu0 0.0
        %3516 = vmatpush1.msra.mxu0 0.0
        %3517 = vmatprep.subr.mxu0 0.0
        %3518 = vmatpush1.msra.mxu0 0.0
        %3519 = vmatprep.subr.mxu0 0.0
        %3520 = vmatpush1.msra.mxu0 0.0
        %3521 = vmatprep.subr.mxu0 0.0
        %3522 = vmatpush1.msra.mxu0 0.0
        %3523 = vmatprep.subr.mxu0 0.0
        %3524 = vmatpush1.msra.mxu0 0.0
        %3525 = vmatprep.subr.mxu0 0.0
        %3526 = vmatpush1.msra.mxu0 0.0
        %3527 = vmatprep.subr.mxu0 0.0
        %3528 = vmatpush1.msra.mxu0 0.0
        %3529 = vmatprep.subr.mxu0 0.0
        %3530 = vmatpush1.msra.mxu0 0.0
        %3531 = vmatprep.subr.mxu0 0.0
        %3532 = vmatpush1.msra.mxu0 0.0
        %3533 = vmatprep.subr.mxu0 0.0
        %3534 = vmatpush1.msra.mxu0 0.0
        %3535 = vmatprep.subr.mxu0 0.0
        %3536 = vmatpush1.msra.mxu0 0.0
        %3537 = vmatprep.subr.mxu0 0.0
        %3538 = vmatpush1.msra.mxu0 0.0
        %3539 = vmatprep.subr.mxu0 0.0
        %3540 = vmatpush1.msra.mxu0 0.0
        %3541 = vmatprep.subr.mxu0 0.0
        %3542 = vmatpush1.msra.mxu0 0.0
        %3543 = vmatprep.subr.mxu0 0.0
        %3544 = vmatpush1.msra.mxu0 0.0
        %3545 = vmatprep.subr.mxu0 0.0
        %3546 = vmatpush1.msra.mxu0 0.0
        %3547 = vmatprep.subr.mxu0 0.0
        %3548 = vmatpush1.msra.mxu0 0.0
        %3549 = vmatprep.subr.mxu0 0.0
        %3550 = vmatpush1.msra.mxu0 0.0
        %3551 = vmatprep.subr.mxu0 0.0
        %3552 = vmatpush1.msra.mxu0 0.0
        %3553 = vmatprep.subr.mxu0 0.0
        %3554 = vmatpush1.msra.mxu0 0.0
        %3555 = vmatprep.subr.mxu0 0.0
        %3556 = vmatpush1.msra.mxu0 0.0
        %3557 = vmatprep.subr.mxu0 0.0
        %3558 = vmatpush1.msra.mxu0 0.0
        %3559 = vmatprep.subr.mxu0 0.0
        %3560 = vmatpush1.msra.mxu0 0.0
        %3561 = vmatprep.subr.mxu0 0.0
        %3562 = vmatpush1.msra.mxu0 0.0
        %3563 = vmatprep.mubr.f32.mxu0 0.0
        %3564 = vmatmul.mubr.f32.gmra.mrb[0].mxu0 %v3494
        %v3565 = vpop.f32.mrb[0].mxu0
        %v3566 = vadd.f32 0.0, %v3565
        %v3567 = vpop.f32.mrb[0].mxu0
        %v3568 = vadd.f32 0.0, %v3567
        %3569 = vmatprep.mubr.f32.mxu0 0.0
        %3570 = vmatmul.mubr.f32.gmra.mrb[0].mxu0 %v3497
        %v3571 = vpop.f32.mrb[0].mxu0
        %v3572 = vadd.f32 0.0, %v3571
        %v3573 = vpop.f32.mrb[0].mxu0
        %v3574 = vadd.f32 0.0, %v3573
        %3575 = vdwg.mxu0
        %v3576 = vadd.f32 %v3396, %v3566
        %v3577 = vadd.f32 %v3397, %v3568
        %v3578 = vadd.f32 %v3398, %v3572
        %v3579 = vadd.f32 %v3399, %v3574
        %3580 = vrot.lane.b32.xlu0 %v681, 127
        %v3581 = vpop.permute.xlu0 %3580
        %3582 = vrot.lane.b32.xlu0 %v683, 127
        %v3583 = vpop.permute.xlu0 %3582
        %3584 = vrot.lane.b32.xlu0 %v682, 127
        %v3585 = vpop.permute.xlu0 %3584
        %3586 = vrot.lane.b32.xlu0 %v684, 127
        %v3587 = vpop.permute.xlu0 %3586
        %vm3588 = vcmp.lt.s32.totalorder %v694, 127
        %v3589 = vsel %vm3588, %v3581, %v3585
        %v3590 = vsel %vm3588, %v3583, %v3587
        %v3591 = vsel %vm3588, %v3585, %v3581
        %v3592 = vsel %vm3588, %v3587, %v3583
        %s3593 = scalar_lea.vmem %s1, 22
        %v3594 = vld [vmem:[%s3593] ss:$8 sm:$0x3]
        %v3596 = vlaneseq
        %v3597 = vshrl.u32 %v3596, 7
        %v3598 = vsub.s32 0, %v3597
        %v3599 = vrot.slane %v3594, %v3598
        %v3600 = vlaneseq
        %v3601 = vshrl.u32 %v3600, 7
        %v3602 = vsub.s32 1, %v3601
        %v3603 = vrot.slane %v3594, %v3602
        %v3606 = vmul.f32 %v3589, %v3599
        %v3607 = vmul.f32 %v3591, %v3603
        %v3608 = vmul.f32 %v3590, %v3599
        %v3609 = vmul.f32 %v3592, %v3603
        %s3610 = scalar_lea.vmem %s5, 448
        %v3611 = vld [vmem:[%s3610] sm:$0xff]
        %v3612 = vld [vmem:[%s3610 + $0x8] sm:$0xff]
        %v3614 = vsel %vm754, %v3611, 0
        %v3617 = vsel %vm754, %v3612, 0
        %3619 = vmatprep.subr.mxu0 %v3607
        %3620 = vmatpush1.msra.mxu0 %v3606
        %3621 = vmatprep.subr.mxu0 0.0
        %3622 = vmatpush1.msra.mxu0 0.0
        %3623 = vmatprep.subr.mxu0 0.0
        %3624 = vmatpush1.msra.mxu0 0.0
        %3625 = vmatprep.subr.mxu0 0.0
        %3626 = vmatpush1.msra.mxu0 0.0
        %3627 = vmatprep.subr.mxu0 0.0
        %3628 = vmatpush1.msra.mxu0 0.0
        %3629 = vmatprep.subr.mxu0 0.0
        %3630 = vmatpush1.msra.mxu0 0.0
        %3631 = vmatprep.subr.mxu0 0.0
        %3632 = vmatpush1.msra.mxu0 0.0
        %3633 = vmatprep.subr.mxu0 0.0
        %3634 = vmatpush1.msra.mxu0 0.0
        %3635 = vmatprep.subr.mxu0 0.0
        %3636 = vmatpush1.msra.mxu0 0.0
        %3637 = vmatprep.subr.mxu0 0.0
        %3638 = vmatpush1.msra.mxu0 0.0
        %3639 = vmatprep.subr.mxu0 0.0
        %3640 = vmatpush1.msra.mxu0 0.0
        %3641 = vmatprep.subr.mxu0 0.0
        %3642 = vmatpush1.msra.mxu0 0.0
        %3643 = vmatprep.subr.mxu0 0.0
        %3644 = vmatpush1.msra.mxu0 0.0
        %3645 = vmatprep.subr.mxu0 0.0
        %3646 = vmatpush1.msra.mxu0 0.0
        %3647 = vmatprep.subr.mxu0 0.0
        %3648 = vmatpush1.msra.mxu0 0.0
        %3649 = vmatprep.subr.mxu0 0.0
        %3650 = vmatpush1.msra.mxu0 0.0
        %3651 = vmatprep.subr.mxu0 0.0
        %3652 = vmatpush1.msra.mxu0 0.0
        %3653 = vmatprep.subr.mxu0 0.0
        %3654 = vmatpush1.msra.mxu0 0.0
        %3655 = vmatprep.subr.mxu0 0.0
        %3656 = vmatpush1.msra.mxu0 0.0
        %3657 = vmatprep.subr.mxu0 0.0
        %3658 = vmatpush1.msra.mxu0 0.0
        %3659 = vmatprep.subr.mxu0 0.0
        %3660 = vmatpush1.msra.mxu0 0.0
        %3661 = vmatprep.subr.mxu0 0.0
        %3662 = vmatpush1.msra.mxu0 0.0
        %3663 = vmatprep.subr.mxu0 0.0
        %3664 = vmatpush1.msra.mxu0 0.0
        %3665 = vmatprep.subr.mxu0 0.0
        %3666 = vmatpush1.msra.mxu0 0.0
        %3667 = vmatprep.subr.mxu0 0.0
        %3668 = vmatpush1.msra.mxu0 0.0
        %3669 = vmatprep.subr.mxu0 0.0
        %3670 = vmatpush1.msra.mxu0 0.0
        %3671 = vmatprep.subr.mxu0 0.0
        %3672 = vmatpush1.msra.mxu0 0.0
        %3673 = vmatprep.subr.mxu0 0.0
        %3674 = vmatpush1.msra.mxu0 0.0
        %3675 = vmatprep.subr.mxu0 0.0
        %3676 = vmatpush1.msra.mxu0 0.0
        %3677 = vmatprep.subr.mxu0 0.0
        %3678 = vmatpush1.msra.mxu0 0.0
        %3679 = vmatprep.subr.mxu0 0.0
        %3680 = vmatpush1.msra.mxu0 0.0
        %3681 = vmatprep.subr.mxu0 0.0
        %3682 = vmatpush1.msra.mxu0 0.0
        %3683 = vmatprep.mubr.f32.mxu0 0.0
        %3684 = vmatmul.mubr.f32.gmra.mrb[0].mxu0 %v3614
        %v3685 = vpop.f32.mrb[0].mxu0
        %v3686 = vadd.f32 0.0, %v3685
        %v3687 = vpop.f32.mrb[0].mxu0
        %v3688 = vadd.f32 0.0, %v3687
        %3689 = vmatprep.mubr.f32.mxu0 0.0
        %3690 = vmatmul.mubr.f32.gmra.mrb[0].mxu0 %v3617
        %v3691 = vpop.f32.mrb[0].mxu0
        %v3692 = vadd.f32 0.0, %v3691
        %v3693 = vpop.f32.mrb[0].mxu0
        %v3694 = vadd.f32 0.0, %v3693
        %3695 = vdwg.mxu0
        %v3696 = vadd.f32 %v3486, %v3686
        %v3697 = vadd.f32 %v3487, %v3688
        %v3698 = vadd.f32 %v3488, %v3692
        %v3699 = vadd.f32 %v3489, %v3694
        %s3700 = scalar_lea.vmem %s5, 464
        %v3701 = vld [vmem:[%s3700] sm:$0xff]
        %v3702 = vld [vmem:[%s3700 + $0x8] sm:$0xff]
        %v3704 = vsel %vm754, %v3701, 0
        %v3707 = vsel %vm754, %v3702, 0
        %3709 = vmatprep.subr.mxu0 %v3609
        %3710 = vmatpush1.msra.mxu0 %v3608
        %3711 = vmatprep.subr.mxu0 0.0
        %3712 = vmatpush1.msra.mxu0 0.0
        %3713 = vmatprep.subr.mxu0 0.0
        %3714 = vmatpush1.msra.mxu0 0.0
        %3715 = vmatprep.subr.mxu0 0.0
        %3716 = vmatpush1.msra.mxu0 0.0
        %3717 = vmatprep.subr.mxu0 0.0
        %3718 = vmatpush1.msra.mxu0 0.0
        %3719 = vmatprep.subr.mxu0 0.0
        %3720 = vmatpush1.msra.mxu0 0.0
        %3721 = vmatprep.subr.mxu0 0.0
        %3722 = vmatpush1.msra.mxu0 0.0
        %3723 = vmatprep.subr.mxu0 0.0
        %3724 = vmatpush1.msra.mxu0 0.0
        %3725 = vmatprep.subr.mxu0 0.0
        %3726 = vmatpush1.msra.mxu0 0.0
        %3727 = vmatprep.subr.mxu0 0.0
        %3728 = vmatpush1.msra.mxu0 0.0
        %3729 = vmatprep.subr.mxu0 0.0
        %3730 = vmatpush1.msra.mxu0 0.0
        %3731 = vmatprep.subr.mxu0 0.0
        %3732 = vmatpush1.msra.mxu0 0.0
        %3733 = vmatprep.subr.mxu0 0.0
        %3734 = vmatpush1.msra.mxu0 0.0
        %3735 = vmatprep.subr.mxu0 0.0
        %3736 = vmatpush1.msra.mxu0 0.0
        %3737 = vmatprep.subr.mxu0 0.0
        %3738 = vmatpush1.msra.mxu0 0.0
        %3739 = vmatprep.subr.mxu0 0.0
        %3740 = vmatpush1.msra.mxu0 0.0
        %3741 = vmatprep.subr.mxu0 0.0
        %3742 = vmatpush1.msra.mxu0 0.0
        %3743 = vmatprep.subr.mxu0 0.0
        %3744 = vmatpush1.msra.mxu0 0.0
        %3745 = vmatprep.subr.mxu0 0.0
        %3746 = vmatpush1.msra.mxu0 0.0
        %3747 = vmatprep.subr.mxu0 0.0
        %3748 = vmatpush1.msra.mxu0 0.0
        %3749 = vmatprep.subr.mxu0 0.0
        %3750 = vmatpush1.msra.mxu0 0.0
        %3751 = vmatprep.subr.mxu0 0.0
        %3752 = vmatpush1.msra.mxu0 0.0
        %3753 = vmatprep.subr.mxu0 0.0
        %3754 = vmatpush1.msra.mxu0 0.0
        %3755 = vmatprep.subr.mxu0 0.0
        %3756 = vmatpush1.msra.mxu0 0.0
        %3757 = vmatprep.subr.mxu0 0.0
        %3758 = vmatpush1.msra.mxu0 0.0
        %3759 = vmatprep.subr.mxu0 0.0
        %3760 = vmatpush1.msra.mxu0 0.0
        %3761 = vmatprep.subr.mxu0 0.0
        %3762 = vmatpush1.msra.mxu0 0.0
        %3763 = vmatprep.subr.mxu0 0.0
        %3764 = vmatpush1.msra.mxu0 0.0
        %3765 = vmatprep.subr.mxu0 0.0
        %3766 = vmatpush1.msra.mxu0 0.0
        %3767 = vmatprep.subr.mxu0 0.0
        %3768 = vmatpush1.msra.mxu0 0.0
        %3769 = vmatprep.subr.mxu0 0.0
        %3770 = vmatpush1.msra.mxu0 0.0
        %3771 = vmatprep.subr.mxu0 0.0
        %3772 = vmatpush1.msra.mxu0 0.0
        %3773 = vmatprep.mubr.f32.mxu0 0.0
        %3774 = vmatmul.mubr.f32.gmra.mrb[0].mxu0 %v3704
        %v3775 = vpop.f32.mrb[0].mxu0
        %v3776 = vadd.f32 0.0, %v3775
        %v3777 = vpop.f32.mrb[0].mxu0
        %v3778 = vadd.f32 0.0, %v3777
        %3779 = vmatprep.mubr.f32.mxu0 0.0
        %3780 = vmatmul.mubr.f32.gmra.mrb[0].mxu0 %v3707
        %v3781 = vpop.f32.mrb[0].mxu0
        %v3782 = vadd.f32 0.0, %v3781
        %v3783 = vpop.f32.mrb[0].mxu0
        %v3784 = vadd.f32 0.0, %v3783
        %3785 = vdwg.mxu0
        %v3786 = vadd.f32 %v3576, %v3776
        %v3787 = vadd.f32 %v3577, %v3778
        %v3788 = vadd.f32 %v3578, %v3782
        %v3789 = vadd.f32 %v3579, %v3784
        %3790 = vrot.lane.b32.xlu0 %v681, 121
        %v3791 = vpop.permute.xlu0 %3790
        %3792 = vrot.lane.b32.xlu0 %v683, 121
        %v3793 = vpop.permute.xlu0 %3792
        %3794 = vrot.lane.b32.xlu0 %v682, 121
        %v3795 = vpop.permute.xlu0 %3794
        %3796 = vrot.lane.b32.xlu0 %v684, 121
        %v3797 = vpop.permute.xlu0 %3796
        %vm3798 = vcmp.lt.s32.totalorder %v694, 121
        %v3799 = vsel %vm3798, %v3791, %v3795
        %v3800 = vsel %vm3798, %v3793, %v3797
        %v3801 = vsel %vm3798, %v3795, %v3791
        %v3802 = vsel %vm3798, %v3797, %v3793
        %s3803 = scalar_lea.vmem %s1, 23
        %v3804 = vld [vmem:[%s3803] ss:$8 sm:$0x3]
        %v3806 = vlaneseq
        %v3807 = vshrl.u32 %v3806, 7
        %v3808 = vsub.s32 0, %v3807
        %v3809 = vrot.slane %v3804, %v3808
        %v3810 = vlaneseq
        %v3811 = vshrl.u32 %v3810, 7
        %v3812 = vsub.s32 1, %v3811
        %v3813 = vrot.slane %v3804, %v3812
        %v3816 = vmul.f32 %v3799, %v3809
        %v3817 = vmul.f32 %v3801, %v3813
        %v3818 = vmul.f32 %v3800, %v3809
        %v3819 = vmul.f32 %v3802, %v3813
        %s3820 = scalar_lea.vmem %s5, 480
        %v3821 = vld [vmem:[%s3820] sm:$0xff]
        %v3822 = vld [vmem:[%s3820 + $0x8] sm:$0xff]
        %v3824 = vsel %vm754, %v3821, 0
        %v3827 = vsel %vm754, %v3822, 0
        %3829 = vmatprep.subr.mxu0 %v3817
        %3830 = vmatpush1.msra.mxu0 %v3816
        %3831 = vmatprep.subr.mxu0 0.0
        %3832 = vmatpush1.msra.mxu0 0.0
        %3833 = vmatprep.subr.mxu0 0.0
        %3834 = vmatpush1.msra.mxu0 0.0
        %3835 = vmatprep.subr.mxu0 0.0
        %3836 = vmatpush1.msra.mxu0 0.0
        %3837 = vmatprep.subr.mxu0 0.0
        %3838 = vmatpush1.msra.mxu0 0.0
        %3839 = vmatprep.subr.mxu0 0.0
        %3840 = vmatpush1.msra.mxu0 0.0
        %3841 = vmatprep.subr.mxu0 0.0
        %3842 = vmatpush1.msra.mxu0 0.0
        %3843 = vmatprep.subr.mxu0 0.0
        %3844 = vmatpush1.msra.mxu0 0.0
        %3845 = vmatprep.subr.mxu0 0.0
        %3846 = vmatpush1.msra.mxu0 0.0
        %3847 = vmatprep.subr.mxu0 0.0
        %3848 = vmatpush1.msra.mxu0 0.0
        %3849 = vmatprep.subr.mxu0 0.0
        %3850 = vmatpush1.msra.mxu0 0.0
        %3851 = vmatprep.subr.mxu0 0.0
        %3852 = vmatpush1.msra.mxu0 0.0
        %3853 = vmatprep.subr.mxu0 0.0
        %3854 = vmatpush1.msra.mxu0 0.0
        %3855 = vmatprep.subr.mxu0 0.0
        %3856 = vmatpush1.msra.mxu0 0.0
        %3857 = vmatprep.subr.mxu0 0.0
        %3858 = vmatpush1.msra.mxu0 0.0
        %3859 = vmatprep.subr.mxu0 0.0
        %3860 = vmatpush1.msra.mxu0 0.0
        %3861 = vmatprep.subr.mxu0 0.0
        %3862 = vmatpush1.msra.mxu0 0.0
        %3863 = vmatprep.subr.mxu0 0.0
        %3864 = vmatpush1.msra.mxu0 0.0
        %3865 = vmatprep.subr.mxu0 0.0
        %3866 = vmatpush1.msra.mxu0 0.0
        %3867 = vmatprep.subr.mxu0 0.0
        %3868 = vmatpush1.msra.mxu0 0.0
        %3869 = vmatprep.subr.mxu0 0.0
        %3870 = vmatpush1.msra.mxu0 0.0
        %3871 = vmatprep.subr.mxu0 0.0
        %3872 = vmatpush1.msra.mxu0 0.0
        %3873 = vmatprep.subr.mxu0 0.0
        %3874 = vmatpush1.msra.mxu0 0.0
        %3875 = vmatprep.subr.mxu0 0.0
        %3876 = vmatpush1.msra.mxu0 0.0
        %3877 = vmatprep.subr.mxu0 0.0
        %3878 = vmatpush1.msra.mxu0 0.0
        %3879 = vmatprep.subr.mxu0 0.0
        %3880 = vmatpush1.msra.mxu0 0.0
        %3881 = vmatprep.subr.mxu0 0.0
        %3882 = vmatpush1.msra.mxu0 0.0
        %3883 = vmatprep.subr.mxu0 0.0
        %3884 = vmatpush1.msra.mxu0 0.0
        %3885 = vmatprep.subr.mxu0 0.0
        %3886 = vmatpush1.msra.mxu0 0.0
        %3887 = vmatprep.subr.mxu0 0.0
        %3888 = vmatpush1.msra.mxu0 0.0
        %3889 = vmatprep.subr.mxu0 0.0
        %3890 = vmatpush1.msra.mxu0 0.0
        %3891 = vmatprep.subr.mxu0 0.0
        %3892 = vmatpush1.msra.mxu0 0.0
        %3893 = vmatprep.mubr.f32.mxu0 0.0
        %3894 = vmatmul.mubr.f32.gmra.mrb[0].mxu0 %v3824
        %v3895 = vpop.f32.mrb[0].mxu0
        %v3896 = vadd.f32 0.0, %v3895
        %v3897 = vpop.f32.mrb[0].mxu0
        %v3898 = vadd.f32 0.0, %v3897
        %3899 = vmatprep.mubr.f32.mxu0 0.0
        %3900 = vmatmul.mubr.f32.gmra.mrb[0].mxu0 %v3827
        %v3901 = vpop.f32.mrb[0].mxu0
        %v3902 = vadd.f32 0.0, %v3901
        %v3903 = vpop.f32.mrb[0].mxu0
        %v3904 = vadd.f32 0.0, %v3903
        %3905 = vdwg.mxu0
        %v3906 = vadd.f32 %v3696, %v3896
        %v3907 = vadd.f32 %v3697, %v3898
        %v3908 = vadd.f32 %v3698, %v3902
        %v3909 = vadd.f32 %v3699, %v3904
        %s3910 = scalar_lea.vmem %s5, 496
        %v3911 = vld [vmem:[%s3910] sm:$0xff]
        %v3912 = vld [vmem:[%s3910 + $0x8] sm:$0xff]
        %v3914 = vsel %vm754, %v3911, 0
        %v3917 = vsel %vm754, %v3912, 0
        %3919 = vmatprep.subr.mxu0 %v3819
        %3920 = vmatpush1.msra.mxu0 %v3818
        %3921 = vmatprep.subr.mxu0 0.0
        %3922 = vmatpush1.msra.mxu0 0.0
        %3923 = vmatprep.subr.mxu0 0.0
        %3924 = vmatpush1.msra.mxu0 0.0
        %3925 = vmatprep.subr.mxu0 0.0
        %3926 = vmatpush1.msra.mxu0 0.0
        %3927 = vmatprep.subr.mxu0 0.0
        %3928 = vmatpush1.msra.mxu0 0.0
        %3929 = vmatprep.subr.mxu0 0.0
        %3930 = vmatpush1.msra.mxu0 0.0
        %3931 = vmatprep.subr.mxu0 0.0
        %3932 = vmatpush1.msra.mxu0 0.0
        %3933 = vmatprep.subr.mxu0 0.0
        %3934 = vmatpush1.msra.mxu0 0.0
        %3935 = vmatprep.subr.mxu0 0.0
        %3936 = vmatpush1.msra.mxu0 0.0
        %3937 = vmatprep.subr.mxu0 0.0
        %3938 = vmatpush1.msra.mxu0 0.0
        %3939 = vmatprep.subr.mxu0 0.0
        %3940 = vmatpush1.msra.mxu0 0.0
        %3941 = vmatprep.subr.mxu0 0.0
        %3942 = vmatpush1.msra.mxu0 0.0
        %3943 = vmatprep.subr.mxu0 0.0
        %3944 = vmatpush1.msra.mxu0 0.0
        %3945 = vmatprep.subr.mxu0 0.0
        %3946 = vmatpush1.msra.mxu0 0.0
        %3947 = vmatprep.subr.mxu0 0.0
        %3948 = vmatpush1.msra.mxu0 0.0
        %3949 = vmatprep.subr.mxu0 0.0
        %3950 = vmatpush1.msra.mxu0 0.0
        %3951 = vmatprep.subr.mxu0 0.0
        %3952 = vmatpush1.msra.mxu0 0.0
        %3953 = vmatprep.subr.mxu0 0.0
        %3954 = vmatpush1.msra.mxu0 0.0
        %3955 = vmatprep.subr.mxu0 0.0
        %3956 = vmatpush1.msra.mxu0 0.0
        %3957 = vmatprep.subr.mxu0 0.0
        %3958 = vmatpush1.msra.mxu0 0.0
        %3959 = vmatprep.subr.mxu0 0.0
        %3960 = vmatpush1.msra.mxu0 0.0
        %3961 = vmatprep.subr.mxu0 0.0
        %3962 = vmatpush1.msra.mxu0 0.0
        %3963 = vmatprep.subr.mxu0 0.0
        %3964 = vmatpush1.msra.mxu0 0.0
        %3965 = vmatprep.subr.mxu0 0.0
        %3966 = vmatpush1.msra.mxu0 0.0
        %3967 = vmatprep.subr.mxu0 0.0
        %3968 = vmatpush1.msra.mxu0 0.0
        %3969 = vmatprep.subr.mxu0 0.0
        %3970 = vmatpush1.msra.mxu0 0.0
        %3971 = vmatprep.subr.mxu0 0.0
        %3972 = vmatpush1.msra.mxu0 0.0
        %3973 = vmatprep.subr.mxu0 0.0
        %3974 = vmatpush1.msra.mxu0 0.0
        %3975 = vmatprep.subr.mxu0 0.0
        %3976 = vmatpush1.msra.mxu0 0.0
        %3977 = vmatprep.subr.mxu0 0.0
        %3978 = vmatpush1.msra.mxu0 0.0
        %3979 = vmatprep.subr.mxu0 0.0
        %3980 = vmatpush1.msra.mxu0 0.0
        %3981 = vmatprep.subr.mxu0 0.0
        %3982 = vmatpush1.msra.mxu0 0.0
        %3983 = vmatprep.mubr.f32.mxu0 0.0
        %3984 = vmatmul.mubr.f32.gmra.mrb[0].mxu0 %v3914
        %v3985 = vpop.f32.mrb[0].mxu0
        %v3986 = vadd.f32 0.0, %v3985
        %v3987 = vpop.f32.mrb[0].mxu0
        %v3988 = vadd.f32 0.0, %v3987
        %3989 = vmatprep.mubr.f32.mxu0 0.0
        %3990 = vmatmul.mubr.f32.gmra.mrb[0].mxu0 %v3917
        %v3991 = vpop.f32.mrb[0].mxu0
        %v3992 = vadd.f32 0.0, %v3991
        %v3993 = vpop.f32.mrb[0].mxu0
        %v3994 = vadd.f32 0.0, %v3993
        %3995 = vdwg.mxu0
        %v3996 = vadd.f32 %v3786, %v3986
        %v3997 = vadd.f32 %v3787, %v3988
        %v3998 = vadd.f32 %v3788, %v3992
        %v3999 = vadd.f32 %v3789, %v3994
        %4000 = vrot.lane.b32.xlu0 %v681, 120
        %v4001 = vpop.permute.xlu0 %4000
        %4002 = vrot.lane.b32.xlu0 %v683, 120
        %v4003 = vpop.permute.xlu0 %4002
        %4004 = vrot.lane.b32.xlu0 %v682, 120
        %v4005 = vpop.permute.xlu0 %4004
        %4006 = vrot.lane.b32.xlu0 %v684, 120
        %v4007 = vpop.permute.xlu0 %4006
        %vm4008 = vcmp.lt.s32.totalorder %v694, 120
        %v4009 = vsel %vm4008, %v4001, %v4005
        %v4010 = vsel %vm4008, %v4003, %v4007
        %v4011 = vsel %vm4008, %v4005, %v4001
        %v4012 = vsel %vm4008, %v4007, %v4003
        %s4013 = scalar_lea.vmem %s1, 32
        %v4014 = vld [vmem:[%s4013] ss:$8 sm:$0x3]
        %v4016 = vlaneseq
        %v4017 = vshrl.u32 %v4016, 7
        %v4018 = vsub.s32 0, %v4017
        %v4019 = vrot.slane %v4014, %v4018
        %v4020 = vlaneseq
        %v4021 = vshrl.u32 %v4020, 7
        %v4022 = vsub.s32 1, %v4021
        %v4023 = vrot.slane %v4014, %v4022
        %v4026 = vmul.f32 %v4009, %v4019
        %v4027 = vmul.f32 %v4011, %v4023
        %v4028 = vmul.f32 %v4010, %v4019
        %v4029 = vmul.f32 %v4012, %v4023
        %s4030 = scalar_lea.vmem %s5, 512
        %v4031 = vld [vmem:[%s4030] sm:$0xff]
        %v4032 = vld [vmem:[%s4030 + $0x8] sm:$0xff]
        %v4034 = vsel %vm754, %v4031, 0
        %v4037 = vsel %vm754, %v4032, 0
        %4039 = vmatprep.subr.mxu0 %v4027
        %4040 = vmatpush1.msra.mxu0 %v4026
        %4041 = vmatprep.subr.mxu0 0.0
        %4042 = vmatpush1.msra.mxu0 0.0
        %4043 = vmatprep.subr.mxu0 0.0
        %4044 = vmatpush1.msra.mxu0 0.0
        %4045 = vmatprep.subr.mxu0 0.0
        %4046 = vmatpush1.msra.mxu0 0.0
        %4047 = vmatprep.subr.mxu0 0.0
        %4048 = vmatpush1.msra.mxu0 0.0
        %4049 = vmatprep.subr.mxu0 0.0
        %4050 = vmatpush1.msra.mxu0 0.0
        %4051 = vmatprep.subr.mxu0 0.0
        %4052 = vmatpush1.msra.mxu0 0.0
        %4053 = vmatprep.subr.mxu0 0.0
        %4054 = vmatpush1.msra.mxu0 0.0
        %4055 = vmatprep.subr.mxu0 0.0
        %4056 = vmatpush1.msra.mxu0 0.0
        %4057 = vmatprep.subr.mxu0 0.0
        %4058 = vmatpush1.msra.mxu0 0.0
        %4059 = vmatprep.subr.mxu0 0.0
        %4060 = vmatpush1.msra.mxu0 0.0
        %4061 = vmatprep.subr.mxu0 0.0
        %4062 = vmatpush1.msra.mxu0 0.0
        %4063 = vmatprep.subr.mxu0 0.0
        %4064 = vmatpush1.msra.mxu0 0.0
        %4065 = vmatprep.subr.mxu0 0.0
        %4066 = vmatpush1.msra.mxu0 0.0
        %4067 = vmatprep.subr.mxu0 0.0
        %4068 = vmatpush1.msra.mxu0 0.0
        %4069 = vmatprep.subr.mxu0 0.0
        %4070 = vmatpush1.msra.mxu0 0.0
        %4071 = vmatprep.subr.mxu0 0.0
        %4072 = vmatpush1.msra.mxu0 0.0
        %4073 = vmatprep.subr.mxu0 0.0
        %4074 = vmatpush1.msra.mxu0 0.0
        %4075 = vmatprep.subr.mxu0 0.0
        %4076 = vmatpush1.msra.mxu0 0.0
        %4077 = vmatprep.subr.mxu0 0.0
        %4078 = vmatpush1.msra.mxu0 0.0
        %4079 = vmatprep.subr.mxu0 0.0
        %4080 = vmatpush1.msra.mxu0 0.0
        %4081 = vmatprep.subr.mxu0 0.0
        %4082 = vmatpush1.msra.mxu0 0.0
        %4083 = vmatprep.subr.mxu0 0.0
        %4084 = vmatpush1.msra.mxu0 0.0
        %4085 = vmatprep.subr.mxu0 0.0
        %4086 = vmatpush1.msra.mxu0 0.0
        %4087 = vmatprep.subr.mxu0 0.0
        %4088 = vmatpush1.msra.mxu0 0.0
        %4089 = vmatprep.subr.mxu0 0.0
        %4090 = vmatpush1.msra.mxu0 0.0
        %4091 = vmatprep.subr.mxu0 0.0
        %4092 = vmatpush1.msra.mxu0 0.0
        %4093 = vmatprep.subr.mxu0 0.0
        %4094 = vmatpush1.msra.mxu0 0.0
        %4095 = vmatprep.subr.mxu0 0.0
        %4096 = vmatpush1.msra.mxu0 0.0
        %4097 = vmatprep.subr.mxu0 0.0
        %4098 = vmatpush1.msra.mxu0 0.0
        %4099 = vmatprep.subr.mxu0 0.0
        %4100 = vmatpush1.msra.mxu0 0.0
        %4101 = vmatprep.subr.mxu0 0.0
        %4102 = vmatpush1.msra.mxu0 0.0
        %4103 = vmatprep.mubr.f32.mxu0 0.0
        %4104 = vmatmul.mubr.f32.gmra.mrb[0].mxu0 %v4034
        %v4105 = vpop.f32.mrb[0].mxu0
        %v4106 = vadd.f32 0.0, %v4105
        %v4107 = vpop.f32.mrb[0].mxu0
        %v4108 = vadd.f32 0.0, %v4107
        %4109 = vmatprep.mubr.f32.mxu0 0.0
        %4110 = vmatmul.mubr.f32.gmra.mrb[0].mxu0 %v4037
        %v4111 = vpop.f32.mrb[0].mxu0
        %v4112 = vadd.f32 0.0, %v4111
        %v4113 = vpop.f32.mrb[0].mxu0
        %v4114 = vadd.f32 0.0, %v4113
        %4115 = vdwg.mxu0
        %v4116 = vadd.f32 %v3906, %v4106
        %v4117 = vadd.f32 %v3907, %v4108
        %v4118 = vadd.f32 %v3908, %v4112
        %v4119 = vadd.f32 %v3909, %v4114
        %s4120 = scalar_lea.vmem %s5, 528
        %v4121 = vld [vmem:[%s4120] sm:$0xff]
        %v4122 = vld [vmem:[%s4120 + $0x8] sm:$0xff]
        %v4124 = vsel %vm754, %v4121, 0
        %v4127 = vsel %vm754, %v4122, 0
        %4129 = vmatprep.subr.mxu0 %v4029
        %4130 = vmatpush1.msra.mxu0 %v4028
        %4131 = vmatprep.subr.mxu0 0.0
        %4132 = vmatpush1.msra.mxu0 0.0
        %4133 = vmatprep.subr.mxu0 0.0
        %4134 = vmatpush1.msra.mxu0 0.0
        %4135 = vmatprep.subr.mxu0 0.0
        %4136 = vmatpush1.msra.mxu0 0.0
        %4137 = vmatprep.subr.mxu0 0.0
        %4138 = vmatpush1.msra.mxu0 0.0
        %4139 = vmatprep.subr.mxu0 0.0
        %4140 = vmatpush1.msra.mxu0 0.0
        %4141 = vmatprep.subr.mxu0 0.0
        %4142 = vmatpush1.msra.mxu0 0.0
        %4143 = vmatprep.subr.mxu0 0.0
        %4144 = vmatpush1.msra.mxu0 0.0
        %4145 = vmatprep.subr.mxu0 0.0
        %4146 = vmatpush1.msra.mxu0 0.0
        %4147 = vmatprep.subr.mxu0 0.0
        %4148 = vmatpush1.msra.mxu0 0.0
        %4149 = vmatprep.subr.mxu0 0.0
        %4150 = vmatpush1.msra.mxu0 0.0
        %4151 = vmatprep.subr.mxu0 0.0
        %4152 = vmatpush1.msra.mxu0 0.0
        %4153 = vmatprep.subr.mxu0 0.0
        %4154 = vmatpush1.msra.mxu0 0.0
        %4155 = vmatprep.subr.mxu0 0.0
        %4156 = vmatpush1.msra.mxu0 0.0
        %4157 = vmatprep.subr.mxu0 0.0
        %4158 = vmatpush1.msra.mxu0 0.0
        %4159 = vmatprep.subr.mxu0 0.0
        %4160 = vmatpush1.msra.mxu0 0.0
        %4161 = vmatprep.subr.mxu0 0.0
        %4162 = vmatpush1.msra.mxu0 0.0
        %4163 = vmatprep.subr.mxu0 0.0
        %4164 = vmatpush1.msra.mxu0 0.0
        %4165 = vmatprep.subr.mxu0 0.0
        %4166 = vmatpush1.msra.mxu0 0.0
        %4167 = vmatprep.subr.mxu0 0.0
        %4168 = vmatpush1.msra.mxu0 0.0
        %4169 = vmatprep.subr.mxu0 0.0
        %4170 = vmatpush1.msra.mxu0 0.0
        %4171 = vmatprep.subr.mxu0 0.0
        %4172 = vmatpush1.msra.mxu0 0.0
        %4173 = vmatprep.subr.mxu0 0.0
        %4174 = vmatpush1.msra.mxu0 0.0
        %4175 = vmatprep.subr.mxu0 0.0
        %4176 = vmatpush1.msra.mxu0 0.0
        %4177 = vmatprep.subr.mxu0 0.0
        %4178 = vmatpush1.msra.mxu0 0.0
        %4179 = vmatprep.subr.mxu0 0.0
        %4180 = vmatpush1.msra.mxu0 0.0
        %4181 = vmatprep.subr.mxu0 0.0
        %4182 = vmatpush1.msra.mxu0 0.0
        %4183 = vmatprep.subr.mxu0 0.0
        %4184 = vmatpush1.msra.mxu0 0.0
        %4185 = vmatprep.subr.mxu0 0.0
        %4186 = vmatpush1.msra.mxu0 0.0
        %4187 = vmatprep.subr.mxu0 0.0
        %4188 = vmatpush1.msra.mxu0 0.0
        %4189 = vmatprep.subr.mxu0 0.0
        %4190 = vmatpush1.msra.mxu0 0.0
        %4191 = vmatprep.subr.mxu0 0.0
        %4192 = vmatpush1.msra.mxu0 0.0
        %4193 = vmatprep.mubr.f32.mxu0 0.0
        %4194 = vmatmul.mubr.f32.gmra.mrb[0].mxu0 %v4124
        %v4195 = vpop.f32.mrb[0].mxu0
        %v4196 = vadd.f32 0.0, %v4195
        %v4197 = vpop.f32.mrb[0].mxu0
        %v4198 = vadd.f32 0.0, %v4197
        %4199 = vmatprep.mubr.f32.mxu0 0.0
        %4200 = vmatmul.mubr.f32.gmra.mrb[0].mxu0 %v4127
        %v4201 = vpop.f32.mrb[0].mxu0
        %v4202 = vadd.f32 0.0, %v4201
        %v4203 = vpop.f32.mrb[0].mxu0
        %v4204 = vadd.f32 0.0, %v4203
        %4205 = vdwg.mxu0
        %v4206 = vadd.f32 %v3996, %v4196
        %v4207 = vadd.f32 %v3997, %v4198
        %v4208 = vadd.f32 %v3998, %v4202
        %v4209 = vadd.f32 %v3999, %v4204
        %4210 = vrot.lane.b32.xlu0 %v681, 119
        %v4211 = vpop.permute.xlu0 %4210
        %4212 = vrot.lane.b32.xlu0 %v683, 119
        %v4213 = vpop.permute.xlu0 %4212
        %4214 = vrot.lane.b32.xlu0 %v682, 119
        %v4215 = vpop.permute.xlu0 %4214
        %4216 = vrot.lane.b32.xlu0 %v684, 119
        %v4217 = vpop.permute.xlu0 %4216
        %vm4218 = vcmp.lt.s32.totalorder %v694, 119
        %v4219 = vsel %vm4218, %v4211, %v4215
        %v4220 = vsel %vm4218, %v4213, %v4217
        %v4221 = vsel %vm4218, %v4215, %v4211
        %v4222 = vsel %vm4218, %v4217, %v4213
        %s4223 = scalar_lea.vmem %s1, 33
        %v4224 = vld [vmem:[%s4223] ss:$8 sm:$0x3]
        %v4226 = vlaneseq
        %v4227 = vshrl.u32 %v4226, 7
        %v4228 = vsub.s32 0, %v4227
        %v4229 = vrot.slane %v4224, %v4228
        %v4230 = vlaneseq
        %v4231 = vshrl.u32 %v4230, 7
        %v4232 = vsub.s32 1, %v4231
        %v4233 = vrot.slane %v4224, %v4232
        %v4236 = vmul.f32 %v4219, %v4229
        %v4237 = vmul.f32 %v4221, %v4233
        %v4238 = vmul.f32 %v4220, %v4229
        %v4239 = vmul.f32 %v4222, %v4233
        %s4240 = scalar_lea.vmem %s5, 544
        %v4241 = vld [vmem:[%s4240] sm:$0xff]
        %v4242 = vld [vmem:[%s4240 + $0x8] sm:$0xff]
        %v4244 = vsel %vm754, %v4241, 0
        %v4247 = vsel %vm754, %v4242, 0
        %4249 = vmatprep.subr.mxu0 %v4237
        %4250 = vmatpush1.msra.mxu0 %v4236
        %4251 = vmatprep.subr.mxu0 0.0
        %4252 = vmatpush1.msra.mxu0 0.0
        %4253 = vmatprep.subr.mxu0 0.0
        %4254 = vmatpush1.msra.mxu0 0.0
        %4255 = vmatprep.subr.mxu0 0.0
        %4256 = vmatpush1.msra.mxu0 0.0
        %4257 = vmatprep.subr.mxu0 0.0
        %4258 = vmatpush1.msra.mxu0 0.0
        %4259 = vmatprep.subr.mxu0 0.0
        %4260 = vmatpush1.msra.mxu0 0.0
        %4261 = vmatprep.subr.mxu0 0.0
        %4262 = vmatpush1.msra.mxu0 0.0
        %4263 = vmatprep.subr.mxu0 0.0
        %4264 = vmatpush1.msra.mxu0 0.0
        %4265 = vmatprep.subr.mxu0 0.0
        %4266 = vmatpush1.msra.mxu0 0.0
        %4267 = vmatprep.subr.mxu0 0.0
        %4268 = vmatpush1.msra.mxu0 0.0
        %4269 = vmatprep.subr.mxu0 0.0
        %4270 = vmatpush1.msra.mxu0 0.0
        %4271 = vmatprep.subr.mxu0 0.0
        %4272 = vmatpush1.msra.mxu0 0.0
        %4273 = vmatprep.subr.mxu0 0.0
        %4274 = vmatpush1.msra.mxu0 0.0
        %4275 = vmatprep.subr.mxu0 0.0
        %4276 = vmatpush1.msra.mxu0 0.0
        %4277 = vmatprep.subr.mxu0 0.0
        %4278 = vmatpush1.msra.mxu0 0.0
        %4279 = vmatprep.subr.mxu0 0.0
        %4280 = vmatpush1.msra.mxu0 0.0
        %4281 = vmatprep.subr.mxu0 0.0
        %4282 = vmatpush1.msra.mxu0 0.0
        %4283 = vmatprep.subr.mxu0 0.0
        %4284 = vmatpush1.msra.mxu0 0.0
        %4285 = vmatprep.subr.mxu0 0.0
        %4286 = vmatpush1.msra.mxu0 0.0
        %4287 = vmatprep.subr.mxu0 0.0
        %4288 = vmatpush1.msra.mxu0 0.0
        %4289 = vmatprep.subr.mxu0 0.0
        %4290 = vmatpush1.msra.mxu0 0.0
        %4291 = vmatprep.subr.mxu0 0.0
        %4292 = vmatpush1.msra.mxu0 0.0
        %4293 = vmatprep.subr.mxu0 0.0
        %4294 = vmatpush1.msra.mxu0 0.0
        %4295 = vmatprep.subr.mxu0 0.0
        %4296 = vmatpush1.msra.mxu0 0.0
        %4297 = vmatprep.subr.mxu0 0.0
        %4298 = vmatpush1.msra.mxu0 0.0
        %4299 = vmatprep.subr.mxu0 0.0
        %4300 = vmatpush1.msra.mxu0 0.0
        %4301 = vmatprep.subr.mxu0 0.0
        %4302 = vmatpush1.msra.mxu0 0.0
        %4303 = vmatprep.subr.mxu0 0.0
        %4304 = vmatpush1.msra.mxu0 0.0
        %4305 = vmatprep.subr.mxu0 0.0
        %4306 = vmatpush1.msra.mxu0 0.0
        %4307 = vmatprep.subr.mxu0 0.0
        %4308 = vmatpush1.msra.mxu0 0.0
        %4309 = vmatprep.subr.mxu0 0.0
        %4310 = vmatpush1.msra.mxu0 0.0
        %4311 = vmatprep.subr.mxu0 0.0
        %4312 = vmatpush1.msra.mxu0 0.0
        %4313 = vmatprep.mubr.f32.mxu0 0.0
        %4314 = vmatmul.mubr.f32.gmra.mrb[0].mxu0 %v4244
        %v4315 = vpop.f32.mrb[0].mxu0
        %v4316 = vadd.f32 0.0, %v4315
        %v4317 = vpop.f32.mrb[0].mxu0
        %v4318 = vadd.f32 0.0, %v4317
        %4319 = vmatprep.mubr.f32.mxu0 0.0
        %4320 = vmatmul.mubr.f32.gmra.mrb[0].mxu0 %v4247
        %v4321 = vpop.f32.mrb[0].mxu0
        %v4322 = vadd.f32 0.0, %v4321
        %v4323 = vpop.f32.mrb[0].mxu0
        %v4324 = vadd.f32 0.0, %v4323
        %4325 = vdwg.mxu0
        %v4326 = vadd.f32 %v4116, %v4316
        %v4327 = vadd.f32 %v4117, %v4318
        %v4328 = vadd.f32 %v4118, %v4322
        %v4329 = vadd.f32 %v4119, %v4324
        %s4330 = scalar_lea.vmem %s5, 560
        %v4331 = vld [vmem:[%s4330] sm:$0xff]
        %v4332 = vld [vmem:[%s4330 + $0x8] sm:$0xff]
        %v4334 = vsel %vm754, %v4331, 0
        %v4337 = vsel %vm754, %v4332, 0
        %4339 = vmatprep.subr.mxu0 %v4239
        %4340 = vmatpush1.msra.mxu0 %v4238
        %4341 = vmatprep.subr.mxu0 0.0
        %4342 = vmatpush1.msra.mxu0 0.0
        %4343 = vmatprep.subr.mxu0 0.0
        %4344 = vmatpush1.msra.mxu0 0.0
        %4345 = vmatprep.subr.mxu0 0.0
        %4346 = vmatpush1.msra.mxu0 0.0
        %4347 = vmatprep.subr.mxu0 0.0
        %4348 = vmatpush1.msra.mxu0 0.0
        %4349 = vmatprep.subr.mxu0 0.0
        %4350 = vmatpush1.msra.mxu0 0.0
        %4351 = vmatprep.subr.mxu0 0.0
        %4352 = vmatpush1.msra.mxu0 0.0
        %4353 = vmatprep.subr.mxu0 0.0
        %4354 = vmatpush1.msra.mxu0 0.0
        %4355 = vmatprep.subr.mxu0 0.0
        %4356 = vmatpush1.msra.mxu0 0.0
        %4357 = vmatprep.subr.mxu0 0.0
        %4358 = vmatpush1.msra.mxu0 0.0
        %4359 = vmatprep.subr.mxu0 0.0
        %4360 = vmatpush1.msra.mxu0 0.0
        %4361 = vmatprep.subr.mxu0 0.0
        %4362 = vmatpush1.msra.mxu0 0.0
        %4363 = vmatprep.subr.mxu0 0.0
        %4364 = vmatpush1.msra.mxu0 0.0
        %4365 = vmatprep.subr.mxu0 0.0
        %4366 = vmatpush1.msra.mxu0 0.0
        %4367 = vmatprep.subr.mxu0 0.0
        %4368 = vmatpush1.msra.mxu0 0.0
        %4369 = vmatprep.subr.mxu0 0.0
        %4370 = vmatpush1.msra.mxu0 0.0
        %4371 = vmatprep.subr.mxu0 0.0
        %4372 = vmatpush1.msra.mxu0 0.0
        %4373 = vmatprep.subr.mxu0 0.0
        %4374 = vmatpush1.msra.mxu0 0.0
        %4375 = vmatprep.subr.mxu0 0.0
        %4376 = vmatpush1.msra.mxu0 0.0
        %4377 = vmatprep.subr.mxu0 0.0
        %4378 = vmatpush1.msra.mxu0 0.0
        %4379 = vmatprep.subr.mxu0 0.0
        %4380 = vmatpush1.msra.mxu0 0.0
        %4381 = vmatprep.subr.mxu0 0.0
        %4382 = vmatpush1.msra.mxu0 0.0
        %4383 = vmatprep.subr.mxu0 0.0
        %4384 = vmatpush1.msra.mxu0 0.0
        %4385 = vmatprep.subr.mxu0 0.0
        %4386 = vmatpush1.msra.mxu0 0.0
        %4387 = vmatprep.subr.mxu0 0.0
        %4388 = vmatpush1.msra.mxu0 0.0
        %4389 = vmatprep.subr.mxu0 0.0
        %4390 = vmatpush1.msra.mxu0 0.0
        %4391 = vmatprep.subr.mxu0 0.0
        %4392 = vmatpush1.msra.mxu0 0.0
        %4393 = vmatprep.subr.mxu0 0.0
        %4394 = vmatpush1.msra.mxu0 0.0
        %4395 = vmatprep.subr.mxu0 0.0
        %4396 = vmatpush1.msra.mxu0 0.0
        %4397 = vmatprep.subr.mxu0 0.0
        %4398 = vmatpush1.msra.mxu0 0.0
        %4399 = vmatprep.subr.mxu0 0.0
        %4400 = vmatpush1.msra.mxu0 0.0
        %4401 = vmatprep.subr.mxu0 0.0
        %4402 = vmatpush1.msra.mxu0 0.0
        %4403 = vmatprep.mubr.f32.mxu0 0.0
        %4404 = vmatmul.mubr.f32.gmra.mrb[0].mxu0 %v4334
        %v4405 = vpop.f32.mrb[0].mxu0
        %v4406 = vadd.f32 0.0, %v4405
        %v4407 = vpop.f32.mrb[0].mxu0
        %v4408 = vadd.f32 0.0, %v4407
        %4409 = vmatprep.mubr.f32.mxu0 0.0
        %4410 = vmatmul.mubr.f32.gmra.mrb[0].mxu0 %v4337
        %v4411 = vpop.f32.mrb[0].mxu0
        %v4412 = vadd.f32 0.0, %v4411
        %v4413 = vpop.f32.mrb[0].mxu0
        %v4414 = vadd.f32 0.0, %v4413
        %4415 = vdwg.mxu0
        %v4416 = vadd.f32 %v4206, %v4406
        %v4417 = vadd.f32 %v4207, %v4408
        %v4418 = vadd.f32 %v4208, %v4412
        %v4419 = vadd.f32 %v4209, %v4414
        %s4420 = scalar_lea.vmem %s1, 34
        %v4421 = vld [vmem:[%s4420] ss:$8 sm:$0x3]
        %v4423 = vlaneseq
        %v4424 = vshrl.u32 %v4423, 7
        %v4425 = vsub.s32 0, %v4424
        %v4426 = vrot.slane %v4421, %v4425
        %v4427 = vlaneseq
        %v4428 = vshrl.u32 %v4427, 7
        %v4429 = vsub.s32 1, %v4428
        %v4430 = vrot.slane %v4421, %v4429
        %v4433 = vmul.f32 %v696, %v4426
        %v4434 = vmul.f32 %v698, %v4430
        %v4435 = vmul.f32 %v697, %v4426
        %v4436 = vmul.f32 %v699, %v4430
        %s4437 = scalar_lea.vmem %s5, 576
        %v4438 = vld [vmem:[%s4437] sm:$0xff]
        %v4439 = vld [vmem:[%s4437 + $0x8] sm:$0xff]
        %v4441 = vsel %vm754, %v4438, 0
        %v4444 = vsel %vm754, %v4439, 0
        %4446 = vmatprep.subr.mxu0 %v4434
        %4447 = vmatpush1.msra.mxu0 %v4433
        %4448 = vmatprep.subr.mxu0 0.0
        %4449 = vmatpush1.msra.mxu0 0.0
        %4450 = vmatprep.subr.mxu0 0.0
        %4451 = vmatpush1.msra.mxu0 0.0
        %4452 = vmatprep.subr.mxu0 0.0
        %4453 = vmatpush1.msra.mxu0 0.0
        %4454 = vmatprep.subr.mxu0 0.0
        %4455 = vmatpush1.msra.mxu0 0.0
        %4456 = vmatprep.subr.mxu0 0.0
        %4457 = vmatpush1.msra.mxu0 0.0
        %4458 = vmatprep.subr.mxu0 0.0
        %4459 = vmatpush1.msra.mxu0 0.0
        %4460 = vmatprep.subr.mxu0 0.0
        %4461 = vmatpush1.msra.mxu0 0.0
        %4462 = vmatprep.subr.mxu0 0.0
        %4463 = vmatpush1.msra.mxu0 0.0
        %4464 = vmatprep.subr.mxu0 0.0
        %4465 = vmatpush1.msra.mxu0 0.0
        %4466 = vmatprep.subr.mxu0 0.0
        %4467 = vmatpush1.msra.mxu0 0.0
        %4468 = vmatprep.subr.mxu0 0.0
        %4469 = vmatpush1.msra.mxu0 0.0
        %4470 = vmatprep.subr.mxu0 0.0
        %4471 = vmatpush1.msra.mxu0 0.0
        %4472 = vmatprep.subr.mxu0 0.0
        %4473 = vmatpush1.msra.mxu0 0.0
        %4474 = vmatprep.subr.mxu0 0.0
        %4475 = vmatpush1.msra.mxu0 0.0
        %4476 = vmatprep.subr.mxu0 0.0
        %4477 = vmatpush1.msra.mxu0 0.0
        %4478 = vmatprep.subr.mxu0 0.0
        %4479 = vmatpush1.msra.mxu0 0.0
        %4480 = vmatprep.subr.mxu0 0.0
        %4481 = vmatpush1.msra.mxu0 0.0
        %4482 = vmatprep.subr.mxu0 0.0
        %4483 = vmatpush1.msra.mxu0 0.0
        %4484 = vmatprep.subr.mxu0 0.0
        %4485 = vmatpush1.msra.mxu0 0.0
        %4486 = vmatprep.subr.mxu0 0.0
        %4487 = vmatpush1.msra.mxu0 0.0
        %4488 = vmatprep.subr.mxu0 0.0
        %4489 = vmatpush1.msra.mxu0 0.0
        %4490 = vmatprep.subr.mxu0 0.0
        %4491 = vmatpush1.msra.mxu0 0.0
        %4492 = vmatprep.subr.mxu0 0.0
        %4493 = vmatpush1.msra.mxu0 0.0
        %4494 = vmatprep.subr.mxu0 0.0
        %4495 = vmatpush1.msra.mxu0 0.0
        %4496 = vmatprep.subr.mxu0 0.0
        %4497 = vmatpush1.msra.mxu0 0.0
        %4498 = vmatprep.subr.mxu0 0.0
        %4499 = vmatpush1.msra.mxu0 0.0
        %4500 = vmatprep.subr.mxu0 0.0
        %4501 = vmatpush1.msra.mxu0 0.0
        %4502 = vmatprep.subr.mxu0 0.0
        %4503 = vmatpush1.msra.mxu0 0.0
        %4504 = vmatprep.subr.mxu0 0.0
        %4505 = vmatpush1.msra.mxu0 0.0
        %4506 = vmatprep.subr.mxu0 0.0
        %4507 = vmatpush1.msra.mxu0 0.0
        %4508 = vmatprep.subr.mxu0 0.0
        %4509 = vmatpush1.msra.mxu0 0.0
        %4510 = vmatprep.mubr.f32.mxu0 0.0
        %4511 = vmatmul.mubr.f32.gmra.mrb[0].mxu0 %v4441
        %v4512 = vpop.f32.mrb[0].mxu0
        %v4513 = vadd.f32 0.0, %v4512
        %v4514 = vpop.f32.mrb[0].mxu0
        %v4515 = vadd.f32 0.0, %v4514
        %4516 = vmatprep.mubr.f32.mxu0 0.0
        %4517 = vmatmul.mubr.f32.gmra.mrb[0].mxu0 %v4444
        %v4518 = vpop.f32.mrb[0].mxu0
        %v4519 = vadd.f32 0.0, %v4518
        %v4520 = vpop.f32.mrb[0].mxu0
        %v4521 = vadd.f32 0.0, %v4520
        %4522 = vdwg.mxu0
        %v4523 = vadd.f32 %v4326, %v4513
        %v4524 = vadd.f32 %v4327, %v4515
        %v4525 = vadd.f32 %v4328, %v4519
        %v4526 = vadd.f32 %v4329, %v4521
        %s4527 = scalar_lea.vmem %s5, 592
        %v4528 = vld [vmem:[%s4527] sm:$0xff]
        %v4529 = vld [vmem:[%s4527 + $0x8] sm:$0xff]
        %v4531 = vsel %vm754, %v4528, 0
        %v4534 = vsel %vm754, %v4529, 0
        %4536 = vmatprep.subr.mxu0 %v4436
        %4537 = vmatpush1.msra.mxu0 %v4435
        %4538 = vmatprep.subr.mxu0 0.0
        %4539 = vmatpush1.msra.mxu0 0.0
        %4540 = vmatprep.subr.mxu0 0.0
        %4541 = vmatpush1.msra.mxu0 0.0
        %4542 = vmatprep.subr.mxu0 0.0
        %4543 = vmatpush1.msra.mxu0 0.0
        %4544 = vmatprep.subr.mxu0 0.0
        %4545 = vmatpush1.msra.mxu0 0.0
        %4546 = vmatprep.subr.mxu0 0.0
        %4547 = vmatpush1.msra.mxu0 0.0
        %4548 = vmatprep.subr.mxu0 0.0
        %4549 = vmatpush1.msra.mxu0 0.0
        %4550 = vmatprep.subr.mxu0 0.0
        %4551 = vmatpush1.msra.mxu0 0.0
        %4552 = vmatprep.subr.mxu0 0.0
        %4553 = vmatpush1.msra.mxu0 0.0
        %4554 = vmatprep.subr.mxu0 0.0
        %4555 = vmatpush1.msra.mxu0 0.0
        %4556 = vmatprep.subr.mxu0 0.0
        %4557 = vmatpush1.msra.mxu0 0.0
        %4558 = vmatprep.subr.mxu0 0.0
        %4559 = vmatpush1.msra.mxu0 0.0
        %4560 = vmatprep.subr.mxu0 0.0
        %4561 = vmatpush1.msra.mxu0 0.0
        %4562 = vmatprep.subr.mxu0 0.0
        %4563 = vmatpush1.msra.mxu0 0.0
        %4564 = vmatprep.subr.mxu0 0.0
        %4565 = vmatpush1.msra.mxu0 0.0
        %4566 = vmatprep.subr.mxu0 0.0
        %4567 = vmatpush1.msra.mxu0 0.0
        %4568 = vmatprep.subr.mxu0 0.0
        %4569 = vmatpush1.msra.mxu0 0.0
        %4570 = vmatprep.subr.mxu0 0.0
        %4571 = vmatpush1.msra.mxu0 0.0
        %4572 = vmatprep.subr.mxu0 0.0
        %4573 = vmatpush1.msra.mxu0 0.0
        %4574 = vmatprep.subr.mxu0 0.0
        %4575 = vmatpush1.msra.mxu0 0.0
        %4576 = vmatprep.subr.mxu0 0.0
        %4577 = vmatpush1.msra.mxu0 0.0
        %4578 = vmatprep.subr.mxu0 0.0
        %4579 = vmatpush1.msra.mxu0 0.0
        %4580 = vmatprep.subr.mxu0 0.0
        %4581 = vmatpush1.msra.mxu0 0.0
        %4582 = vmatprep.subr.mxu0 0.0
        %4583 = vmatpush1.msra.mxu0 0.0
        %4584 = vmatprep.subr.mxu0 0.0
        %4585 = vmatpush1.msra.mxu0 0.0
        %4586 = vmatprep.subr.mxu0 0.0
        %4587 = vmatpush1.msra.mxu0 0.0
        %4588 = vmatprep.subr.mxu0 0.0
        %4589 = vmatpush1.msra.mxu0 0.0
        %4590 = vmatprep.subr.mxu0 0.0
        %4591 = vmatpush1.msra.mxu0 0.0
        %4592 = vmatprep.subr.mxu0 0.0
        %4593 = vmatpush1.msra.mxu0 0.0
        %4594 = vmatprep.subr.mxu0 0.0
        %4595 = vmatpush1.msra.mxu0 0.0
        %4596 = vmatprep.subr.mxu0 0.0
        %4597 = vmatpush1.msra.mxu0 0.0
        %4598 = vmatprep.subr.mxu0 0.0
        %4599 = vmatpush1.msra.mxu0 0.0
        %4600 = vmatprep.mubr.f32.mxu0 0.0
        %4601 = vmatmul.mubr.f32.gmra.mrb[0].mxu0 %v4531
        %v4602 = vpop.f32.mrb[0].mxu0
        %v4603 = vadd.f32 0.0, %v4602
        %v4604 = vpop.f32.mrb[0].mxu0
        %v4605 = vadd.f32 0.0, %v4604
        %4606 = vmatprep.mubr.f32.mxu0 0.0
        %4607 = vmatmul.mubr.f32.gmra.mrb[0].mxu0 %v4534
        %v4608 = vpop.f32.mrb[0].mxu0
        %v4609 = vadd.f32 0.0, %v4608
        %v4610 = vpop.f32.mrb[0].mxu0
        %v4611 = vadd.f32 0.0, %v4610
        %4612 = vdwg.mxu0
        %v4613 = vadd.f32 %v4416, %v4603
        %v4614 = vadd.f32 %v4417, %v4605
        %v4615 = vadd.f32 %v4418, %v4609
        %v4616 = vadd.f32 %v4419, %v4611
        %s4617 = scalar_lea.vmem %s1, 35
        %v4618 = vld [vmem:[%s4617] ss:$8 sm:$0x3]
        %v4620 = vlaneseq
        %v4621 = vshrl.u32 %v4620, 7
        %v4622 = vsub.s32 0, %v4621
        %v4623 = vrot.slane %v4618, %v4622
        %v4624 = vlaneseq
        %v4625 = vshrl.u32 %v4624, 7
        %v4626 = vsub.s32 1, %v4625
        %v4627 = vrot.slane %v4618, %v4626
        %v4630 = vmul.f32 %v730, %v4623
        %v4631 = vmul.f32 %v732, %v4627
        %v4632 = vmul.f32 %v731, %v4623
        %v4633 = vmul.f32 %v733, %v4627
        %s4634 = scalar_lea.vmem %s5, 608
        %v4635 = vld [vmem:[%s4634] sm:$0xff]
        %v4636 = vld [vmem:[%s4634 + $0x8] sm:$0xff]
        %v4638 = vsel %vm754, %v4635, 0
        %v4641 = vsel %vm754, %v4636, 0
        %4643 = vmatprep.subr.mxu0 %v4631
        %4644 = vmatpush1.msra.mxu0 %v4630
        %4645 = vmatprep.subr.mxu0 0.0
        %4646 = vmatpush1.msra.mxu0 0.0
        %4647 = vmatprep.subr.mxu0 0.0
        %4648 = vmatpush1.msra.mxu0 0.0
        %4649 = vmatprep.subr.mxu0 0.0
        %4650 = vmatpush1.msra.mxu0 0.0
        %4651 = vmatprep.subr.mxu0 0.0
        %4652 = vmatpush1.msra.mxu0 0.0
        %4653 = vmatprep.subr.mxu0 0.0
        %4654 = vmatpush1.msra.mxu0 0.0
        %4655 = vmatprep.subr.mxu0 0.0
        %4656 = vmatpush1.msra.mxu0 0.0
        %4657 = vmatprep.subr.mxu0 0.0
        %4658 = vmatpush1.msra.mxu0 0.0
        %4659 = vmatprep.subr.mxu0 0.0
        %4660 = vmatpush1.msra.mxu0 0.0
        %4661 = vmatprep.subr.mxu0 0.0
        %4662 = vmatpush1.msra.mxu0 0.0
        %4663 = vmatprep.subr.mxu0 0.0
        %4664 = vmatpush1.msra.mxu0 0.0
        %4665 = vmatprep.subr.mxu0 0.0
        %4666 = vmatpush1.msra.mxu0 0.0
        %4667 = vmatprep.subr.mxu0 0.0
        %4668 = vmatpush1.msra.mxu0 0.0
        %4669 = vmatprep.subr.mxu0 0.0
        %4670 = vmatpush1.msra.mxu0 0.0
        %4671 = vmatprep.subr.mxu0 0.0
        %4672 = vmatpush1.msra.mxu0 0.0
        %4673 = vmatprep.subr.mxu0 0.0
        %4674 = vmatpush1.msra.mxu0 0.0
        %4675 = vmatprep.subr.mxu0 0.0
        %4676 = vmatpush1.msra.mxu0 0.0
        %4677 = vmatprep.subr.mxu0 0.0
        %4678 = vmatpush1.msra.mxu0 0.0
        %4679 = vmatprep.subr.mxu0 0.0
        %4680 = vmatpush1.msra.mxu0 0.0
        %4681 = vmatprep.subr.mxu0 0.0
        %4682 = vmatpush1.msra.mxu0 0.0
        %4683 = vmatprep.subr.mxu0 0.0
        %4684 = vmatpush1.msra.mxu0 0.0
        %4685 = vmatprep.subr.mxu0 0.0
        %4686 = vmatpush1.msra.mxu0 0.0
        %4687 = vmatprep.subr.mxu0 0.0
        %4688 = vmatpush1.msra.mxu0 0.0
        %4689 = vmatprep.subr.mxu0 0.0
        %4690 = vmatpush1.msra.mxu0 0.0
        %4691 = vmatprep.subr.mxu0 0.0
        %4692 = vmatpush1.msra.mxu0 0.0
        %4693 = vmatprep.subr.mxu0 0.0
        %4694 = vmatpush1.msra.mxu0 0.0
        %4695 = vmatprep.subr.mxu0 0.0
        %4696 = vmatpush1.msra.mxu0 0.0
        %4697 = vmatprep.subr.mxu0 0.0
        %4698 = vmatpush1.msra.mxu0 0.0
        %4699 = vmatprep.subr.mxu0 0.0
        %4700 = vmatpush1.msra.mxu0 0.0
        %4701 = vmatprep.subr.mxu0 0.0
        %4702 = vmatpush1.msra.mxu0 0.0
        %4703 = vmatprep.subr.mxu0 0.0
        %4704 = vmatpush1.msra.mxu0 0.0
        %4705 = vmatprep.subr.mxu0 0.0
        %4706 = vmatpush1.msra.mxu0 0.0
        %4707 = vmatprep.mubr.f32.mxu0 0.0
        %4708 = vmatmul.mubr.f32.gmra.mrb[0].mxu0 %v4638
        %v4709 = vpop.f32.mrb[0].mxu0
        %v4710 = vadd.f32 0.0, %v4709
        %v4711 = vpop.f32.mrb[0].mxu0
        %v4712 = vadd.f32 0.0, %v4711
        %4713 = vmatprep.mubr.f32.mxu0 0.0
        %4714 = vmatmul.mubr.f32.gmra.mrb[0].mxu0 %v4641
        %v4715 = vpop.f32.mrb[0].mxu0
        %v4716 = vadd.f32 0.0, %v4715
        %v4717 = vpop.f32.mrb[0].mxu0
        %v4718 = vadd.f32 0.0, %v4717
        %4719 = vdwg.mxu0
        %v4720 = vadd.f32 %v4523, %v4710
        %v4721 = vadd.f32 %v4524, %v4712
        %v4722 = vadd.f32 %v4525, %v4716
        %v4723 = vadd.f32 %v4526, %v4718
        %s4724 = scalar_lea.vmem %s5, 624
        %v4725 = vld [vmem:[%s4724] sm:$0xff]
        %v4726 = vld [vmem:[%s4724 + $0x8] sm:$0xff]
        %v4728 = vsel %vm754, %v4725, 0
        %v4731 = vsel %vm754, %v4726, 0
        %4733 = vmatprep.subr.mxu0 %v4633
        %4734 = vmatpush1.msra.mxu0 %v4632
        %4735 = vmatprep.subr.mxu0 0.0
        %4736 = vmatpush1.msra.mxu0 0.0
        %4737 = vmatprep.subr.mxu0 0.0
        %4738 = vmatpush1.msra.mxu0 0.0
        %4739 = vmatprep.subr.mxu0 0.0
        %4740 = vmatpush1.msra.mxu0 0.0
        %4741 = vmatprep.subr.mxu0 0.0
        %4742 = vmatpush1.msra.mxu0 0.0
        %4743 = vmatprep.subr.mxu0 0.0
        %4744 = vmatpush1.msra.mxu0 0.0
        %4745 = vmatprep.subr.mxu0 0.0
        %4746 = vmatpush1.msra.mxu0 0.0
        %4747 = vmatprep.subr.mxu0 0.0
        %4748 = vmatpush1.msra.mxu0 0.0
        %4749 = vmatprep.subr.mxu0 0.0
        %4750 = vmatpush1.msra.mxu0 0.0
        %4751 = vmatprep.subr.mxu0 0.0
        %4752 = vmatpush1.msra.mxu0 0.0
        %4753 = vmatprep.subr.mxu0 0.0
        %4754 = vmatpush1.msra.mxu0 0.0
        %4755 = vmatprep.subr.mxu0 0.0
        %4756 = vmatpush1.msra.mxu0 0.0
        %4757 = vmatprep.subr.mxu0 0.0
        %4758 = vmatpush1.msra.mxu0 0.0
        %4759 = vmatprep.subr.mxu0 0.0
        %4760 = vmatpush1.msra.mxu0 0.0
        %4761 = vmatprep.subr.mxu0 0.0
        %4762 = vmatpush1.msra.mxu0 0.0
        %4763 = vmatprep.subr.mxu0 0.0
        %4764 = vmatpush1.msra.mxu0 0.0
        %4765 = vmatprep.subr.mxu0 0.0
        %4766 = vmatpush1.msra.mxu0 0.0
        %4767 = vmatprep.subr.mxu0 0.0
        %4768 = vmatpush1.msra.mxu0 0.0
        %4769 = vmatprep.subr.mxu0 0.0
        %4770 = vmatpush1.msra.mxu0 0.0
        %4771 = vmatprep.subr.mxu0 0.0
        %4772 = vmatpush1.msra.mxu0 0.0
        %4773 = vmatprep.subr.mxu0 0.0
        %4774 = vmatpush1.msra.mxu0 0.0
        %4775 = vmatprep.subr.mxu0 0.0
        %4776 = vmatpush1.msra.mxu0 0.0
        %4777 = vmatprep.subr.mxu0 0.0
        %4778 = vmatpush1.msra.mxu0 0.0
        %4779 = vmatprep.subr.mxu0 0.0
        %4780 = vmatpush1.msra.mxu0 0.0
        %4781 = vmatprep.subr.mxu0 0.0
        %4782 = vmatpush1.msra.mxu0 0.0
        %4783 = vmatprep.subr.mxu0 0.0
        %4784 = vmatpush1.msra.mxu0 0.0
        %4785 = vmatprep.subr.mxu0 0.0
        %4786 = vmatpush1.msra.mxu0 0.0
        %4787 = vmatprep.subr.mxu0 0.0
        %4788 = vmatpush1.msra.mxu0 0.0
        %4789 = vmatprep.subr.mxu0 0.0
        %4790 = vmatpush1.msra.mxu0 0.0
        %4791 = vmatprep.subr.mxu0 0.0
        %4792 = vmatpush1.msra.mxu0 0.0
        %4793 = vmatprep.subr.mxu0 0.0
        %4794 = vmatpush1.msra.mxu0 0.0
        %4795 = vmatprep.subr.mxu0 0.0
        %4796 = vmatpush1.msra.mxu0 0.0
        %4797 = vmatprep.mubr.f32.mxu0 0.0
        %4798 = vmatmul.mubr.f32.gmra.mrb[0].mxu0 %v4728
        %v4799 = vpop.f32.mrb[0].mxu0
        %v4800 = vadd.f32 0.0, %v4799
        %v4801 = vpop.f32.mrb[0].mxu0
        %v4802 = vadd.f32 0.0, %v4801
        %4803 = vmatprep.mubr.f32.mxu0 0.0
        %4804 = vmatmul.mubr.f32.gmra.mrb[0].mxu0 %v4731
        %v4805 = vpop.f32.mrb[0].mxu0
        %v4806 = vadd.f32 0.0, %v4805
        %v4807 = vpop.f32.mrb[0].mxu0
        %v4808 = vadd.f32 0.0, %v4807
        %4809 = vdwg.mxu0
        %v4810 = vadd.f32 %v4613, %v4800
        %v4811 = vadd.f32 %v4614, %v4802
        %v4812 = vadd.f32 %v4615, %v4806
        %v4813 = vadd.f32 %v4616, %v4808
        %s4814 = scalar_lea.vmem %s1, 36
        %v4815 = vld [vmem:[%s4814] ss:$8 sm:$0x3]
        %v4817 = vlaneseq
        %v4818 = vshrl.u32 %v4817, 7
        %v4819 = vsub.s32 0, %v4818
        %v4820 = vrot.slane %v4815, %v4819
        %v4821 = vlaneseq
        %v4822 = vshrl.u32 %v4821, 7
        %v4823 = vsub.s32 1, %v4822
        %v4824 = vrot.slane %v4815, %v4823
        %v4827 = vmul.f32 %v1099, %v4820
        %v4828 = vmul.f32 %v1101, %v4824
        %v4829 = vmul.f32 %v1100, %v4820
        %v4830 = vmul.f32 %v1102, %v4824
        %s4831 = scalar_lea.vmem %s5, 640
        %v4832 = vld [vmem:[%s4831] sm:$0xff]
        %v4833 = vld [vmem:[%s4831 + $0x8] sm:$0xff]
        %v4835 = vsel %vm754, %v4832, 0
        %v4838 = vsel %vm754, %v4833, 0
        %4840 = vmatprep.subr.mxu0 %v4828
        %4841 = vmatpush1.msra.mxu0 %v4827
        %4842 = vmatprep.subr.mxu0 0.0
        %4843 = vmatpush1.msra.mxu0 0.0
        %4844 = vmatprep.subr.mxu0 0.0
        %4845 = vmatpush1.msra.mxu0 0.0
        %4846 = vmatprep.subr.mxu0 0.0
        %4847 = vmatpush1.msra.mxu0 0.0
        %4848 = vmatprep.subr.mxu0 0.0
        %4849 = vmatpush1.msra.mxu0 0.0
        %4850 = vmatprep.subr.mxu0 0.0
        %4851 = vmatpush1.msra.mxu0 0.0
        %4852 = vmatprep.subr.mxu0 0.0
        %4853 = vmatpush1.msra.mxu0 0.0
        %4854 = vmatprep.subr.mxu0 0.0
        %4855 = vmatpush1.msra.mxu0 0.0
        %4856 = vmatprep.subr.mxu0 0.0
        %4857 = vmatpush1.msra.mxu0 0.0
        %4858 = vmatprep.subr.mxu0 0.0
        %4859 = vmatpush1.msra.mxu0 0.0
        %4860 = vmatprep.subr.mxu0 0.0
        %4861 = vmatpush1.msra.mxu0 0.0
        %4862 = vmatprep.subr.mxu0 0.0
        %4863 = vmatpush1.msra.mxu0 0.0
        %4864 = vmatprep.subr.mxu0 0.0
        %4865 = vmatpush1.msra.mxu0 0.0
        %4866 = vmatprep.subr.mxu0 0.0
        %4867 = vmatpush1.msra.mxu0 0.0
        %4868 = vmatprep.subr.mxu0 0.0
        %4869 = vmatpush1.msra.mxu0 0.0
        %4870 = vmatprep.subr.mxu0 0.0
        %4871 = vmatpush1.msra.mxu0 0.0
        %4872 = vmatprep.subr.mxu0 0.0
        %4873 = vmatpush1.msra.mxu0 0.0
        %4874 = vmatprep.subr.mxu0 0.0
        %4875 = vmatpush1.msra.mxu0 0.0
        %4876 = vmatprep.subr.mxu0 0.0
        %4877 = vmatpush1.msra.mxu0 0.0
        %4878 = vmatprep.subr.mxu0 0.0
        %4879 = vmatpush1.msra.mxu0 0.0
        %4880 = vmatprep.subr.mxu0 0.0
        %4881 = vmatpush1.msra.mxu0 0.0
        %4882 = vmatprep.subr.mxu0 0.0
        %4883 = vmatpush1.msra.mxu0 0.0
        %4884 = vmatprep.subr.mxu0 0.0
        %4885 = vmatpush1.msra.mxu0 0.0
        %4886 = vmatprep.subr.mxu0 0.0
        %4887 = vmatpush1.msra.mxu0 0.0
        %4888 = vmatprep.subr.mxu0 0.0
        %4889 = vmatpush1.msra.mxu0 0.0
        %4890 = vmatprep.subr.mxu0 0.0
        %4891 = vmatpush1.msra.mxu0 0.0
        %4892 = vmatprep.subr.mxu0 0.0
        %4893 = vmatpush1.msra.mxu0 0.0
        %4894 = vmatprep.subr.mxu0 0.0
        %4895 = vmatpush1.msra.mxu0 0.0
        %4896 = vmatprep.subr.mxu0 0.0
        %4897 = vmatpush1.msra.mxu0 0.0
        %4898 = vmatprep.subr.mxu0 0.0
        %4899 = vmatpush1.msra.mxu0 0.0
        %4900 = vmatprep.subr.mxu0 0.0
        %4901 = vmatpush1.msra.mxu0 0.0
        %4902 = vmatprep.subr.mxu0 0.0
        %4903 = vmatpush1.msra.mxu0 0.0
        %4904 = vmatprep.mubr.f32.mxu0 0.0
        %4905 = vmatmul.mubr.f32.gmra.mrb[0].mxu0 %v4835
        %v4906 = vpop.f32.mrb[0].mxu0
        %v4907 = vadd.f32 0.0, %v4906
        %v4908 = vpop.f32.mrb[0].mxu0
        %v4909 = vadd.f32 0.0, %v4908
        %4910 = vmatprep.mubr.f32.mxu0 0.0
        %4911 = vmatmul.mubr.f32.gmra.mrb[0].mxu0 %v4838
        %v4912 = vpop.f32.mrb[0].mxu0
        %v4913 = vadd.f32 0.0, %v4912
        %v4914 = vpop.f32.mrb[0].mxu0
        %v4915 = vadd.f32 0.0, %v4914
        %4916 = vdwg.mxu0
        %v4917 = vadd.f32 %v4720, %v4907
        %v4918 = vadd.f32 %v4721, %v4909
        %v4919 = vadd.f32 %v4722, %v4913
        %v4920 = vadd.f32 %v4723, %v4915
        %s4921 = scalar_lea.vmem %s5, 656
        %v4922 = vld [vmem:[%s4921] sm:$0xff]
        %v4923 = vld [vmem:[%s4921 + $0x8] sm:$0xff]
        %v4925 = vsel %vm754, %v4922, 0
        %v4928 = vsel %vm754, %v4923, 0
        %4930 = vmatprep.subr.mxu0 %v4830
        %4931 = vmatpush1.msra.mxu0 %v4829
        %4932 = vmatprep.subr.mxu0 0.0
        %4933 = vmatpush1.msra.mxu0 0.0
        %4934 = vmatprep.subr.mxu0 0.0
        %4935 = vmatpush1.msra.mxu0 0.0
        %4936 = vmatprep.subr.mxu0 0.0
        %4937 = vmatpush1.msra.mxu0 0.0
        %4938 = vmatprep.subr.mxu0 0.0
        %4939 = vmatpush1.msra.mxu0 0.0
        %4940 = vmatprep.subr.mxu0 0.0
        %4941 = vmatpush1.msra.mxu0 0.0
        %4942 = vmatprep.subr.mxu0 0.0
        %4943 = vmatpush1.msra.mxu0 0.0
        %4944 = vmatprep.subr.mxu0 0.0
        %4945 = vmatpush1.msra.mxu0 0.0
        %4946 = vmatprep.subr.mxu0 0.0
        %4947 = vmatpush1.msra.mxu0 0.0
        %4948 = vmatprep.subr.mxu0 0.0
        %4949 = vmatpush1.msra.mxu0 0.0
        %4950 = vmatprep.subr.mxu0 0.0
        %4951 = vmatpush1.msra.mxu0 0.0
        %4952 = vmatprep.subr.mxu0 0.0
        %4953 = vmatpush1.msra.mxu0 0.0
        %4954 = vmatprep.subr.mxu0 0.0
        %4955 = vmatpush1.msra.mxu0 0.0
        %4956 = vmatprep.subr.mxu0 0.0
        %4957 = vmatpush1.msra.mxu0 0.0
        %4958 = vmatprep.subr.mxu0 0.0
        %4959 = vmatpush1.msra.mxu0 0.0
        %4960 = vmatprep.subr.mxu0 0.0
        %4961 = vmatpush1.msra.mxu0 0.0
        %4962 = vmatprep.subr.mxu0 0.0
        %4963 = vmatpush1.msra.mxu0 0.0
        %4964 = vmatprep.subr.mxu0 0.0
        %4965 = vmatpush1.msra.mxu0 0.0
        %4966 = vmatprep.subr.mxu0 0.0
        %4967 = vmatpush1.msra.mxu0 0.0
        %4968 = vmatprep.subr.mxu0 0.0
        %4969 = vmatpush1.msra.mxu0 0.0
        %4970 = vmatprep.subr.mxu0 0.0
        %4971 = vmatpush1.msra.mxu0 0.0
        %4972 = vmatprep.subr.mxu0 0.0
        %4973 = vmatpush1.msra.mxu0 0.0
        %4974 = vmatprep.subr.mxu0 0.0
        %4975 = vmatpush1.msra.mxu0 0.0
        %4976 = vmatprep.subr.mxu0 0.0
        %4977 = vmatpush1.msra.mxu0 0.0
        %4978 = vmatprep.subr.mxu0 0.0
        %4979 = vmatpush1.msra.mxu0 0.0
        %4980 = vmatprep.subr.mxu0 0.0
        %4981 = vmatpush1.msra.mxu0 0.0
        %4982 = vmatprep.subr.mxu0 0.0
        %4983 = vmatpush1.msra.mxu0 0.0
        %4984 = vmatprep.subr.mxu0 0.0
        %4985 = vmatpush1.msra.mxu0 0.0
        %4986 = vmatprep.subr.mxu0 0.0
        %4987 = vmatpush1.msra.mxu0 0.0
        %4988 = vmatprep.subr.mxu0 0.0
        %4989 = vmatpush1.msra.mxu0 0.0
        %4990 = vmatprep.subr.mxu0 0.0
        %4991 = vmatpush1.msra.mxu0 0.0
        %4992 = vmatprep.subr.mxu0 0.0
        %4993 = vmatpush1.msra.mxu0 0.0
        %4994 = vmatprep.mubr.f32.mxu0 0.0
        %4995 = vmatmul.mubr.f32.gmra.mrb[0].mxu0 %v4925
        %v4996 = vpop.f32.mrb[0].mxu0
        %v4997 = vadd.f32 0.0, %v4996
        %v4998 = vpop.f32.mrb[0].mxu0
        %v4999 = vadd.f32 0.0, %v4998
        %5000 = vmatprep.mubr.f32.mxu0 0.0
        %5001 = vmatmul.mubr.f32.gmra.mrb[0].mxu0 %v4928
        %v5002 = vpop.f32.mrb[0].mxu0
        %v5003 = vadd.f32 0.0, %v5002
        %v5004 = vpop.f32.mrb[0].mxu0
        %v5005 = vadd.f32 0.0, %v5004
        %5006 = vdwg.mxu0
        %v5007 = vadd.f32 %v4810, %v4997
        %v5008 = vadd.f32 %v4811, %v4999
        %v5009 = vadd.f32 %v4812, %v5003
        %v5010 = vadd.f32 %v4813, %v5005
        %s5011 = scalar_lea.vmem %s1, 37
        %v5012 = vld [vmem:[%s5011] ss:$8 sm:$0x3]
        %v5014 = vlaneseq
        %v5015 = vshrl.u32 %v5014, 7
        %v5016 = vsub.s32 0, %v5015
        %v5017 = vrot.slane %v5012, %v5016
        %v5018 = vlaneseq
        %v5019 = vshrl.u32 %v5018, 7
        %v5020 = vsub.s32 1, %v5019
        %v5021 = vrot.slane %v5012, %v5020
        %v5024 = vmul.f32 %v1309, %v5017
        %v5025 = vmul.f32 %v1311, %v5021
        %v5026 = vmul.f32 %v1310, %v5017
        %v5027 = vmul.f32 %v1312, %v5021
        %s5028 = scalar_lea.vmem %s5, 672
        %v5029 = vld [vmem:[%s5028] sm:$0xff]
        %v5030 = vld [vmem:[%s5028 + $0x8] sm:$0xff]
        %v5032 = vsel %vm754, %v5029, 0
        %v5035 = vsel %vm754, %v5030, 0
        %5037 = vmatprep.subr.mxu0 %v5025
        %5038 = vmatpush1.msra.mxu0 %v5024
        %5039 = vmatprep.subr.mxu0 0.0
        %5040 = vmatpush1.msra.mxu0 0.0
        %5041 = vmatprep.subr.mxu0 0.0
        %5042 = vmatpush1.msra.mxu0 0.0
        %5043 = vmatprep.subr.mxu0 0.0
        %5044 = vmatpush1.msra.mxu0 0.0
        %5045 = vmatprep.subr.mxu0 0.0
        %5046 = vmatpush1.msra.mxu0 0.0
        %5047 = vmatprep.subr.mxu0 0.0
        %5048 = vmatpush1.msra.mxu0 0.0
        %5049 = vmatprep.subr.mxu0 0.0
        %5050 = vmatpush1.msra.mxu0 0.0
        %5051 = vmatprep.subr.mxu0 0.0
        %5052 = vmatpush1.msra.mxu0 0.0
        %5053 = vmatprep.subr.mxu0 0.0
        %5054 = vmatpush1.msra.mxu0 0.0
        %5055 = vmatprep.subr.mxu0 0.0
        %5056 = vmatpush1.msra.mxu0 0.0
        %5057 = vmatprep.subr.mxu0 0.0
        %5058 = vmatpush1.msra.mxu0 0.0
        %5059 = vmatprep.subr.mxu0 0.0
        %5060 = vmatpush1.msra.mxu0 0.0
        %5061 = vmatprep.subr.mxu0 0.0
        %5062 = vmatpush1.msra.mxu0 0.0
        %5063 = vmatprep.subr.mxu0 0.0
        %5064 = vmatpush1.msra.mxu0 0.0
        %5065 = vmatprep.subr.mxu0 0.0
        %5066 = vmatpush1.msra.mxu0 0.0
        %5067 = vmatprep.subr.mxu0 0.0
        %5068 = vmatpush1.msra.mxu0 0.0
        %5069 = vmatprep.subr.mxu0 0.0
        %5070 = vmatpush1.msra.mxu0 0.0
        %5071 = vmatprep.subr.mxu0 0.0
        %5072 = vmatpush1.msra.mxu0 0.0
        %5073 = vmatprep.subr.mxu0 0.0
        %5074 = vmatpush1.msra.mxu0 0.0
        %5075 = vmatprep.subr.mxu0 0.0
        %5076 = vmatpush1.msra.mxu0 0.0
        %5077 = vmatprep.subr.mxu0 0.0
        %5078 = vmatpush1.msra.mxu0 0.0
        %5079 = vmatprep.subr.mxu0 0.0
        %5080 = vmatpush1.msra.mxu0 0.0
        %5081 = vmatprep.subr.mxu0 0.0
        %5082 = vmatpush1.msra.mxu0 0.0
        %5083 = vmatprep.subr.mxu0 0.0
        %5084 = vmatpush1.msra.mxu0 0.0
        %5085 = vmatprep.subr.mxu0 0.0
        %5086 = vmatpush1.msra.mxu0 0.0
        %5087 = vmatprep.subr.mxu0 0.0
        %5088 = vmatpush1.msra.mxu0 0.0
        %5089 = vmatprep.subr.mxu0 0.0
        %5090 = vmatpush1.msra.mxu0 0.0
        %5091 = vmatprep.subr.mxu0 0.0
        %5092 = vmatpush1.msra.mxu0 0.0
        %5093 = vmatprep.subr.mxu0 0.0
        %5094 = vmatpush1.msra.mxu0 0.0
        %5095 = vmatprep.subr.mxu0 0.0
        %5096 = vmatpush1.msra.mxu0 0.0
        %5097 = vmatprep.subr.mxu0 0.0
        %5098 = vmatpush1.msra.mxu0 0.0
        %5099 = vmatprep.subr.mxu0 0.0
        %5100 = vmatpush1.msra.mxu0 0.0
        %5101 = vmatprep.mubr.f32.mxu0 0.0
        %5102 = vmatmul.mubr.f32.gmra.mrb[0].mxu0 %v5032
        %v5103 = vpop.f32.mrb[0].mxu0
        %v5104 = vadd.f32 0.0, %v5103
        %v5105 = vpop.f32.mrb[0].mxu0
        %v5106 = vadd.f32 0.0, %v5105
        %5107 = vmatprep.mubr.f32.mxu0 0.0
        %5108 = vmatmul.mubr.f32.gmra.mrb[0].mxu0 %v5035
        %v5109 = vpop.f32.mrb[0].mxu0
        %v5110 = vadd.f32 0.0, %v5109
        %v5111 = vpop.f32.mrb[0].mxu0
        %v5112 = vadd.f32 0.0, %v5111
        %5113 = vdwg.mxu0
        %v5114 = vadd.f32 %v4917, %v5104
        %v5115 = vadd.f32 %v4918, %v5106
        %v5116 = vadd.f32 %v4919, %v5110
        %v5117 = vadd.f32 %v4920, %v5112
        %s5118 = scalar_lea.vmem %s5, 688
        %v5119 = vld [vmem:[%s5118] sm:$0xff]
        %v5120 = vld [vmem:[%s5118 + $0x8] sm:$0xff]
        %v5122 = vsel %vm754, %v5119, 0
        %v5125 = vsel %vm754, %v5120, 0
        %5127 = vmatprep.subr.mxu0 %v5027
        %5128 = vmatpush1.msra.mxu0 %v5026
        %5129 = vmatprep.subr.mxu0 0.0
        %5130 = vmatpush1.msra.mxu0 0.0
        %5131 = vmatprep.subr.mxu0 0.0
        %5132 = vmatpush1.msra.mxu0 0.0
        %5133 = vmatprep.subr.mxu0 0.0
        %5134 = vmatpush1.msra.mxu0 0.0
        %5135 = vmatprep.subr.mxu0 0.0
        %5136 = vmatpush1.msra.mxu0 0.0
        %5137 = vmatprep.subr.mxu0 0.0
        %5138 = vmatpush1.msra.mxu0 0.0
        %5139 = vmatprep.subr.mxu0 0.0
        %5140 = vmatpush1.msra.mxu0 0.0
        %5141 = vmatprep.subr.mxu0 0.0
        %5142 = vmatpush1.msra.mxu0 0.0
        %5143 = vmatprep.subr.mxu0 0.0
        %5144 = vmatpush1.msra.mxu0 0.0
        %5145 = vmatprep.subr.mxu0 0.0
        %5146 = vmatpush1.msra.mxu0 0.0
        %5147 = vmatprep.subr.mxu0 0.0
        %5148 = vmatpush1.msra.mxu0 0.0
        %5149 = vmatprep.subr.mxu0 0.0
        %5150 = vmatpush1.msra.mxu0 0.0
        %5151 = vmatprep.subr.mxu0 0.0
        %5152 = vmatpush1.msra.mxu0 0.0
        %5153 = vmatprep.subr.mxu0 0.0
        %5154 = vmatpush1.msra.mxu0 0.0
        %5155 = vmatprep.subr.mxu0 0.0
        %5156 = vmatpush1.msra.mxu0 0.0
        %5157 = vmatprep.subr.mxu0 0.0
        %5158 = vmatpush1.msra.mxu0 0.0
        %5159 = vmatprep.subr.mxu0 0.0
        %5160 = vmatpush1.msra.mxu0 0.0
        %5161 = vmatprep.subr.mxu0 0.0
        %5162 = vmatpush1.msra.mxu0 0.0
        %5163 = vmatprep.subr.mxu0 0.0
        %5164 = vmatpush1.msra.mxu0 0.0
        %5165 = vmatprep.subr.mxu0 0.0
        %5166 = vmatpush1.msra.mxu0 0.0
        %5167 = vmatprep.subr.mxu0 0.0
        %5168 = vmatpush1.msra.mxu0 0.0
        %5169 = vmatprep.subr.mxu0 0.0
        %5170 = vmatpush1.msra.mxu0 0.0
        %5171 = vmatprep.subr.mxu0 0.0
        %5172 = vmatpush1.msra.mxu0 0.0
        %5173 = vmatprep.subr.mxu0 0.0
        %5174 = vmatpush1.msra.mxu0 0.0
        %5175 = vmatprep.subr.mxu0 0.0
        %5176 = vmatpush1.msra.mxu0 0.0
        %5177 = vmatprep.subr.mxu0 0.0
        %5178 = vmatpush1.msra.mxu0 0.0
        %5179 = vmatprep.subr.mxu0 0.0
        %5180 = vmatpush1.msra.mxu0 0.0
        %5181 = vmatprep.subr.mxu0 0.0
        %5182 = vmatpush1.msra.mxu0 0.0
        %5183 = vmatprep.subr.mxu0 0.0
        %5184 = vmatpush1.msra.mxu0 0.0
        %5185 = vmatprep.subr.mxu0 0.0
        %5186 = vmatpush1.msra.mxu0 0.0
        %5187 = vmatprep.subr.mxu0 0.0
        %5188 = vmatpush1.msra.mxu0 0.0
        %5189 = vmatprep.subr.mxu0 0.0
        %5190 = vmatpush1.msra.mxu0 0.0
        %5191 = vmatprep.mubr.f32.mxu0 0.0
        %5192 = vmatmul.mubr.f32.gmra.mrb[0].mxu0 %v5122
        %v5193 = vpop.f32.mrb[0].mxu0
        %v5194 = vadd.f32 0.0, %v5193
        %v5195 = vpop.f32.mrb[0].mxu0
        %v5196 = vadd.f32 0.0, %v5195
        %5197 = vmatprep.mubr.f32.mxu0 0.0
        %5198 = vmatmul.mubr.f32.gmra.mrb[0].mxu0 %v5125
        %v5199 = vpop.f32.mrb[0].mxu0
        %v5200 = vadd.f32 0.0, %v5199
        %v5201 = vpop.f32.mrb[0].mxu0
        %v5202 = vadd.f32 0.0, %v5201
        %5203 = vdwg.mxu0
        %v5204 = vadd.f32 %v5007, %v5194
        %v5205 = vadd.f32 %v5008, %v5196
        %v5206 = vadd.f32 %v5009, %v5200
        %v5207 = vadd.f32 %v5010, %v5202
        %s5208 = scalar_lea.vmem %s1, 38
        %v5209 = vld [vmem:[%s5208] ss:$8 sm:$0x3]
        %v5211 = vlaneseq
        %v5212 = vshrl.u32 %v5211, 7
        %v5213 = vsub.s32 0, %v5212
        %v5214 = vrot.slane %v5209, %v5213
        %v5215 = vlaneseq
        %v5216 = vshrl.u32 %v5215, 7
        %v5217 = vsub.s32 1, %v5216
        %v5218 = vrot.slane %v5209, %v5217
        %v5221 = vmul.f32 %v1519, %v5214
        %v5222 = vmul.f32 %v1521, %v5218
        %v5223 = vmul.f32 %v1520, %v5214
        %v5224 = vmul.f32 %v1522, %v5218
        %s5225 = scalar_lea.vmem %s5, 704
        %v5226 = vld [vmem:[%s5225] sm:$0xff]
        %v5227 = vld [vmem:[%s5225 + $0x8] sm:$0xff]
        %v5229 = vsel %vm754, %v5226, 0
        %v5232 = vsel %vm754, %v5227, 0
        %5234 = vmatprep.subr.mxu0 %v5222
        %5235 = vmatpush1.msra.mxu0 %v5221
        %5236 = vmatprep.subr.mxu0 0.0
        %5237 = vmatpush1.msra.mxu0 0.0
        %5238 = vmatprep.subr.mxu0 0.0
        %5239 = vmatpush1.msra.mxu0 0.0
        %5240 = vmatprep.subr.mxu0 0.0
        %5241 = vmatpush1.msra.mxu0 0.0
        %5242 = vmatprep.subr.mxu0 0.0
        %5243 = vmatpush1.msra.mxu0 0.0
        %5244 = vmatprep.subr.mxu0 0.0
        %5245 = vmatpush1.msra.mxu0 0.0
        %5246 = vmatprep.subr.mxu0 0.0
        %5247 = vmatpush1.msra.mxu0 0.0
        %5248 = vmatprep.subr.mxu0 0.0
        %5249 = vmatpush1.msra.mxu0 0.0
        %5250 = vmatprep.subr.mxu0 0.0
        %5251 = vmatpush1.msra.mxu0 0.0
        %5252 = vmatprep.subr.mxu0 0.0
        %5253 = vmatpush1.msra.mxu0 0.0
        %5254 = vmatprep.subr.mxu0 0.0
        %5255 = vmatpush1.msra.mxu0 0.0
        %5256 = vmatprep.subr.mxu0 0.0
        %5257 = vmatpush1.msra.mxu0 0.0
        %5258 = vmatprep.subr.mxu0 0.0
        %5259 = vmatpush1.msra.mxu0 0.0
        %5260 = vmatprep.subr.mxu0 0.0
        %5261 = vmatpush1.msra.mxu0 0.0
        %5262 = vmatprep.subr.mxu0 0.0
        %5263 = vmatpush1.msra.mxu0 0.0
        %5264 = vmatprep.subr.mxu0 0.0
        %5265 = vmatpush1.msra.mxu0 0.0
        %5266 = vmatprep.subr.mxu0 0.0
        %5267 = vmatpush1.msra.mxu0 0.0
        %5268 = vmatprep.subr.mxu0 0.0
        %5269 = vmatpush1.msra.mxu0 0.0
        %5270 = vmatprep.subr.mxu0 0.0
        %5271 = vmatpush1.msra.mxu0 0.0
        %5272 = vmatprep.subr.mxu0 0.0
        %5273 = vmatpush1.msra.mxu0 0.0
        %5274 = vmatprep.subr.mxu0 0.0
        %5275 = vmatpush1.msra.mxu0 0.0
        %5276 = vmatprep.subr.mxu0 0.0
        %5277 = vmatpush1.msra.mxu0 0.0
        %5278 = vmatprep.subr.mxu0 0.0
        %5279 = vmatpush1.msra.mxu0 0.0
        %5280 = vmatprep.subr.mxu0 0.0
        %5281 = vmatpush1.msra.mxu0 0.0
        %5282 = vmatprep.subr.mxu0 0.0
        %5283 = vmatpush1.msra.mxu0 0.0
        %5284 = vmatprep.subr.mxu0 0.0
        %5285 = vmatpush1.msra.mxu0 0.0
        %5286 = vmatprep.subr.mxu0 0.0
        %5287 = vmatpush1.msra.mxu0 0.0
        %5288 = vmatprep.subr.mxu0 0.0
        %5289 = vmatpush1.msra.mxu0 0.0
        %5290 = vmatprep.subr.mxu0 0.0
        %5291 = vmatpush1.msra.mxu0 0.0
        %5292 = vmatprep.subr.mxu0 0.0
        %5293 = vmatpush1.msra.mxu0 0.0
        %5294 = vmatprep.subr.mxu0 0.0
        %5295 = vmatpush1.msra.mxu0 0.0
        %5296 = vmatprep.subr.mxu0 0.0
        %5297 = vmatpush1.msra.mxu0 0.0
        %5298 = vmatprep.mubr.f32.mxu0 0.0
        %5299 = vmatmul.mubr.f32.gmra.mrb[0].mxu0 %v5229
        %v5300 = vpop.f32.mrb[0].mxu0
        %v5301 = vadd.f32 0.0, %v5300
        %v5302 = vpop.f32.mrb[0].mxu0
        %v5303 = vadd.f32 0.0, %v5302
        %5304 = vmatprep.mubr.f32.mxu0 0.0
        %5305 = vmatmul.mubr.f32.gmra.mrb[0].mxu0 %v5232
        %v5306 = vpop.f32.mrb[0].mxu0
        %v5307 = vadd.f32 0.0, %v5306
        %v5308 = vpop.f32.mrb[0].mxu0
        %v5309 = vadd.f32 0.0, %v5308
        %5310 = vdwg.mxu0
        %v5311 = vadd.f32 %v5114, %v5301
        %v5312 = vadd.f32 %v5115, %v5303
        %v5313 = vadd.f32 %v5116, %v5307
        %v5314 = vadd.f32 %v5117, %v5309
        %s5315 = scalar_lea.vmem %s5, 720
        %v5316 = vld [vmem:[%s5315] sm:$0xff]
        %v5317 = vld [vmem:[%s5315 + $0x8] sm:$0xff]
        %v5319 = vsel %vm754, %v5316, 0
        %v5322 = vsel %vm754, %v5317, 0
        %5324 = vmatprep.subr.mxu0 %v5224
        %5325 = vmatpush1.msra.mxu0 %v5223
        %5326 = vmatprep.subr.mxu0 0.0
        %5327 = vmatpush1.msra.mxu0 0.0
        %5328 = vmatprep.subr.mxu0 0.0
        %5329 = vmatpush1.msra.mxu0 0.0
        %5330 = vmatprep.subr.mxu0 0.0
        %5331 = vmatpush1.msra.mxu0 0.0
        %5332 = vmatprep.subr.mxu0 0.0
        %5333 = vmatpush1.msra.mxu0 0.0
        %5334 = vmatprep.subr.mxu0 0.0
        %5335 = vmatpush1.msra.mxu0 0.0
        %5336 = vmatprep.subr.mxu0 0.0
        %5337 = vmatpush1.msra.mxu0 0.0
        %5338 = vmatprep.subr.mxu0 0.0
        %5339 = vmatpush1.msra.mxu0 0.0
        %5340 = vmatprep.subr.mxu0 0.0
        %5341 = vmatpush1.msra.mxu0 0.0
        %5342 = vmatprep.subr.mxu0 0.0
        %5343 = vmatpush1.msra.mxu0 0.0
        %5344 = vmatprep.subr.mxu0 0.0
        %5345 = vmatpush1.msra.mxu0 0.0
        %5346 = vmatprep.subr.mxu0 0.0
        %5347 = vmatpush1.msra.mxu0 0.0
        %5348 = vmatprep.subr.mxu0 0.0
        %5349 = vmatpush1.msra.mxu0 0.0
        %5350 = vmatprep.subr.mxu0 0.0
        %5351 = vmatpush1.msra.mxu0 0.0
        %5352 = vmatprep.subr.mxu0 0.0
        %5353 = vmatpush1.msra.mxu0 0.0
        %5354 = vmatprep.subr.mxu0 0.0
        %5355 = vmatpush1.msra.mxu0 0.0
        %5356 = vmatprep.subr.mxu0 0.0
        %5357 = vmatpush1.msra.mxu0 0.0
        %5358 = vmatprep.subr.mxu0 0.0
        %5359 = vmatpush1.msra.mxu0 0.0
        %5360 = vmatprep.subr.mxu0 0.0
        %5361 = vmatpush1.msra.mxu0 0.0
        %5362 = vmatprep.subr.mxu0 0.0
        %5363 = vmatpush1.msra.mxu0 0.0
        %5364 = vmatprep.subr.mxu0 0.0
        %5365 = vmatpush1.msra.mxu0 0.0
        %5366 = vmatprep.subr.mxu0 0.0
        %5367 = vmatpush1.msra.mxu0 0.0
        %5368 = vmatprep.subr.mxu0 0.0
        %5369 = vmatpush1.msra.mxu0 0.0
        %5370 = vmatprep.subr.mxu0 0.0
        %5371 = vmatpush1.msra.mxu0 0.0
        %5372 = vmatprep.subr.mxu0 0.0
        %5373 = vmatpush1.msra.mxu0 0.0
        %5374 = vmatprep.subr.mxu0 0.0
        %5375 = vmatpush1.msra.mxu0 0.0
        %5376 = vmatprep.subr.mxu0 0.0
        %5377 = vmatpush1.msra.mxu0 0.0
        %5378 = vmatprep.subr.mxu0 0.0
        %5379 = vmatpush1.msra.mxu0 0.0
        %5380 = vmatprep.subr.mxu0 0.0
        %5381 = vmatpush1.msra.mxu0 0.0
        %5382 = vmatprep.subr.mxu0 0.0
        %5383 = vmatpush1.msra.mxu0 0.0
        %5384 = vmatprep.subr.mxu0 0.0
        %5385 = vmatpush1.msra.mxu0 0.0
        %5386 = vmatprep.subr.mxu0 0.0
        %5387 = vmatpush1.msra.mxu0 0.0
        %5388 = vmatprep.mubr.f32.mxu0 0.0
        %5389 = vmatmul.mubr.f32.gmra.mrb[0].mxu0 %v5319
        %v5390 = vpop.f32.mrb[0].mxu0
        %v5391 = vadd.f32 0.0, %v5390
        %v5392 = vpop.f32.mrb[0].mxu0
        %v5393 = vadd.f32 0.0, %v5392
        %5394 = vmatprep.mubr.f32.mxu0 0.0
        %5395 = vmatmul.mubr.f32.gmra.mrb[0].mxu0 %v5322
        %v5396 = vpop.f32.mrb[0].mxu0
        %v5397 = vadd.f32 0.0, %v5396
        %v5398 = vpop.f32.mrb[0].mxu0
        %v5399 = vadd.f32 0.0, %v5398
        %5400 = vdwg.mxu0
        %v5401 = vadd.f32 %v5204, %v5391
        %v5402 = vadd.f32 %v5205, %v5393
        %v5403 = vadd.f32 %v5206, %v5397
        %v5404 = vadd.f32 %v5207, %v5399
        %s5405 = scalar_lea.vmem %s1, 39
        %v5406 = vld [vmem:[%s5405] ss:$8 sm:$0x3]
        %v5408 = vlaneseq
        %v5409 = vshrl.u32 %v5408, 7
        %v5410 = vsub.s32 0, %v5409
        %v5411 = vrot.slane %v5406, %v5410
        %v5412 = vlaneseq
        %v5413 = vshrl.u32 %v5412, 7
        %v5414 = vsub.s32 1, %v5413
        %v5415 = vrot.slane %v5406, %v5414
        %v5418 = vmul.f32 %v1729, %v5411
        %v5419 = vmul.f32 %v1731, %v5415
        %v5420 = vmul.f32 %v1730, %v5411
        %v5421 = vmul.f32 %v1732, %v5415
        %s5422 = scalar_lea.vmem %s5, 736
        %v5423 = vld [vmem:[%s5422] sm:$0xff]
        %v5424 = vld [vmem:[%s5422 + $0x8] sm:$0xff]
        %v5426 = vsel %vm754, %v5423, 0
        %v5429 = vsel %vm754, %v5424, 0
        %5431 = vmatprep.subr.mxu0 %v5419
        %5432 = vmatpush1.msra.mxu0 %v5418
        %5433 = vmatprep.subr.mxu0 0.0
        %5434 = vmatpush1.msra.mxu0 0.0
        %5435 = vmatprep.subr.mxu0 0.0
        %5436 = vmatpush1.msra.mxu0 0.0
        %5437 = vmatprep.subr.mxu0 0.0
        %5438 = vmatpush1.msra.mxu0 0.0
        %5439 = vmatprep.subr.mxu0 0.0
        %5440 = vmatpush1.msra.mxu0 0.0
        %5441 = vmatprep.subr.mxu0 0.0
        %5442 = vmatpush1.msra.mxu0 0.0
        %5443 = vmatprep.subr.mxu0 0.0
        %5444 = vmatpush1.msra.mxu0 0.0
        %5445 = vmatprep.subr.mxu0 0.0
        %5446 = vmatpush1.msra.mxu0 0.0
        %5447 = vmatprep.subr.mxu0 0.0
        %5448 = vmatpush1.msra.mxu0 0.0
        %5449 = vmatprep.subr.mxu0 0.0
        %5450 = vmatpush1.msra.mxu0 0.0
        %5451 = vmatprep.subr.mxu0 0.0
        %5452 = vmatpush1.msra.mxu0 0.0
        %5453 = vmatprep.subr.mxu0 0.0
        %5454 = vmatpush1.msra.mxu0 0.0
        %5455 = vmatprep.subr.mxu0 0.0
        %5456 = vmatpush1.msra.mxu0 0.0
        %5457 = vmatprep.subr.mxu0 0.0
        %5458 = vmatpush1.msra.mxu0 0.0
        %5459 = vmatprep.subr.mxu0 0.0
        %5460 = vmatpush1.msra.mxu0 0.0
        %5461 = vmatprep.subr.mxu0 0.0
        %5462 = vmatpush1.msra.mxu0 0.0
        %5463 = vmatprep.subr.mxu0 0.0
        %5464 = vmatpush1.msra.mxu0 0.0
        %5465 = vmatprep.subr.mxu0 0.0
        %5466 = vmatpush1.msra.mxu0 0.0
        %5467 = vmatprep.subr.mxu0 0.0
        %5468 = vmatpush1.msra.mxu0 0.0
        %5469 = vmatprep.subr.mxu0 0.0
        %5470 = vmatpush1.msra.mxu0 0.0
        %5471 = vmatprep.subr.mxu0 0.0
        %5472 = vmatpush1.msra.mxu0 0.0
        %5473 = vmatprep.subr.mxu0 0.0
        %5474 = vmatpush1.msra.mxu0 0.0
        %5475 = vmatprep.subr.mxu0 0.0
        %5476 = vmatpush1.msra.mxu0 0.0
        %5477 = vmatprep.subr.mxu0 0.0
        %5478 = vmatpush1.msra.mxu0 0.0
        %5479 = vmatprep.subr.mxu0 0.0
        %5480 = vmatpush1.msra.mxu0 0.0
        %5481 = vmatprep.subr.mxu0 0.0
        %5482 = vmatpush1.msra.mxu0 0.0
        %5483 = vmatprep.subr.mxu0 0.0
        %5484 = vmatpush1.msra.mxu0 0.0
        %5485 = vmatprep.subr.mxu0 0.0
        %5486 = vmatpush1.msra.mxu0 0.0
        %5487 = vmatprep.subr.mxu0 0.0
        %5488 = vmatpush1.msra.mxu0 0.0
        %5489 = vmatprep.subr.mxu0 0.0
        %5490 = vmatpush1.msra.mxu0 0.0
        %5491 = vmatprep.subr.mxu0 0.0
        %5492 = vmatpush1.msra.mxu0 0.0
        %5493 = vmatprep.subr.mxu0 0.0
        %5494 = vmatpush1.msra.mxu0 0.0
        %5495 = vmatprep.mubr.f32.mxu0 0.0
        %5496 = vmatmul.mubr.f32.gmra.mrb[0].mxu0 %v5426
        %v5497 = vpop.f32.mrb[0].mxu0
        %v5498 = vadd.f32 0.0, %v5497
        %v5499 = vpop.f32.mrb[0].mxu0
        %v5500 = vadd.f32 0.0, %v5499
        %5501 = vmatprep.mubr.f32.mxu0 0.0
        %5502 = vmatmul.mubr.f32.gmra.mrb[0].mxu0 %v5429
        %v5503 = vpop.f32.mrb[0].mxu0
        %v5504 = vadd.f32 0.0, %v5503
        %v5505 = vpop.f32.mrb[0].mxu0
        %v5506 = vadd.f32 0.0, %v5505
        %5507 = vdwg.mxu0
        %v5508 = vadd.f32 %v5311, %v5498
        %v5509 = vadd.f32 %v5312, %v5500
        %v5510 = vadd.f32 %v5313, %v5504
        %v5511 = vadd.f32 %v5314, %v5506
        %s5512 = scalar_lea.vmem %s5, 752
        %v5513 = vld [vmem:[%s5512] sm:$0xff]
        %v5514 = vld [vmem:[%s5512 + $0x8] sm:$0xff]
        %v5516 = vsel %vm754, %v5513, 0
        %v5519 = vsel %vm754, %v5514, 0
        %5521 = vmatprep.subr.mxu0 %v5421
        %5522 = vmatpush1.msra.mxu0 %v5420
        %5523 = vmatprep.subr.mxu0 0.0
        %5524 = vmatpush1.msra.mxu0 0.0
        %5525 = vmatprep.subr.mxu0 0.0
        %5526 = vmatpush1.msra.mxu0 0.0
        %5527 = vmatprep.subr.mxu0 0.0
        %5528 = vmatpush1.msra.mxu0 0.0
        %5529 = vmatprep.subr.mxu0 0.0
        %5530 = vmatpush1.msra.mxu0 0.0
        %5531 = vmatprep.subr.mxu0 0.0
        %5532 = vmatpush1.msra.mxu0 0.0
        %5533 = vmatprep.subr.mxu0 0.0
        %5534 = vmatpush1.msra.mxu0 0.0
        %5535 = vmatprep.subr.mxu0 0.0
        %5536 = vmatpush1.msra.mxu0 0.0
        %5537 = vmatprep.subr.mxu0 0.0
        %5538 = vmatpush1.msra.mxu0 0.0
        %5539 = vmatprep.subr.mxu0 0.0
        %5540 = vmatpush1.msra.mxu0 0.0
        %5541 = vmatprep.subr.mxu0 0.0
        %5542 = vmatpush1.msra.mxu0 0.0
        %5543 = vmatprep.subr.mxu0 0.0
        %5544 = vmatpush1.msra.mxu0 0.0
        %5545 = vmatprep.subr.mxu0 0.0
        %5546 = vmatpush1.msra.mxu0 0.0
        %5547 = vmatprep.subr.mxu0 0.0
        %5548 = vmatpush1.msra.mxu0 0.0
        %5549 = vmatprep.subr.mxu0 0.0
        %5550 = vmatpush1.msra.mxu0 0.0
        %5551 = vmatprep.subr.mxu0 0.0
        %5552 = vmatpush1.msra.mxu0 0.0
        %5553 = vmatprep.subr.mxu0 0.0
        %5554 = vmatpush1.msra.mxu0 0.0
        %5555 = vmatprep.subr.mxu0 0.0
        %5556 = vmatpush1.msra.mxu0 0.0
        %5557 = vmatprep.subr.mxu0 0.0
        %5558 = vmatpush1.msra.mxu0 0.0
        %5559 = vmatprep.subr.mxu0 0.0
        %5560 = vmatpush1.msra.mxu0 0.0
        %5561 = vmatprep.subr.mxu0 0.0
        %5562 = vmatpush1.msra.mxu0 0.0
        %5563 = vmatprep.subr.mxu0 0.0
        %5564 = vmatpush1.msra.mxu0 0.0
        %5565 = vmatprep.subr.mxu0 0.0
        %5566 = vmatpush1.msra.mxu0 0.0
        %5567 = vmatprep.subr.mxu0 0.0
        %5568 = vmatpush1.msra.mxu0 0.0
        %5569 = vmatprep.subr.mxu0 0.0
        %5570 = vmatpush1.msra.mxu0 0.0
        %5571 = vmatprep.subr.mxu0 0.0
        %5572 = vmatpush1.msra.mxu0 0.0
        %5573 = vmatprep.subr.mxu0 0.0
        %5574 = vmatpush1.msra.mxu0 0.0
        %5575 = vmatprep.subr.mxu0 0.0
        %5576 = vmatpush1.msra.mxu0 0.0
        %5577 = vmatprep.subr.mxu0 0.0
        %5578 = vmatpush1.msra.mxu0 0.0
        %5579 = vmatprep.subr.mxu0 0.0
        %5580 = vmatpush1.msra.mxu0 0.0
        %5581 = vmatprep.subr.mxu0 0.0
        %5582 = vmatpush1.msra.mxu0 0.0
        %5583 = vmatprep.subr.mxu0 0.0
        %5584 = vmatpush1.msra.mxu0 0.0
        %5585 = vmatprep.mubr.f32.mxu0 0.0
        %5586 = vmatmul.mubr.f32.gmra.mrb[0].mxu0 %v5516
        %v5587 = vpop.f32.mrb[0].mxu0
        %v5588 = vadd.f32 0.0, %v5587
        %v5589 = vpop.f32.mrb[0].mxu0
        %v5590 = vadd.f32 0.0, %v5589
        %5591 = vmatprep.mubr.f32.mxu0 0.0
        %5592 = vmatmul.mubr.f32.gmra.mrb[0].mxu0 %v5519
        %v5593 = vpop.f32.mrb[0].mxu0
        %v5594 = vadd.f32 0.0, %v5593
        %v5595 = vpop.f32.mrb[0].mxu0
        %v5596 = vadd.f32 0.0, %v5595
        %5597 = vdwg.mxu0
        %v5598 = vadd.f32 %v5401, %v5588
        %v5599 = vadd.f32 %v5402, %v5590
        %v5600 = vadd.f32 %v5403, %v5594
        %v5601 = vadd.f32 %v5404, %v5596
        %s5602 = scalar_lea.vmem %s1, 48
        %v5603 = vld [vmem:[%s5602] ss:$8 sm:$0x3]
        %v5605 = vlaneseq
        %v5606 = vshrl.u32 %v5605, 7
        %v5607 = vsub.s32 0, %v5606
        %v5608 = vrot.slane %v5603, %v5607
        %v5609 = vlaneseq
        %v5610 = vshrl.u32 %v5609, 7
        %v5611 = vsub.s32 1, %v5610
        %v5612 = vrot.slane %v5603, %v5611
        %v5615 = vmul.f32 %v1939, %v5608
        %v5616 = vmul.f32 %v1941, %v5612
        %v5617 = vmul.f32 %v1940, %v5608
        %v5618 = vmul.f32 %v1942, %v5612
        %s5619 = scalar_lea.vmem %s5, 768
        %v5620 = vld [vmem:[%s5619] sm:$0xff]
        %v5621 = vld [vmem:[%s5619 + $0x8] sm:$0xff]
        %v5623 = vsel %vm754, %v5620, 0
        %v5626 = vsel %vm754, %v5621, 0
        %5628 = vmatprep.subr.mxu0 %v5616
        %5629 = vmatpush1.msra.mxu0 %v5615
        %5630 = vmatprep.subr.mxu0 0.0
        %5631 = vmatpush1.msra.mxu0 0.0
        %5632 = vmatprep.subr.mxu0 0.0
        %5633 = vmatpush1.msra.mxu0 0.0
        %5634 = vmatprep.subr.mxu0 0.0
        %5635 = vmatpush1.msra.mxu0 0.0
        %5636 = vmatprep.subr.mxu0 0.0
        %5637 = vmatpush1.msra.mxu0 0.0
        %5638 = vmatprep.subr.mxu0 0.0
        %5639 = vmatpush1.msra.mxu0 0.0
        %5640 = vmatprep.subr.mxu0 0.0
        %5641 = vmatpush1.msra.mxu0 0.0
        %5642 = vmatprep.subr.mxu0 0.0
        %5643 = vmatpush1.msra.mxu0 0.0
        %5644 = vmatprep.subr.mxu0 0.0
        %5645 = vmatpush1.msra.mxu0 0.0
        %5646 = vmatprep.subr.mxu0 0.0
        %5647 = vmatpush1.msra.mxu0 0.0
        %5648 = vmatprep.subr.mxu0 0.0
        %5649 = vmatpush1.msra.mxu0 0.0
        %5650 = vmatprep.subr.mxu0 0.0
        %5651 = vmatpush1.msra.mxu0 0.0
        %5652 = vmatprep.subr.mxu0 0.0
        %5653 = vmatpush1.msra.mxu0 0.0
        %5654 = vmatprep.subr.mxu0 0.0
        %5655 = vmatpush1.msra.mxu0 0.0
        %5656 = vmatprep.subr.mxu0 0.0
        %5657 = vmatpush1.msra.mxu0 0.0
        %5658 = vmatprep.subr.mxu0 0.0
        %5659 = vmatpush1.msra.mxu0 0.0
        %5660 = vmatprep.subr.mxu0 0.0
        %5661 = vmatpush1.msra.mxu0 0.0
        %5662 = vmatprep.subr.mxu0 0.0
        %5663 = vmatpush1.msra.mxu0 0.0
        %5664 = vmatprep.subr.mxu0 0.0
        %5665 = vmatpush1.msra.mxu0 0.0
        %5666 = vmatprep.subr.mxu0 0.0
        %5667 = vmatpush1.msra.mxu0 0.0
        %5668 = vmatprep.subr.mxu0 0.0
        %5669 = vmatpush1.msra.mxu0 0.0
        %5670 = vmatprep.subr.mxu0 0.0
        %5671 = vmatpush1.msra.mxu0 0.0
        %5672 = vmatprep.subr.mxu0 0.0
        %5673 = vmatpush1.msra.mxu0 0.0
        %5674 = vmatprep.subr.mxu0 0.0
        %5675 = vmatpush1.msra.mxu0 0.0
        %5676 = vmatprep.subr.mxu0 0.0
        %5677 = vmatpush1.msra.mxu0 0.0
        %5678 = vmatprep.subr.mxu0 0.0
        %5679 = vmatpush1.msra.mxu0 0.0
        %5680 = vmatprep.subr.mxu0 0.0
        %5681 = vmatpush1.msra.mxu0 0.0
        %5682 = vmatprep.subr.mxu0 0.0
        %5683 = vmatpush1.msra.mxu0 0.0
        %5684 = vmatprep.subr.mxu0 0.0
        %5685 = vmatpush1.msra.mxu0 0.0
        %5686 = vmatprep.subr.mxu0 0.0
        %5687 = vmatpush1.msra.mxu0 0.0
        %5688 = vmatprep.subr.mxu0 0.0
        %5689 = vmatpush1.msra.mxu0 0.0
        %5690 = vmatprep.subr.mxu0 0.0
        %5691 = vmatpush1.msra.mxu0 0.0
        %5692 = vmatprep.mubr.f32.mxu0 0.0
        %5693 = vmatmul.mubr.f32.gmra.mrb[0].mxu0 %v5623
        %v5694 = vpop.f32.mrb[0].mxu0
        %v5695 = vadd.f32 0.0, %v5694
        %v5696 = vpop.f32.mrb[0].mxu0
        %v5697 = vadd.f32 0.0, %v5696
        %5698 = vmatprep.mubr.f32.mxu0 0.0
        %5699 = vmatmul.mubr.f32.gmra.mrb[0].mxu0 %v5626
        %v5700 = vpop.f32.mrb[0].mxu0
        %v5701 = vadd.f32 0.0, %v5700
        %v5702 = vpop.f32.mrb[0].mxu0
        %v5703 = vadd.f32 0.0, %v5702
        %5704 = vdwg.mxu0
        %v5705 = vadd.f32 %v5508, %v5695
        %v5706 = vadd.f32 %v5509, %v5697
        %v5707 = vadd.f32 %v5510, %v5701
        %v5708 = vadd.f32 %v5511, %v5703
        %s5709 = scalar_lea.vmem %s5, 784
        %v5710 = vld [vmem:[%s5709] sm:$0xff]
        %v5711 = vld [vmem:[%s5709 + $0x8] sm:$0xff]
        %v5713 = vsel %vm754, %v5710, 0
        %v5716 = vsel %vm754, %v5711, 0
        %5718 = vmatprep.subr.mxu0 %v5618
        %5719 = vmatpush1.msra.mxu0 %v5617
        %5720 = vmatprep.subr.mxu0 0.0
        %5721 = vmatpush1.msra.mxu0 0.0
        %5722 = vmatprep.subr.mxu0 0.0
        %5723 = vmatpush1.msra.mxu0 0.0
        %5724 = vmatprep.subr.mxu0 0.0
        %5725 = vmatpush1.msra.mxu0 0.0
        %5726 = vmatprep.subr.mxu0 0.0
        %5727 = vmatpush1.msra.mxu0 0.0
        %5728 = vmatprep.subr.mxu0 0.0
        %5729 = vmatpush1.msra.mxu0 0.0
        %5730 = vmatprep.subr.mxu0 0.0
        %5731 = vmatpush1.msra.mxu0 0.0
        %5732 = vmatprep.subr.mxu0 0.0
        %5733 = vmatpush1.msra.mxu0 0.0
        %5734 = vmatprep.subr.mxu0 0.0
        %5735 = vmatpush1.msra.mxu0 0.0
        %5736 = vmatprep.subr.mxu0 0.0
        %5737 = vmatpush1.msra.mxu0 0.0
        %5738 = vmatprep.subr.mxu0 0.0
        %5739 = vmatpush1.msra.mxu0 0.0
        %5740 = vmatprep.subr.mxu0 0.0
        %5741 = vmatpush1.msra.mxu0 0.0
        %5742 = vmatprep.subr.mxu0 0.0
        %5743 = vmatpush1.msra.mxu0 0.0
        %5744 = vmatprep.subr.mxu0 0.0
        %5745 = vmatpush1.msra.mxu0 0.0
        %5746 = vmatprep.subr.mxu0 0.0
        %5747 = vmatpush1.msra.mxu0 0.0
        %5748 = vmatprep.subr.mxu0 0.0
        %5749 = vmatpush1.msra.mxu0 0.0
        %5750 = vmatprep.subr.mxu0 0.0
        %5751 = vmatpush1.msra.mxu0 0.0
        %5752 = vmatprep.subr.mxu0 0.0
        %5753 = vmatpush1.msra.mxu0 0.0
        %5754 = vmatprep.subr.mxu0 0.0
        %5755 = vmatpush1.msra.mxu0 0.0
        %5756 = vmatprep.subr.mxu0 0.0
        %5757 = vmatpush1.msra.mxu0 0.0
        %5758 = vmatprep.subr.mxu0 0.0
        %5759 = vmatpush1.msra.mxu0 0.0
        %5760 = vmatprep.subr.mxu0 0.0
        %5761 = vmatpush1.msra.mxu0 0.0
        %5762 = vmatprep.subr.mxu0 0.0
        %5763 = vmatpush1.msra.mxu0 0.0
        %5764 = vmatprep.subr.mxu0 0.0
        %5765 = vmatpush1.msra.mxu0 0.0
        %5766 = vmatprep.subr.mxu0 0.0
        %5767 = vmatpush1.msra.mxu0 0.0
        %5768 = vmatprep.subr.mxu0 0.0
        %5769 = vmatpush1.msra.mxu0 0.0
        %5770 = vmatprep.subr.mxu0 0.0
        %5771 = vmatpush1.msra.mxu0 0.0
        %5772 = vmatprep.subr.mxu0 0.0
        %5773 = vmatpush1.msra.mxu0 0.0
        %5774 = vmatprep.subr.mxu0 0.0
        %5775 = vmatpush1.msra.mxu0 0.0
        %5776 = vmatprep.subr.mxu0 0.0
        %5777 = vmatpush1.msra.mxu0 0.0
        %5778 = vmatprep.subr.mxu0 0.0
        %5779 = vmatpush1.msra.mxu0 0.0
        %5780 = vmatprep.subr.mxu0 0.0
        %5781 = vmatpush1.msra.mxu0 0.0
        %5782 = vmatprep.mubr.f32.mxu0 0.0
        %5783 = vmatmul.mubr.f32.gmra.mrb[0].mxu0 %v5713
        %v5784 = vpop.f32.mrb[0].mxu0
        %v5785 = vadd.f32 0.0, %v5784
        %v5786 = vpop.f32.mrb[0].mxu0
        %v5787 = vadd.f32 0.0, %v5786
        %5788 = vmatprep.mubr.f32.mxu0 0.0
        %5789 = vmatmul.mubr.f32.gmra.mrb[0].mxu0 %v5716
        %v5790 = vpop.f32.mrb[0].mxu0
        %v5791 = vadd.f32 0.0, %v5790
        %v5792 = vpop.f32.mrb[0].mxu0
        %v5793 = vadd.f32 0.0, %v5792
        %5794 = vdwg.mxu0
        %v5795 = vadd.f32 %v5598, %v5785
        %v5796 = vadd.f32 %v5599, %v5787
        %v5797 = vadd.f32 %v5600, %v5791
        %v5798 = vadd.f32 %v5601, %v5793
        %s5799 = scalar_lea.vmem %s1, 49
        %v5800 = vld [vmem:[%s5799] ss:$8 sm:$0x3]
        %v5802 = vlaneseq
        %v5803 = vshrl.u32 %v5802, 7
        %v5804 = vsub.s32 0, %v5803
        %v5805 = vrot.slane %v5800, %v5804
        %v5806 = vlaneseq
        %v5807 = vshrl.u32 %v5806, 7
        %v5808 = vsub.s32 1, %v5807
        %v5809 = vrot.slane %v5800, %v5808
        %v5812 = vmul.f32 %v2149, %v5805
        %v5813 = vmul.f32 %v2151, %v5809
        %v5814 = vmul.f32 %v2150, %v5805
        %v5815 = vmul.f32 %v2152, %v5809
        %s5816 = scalar_lea.vmem %s5, 800
        %v5817 = vld [vmem:[%s5816] sm:$0xff]
        %v5818 = vld [vmem:[%s5816 + $0x8] sm:$0xff]
        %v5820 = vsel %vm754, %v5817, 0
        %v5823 = vsel %vm754, %v5818, 0
        %5825 = vmatprep.subr.mxu0 %v5813
        %5826 = vmatpush1.msra.mxu0 %v5812
        %5827 = vmatprep.subr.mxu0 0.0
        %5828 = vmatpush1.msra.mxu0 0.0
        %5829 = vmatprep.subr.mxu0 0.0
        %5830 = vmatpush1.msra.mxu0 0.0
        %5831 = vmatprep.subr.mxu0 0.0
        %5832 = vmatpush1.msra.mxu0 0.0
        %5833 = vmatprep.subr.mxu0 0.0
        %5834 = vmatpush1.msra.mxu0 0.0
        %5835 = vmatprep.subr.mxu0 0.0
        %5836 = vmatpush1.msra.mxu0 0.0
        %5837 = vmatprep.subr.mxu0 0.0
        %5838 = vmatpush1.msra.mxu0 0.0
        %5839 = vmatprep.subr.mxu0 0.0
        %5840 = vmatpush1.msra.mxu0 0.0
        %5841 = vmatprep.subr.mxu0 0.0
        %5842 = vmatpush1.msra.mxu0 0.0
        %5843 = vmatprep.subr.mxu0 0.0
        %5844 = vmatpush1.msra.mxu0 0.0
        %5845 = vmatprep.subr.mxu0 0.0
        %5846 = vmatpush1.msra.mxu0 0.0
        %5847 = vmatprep.subr.mxu0 0.0
        %5848 = vmatpush1.msra.mxu0 0.0
        %5849 = vmatprep.subr.mxu0 0.0
        %5850 = vmatpush1.msra.mxu0 0.0
        %5851 = vmatprep.subr.mxu0 0.0
        %5852 = vmatpush1.msra.mxu0 0.0
        %5853 = vmatprep.subr.mxu0 0.0
        %5854 = vmatpush1.msra.mxu0 0.0
        %5855 = vmatprep.subr.mxu0 0.0
        %5856 = vmatpush1.msra.mxu0 0.0
        %5857 = vmatprep.subr.mxu0 0.0
        %5858 = vmatpush1.msra.mxu0 0.0
        %5859 = vmatprep.subr.mxu0 0.0
        %5860 = vmatpush1.msra.mxu0 0.0
        %5861 = vmatprep.subr.mxu0 0.0
        %5862 = vmatpush1.msra.mxu0 0.0
        %5863 = vmatprep.subr.mxu0 0.0
        %5864 = vmatpush1.msra.mxu0 0.0
        %5865 = vmatprep.subr.mxu0 0.0
        %5866 = vmatpush1.msra.mxu0 0.0
        %5867 = vmatprep.subr.mxu0 0.0
        %5868 = vmatpush1.msra.mxu0 0.0
        %5869 = vmatprep.subr.mxu0 0.0
        %5870 = vmatpush1.msra.mxu0 0.0
        %5871 = vmatprep.subr.mxu0 0.0
        %5872 = vmatpush1.msra.mxu0 0.0
        %5873 = vmatprep.subr.mxu0 0.0
        %5874 = vmatpush1.msra.mxu0 0.0
        %5875 = vmatprep.subr.mxu0 0.0
        %5876 = vmatpush1.msra.mxu0 0.0
        %5877 = vmatprep.subr.mxu0 0.0
        %5878 = vmatpush1.msra.mxu0 0.0
        %5879 = vmatprep.subr.mxu0 0.0
        %5880 = vmatpush1.msra.mxu0 0.0
        %5881 = vmatprep.subr.mxu0 0.0
        %5882 = vmatpush1.msra.mxu0 0.0
        %5883 = vmatprep.subr.mxu0 0.0
        %5884 = vmatpush1.msra.mxu0 0.0
        %5885 = vmatprep.subr.mxu0 0.0
        %5886 = vmatpush1.msra.mxu0 0.0
        %5887 = vmatprep.subr.mxu0 0.0
        %5888 = vmatpush1.msra.mxu0 0.0
        %5889 = vmatprep.mubr.f32.mxu0 0.0
        %5890 = vmatmul.mubr.f32.gmra.mrb[0].mxu0 %v5820
        %v5891 = vpop.f32.mrb[0].mxu0
        %v5892 = vadd.f32 0.0, %v5891
        %v5893 = vpop.f32.mrb[0].mxu0
        %v5894 = vadd.f32 0.0, %v5893
        %5895 = vmatprep.mubr.f32.mxu0 0.0
        %5896 = vmatmul.mubr.f32.gmra.mrb[0].mxu0 %v5823
        %v5897 = vpop.f32.mrb[0].mxu0
        %v5898 = vadd.f32 0.0, %v5897
        %v5899 = vpop.f32.mrb[0].mxu0
        %v5900 = vadd.f32 0.0, %v5899
        %5901 = vdwg.mxu0
        %v5902 = vadd.f32 %v5705, %v5892
        %v5903 = vadd.f32 %v5706, %v5894
        %v5904 = vadd.f32 %v5707, %v5898
        %v5905 = vadd.f32 %v5708, %v5900
        %s5906 = scalar_lea.vmem %s5, 816
        %v5907 = vld [vmem:[%s5906] sm:$0xff]
        %v5908 = vld [vmem:[%s5906 + $0x8] sm:$0xff]
        %v5910 = vsel %vm754, %v5907, 0
        %v5913 = vsel %vm754, %v5908, 0
        %5915 = vmatprep.subr.mxu0 %v5815
        %5916 = vmatpush1.msra.mxu0 %v5814
        %5917 = vmatprep.subr.mxu0 0.0
        %5918 = vmatpush1.msra.mxu0 0.0
        %5919 = vmatprep.subr.mxu0 0.0
        %5920 = vmatpush1.msra.mxu0 0.0
        %5921 = vmatprep.subr.mxu0 0.0
        %5922 = vmatpush1.msra.mxu0 0.0
        %5923 = vmatprep.subr.mxu0 0.0
        %5924 = vmatpush1.msra.mxu0 0.0
        %5925 = vmatprep.subr.mxu0 0.0
        %5926 = vmatpush1.msra.mxu0 0.0
        %5927 = vmatprep.subr.mxu0 0.0
        %5928 = vmatpush1.msra.mxu0 0.0
        %5929 = vmatprep.subr.mxu0 0.0
        %5930 = vmatpush1.msra.mxu0 0.0
        %5931 = vmatprep.subr.mxu0 0.0
        %5932 = vmatpush1.msra.mxu0 0.0
        %5933 = vmatprep.subr.mxu0 0.0
        %5934 = vmatpush1.msra.mxu0 0.0
        %5935 = vmatprep.subr.mxu0 0.0
        %5936 = vmatpush1.msra.mxu0 0.0
        %5937 = vmatprep.subr.mxu0 0.0
        %5938 = vmatpush1.msra.mxu0 0.0
        %5939 = vmatprep.subr.mxu0 0.0
        %5940 = vmatpush1.msra.mxu0 0.0
        %5941 = vmatprep.subr.mxu0 0.0
        %5942 = vmatpush1.msra.mxu0 0.0
        %5943 = vmatprep.subr.mxu0 0.0
        %5944 = vmatpush1.msra.mxu0 0.0
        %5945 = vmatprep.subr.mxu0 0.0
        %5946 = vmatpush1.msra.mxu0 0.0
        %5947 = vmatprep.subr.mxu0 0.0
        %5948 = vmatpush1.msra.mxu0 0.0
        %5949 = vmatprep.subr.mxu0 0.0
        %5950 = vmatpush1.msra.mxu0 0.0
        %5951 = vmatprep.subr.mxu0 0.0
        %5952 = vmatpush1.msra.mxu0 0.0
        %5953 = vmatprep.subr.mxu0 0.0
        %5954 = vmatpush1.msra.mxu0 0.0
        %5955 = vmatprep.subr.mxu0 0.0
        %5956 = vmatpush1.msra.mxu0 0.0
        %5957 = vmatprep.subr.mxu0 0.0
        %5958 = vmatpush1.msra.mxu0 0.0
        %5959 = vmatprep.subr.mxu0 0.0
        %5960 = vmatpush1.msra.mxu0 0.0
        %5961 = vmatprep.subr.mxu0 0.0
        %5962 = vmatpush1.msra.mxu0 0.0
        %5963 = vmatprep.subr.mxu0 0.0
        %5964 = vmatpush1.msra.mxu0 0.0
        %5965 = vmatprep.subr.mxu0 0.0
        %5966 = vmatpush1.msra.mxu0 0.0
        %5967 = vmatprep.subr.mxu0 0.0
        %5968 = vmatpush1.msra.mxu0 0.0
        %5969 = vmatprep.subr.mxu0 0.0
        %5970 = vmatpush1.msra.mxu0 0.0
        %5971 = vmatprep.subr.mxu0 0.0
        %5972 = vmatpush1.msra.mxu0 0.0
        %5973 = vmatprep.subr.mxu0 0.0
        %5974 = vmatpush1.msra.mxu0 0.0
        %5975 = vmatprep.subr.mxu0 0.0
        %5976 = vmatpush1.msra.mxu0 0.0
        %5977 = vmatprep.subr.mxu0 0.0
        %5978 = vmatpush1.msra.mxu0 0.0
        %5979 = vmatprep.mubr.f32.mxu0 0.0
        %5980 = vmatmul.mubr.f32.gmra.mrb[0].mxu0 %v5910
        %v5981 = vpop.f32.mrb[0].mxu0
        %v5982 = vadd.f32 0.0, %v5981
        %v5983 = vpop.f32.mrb[0].mxu0
        %v5984 = vadd.f32 0.0, %v5983
        %5985 = vmatprep.mubr.f32.mxu0 0.0
        %5986 = vmatmul.mubr.f32.gmra.mrb[0].mxu0 %v5913
        %v5987 = vpop.f32.mrb[0].mxu0
        %v5988 = vadd.f32 0.0, %v5987
        %v5989 = vpop.f32.mrb[0].mxu0
        %v5990 = vadd.f32 0.0, %v5989
        %5991 = vdwg.mxu0
        %v5992 = vadd.f32 %v5795, %v5982
        %v5993 = vadd.f32 %v5796, %v5984
        %v5994 = vadd.f32 %v5797, %v5988
        %v5995 = vadd.f32 %v5798, %v5990
        %s5996 = scalar_lea.vmem %s1, 50
        %v5997 = vld [vmem:[%s5996] ss:$8 sm:$0x3]
        %v5999 = vlaneseq
        %v6000 = vshrl.u32 %v5999, 7
        %v6001 = vsub.s32 0, %v6000
        %v6002 = vrot.slane %v5997, %v6001
        %v6003 = vlaneseq
        %v6004 = vshrl.u32 %v6003, 7
        %v6005 = vsub.s32 1, %v6004
        %v6006 = vrot.slane %v5997, %v6005
        %v6009 = vmul.f32 %v2359, %v6002
        %v6010 = vmul.f32 %v2361, %v6006
        %v6011 = vmul.f32 %v2360, %v6002
        %v6012 = vmul.f32 %v2362, %v6006
        %s6013 = scalar_lea.vmem %s5, 832
        %v6014 = vld [vmem:[%s6013] sm:$0xff]
        %v6015 = vld [vmem:[%s6013 + $0x8] sm:$0xff]
        %v6017 = vsel %vm754, %v6014, 0
        %v6020 = vsel %vm754, %v6015, 0
        %6022 = vmatprep.subr.mxu0 %v6010
        %6023 = vmatpush1.msra.mxu0 %v6009
        %6024 = vmatprep.subr.mxu0 0.0
        %6025 = vmatpush1.msra.mxu0 0.0
        %6026 = vmatprep.subr.mxu0 0.0
        %6027 = vmatpush1.msra.mxu0 0.0
        %6028 = vmatprep.subr.mxu0 0.0
        %6029 = vmatpush1.msra.mxu0 0.0
        %6030 = vmatprep.subr.mxu0 0.0
        %6031 = vmatpush1.msra.mxu0 0.0
        %6032 = vmatprep.subr.mxu0 0.0
        %6033 = vmatpush1.msra.mxu0 0.0
        %6034 = vmatprep.subr.mxu0 0.0
        %6035 = vmatpush1.msra.mxu0 0.0
        %6036 = vmatprep.subr.mxu0 0.0
        %6037 = vmatpush1.msra.mxu0 0.0
        %6038 = vmatprep.subr.mxu0 0.0
        %6039 = vmatpush1.msra.mxu0 0.0
        %6040 = vmatprep.subr.mxu0 0.0
        %6041 = vmatpush1.msra.mxu0 0.0
        %6042 = vmatprep.subr.mxu0 0.0
        %6043 = vmatpush1.msra.mxu0 0.0
        %6044 = vmatprep.subr.mxu0 0.0
        %6045 = vmatpush1.msra.mxu0 0.0
        %6046 = vmatprep.subr.mxu0 0.0
        %6047 = vmatpush1.msra.mxu0 0.0
        %6048 = vmatprep.subr.mxu0 0.0
        %6049 = vmatpush1.msra.mxu0 0.0
        %6050 = vmatprep.subr.mxu0 0.0
        %6051 = vmatpush1.msra.mxu0 0.0
        %6052 = vmatprep.subr.mxu0 0.0
        %6053 = vmatpush1.msra.mxu0 0.0
        %6054 = vmatprep.subr.mxu0 0.0
        %6055 = vmatpush1.msra.mxu0 0.0
        %6056 = vmatprep.subr.mxu0 0.0
        %6057 = vmatpush1.msra.mxu0 0.0
        %6058 = vmatprep.subr.mxu0 0.0
        %6059 = vmatpush1.msra.mxu0 0.0
        %6060 = vmatprep.subr.mxu0 0.0
        %6061 = vmatpush1.msra.mxu0 0.0
        %6062 = vmatprep.subr.mxu0 0.0
        %6063 = vmatpush1.msra.mxu0 0.0
        %6064 = vmatprep.subr.mxu0 0.0
        %6065 = vmatpush1.msra.mxu0 0.0
        %6066 = vmatprep.subr.mxu0 0.0
        %6067 = vmatpush1.msra.mxu0 0.0
        %6068 = vmatprep.subr.mxu0 0.0
        %6069 = vmatpush1.msra.mxu0 0.0
        %6070 = vmatprep.subr.mxu0 0.0
        %6071 = vmatpush1.msra.mxu0 0.0
        %6072 = vmatprep.subr.mxu0 0.0
        %6073 = vmatpush1.msra.mxu0 0.0
        %6074 = vmatprep.subr.mxu0 0.0
        %6075 = vmatpush1.msra.mxu0 0.0
        %6076 = vmatprep.subr.mxu0 0.0
        %6077 = vmatpush1.msra.mxu0 0.0
        %6078 = vmatprep.subr.mxu0 0.0
        %6079 = vmatpush1.msra.mxu0 0.0
        %6080 = vmatprep.subr.mxu0 0.0
        %6081 = vmatpush1.msra.mxu0 0.0
        %6082 = vmatprep.subr.mxu0 0.0
        %6083 = vmatpush1.msra.mxu0 0.0
        %6084 = vmatprep.subr.mxu0 0.0
        %6085 = vmatpush1.msra.mxu0 0.0
        %6086 = vmatprep.mubr.f32.mxu0 0.0
        %6087 = vmatmul.mubr.f32.gmra.mrb[0].mxu0 %v6017
        %v6088 = vpop.f32.mrb[0].mxu0
        %v6089 = vadd.f32 0.0, %v6088
        %v6090 = vpop.f32.mrb[0].mxu0
        %v6091 = vadd.f32 0.0, %v6090
        %6092 = vmatprep.mubr.f32.mxu0 0.0
        %6093 = vmatmul.mubr.f32.gmra.mrb[0].mxu0 %v6020
        %v6094 = vpop.f32.mrb[0].mxu0
        %v6095 = vadd.f32 0.0, %v6094
        %v6096 = vpop.f32.mrb[0].mxu0
        %v6097 = vadd.f32 0.0, %v6096
        %6098 = vdwg.mxu0
        %v6099 = vadd.f32 %v5902, %v6089
        %v6100 = vadd.f32 %v5903, %v6091
        %v6101 = vadd.f32 %v5904, %v6095
        %v6102 = vadd.f32 %v5905, %v6097
        %s6103 = scalar_lea.vmem %s5, 848
        %v6104 = vld [vmem:[%s6103] sm:$0xff]
        %v6105 = vld [vmem:[%s6103 + $0x8] sm:$0xff]
        %v6107 = vsel %vm754, %v6104, 0
        %v6110 = vsel %vm754, %v6105, 0
        %6112 = vmatprep.subr.mxu0 %v6012
        %6113 = vmatpush1.msra.mxu0 %v6011
        %6114 = vmatprep.subr.mxu0 0.0
        %6115 = vmatpush1.msra.mxu0 0.0
        %6116 = vmatprep.subr.mxu0 0.0
        %6117 = vmatpush1.msra.mxu0 0.0
        %6118 = vmatprep.subr.mxu0 0.0
        %6119 = vmatpush1.msra.mxu0 0.0
        %6120 = vmatprep.subr.mxu0 0.0
        %6121 = vmatpush1.msra.mxu0 0.0
        %6122 = vmatprep.subr.mxu0 0.0
        %6123 = vmatpush1.msra.mxu0 0.0
        %6124 = vmatprep.subr.mxu0 0.0
        %6125 = vmatpush1.msra.mxu0 0.0
        %6126 = vmatprep.subr.mxu0 0.0
        %6127 = vmatpush1.msra.mxu0 0.0
        %6128 = vmatprep.subr.mxu0 0.0
        %6129 = vmatpush1.msra.mxu0 0.0
        %6130 = vmatprep.subr.mxu0 0.0
        %6131 = vmatpush1.msra.mxu0 0.0
        %6132 = vmatprep.subr.mxu0 0.0
        %6133 = vmatpush1.msra.mxu0 0.0
        %6134 = vmatprep.subr.mxu0 0.0
        %6135 = vmatpush1.msra.mxu0 0.0
        %6136 = vmatprep.subr.mxu0 0.0
        %6137 = vmatpush1.msra.mxu0 0.0
        %6138 = vmatprep.subr.mxu0 0.0
        %6139 = vmatpush1.msra.mxu0 0.0
        %6140 = vmatprep.subr.mxu0 0.0
        %6141 = vmatpush1.msra.mxu0 0.0
        %6142 = vmatprep.subr.mxu0 0.0
        %6143 = vmatpush1.msra.mxu0 0.0
        %6144 = vmatprep.subr.mxu0 0.0
        %6145 = vmatpush1.msra.mxu0 0.0
        %6146 = vmatprep.subr.mxu0 0.0
        %6147 = vmatpush1.msra.mxu0 0.0
        %6148 = vmatprep.subr.mxu0 0.0
        %6149 = vmatpush1.msra.mxu0 0.0
        %6150 = vmatprep.subr.mxu0 0.0
        %6151 = vmatpush1.msra.mxu0 0.0
        %6152 = vmatprep.subr.mxu0 0.0
        %6153 = vmatpush1.msra.mxu0 0.0
        %6154 = vmatprep.subr.mxu0 0.0
        %6155 = vmatpush1.msra.mxu0 0.0
        %6156 = vmatprep.subr.mxu0 0.0
        %6157 = vmatpush1.msra.mxu0 0.0
        %6158 = vmatprep.subr.mxu0 0.0
        %6159 = vmatpush1.msra.mxu0 0.0
        %6160 = vmatprep.subr.mxu0 0.0
        %6161 = vmatpush1.msra.mxu0 0.0
        %6162 = vmatprep.subr.mxu0 0.0
        %6163 = vmatpush1.msra.mxu0 0.0
        %6164 = vmatprep.subr.mxu0 0.0
        %6165 = vmatpush1.msra.mxu0 0.0
        %6166 = vmatprep.subr.mxu0 0.0
        %6167 = vmatpush1.msra.mxu0 0.0
        %6168 = vmatprep.subr.mxu0 0.0
        %6169 = vmatpush1.msra.mxu0 0.0
        %6170 = vmatprep.subr.mxu0 0.0
        %6171 = vmatpush1.msra.mxu0 0.0
        %6172 = vmatprep.subr.mxu0 0.0
        %6173 = vmatpush1.msra.mxu0 0.0
        %6174 = vmatprep.subr.mxu0 0.0
        %6175 = vmatpush1.msra.mxu0 0.0
        %6176 = vmatprep.mubr.f32.mxu0 0.0
        %6177 = vmatmul.mubr.f32.gmra.mrb[0].mxu0 %v6107
        %v6178 = vpop.f32.mrb[0].mxu0
        %v6179 = vadd.f32 0.0, %v6178
        %v6180 = vpop.f32.mrb[0].mxu0
        %v6181 = vadd.f32 0.0, %v6180
        %6182 = vmatprep.mubr.f32.mxu0 0.0
        %6183 = vmatmul.mubr.f32.gmra.mrb[0].mxu0 %v6110
        %v6184 = vpop.f32.mrb[0].mxu0
        %v6185 = vadd.f32 0.0, %v6184
        %v6186 = vpop.f32.mrb[0].mxu0
        %v6187 = vadd.f32 0.0, %v6186
        %6188 = vdwg.mxu0
        %v6189 = vadd.f32 %v5992, %v6179
        %v6190 = vadd.f32 %v5993, %v6181
        %v6191 = vadd.f32 %v5994, %v6185
        %v6192 = vadd.f32 %v5995, %v6187
        %v6193 = vld [vmem:[%s6] sm:$0xff]
        %v6194 = vld [vmem:[%s6 + $0x8] sm:$0xff]
        %v6195 = vld [vmem:[%s6 + $0x10] sm:$0xff]
        %v6196 = vld [vmem:[%s6 + $0x18] sm:$0xff]
        %6198 = vset.pattern.permute.xlu0 0
        %6199 = vperm.xlu0 %6198, %v6193
        %v6200 = vpop.permute.xlu0 %6199
        %6203 = vset.pattern.permute.xlu0 0
        %6204 = vperm.xlu0 %6203, %v6194
        %v6205 = vpop.permute.xlu0 %6204
        %6208 = vset.pattern.permute.xlu0 0
        %6209 = vperm.xlu0 %6208, %v6195
        %v6210 = vpop.permute.xlu0 %6209
        %6213 = vset.pattern.permute.xlu0 0
        %6214 = vperm.xlu0 %6213, %v6196
        %v6215 = vpop.permute.xlu0 %6214
        %v6217 = vmul.f32 %v6099, %v6200
        %v6218 = vmul.f32 %v6100, %v6200
        %v6219 = vmul.f32 %v6101, %v6205
        %v6220 = vmul.f32 %v6102, %v6205
        %v6221 = vmul.f32 %v6189, %v6210
        %v6222 = vmul.f32 %v6190, %v6210
        %v6223 = vmul.f32 %v6191, %v6215
        %v6224 = vmul.f32 %v6192, %v6215
        %v6225 = vld [vmem:[%s7] sm:$0xff]
        %v6226 = vld [vmem:[%s7 + $0x8] sm:$0xff]
        %v6227 = vld [vmem:[%s7 + $0x10] sm:$0xff]
        %v6228 = vld [vmem:[%s7 + $0x18] sm:$0xff]
        %6230 = vset.pattern.permute.xlu0 0
        %6231 = vperm.xlu0 %6230, %v6225
        %v6232 = vpop.permute.xlu0 %6231
        %6235 = vset.pattern.permute.xlu0 0
        %6236 = vperm.xlu0 %6235, %v6226
        %v6237 = vpop.permute.xlu0 %6236
        %6240 = vset.pattern.permute.xlu0 0
        %6241 = vperm.xlu0 %6240, %v6227
        %v6242 = vpop.permute.xlu0 %6241
        %6245 = vset.pattern.permute.xlu0 0
        %6246 = vperm.xlu0 %6245, %v6228
        %v6247 = vpop.permute.xlu0 %6246
        %v6249 = vadd.f32 %v6217, %v6232
        %v6250 = vadd.f32 %v6218, %v6232
        %v6251 = vadd.f32 %v6219, %v6237
        %v6252 = vadd.f32 %v6220, %v6237
        %v6253 = vadd.f32 %v6221, %v6242
        %v6254 = vadd.f32 %v6222, %v6242
        %v6255 = vadd.f32 %v6223, %v6247
        %v6256 = vadd.f32 %v6224, %v6247
        %v6257 = vmax.f32 %v6249, 0.0
        %v6258 = vmax.f32 %v6250, 0.0
        %v6259 = vmax.f32 %v6251, 0.0
        %v6260 = vmax.f32 %v6252, 0.0
        %v6261 = vmax.f32 %v6253, 0.0
        %v6262 = vmax.f32 %v6254, 0.0
        %v6263 = vmax.f32 %v6255, 0.0
        %v6264 = vmax.f32 %v6256, 0.0
        %v6265 = vadd.f32 %v6257, %v6261
        %v6266 = vadd.f32 %v6258, %v6262
        %v6267 = vadd.f32 %v6259, %v6263
        %v6268 = vadd.f32 %v6260, %v6264
        %v6269 = vadd.f32 %v6265, %v6266
        %6270 = vadd.xlane.f32.xlu0 %v6269
        %v6271 = vpop.xlane.xlu0 %6270
        %v6272 = vadd.f32 %v6267, %v6268
        %6273 = vadd.xlane.f32.xlu0 %v6272
        %v6274 = vpop.xlane.xlu0 %6273
        %v6275 = vmul.f32 %v6271, 0.00390625
        %v6276 = vmul.f32 %v6274, 0.00390625
        %v6277 = vld [vmem:[%s8] sm:$0xff]
        %v6278 = vld [vmem:[%s8 + $0x8] sm:$0xff]
        %v6279 = vld [vmem:[%s8 + $0x10] sm:$0xff]
        %v6280 = vld [vmem:[%s8 + $0x18] sm:$0xff]
        %v6281 = vld [vmem:[%s9] sm:$0xff]
        %v6282 = vld [vmem:[%s9 + $0x8] sm:$0xff]
        %v6283 = vld [vmem:[%s9 + $0x10] sm:$0xff]
        %v6284 = vld [vmem:[%s9 + $0x18] sm:$0xff]
        %vm6285 = vcmask 130048
        %v6287 = vsel %vm6285, %v6277, 0
        %v6290 = vsel %vm6285, %v6278, 0
        %v6293 = vsel %vm6285, %v6279, 0
        %v6296 = vsel %vm6285, %v6280, 0
        %6298 = vmatprep.subr.mxu0 0.0
        %6299 = vmatpush1.msra.mxu0 %v6275
        %6300 = vmatprep.subr.mxu0 0.0
        %6301 = vmatpush1.msra.mxu0 %v6276
        %6302 = vmatprep.subr.mxu0 0.0
        %6303 = vmatpush1.msra.mxu0 0.0
        %6304 = vmatprep.subr.mxu0 0.0
        %6305 = vmatpush1.msra.mxu0 0.0
        %6306 = vmatprep.subr.mxu0 0.0
        %6307 = vmatpush1.msra.mxu0 0.0
        %6308 = vmatprep.subr.mxu0 0.0
        %6309 = vmatpush1.msra.mxu0 0.0
        %6310 = vmatprep.subr.mxu0 0.0
        %6311 = vmatpush1.msra.mxu0 0.0
        %6312 = vmatprep.subr.mxu0 0.0
        %6313 = vmatpush1.msra.mxu0 0.0
        %6314 = vmatprep.subr.mxu0 0.0
        %6315 = vmatpush1.msra.mxu0 0.0
        %6316 = vmatprep.subr.mxu0 0.0
        %6317 = vmatpush1.msra.mxu0 0.0
        %6318 = vmatprep.subr.mxu0 0.0
        %6319 = vmatpush1.msra.mxu0 0.0
        %6320 = vmatprep.subr.mxu0 0.0
        %6321 = vmatpush1.msra.mxu0 0.0
        %6322 = vmatprep.subr.mxu0 0.0
        %6323 = vmatpush1.msra.mxu0 0.0
        %6324 = vmatprep.subr.mxu0 0.0
        %6325 = vmatpush1.msra.mxu0 0.0
        %6326 = vmatprep.subr.mxu0 0.0
        %6327 = vmatpush1.msra.mxu0 0.0
        %6328 = vmatprep.subr.mxu0 0.0
        %6329 = vmatpush1.msra.mxu0 0.0
        %6330 = vmatprep.subr.mxu0 0.0
        %6331 = vmatpush1.msra.mxu0 0.0
        %6332 = vmatprep.subr.mxu0 0.0
        %6333 = vmatpush1.msra.mxu0 0.0
        %6334 = vmatprep.subr.mxu0 0.0
        %6335 = vmatpush1.msra.mxu0 0.0
        %6336 = vmatprep.subr.mxu0 0.0
        %6337 = vmatpush1.msra.mxu0 0.0
        %6338 = vmatprep.subr.mxu0 0.0
        %6339 = vmatpush1.msra.mxu0 0.0
        %6340 = vmatprep.subr.mxu0 0.0
        %6341 = vmatpush1.msra.mxu0 0.0
        %6342 = vmatprep.subr.mxu0 0.0
        %6343 = vmatpush1.msra.mxu0 0.0
        %6344 = vmatprep.subr.mxu0 0.0
        %6345 = vmatpush1.msra.mxu0 0.0
        %6346 = vmatprep.subr.mxu0 0.0
        %6347 = vmatpush1.msra.mxu0 0.0
        %6348 = vmatprep.subr.mxu0 0.0
        %6349 = vmatpush1.msra.mxu0 0.0
        %6350 = vmatprep.subr.mxu0 0.0
        %6351 = vmatpush1.msra.mxu0 0.0
        %6352 = vmatprep.subr.mxu0 0.0
        %6353 = vmatpush1.msra.mxu0 0.0
        %6354 = vmatprep.subr.mxu0 0.0
        %6355 = vmatpush1.msra.mxu0 0.0
        %6356 = vmatprep.subr.mxu0 0.0
        %6357 = vmatpush1.msra.mxu0 0.0
        %6358 = vmatprep.subr.mxu0 0.0
        %6359 = vmatpush1.msra.mxu0 0.0
        %6360 = vmatprep.subr.mxu0 0.0
        %6361 = vmatpush1.msra.mxu0 0.0
        %6362 = vmatprep.mubr.f32.mxu0 0.0
        %6363 = vmatmul.mubr.f32.gmra.mrb[0].mxu0 %v6287
        %v6364 = vpop.f32.mrb[0].mxu0
        %v6365 = vadd.f32 %v6281, %v6364
        %v6366 = vpop.f32.mrb[0].mxu0
        %6367 = vmatprep.mubr.f32.mxu0 0.0
        %6368 = vmatmul.mubr.f32.gmra.mrb[0].mxu0 %v6290
        %v6369 = vpop.f32.mrb[0].mxu0
        %v6370 = vadd.f32 %v6282, %v6369
        %v6371 = vpop.f32.mrb[0].mxu0
        %6372 = vmatprep.mubr.f32.mxu0 0.0
        %6373 = vmatmul.mubr.f32.gmra.mrb[0].mxu0 %v6293
        %v6374 = vpop.f32.mrb[0].mxu0
        %v6375 = vadd.f32 %v6283, %v6374
        %v6376 = vpop.f32.mrb[0].mxu0
        %6377 = vmatprep.mubr.f32.mxu0 0.0
        %6378 = vmatmul.mubr.f32.gmra.mrb[0].mxu0 %v6296
        %v6379 = vpop.f32.mrb[0].mxu0
        %v6380 = vadd.f32 %v6284, %v6379
        %v6381 = vpop.f32.mrb[0].mxu0
        %6382 = vdwg.mxu0
        %v6383 = vld [vmem:[%s10] sm:$0xff]
        %v6384 = vld [vmem:[%s10 + $0x8] sm:$0xff]
        %v6385 = vld [vmem:[%s10 + $0x10] sm:$0xff]
        %v6386 = vld [vmem:[%s10 + $0x18] sm:$0xff]
        %v6387 = vmul.f32 %v6365, %v6383
        %v6388 = vmul.f32 %v6370, %v6384
        %v6389 = vmul.f32 %v6375, %v6385
        %v6390 = vmul.f32 %v6380, %v6386
        %v6391 = vld [vmem:[%s11] sm:$0xff]
        %v6392 = vld [vmem:[%s11 + $0x8] sm:$0xff]
        %v6393 = vld [vmem:[%s11 + $0x10] sm:$0xff]
        %v6394 = vld [vmem:[%s11 + $0x18] sm:$0xff]
        %v6395 = vadd.f32 %v6387, %v6391
        %v6396 = vadd.f32 %v6388, %v6392
        %v6397 = vadd.f32 %v6389, %v6393
        %v6398 = vadd.f32 %v6390, %v6394
        %v6399 = vmax.f32 %v6395, 0.0
        %v6400 = vmax.f32 %v6396, 0.0
        %v6401 = vmax.f32 %v6397, 0.0
        %v6402 = vmax.f32 %v6398, 0.0
        %v6403 = vld [vmem:[%s12] sm:$0xff]
        %v6404 = vld [vmem:[%s12 + $0x8] sm:$0xff]
        %v6405 = vld [vmem:[%s12 + $0x10] sm:$0xff]
        %v6406 = vld [vmem:[%s12 + $0x18] sm:$0xff]
        %v6407 = vld [vmem:[%s13] sm:$0xff]
        %v6408 = vld [vmem:[%s13 + $0x8] sm:$0xff]
        %v6409 = vld [vmem:[%s13 + $0x10] sm:$0xff]
        %v6410 = vld [vmem:[%s13 + $0x18] sm:$0xff]
        %vm6411 = vcmask 261120
        %v6413 = vsel %vm6411, %v6403, 0
        %v6416 = vsel %vm6411, %v6404, 0
        %v6419 = vsel %vm6411, %v6405, 0
        %v6422 = vsel %vm6411, %v6406, 0
        %6424 = vmatprep.subr.mxu0 0.0
        %6425 = vmatpush1.msra.mxu0 %v6399
        %6426 = vmatprep.subr.mxu0 0.0
        %6427 = vmatpush1.msra.mxu0 %v6400
        %6428 = vmatprep.subr.mxu0 0.0
        %6429 = vmatpush1.msra.mxu0 %v6401
        %6430 = vmatprep.subr.mxu0 0.0
        %6431 = vmatpush1.msra.mxu0 %v6402
        %6432 = vmatprep.subr.mxu0 0.0
        %6433 = vmatpush1.msra.mxu0 0.0
        %6434 = vmatprep.subr.mxu0 0.0
        %6435 = vmatpush1.msra.mxu0 0.0
        %6436 = vmatprep.subr.mxu0 0.0
        %6437 = vmatpush1.msra.mxu0 0.0
        %6438 = vmatprep.subr.mxu0 0.0
        %6439 = vmatpush1.msra.mxu0 0.0
        %6440 = vmatprep.subr.mxu0 0.0
        %6441 = vmatpush1.msra.mxu0 0.0
        %6442 = vmatprep.subr.mxu0 0.0
        %6443 = vmatpush1.msra.mxu0 0.0
        %6444 = vmatprep.subr.mxu0 0.0
        %6445 = vmatpush1.msra.mxu0 0.0
        %6446 = vmatprep.subr.mxu0 0.0
        %6447 = vmatpush1.msra.mxu0 0.0
        %6448 = vmatprep.subr.mxu0 0.0
        %6449 = vmatpush1.msra.mxu0 0.0
        %6450 = vmatprep.subr.mxu0 0.0
        %6451 = vmatpush1.msra.mxu0 0.0
        %6452 = vmatprep.subr.mxu0 0.0
        %6453 = vmatpush1.msra.mxu0 0.0
        %6454 = vmatprep.subr.mxu0 0.0
        %6455 = vmatpush1.msra.mxu0 0.0
        %6456 = vmatprep.subr.mxu0 0.0
        %6457 = vmatpush1.msra.mxu0 0.0
        %6458 = vmatprep.subr.mxu0 0.0
        %6459 = vmatpush1.msra.mxu0 0.0
        %6460 = vmatprep.subr.mxu0 0.0
        %6461 = vmatpush1.msra.mxu0 0.0
        %6462 = vmatprep.subr.mxu0 0.0
        %6463 = vmatpush1.msra.mxu0 0.0
        %6464 = vmatprep.subr.mxu0 0.0
        %6465 = vmatpush1.msra.mxu0 0.0
        %6466 = vmatprep.subr.mxu0 0.0
        %6467 = vmatpush1.msra.mxu0 0.0
        %6468 = vmatprep.subr.mxu0 0.0
        %6469 = vmatpush1.msra.mxu0 0.0
        %6470 = vmatprep.subr.mxu0 0.0
        %6471 = vmatpush1.msra.mxu0 0.0
        %6472 = vmatprep.subr.mxu0 0.0
        %6473 = vmatpush1.msra.mxu0 0.0
        %6474 = vmatprep.subr.mxu0 0.0
        %6475 = vmatpush1.msra.mxu0 0.0
        %6476 = vmatprep.subr.mxu0 0.0
        %6477 = vmatpush1.msra.mxu0 0.0
        %6478 = vmatprep.subr.mxu0 0.0
        %6479 = vmatpush1.msra.mxu0 0.0
        %6480 = vmatprep.subr.mxu0 0.0
        %6481 = vmatpush1.msra.mxu0 0.0
        %6482 = vmatprep.subr.mxu0 0.0
        %6483 = vmatpush1.msra.mxu0 0.0
        %6484 = vmatprep.subr.mxu0 0.0
        %6485 = vmatpush1.msra.mxu0 0.0
        %6486 = vmatprep.subr.mxu0 0.0
        %6487 = vmatpush1.msra.mxu0 0.0
        %6488 = vmatprep.mubr.f32.mxu0 0.0
        %6489 = vmatmul.mubr.f32.gmra.mrb[0].mxu0 %v6413
        %v6490 = vpop.f32.mrb[0].mxu0
        %v6491 = vadd.f32 %v6407, %v6490
        %v6492 = vpop.f32.mrb[0].mxu0
        %6493 = vmatprep.mubr.f32.mxu0 0.0
        %6494 = vmatmul.mubr.f32.gmra.mrb[0].mxu0 %v6416
        %v6495 = vpop.f32.mrb[0].mxu0
        %v6496 = vadd.f32 %v6408, %v6495
        %v6497 = vpop.f32.mrb[0].mxu0
        %6498 = vmatprep.mubr.f32.mxu0 0.0
        %6499 = vmatmul.mubr.f32.gmra.mrb[0].mxu0 %v6419
        %v6500 = vpop.f32.mrb[0].mxu0
        %v6501 = vadd.f32 %v6409, %v6500
        %v6502 = vpop.f32.mrb[0].mxu0
        %6503 = vmatprep.mubr.f32.mxu0 0.0
        %6504 = vmatmul.mubr.f32.gmra.mrb[0].mxu0 %v6422
        %v6505 = vpop.f32.mrb[0].mxu0
        %v6506 = vadd.f32 %v6410, %v6505
        %v6507 = vpop.f32.mrb[0].mxu0
        %6508 = vdwg.mxu0
        %v6509 = vmax.f32 %v6491, %v6501
        %v6510 = vmax.f32 %v6496, %v6506
        %v6511 = vsub.f32 %v6491, %v6509
        %v6512 = vsub.f32 %v6496, %v6510
        %v6513 = vmul.f32 %v6511, 1.442695
        %v6514 = vpow.pop %v6513
        %v6515 = vmul.f32 %v6512, 1.442695
        %v6516 = vpow.pop %v6515
        %v6517 = vsub.f32 %v6501, %v6509
        %v6518 = vsub.f32 %v6506, %v6510
        %v6519 = vmul.f32 %v6517, 1.442695
        %v6520 = vpow.pop %v6519
        %v6521 = vmul.f32 %v6518, 1.442695
        %v6522 = vpow.pop %v6521
        %v6523 = vadd.f32 %v6514, %v6520
        %v6524 = vadd.f32 %v6516, %v6522
        %v6525 = vrcp.pop %v6523
        %v6526 = vmul.f32 %v6514, %v6525
        %v6527 = vrcp.pop %v6524
        %v6528 = vmul.f32 %v6516, %v6527
        %v6529 = vmul.f32 %v6520, %v6525
        %v6530 = vmul.f32 %v6522, %v6527
        %6532 = vset.pattern.permute.xlu0 0
        %6533 = vperm.xlu0 %6532, %v6526
        %v6534 = vpop.permute.xlu0 %6533
        %6537 = vset.pattern.permute.xlu0 0
        %6538 = vperm.xlu0 %6537, %v6528
        %v6539 = vpop.permute.xlu0 %6538
        %v6541 = vmul.f32 %v6257, %v6534
        %v6542 = vmul.f32 %v6258, %v6534
        %v6543 = vmul.f32 %v6259, %v6539
        %v6544 = vmul.f32 %v6260, %v6539
        %6546 = vset.pattern.permute.xlu0 0
        %6547 = vperm.xlu0 %6546, %v6529
        %v6548 = vpop.permute.xlu0 %6547
        %6551 = vset.pattern.permute.xlu0 0
        %6552 = vperm.xlu0 %6551, %v6530
        %v6553 = vpop.permute.xlu0 %6552
        %v6555 = vmul.f32 %v6261, %v6548
        %v6556 = vmul.f32 %v6262, %v6548
        %v6557 = vmul.f32 %v6263, %v6553
        %v6558 = vmul.f32 %v6264, %v6553
        %v6559 = vadd.f32 %v6541, %v6555
        %v6560 = vadd.f32 %v6542, %v6556
        %v6561 = vadd.f32 %v6543, %v6557
        %v6562 = vadd.f32 %v6544, %v6558
        %v6563 = vld [vmem:[%s14] sm:$0xff]
        %v6564 = vld [vmem:[%s14 + $0x8] sm:$0xff]
        %v6565 = vld [vmem:[%s14 + $0x10] sm:$0xff]
        %v6566 = vld [vmem:[%s14 + $0x18] sm:$0xff]
        %v6567 = vld [vmem:[%s14 + $0x20] sm:$0xff]
        %v6568 = vld [vmem:[%s14 + $0x28] sm:$0xff]
        %v6569 = vld [vmem:[%s14 + $0x30] sm:$0xff]
        %v6570 = vld [vmem:[%s14 + $0x38] sm:$0xff]
        %v6572 = vsel %vm6285, %v6563, 0
        %v6575 = vsel %vm6285, %v6564, 0
        %v6578 = vsel %vm6285, %v6565, 0
        %v6581 = vsel %vm6285, %v6566, 0
        %v6584 = vsel %vm6285, %v6567, 0
        %v6587 = vsel %vm6285, %v6568, 0
        %v6590 = vsel %vm6285, %v6569, 0
        %v6593 = vsel %vm6285, %v6570, 0
        %6595 = vmatprep.subr.mxu0 %v6560
        %6596 = vmatpush1.msra.mxu0 %v6559
        %6597 = vmatprep.subr.mxu0 %v6562
        %6598 = vmatpush1.msra.mxu0 %v6561
        %6599 = vmatprep.subr.mxu0 0.0
        %6600 = vmatpush1.msra.mxu0 0.0
        %6601 = vmatprep.subr.mxu0 0.0
        %6602 = vmatpush1.msra.mxu0 0.0
        %6603 = vmatprep.subr.mxu0 0.0
        %6604 = vmatpush1.msra.mxu0 0.0
        %6605 = vmatprep.subr.mxu0 0.0
        %6606 = vmatpush1.msra.mxu0 0.0
        %6607 = vmatprep.subr.mxu0 0.0
        %6608 = vmatpush1.msra.mxu0 0.0
        %6609 = vmatprep.subr.mxu0 0.0
        %6610 = vmatpush1.msra.mxu0 0.0
        %6611 = vmatprep.subr.mxu0 0.0
        %6612 = vmatpush1.msra.mxu0 0.0
        %6613 = vmatprep.subr.mxu0 0.0
        %6614 = vmatpush1.msra.mxu0 0.0
        %6615 = vmatprep.subr.mxu0 0.0
        %6616 = vmatpush1.msra.mxu0 0.0
        %6617 = vmatprep.subr.mxu0 0.0
        %6618 = vmatpush1.msra.mxu0 0.0
        %6619 = vmatprep.subr.mxu0 0.0
        %6620 = vmatpush1.msra.mxu0 0.0
        %6621 = vmatprep.subr.mxu0 0.0
        %6622 = vmatpush1.msra.mxu0 0.0
        %6623 = vmatprep.subr.mxu0 0.0
        %6624 = vmatpush1.msra.mxu0 0.0
        %6625 = vmatprep.subr.mxu0 0.0
        %6626 = vmatpush1.msra.mxu0 0.0
        %6627 = vmatprep.subr.mxu0 0.0
        %6628 = vmatpush1.msra.mxu0 0.0
        %6629 = vmatprep.subr.mxu0 0.0
        %6630 = vmatpush1.msra.mxu0 0.0
        %6631 = vmatprep.subr.mxu0 0.0
        %6632 = vmatpush1.msra.mxu0 0.0
        %6633 = vmatprep.subr.mxu0 0.0
        %6634 = vmatpush1.msra.mxu0 0.0
        %6635 = vmatprep.subr.mxu0 0.0
        %6636 = vmatpush1.msra.mxu0 0.0
        %6637 = vmatprep.subr.mxu0 0.0
        %6638 = vmatpush1.msra.mxu0 0.0
        %6639 = vmatprep.subr.mxu0 0.0
        %6640 = vmatpush1.msra.mxu0 0.0
        %6641 = vmatprep.subr.mxu0 0.0
        %6642 = vmatpush1.msra.mxu0 0.0
        %6643 = vmatprep.subr.mxu0 0.0
        %6644 = vmatpush1.msra.mxu0 0.0
        %6645 = vmatprep.subr.mxu0 0.0
        %6646 = vmatpush1.msra.mxu0 0.0
        %6647 = vmatprep.subr.mxu0 0.0
        %6648 = vmatpush1.msra.mxu0 0.0
        %6649 = vmatprep.subr.mxu0 0.0
        %6650 = vmatpush1.msra.mxu0 0.0
        %6651 = vmatprep.subr.mxu0 0.0
        %6652 = vmatpush1.msra.mxu0 0.0
        %6653 = vmatprep.subr.mxu0 0.0
        %6654 = vmatpush1.msra.mxu0 0.0
        %6655 = vmatprep.subr.mxu0 0.0
        %6656 = vmatpush1.msra.mxu0 0.0
        %6657 = vmatprep.subr.mxu0 0.0
        %6658 = vmatpush1.msra.mxu0 0.0
        %6659 = vmatprep.mubr.f32.mxu0 0.0
        %6660 = vmatmul.mubr.f32.gmra.mrb[0].mxu0 %v6572
        %v6661 = vpop.f32.mrb[0].mxu0
        %v6662 = vadd.f32 0.0, %v6661
        %v6663 = vpop.f32.mrb[0].mxu0
        %v6664 = vadd.f32 0.0, %v6663
        %6665 = vmatprep.mubr.f32.mxu0 0.0
        %6666 = vmatmul.mubr.f32.gmra.mrb[0].mxu0 %v6575
        %v6667 = vpop.f32.mrb[0].mxu0
        %v6668 = vadd.f32 0.0, %v6667
        %v6669 = vpop.f32.mrb[0].mxu0
        %v6670 = vadd.f32 0.0, %v6669
        %6671 = vmatprep.mubr.f32.mxu0 0.0
        %6672 = vmatmul.mubr.f32.gmra.mrb[0].mxu0 %v6578
        %v6673 = vpop.f32.mrb[0].mxu0
        %v6674 = vadd.f32 0.0, %v6673
        %v6675 = vpop.f32.mrb[0].mxu0
        %v6676 = vadd.f32 0.0, %v6675
        %6677 = vmatprep.mubr.f32.mxu0 0.0
        %6678 = vmatmul.mubr.f32.gmra.mrb[0].mxu0 %v6581
        %v6679 = vpop.f32.mrb[0].mxu0
        %v6680 = vadd.f32 0.0, %v6679
        %v6681 = vpop.f32.mrb[0].mxu0
        %v6682 = vadd.f32 0.0, %v6681
        %6683 = vmatprep.mubr.f32.mxu0 0.0
        %6684 = vmatmul.mubr.f32.gmra.mrb[0].mxu0 %v6584
        %v6685 = vpop.f32.mrb[0].mxu0
        %v6686 = vadd.f32 0.0, %v6685
        %v6687 = vpop.f32.mrb[0].mxu0
        %v6688 = vadd.f32 0.0, %v6687
        %6689 = vmatprep.mubr.f32.mxu0 0.0
        %6690 = vmatmul.mubr.f32.gmra.mrb[0].mxu0 %v6587
        %v6691 = vpop.f32.mrb[0].mxu0
        %v6692 = vadd.f32 0.0, %v6691
        %v6693 = vpop.f32.mrb[0].mxu0
        %v6694 = vadd.f32 0.0, %v6693
        %6695 = vmatprep.mubr.f32.mxu0 0.0
        %6696 = vmatmul.mubr.f32.gmra.mrb[0].mxu0 %v6590
        %v6697 = vpop.f32.mrb[0].mxu0
        %v6698 = vadd.f32 0.0, %v6697
        %v6699 = vpop.f32.mrb[0].mxu0
        %v6700 = vadd.f32 0.0, %v6699
        %6701 = vmatprep.mubr.f32.mxu0 0.0
        %6702 = vmatmul.mubr.f32.gmra.mrb[0].mxu0 %v6593
        %v6703 = vpop.f32.mrb[0].mxu0
        %v6704 = vadd.f32 0.0, %v6703
        %v6705 = vpop.f32.mrb[0].mxu0
        %v6706 = vadd.f32 0.0, %v6705
        %6707 = vdwg.mxu0
        %v6708 = vld [vmem:[%s15] sm:$0xff]
        %v6709 = vld [vmem:[%s15 + $0x8] sm:$0xff]
        %v6710 = vld [vmem:[%s15 + $0x10] sm:$0xff]
        %v6711 = vld [vmem:[%s15 + $0x18] sm:$0xff]
        %v6712 = vld [vmem:[%s15 + $0x20] sm:$0xff]
        %v6713 = vld [vmem:[%s15 + $0x28] sm:$0xff]
        %v6714 = vld [vmem:[%s15 + $0x30] sm:$0xff]
        %v6715 = vld [vmem:[%s15 + $0x38] sm:$0xff]
        %6717 = vset.pattern.permute.xlu0 0
        %6718 = vperm.xlu0 %6717, %v6708
        %v6719 = vpop.permute.xlu0 %6718
        %6722 = vset.pattern.permute.xlu0 0
        %6723 = vperm.xlu0 %6722, %v6709
        %v6724 = vpop.permute.xlu0 %6723
        %6727 = vset.pattern.permute.xlu0 0
        %6728 = vperm.xlu0 %6727, %v6710
        %v6729 = vpop.permute.xlu0 %6728
        %6732 = vset.pattern.permute.xlu0 0
        %6733 = vperm.xlu0 %6732, %v6711
        %v6734 = vpop.permute.xlu0 %6733
        %6737 = vset.pattern.permute.xlu0 0
        %6738 = vperm.xlu0 %6737, %v6712
        %v6739 = vpop.permute.xlu0 %6738
        %6742 = vset.pattern.permute.xlu0 0
        %6743 = vperm.xlu0 %6742, %v6713
        %v6744 = vpop.permute.xlu0 %6743
        %6747 = vset.pattern.permute.xlu0 0
        %6748 = vperm.xlu0 %6747, %v6714
        %v6749 = vpop.permute.xlu0 %6748
        %6752 = vset.pattern.permute.xlu0 0
        %6753 = vperm.xlu0 %6752, %v6715
        %v6754 = vpop.permute.xlu0 %6753
        %v6756 = vmul.f32 %v6662, %v6719
        %v6757 = vmul.f32 %v6664, %v6719
        %v6758 = vmul.f32 %v6668, %v6724
        %v6759 = vmul.f32 %v6670, %v6724
        %v6760 = vmul.f32 %v6674, %v6729
        %v6761 = vmul.f32 %v6676, %v6729
        %v6762 = vmul.f32 %v6680, %v6734
        %v6763 = vmul.f32 %v6682, %v6734
        %v6764 = vmul.f32 %v6686, %v6739
        %v6765 = vmul.f32 %v6688, %v6739
        %v6766 = vmul.f32 %v6692, %v6744
        %v6767 = vmul.f32 %v6694, %v6744
        %v6768 = vmul.f32 %v6698, %v6749
        %v6769 = vmul.f32 %v6700, %v6749
        %v6770 = vmul.f32 %v6704, %v6754
        %v6771 = vmul.f32 %v6706, %v6754
        %v6772 = vld [vmem:[%s16] sm:$0xff]
        %v6773 = vld [vmem:[%s16 + $0x8] sm:$0xff]
        %v6774 = vld [vmem:[%s16 + $0x10] sm:$0xff]
        %v6775 = vld [vmem:[%s16 + $0x18] sm:$0xff]
        %v6776 = vld [vmem:[%s16 + $0x20] sm:$0xff]
        %v6777 = vld [vmem:[%s16 + $0x28] sm:$0xff]
        %v6778 = vld [vmem:[%s16 + $0x30] sm:$0xff]
        %v6779 = vld [vmem:[%s16 + $0x38] sm:$0xff]
        %6781 = vset.pattern.permute.xlu0 0
        %6782 = vperm.xlu0 %6781, %v6772
        %v6783 = vpop.permute.xlu0 %6782
        %6786 = vset.pattern.permute.xlu0 0
        %6787 = vperm.xlu0 %6786, %v6773
        %v6788 = vpop.permute.xlu0 %6787
        %6791 = vset.pattern.permute.xlu0 0
        %6792 = vperm.xlu0 %6791, %v6774
        %v6793 = vpop.permute.xlu0 %6792
        %6796 = vset.pattern.permute.xlu0 0
        %6797 = vperm.xlu0 %6796, %v6775
        %v6798 = vpop.permute.xlu0 %6797
        %6801 = vset.pattern.permute.xlu0 0
        %6802 = vperm.xlu0 %6801, %v6776
        %v6803 = vpop.permute.xlu0 %6802
        %6806 = vset.pattern.permute.xlu0 0
        %6807 = vperm.xlu0 %6806, %v6777
        %v6808 = vpop.permute.xlu0 %6807
        %6811 = vset.pattern.permute.xlu0 0
        %6812 = vperm.xlu0 %6811, %v6778
        %v6813 = vpop.permute.xlu0 %6812
        %6816 = vset.pattern.permute.xlu0 0
        %6817 = vperm.xlu0 %6816, %v6779
        %v6818 = vpop.permute.xlu0 %6817
        %v6820 = vadd.f32 %v6756, %v6783
        %v6821 = vadd.f32 %v6757, %v6783
        %v6822 = vadd.f32 %v6758, %v6788
        %v6823 = vadd.f32 %v6759, %v6788
        %v6824 = vadd.f32 %v6760, %v6793
        %v6825 = vadd.f32 %v6761, %v6793
        %v6826 = vadd.f32 %v6762, %v6798
        %v6827 = vadd.f32 %v6763, %v6798
        %v6828 = vadd.f32 %v6764, %v6803
        %v6829 = vadd.f32 %v6765, %v6803
        %v6830 = vadd.f32 %v6766, %v6808
        %v6831 = vadd.f32 %v6767, %v6808
        %v6832 = vadd.f32 %v6768, %v6813
        %v6833 = vadd.f32 %v6769, %v6813
        %v6834 = vadd.f32 %v6770, %v6818
        %v6835 = vadd.f32 %v6771, %v6818
        %v6836 = vadd.f32 %v6820, %v547
        %v6837 = vadd.f32 %v6821, %v548
        %v6838 = vadd.f32 %v6822, %v549
        %v6839 = vadd.f32 %v6823, %v550
        %v6840 = vadd.f32 %v6824, %v551
        %v6841 = vadd.f32 %v6825, %v552
        %v6842 = vadd.f32 %v6826, %v553
        %v6843 = vadd.f32 %v6827, %v554
        %v6844 = vadd.f32 %v6828, %v555
        %v6845 = vadd.f32 %v6829, %v556
        %v6846 = vadd.f32 %v6830, %v557
        %v6847 = vadd.f32 %v6831, %v558
        %v6848 = vadd.f32 %v6832, %v559
        %v6849 = vadd.f32 %v6833, %v560
        %v6850 = vadd.f32 %v6834, %v561
        %v6851 = vadd.f32 %v6835, %v562
        %v6852 = vmax.f32 %v6836, 0.0
        %v6853 = vmax.f32 %v6837, 0.0
        %v6854 = vmax.f32 %v6838, 0.0
        %v6855 = vmax.f32 %v6839, 0.0
        %v6856 = vmax.f32 %v6840, 0.0
        %v6857 = vmax.f32 %v6841, 0.0
        %v6858 = vmax.f32 %v6842, 0.0
        %v6859 = vmax.f32 %v6843, 0.0
        %v6860 = vmax.f32 %v6844, 0.0
        %v6861 = vmax.f32 %v6845, 0.0
        %v6862 = vmax.f32 %v6846, 0.0
        %v6863 = vmax.f32 %v6847, 0.0
        %v6864 = vmax.f32 %v6848, 0.0
        %v6865 = vmax.f32 %v6849, 0.0
        %v6866 = vmax.f32 %v6850, 0.0
        %v6867 = vmax.f32 %v6851, 0.0
        %6868 = vst [vmem:[%s541] sm:$0xff] %v6852
        %6869 = vst [vmem:[%s541 + $0x8] sm:$0xff] %v6853
        %6870 = vst [vmem:[%s541 + $0x10] sm:$0xff] %v6854
        %6871 = vst [vmem:[%s541 + $0x18] sm:$0xff] %v6855
        %6872 = vst [vmem:[%s541 + $0x20] sm:$0xff] %v6856
        %6873 = vst [vmem:[%s541 + $0x28] sm:$0xff] %v6857
        %6874 = vst [vmem:[%s541 + $0x30] sm:$0xff] %v6858
        %6875 = vst [vmem:[%s541 + $0x38] sm:$0xff] %v6859
        %6876 = vst [vmem:[%s541 + $0x40] sm:$0xff] %v6860
        %6877 = vst [vmem:[%s541 + $0x48] sm:$0xff] %v6861
        %6878 = vst [vmem:[%s541 + $0x50] sm:$0xff] %v6862
        %6879 = vst [vmem:[%s541 + $0x58] sm:$0xff] %v6863
        %6880 = vst [vmem:[%s541 + $0x60] sm:$0xff] %v6864
        %6881 = vst [vmem:[%s541 + $0x68] sm:$0xff] %v6865
        %6882 = vst [vmem:[%s541 + $0x70] sm:$0xff] %v6866
        %6883 = vst [vmem:[%s541 + $0x78] sm:$0xff] %v6867
        %s6884 = sand.u32 %s401, 1
        %s6885 = scalar_lea.sflag [#allocation3], %s6884
        %s6886 = sand.u32 %s401, 1
        %s6887 = smul.addr %s6886, 128
        %s6888 = scalar_lea.vmem [#allocation2], %s6887
        // Predicated region
        $region89: #{tpu_custom_call.1} parent=87 // pred_check
          %p6889 = pneg %p411
        $region90: #{tpu_custom_call.1} parent=87 // pred_check_branch
          %6891 = sbr.rel (%p6889) target = $region92
        $region91: #{tpu_custom_call.1} parent=87 // pred_region
          %s6893 = ssub.s32 2048, 2048
          %6894 = vsyncadd %s6885, %s6893
          %s6895 = smul.addr %s31, 16
          %s6896 = smul.addr %s6895, 128
          %s6897 = scalar_lea.hbm %s17, %s6896
          %s6898 = sshll.u32 %s6888, 4
          %s6899 = int_to_ptr.vmem [resolvable:$true] %s6898
          %6904 = dma.vmem_to_hbm [thread:$0]  %s6899, 2048, %s6897, %s6885, 256, 256, 16
        $region92: #{tpu_custom_call.1} parent=87 // pred_fallthru
          _
      $region88: #{tpu_custom_call.1} parent=5 // pred_fallthru
        _
      %p6905 = scmp.le.s32.totalorder 2, %s26
      // Predicated region
      $region93: #{tpu_custom_call.1} parent=5 // pred_check
        %p6906 = pneg %p6905
      $region94: #{tpu_custom_call.1} parent=5 // pred_check_branch
        %6908 = sbr.rel (%p6906) target = $region96
      $region95: #{tpu_custom_call.1} parent=5 // pred_region
        %s6909 = ssub.s32 %s26, 2
        // Predicated region
        $region97: #{tpu_custom_call.1} parent=95 // pred_check
          %p6910 = pneg %p417
        $region98: #{tpu_custom_call.1} parent=95 // pred_check_branch
          %6912 = sbr.rel (%p6910) target = $region100
        $region99: #{tpu_custom_call.1} parent=95 // pred_region
          %s6913 = sand.u32 %s402, 1
          %s6914 = scalar_lea.sflag [#allocation3], %s6913
          %s6915 = sand.u32 %s402, 1
          %s6916 = smul.addr %s6915, 128
          %s6917 = scalar_lea.vmem [#allocation2], %s6916
          %6918 = dma.done %s6914, 2048
        $region100: #{tpu_custom_call.1} parent=95 // pred_fallthru
          _
      $region96: #{tpu_custom_call.1} parent=5 // pred_fallthru
        _
    $region6: #{tpu_custom_call.1} parent=1 // loop_footer
      %s30 = sadd.s32 1, %s26
    $region7: #{tpu_custom_call.1} parent=1 // loop_footer_branch
      %25 = sbr.rel target = $region3
    $region8: #{tpu_custom_call.1} parent=1 // loop_exit
      _
    %6919 = vsyncpa [#allocation3], 1
    %s6920 = scalar_lea.sflag [#allocation3], 1
    %6921 = vsyncpa %s6920, 1

</llo_original>
